<compile_context>
chip_gen: v7x
topology: tpu7x:2x2x1
jax: 0.10.0
libtpu: 0.0.40
codegen_flags: <defaults>
</compile_context>

<pallas_src>
import math

import jax
import jax.numpy as jnp
from jax.experimental import pallas as pl
from jax.experimental.pallas import tpu as pltpu

FEATURE_DIM = 2
GRID_SIZE = 5
SPLINE_ORDER = 3
NUM_BASIS = GRID_SIZE + SPLINE_ORDER                 # 8 cubic B-spline bases
NUM_FEATS = NUM_BASIS + 1                            # [silu | B_0 .. B_7] feature blocks
_H = 2.0 / GRID_SIZE                                 # uniform knot spacing
GRID_PTS = [-1.0 + (i - SPLINE_ORDER) * _H
            for i in range(GRID_SIZE + 2 * SPLINE_ORDER + 1)]   # 12 static knots
MAX_KAN_IN = 4 * 128                                 # widest KAN input (fc1: 512)


def _sigmoid(x):
    return 1.0 / (1.0 + jnp.exp(-x))


def _bspline_bases(x):
    """Cubic B-spline bases on the static uniform grid (efficient-kan b_splines).

    Divisions by knot spacings are Python-constant reciprocal multiplies
    (uniform grid: every denominator at level p equals p*h) and the (x - knot)
    differences are computed once and reused across levels.  All math in f32.
    """
    d = [x - g for g in GRID_PTS]
    bases = [jnp.where((d[j] >= 0.0) & (d[j + 1] < 0.0), 1.0, 0.0)
             for j in range(len(GRID_PTS) - 1)]
    for p in range(1, SPLINE_ORDER + 1):
        ph = p * _H
        inv = 1.0 / ph                               # static Python constant
        t = [d[j] * bases[j] for j in range(len(bases))]
        # B_{j,p} = ( t_j + p*h*B_{j+1,p-1} - t_{j+1} ) / (p*h)
        bases = [(t[j] + ph * bases[j + 1] - t[j + 1]) * inv
                 for j in range(len(bases) - 1)]
    return bases                                     # NUM_BASIS arrays shaped like x


def _kan_wide(x, w_ref, feats_ref):
    """KANLinear as ONE wide-K bf16 MXU matmul.

    [silu(x) | B_0(x) | ... | B_7(x)] is written into the bf16 VMEM scratch
    `feats_ref` at 128-aligned lane offsets (f32 elementwise math, cast only at
    the store = matmul operand).  `w_ref` holds the matching pre-flattened bf16
    weight [W_base ; W_spline_0 ; ... ; W_spline_7] of shape (NUM_FEATS*IN, OUT).
    """
    n_in = x.shape[1]
    feats_ref[:, 0:n_in] = (x * _sigmoid(x)).astype(jnp.bfloat16)
    for j, bj in enumerate(_bspline_bases(x)):
        feats_ref[:, (j + 1) * n_in:(j + 2) * n_in] = bj.astype(jnp.bfloat16)
    return jnp.dot(feats_ref[:, :NUM_FEATS * n_in], w_ref[...],
                   preferred_element_type=jnp.float32)


def _kan_tiny(x, w_rows):
    """Tiny KANLinear with OUT=1: VPU multiplies + one cross-lane reduce
    (replaces 9 degenerate K<=8, N=1 MXU matmuls).
    w_rows: (NUM_FEATS, IN) f32 — row 0 = base weight, rows 1.. = spline rows."""
    acc = (x * _sigmoid(x)) * w_rows[0:1, :]
    for j, bj in enumerate(_bspline_bases(x)):
        acc = acc + bj * w_rows[j + 1:j + 2, :]
    return jnp.sum(acc, axis=-1, keepdims=True)


# -----------------------------------------------------------------------------
# The single fused kernel
# -----------------------------------------------------------------------------
def _cmodel_kernel(
        # activations
        y_t_ref, y_g_ref, y_k_ref, y_s_ref, feat_ref,
        # transform_fc_1
        wt_ref, bt_ref,
        # 4 gate MLPs fused into 2 packed matmuls
        gw1_ref, gb1_ref, gw2_ref, gb2_ref,
        # host-precomputed softmax of the 4 learned expert scalars, (1, 4)
        wexp_ref,
        # fc1 (streamed from HBM), batchnorm
        fc1_w_hbm, bn_g_ref, bn_b_ref,
        # fc2 (streamed from HBM), fc3 (VMEM-resident, tiny)
        fc2_w_hbm, fc3_w_ref,
        # fc4 split by input block ([fc3 out | features]), row-layout f32
        fc4a_ref, fc4b_ref,
        # output
        out_ref,
        # scratch
        fc1_w_vmem, fc2_w_vmem, dma_sem,
        stack_ref, moe_ref, feats_ref):

    # Kick off the two big bf16 KAN-weight DMAs first so they overlap the whole
    # front end (transform fc, fused gates, MoE combine, fc1 b-spline bases).
    cp1 = pltpu.make_async_copy(fc1_w_hbm, fc1_w_vmem, dma_sem.at[0])
    cp2 = pltpu.make_async_copy(fc2_w_hbm, fc2_w_vmem, dma_sem.at[1])
    cp1.start()
    cp2.start()

    B = y_g_ref.shape[0]

    # ---------------- transform branch: ReLU(Linear(in_t -> 128)) ---------------
    out_t = jnp.maximum(
        jnp.dot(y_t_ref[...], wt_ref[...], preferred_element_type=jnp.float32)
        + bt_ref[...], 0.0)                                            # (B, 128)

    experts = (out_t, y_g_ref[...], y_k_ref[...], y_s_ref[...])

    # ------- 4 gating MLPs fused into 2 matmuls over row-stacked experts --------
    for e in range(4):                                   # 8-aligned sublane stores
        stack_ref[e * B:(e + 1) * B, :] = experts[e]
    h = jnp.maximum(
        jnp.dot(stack_ref[...], gw1_ref[...], preferred_element_type=jnp.float32)
        + gb1_ref[...], 0.0)                                           # (4B, 256)
    # gw2 is block-diagonal, so only the per-expert diagonal entries are valid.
    logits = (jnp.dot(h, gw2_ref[...], preferred_element_type=jnp.float32)
              + gb2_ref[...])                                          # (4B, 4)
    lg = [logits[e * B:(e + 1) * B, e:e + 1] for e in range(4)]        # each (B, 1)

    # softmax over the 4 per-sample gate logits, column-wise (no (B,4) concat)
    gmax = jnp.maximum(jnp.maximum(lg[0], lg[1]), jnp.maximum(lg[2], lg[3]))
    gexp = [jnp.exp(l - gmax) for l in lg]
    ginv = 1.0 / (gexp[0] + gexp[1] + gexp[2] + gexp[3])               # (B, 1)

    # --------- weighted concat of the 4 experts into (B, 512) VMEM scratch ------
    wexp = wexp_ref[...]                                               # (1, 4)
    for e in range(4):
        scale = (gexp[e] * ginv) * wexp[:, e:e + 1]                    # (B, 1)
        moe_ref[:, e * 128:(e + 1) * 128] = scale * experts[e]         # aligned store
    x = moe_ref[...]                                                   # (B, 512)

    # --------- fc1 (KAN 512->384) + ReLU + BatchNorm (train-mode batch stats) ---
    cp1.wait()                                         # fc1 weight now VMEM-resident
    x = jnp.maximum(_kan_wide(x, fc1_w_vmem, feats_ref), 0.0)
    mean = jnp.mean(x, axis=0, keepdims=True)
    var = jnp.mean((x - mean) ** 2, axis=0, keepdims=True)
    x = bn_g_ref[...] * (x - mean) * jax.lax.rsqrt(var + 1e-5) + bn_b_ref[...]

    # --------- fc2 (KAN 384->128) + ReLU, fc3 (KAN 128->8) + ReLU ---------------
    cp2.wait()
    x = jnp.maximum(_kan_wide(x, fc2_w_vmem, feats_ref), 0.0)
    x = jnp.maximum(_kan_wide(x, fc3_w_ref, feats_ref), 0.0)

    # --------- fc4 = KANLinear(8+2 -> 1) on [x | features], then sigmoid --------
    # exact split-sum over the two input blocks; VPU multiply + lane reduce
    y = _kan_tiny(x, fc4a_ref[...]) + _kan_tiny(feat_ref[...], fc4b_ref[...])
    out_ref[...] = _sigmoid(y)


# -----------------------------------------------------------------------------
# Parameters (deterministic synthetic init)
# -----------------------------------------------------------------------------
def init_params(key, in_transform):
    keys = iter(jax.random.split(key, 32))

    def lin(kin, kout):
        w = jax.random.normal(next(keys), (kin, kout), jnp.float32) / math.sqrt(kin)
        b = jnp.zeros((1, kout), jnp.float32)
        return w, b

    def kan_concat(kin, kout):
        """[W_base ; W_spline_0 ; ... ; W_spline_7] pre-flattened, stored bf16."""
        wb = jax.random.normal(next(keys), (kin, kout), jnp.float32) / math.sqrt(kin)
        ws = jax.random.normal(next(keys), (NUM_BASIS, kin, kout), jnp.float32) * 0.02
        w = jnp.concatenate([wb[None], ws], axis=0).reshape(NUM_FEATS * kin, kout)
        return w.astype(jnp.bfloat16)

    def kan_rows(kin):
        """OUT=1 KAN block stored as (NUM_FEATS, kin) f32 rows for the VPU path."""
        wb = jax.random.normal(next(keys), (kin, 1), jnp.float32) / math.sqrt(kin)
        ws = jax.random.normal(next(keys), (NUM_BASIS, kin, 1), jnp.float32) * 0.02
        return jnp.concatenate([wb.T, ws[:, :, 0]], axis=0)            # (9, kin)

    p = {}
    # transform_fc_1 is created lazily in torch; its in_features is fixed here
    # at trace time to y_transform.shape[1].
    p["fc_t"] = lin(in_transform, 128)

    w1s, b1s, w2s, b2s = [], [], [], []
    for _ in range(4):                                   # transform, gat, kan, se3
        w1, b1 = lin(128, 64)
        w2, b2 = lin(64, 1)
        w1s.append(w1); b1s.append(b1); w2s.append(w2); b2s.append(b2)
    # pack the 4 gate MLPs for 2 fused matmuls over the row-stacked experts
    p["gate_w1"] = jnp.concatenate(w1s, axis=1)          # (128, 256)
    p["gate_b1"] = jnp.concatenate(b1s, axis=1)          # (1, 256)
    gw2 = jnp.zeros((256, 4), jnp.float32)               # block-diagonal layer-2
    for e in range(4):
        gw2 = gw2.at[e * 64:(e + 1) * 64, e].set(w2s[e][:, 0])
    p["gate_w2"] = gw2
    p["gate_b2"] = jnp.concatenate(b2s, axis=1)          # (1, 4)

    p["w_experts"] = jnp.ones((4,), jnp.float32)         # weight_transform/gat/kan/se3
    p["fc1_w"] = kan_concat(4 * 128, 384)                # bf16, streamed from HBM
    p["bn_gamma"] = jnp.ones((1, 384), jnp.float32)
    p["bn_beta"] = jnp.zeros((1, 384), jnp.float32)
    p["fc2_w"] = kan_concat(384, 128)                    # bf16, streamed from HBM
    p["fc3_w"] = kan_concat(128, 8)                      # bf16, tiny (VMEM-resident)
    # fc4 = KANLinear(8 + feature_dim, 1), stored split by input block
    p["fc4_a"] = kan_rows(8)                             # (9, 8) f32
    p["fc4_b"] = kan_rows(FEATURE_DIM)                   # (9, 2) f32
    return p


# -----------------------------------------------------------------------------
# Forward pass (matches CModel.forward) — one fused pallas_call
# -----------------------------------------------------------------------------
@jax.jit
def cmodel_forward(params, y_transform, y_gat, y_kan, y_se3, features):
    batch = y_transform.shape[0]
    # softmax over the 4 learned expert scalars is parameter-only: do it on host
    wexp_sm = jax.nn.softmax(params["w_experts"]).reshape(1, 4)

    vmem = pltpu.MemorySpace.VMEM
    num_inputs = 19
    hbm_stream_idx = {12, 15}                            # fc1_w, fc2_w (manual DMA)
    in_specs = [pl.BlockSpec(memory_space=pl.ANY) if i in hbm_stream_idx
                else pl.BlockSpec(memory_space=vmem)
                for i in range(num_inputs)]

    return pl.pallas_call(
        _cmodel_kernel,
        out_shape=jax.ShapeDtypeStruct((batch, 1), jnp.float32),
        in_specs=in_specs,
        out_specs=pl.BlockSpec(memory_space=vmem),
        scratch_shapes=[
            pltpu.VMEM((NUM_FEATS * 4 * 128, 384), jnp.bfloat16),   # fc1 weight buffer
            pltpu.VMEM((NUM_FEATS * 384, 128), jnp.bfloat16),       # fc2 weight buffer
            pltpu.SemaphoreType.DMA((2,)),                          # fc1/fc2 DMA sems
            pltpu.VMEM((4 * batch, 128), jnp.float32),              # stacked experts
            pltpu.VMEM((batch, 4 * 128), jnp.float32),              # weighted concat
            pltpu.VMEM((batch, NUM_FEATS * MAX_KAN_IN), jnp.bfloat16),  # KAN features
        ],
        compiler_params=pltpu.CompilerParams(
            # ~4.3 MiB scratch + <1 MiB resident weights/activations; 16 MiB
            # leaves headroom and fits comfortably on v5e/v6e/v7x VMEM.
            vmem_limit_bytes=16 * 1024 * 1024,
        ),
    )(
        y_transform, y_gat, y_kan, y_se3, features,
        params["fc_t"][0], params["fc_t"][1],
        params["gate_w1"], params["gate_b1"], params["gate_w2"], params["gate_b2"],
        wexp_sm,
        params["fc1_w"], params["bn_gamma"], params["bn_beta"],
        params["fc2_w"], params["fc3_w"],
        params["fc4_a"], params["fc4_b"],
    )


if __name__ == "__main__":
    B = 8
    IN_TRANSFORM = 32
    key = jax.random.PRNGKey(0)
    kp, k1, k2, k3, k4, k5 = jax.random.split(key, 6)

    params = init_params(kp, IN_TRANSFORM)
    y_transform = jax.random.normal(k1, (B, IN_TRANSFORM), jnp.float32)
    y_gat = jax.random.normal(k2, (B, 128), jnp.float32)
    y_kan = jax.random.normal(k3, (B, 128), jnp.float32)
    y_se3 = jax.random.normal(k4, (B, 128), jnp.float32)
    features = jax.random.normal(k5, (B, FEATURE_DIM), jnp.float32)

    out = cmodel_forward(params, y_transform, y_gat, y_kan, y_se3, features)
    out = jax.block_until_ready(out)

    assert out.shape == (B, 1), out.shape
    assert bool(jnp.all(jnp.isfinite(out)))
    assert bool(jnp.all((out > 0.0) & (out < 1.0)))   # sigmoid output range
    print("KERNEL_OK")
</pallas_src>

<mosaic_0001>
module attributes {stable_mosaic.version = 11 : i64} {
  func.func @_cmodel_kernel(%arg0: memref<8x32xf32, #tpu.memory_space<vmem>>, %arg1: memref<8x128xf32, #tpu.memory_space<vmem>>, %arg2: memref<8x128xf32, #tpu.memory_space<vmem>>, %arg3: memref<8x128xf32, #tpu.memory_space<vmem>>, %arg4: memref<8x2xf32, #tpu.memory_space<vmem>>, %arg5: memref<32x128xf32, #tpu.memory_space<vmem>>, %arg6: memref<1x128xf32, #tpu.memory_space<vmem>>, %arg7: memref<128x256xf32, #tpu.memory_space<vmem>>, %arg8: memref<1x256xf32, #tpu.memory_space<vmem>>, %arg9: memref<256x4xf32, #tpu.memory_space<vmem>>, %arg10: memref<1x4xf32, #tpu.memory_space<vmem>>, %arg11: memref<1x4xf32, #tpu.memory_space<vmem>>, %arg12: memref<4608x384xbf16, #tpu.memory_space<any>>, %arg13: memref<1x384xf32, #tpu.memory_space<vmem>>, %arg14: memref<1x384xf32, #tpu.memory_space<vmem>>, %arg15: memref<3456x128xbf16, #tpu.memory_space<any>>, %arg16: memref<1152x8xbf16, #tpu.memory_space<vmem>>, %arg17: memref<9x8xf32, #tpu.memory_space<vmem>>, %arg18: memref<9x2xf32, #tpu.memory_space<vmem>>, %arg19: memref<8x1xf32, #tpu.memory_space<vmem>>, %arg20: memref<4608x384xbf16, #tpu.memory_space<vmem>>, %arg21: memref<3456x128xbf16, #tpu.memory_space<vmem>>, %arg22: memref<2x!tpu.dma_semaphore, #tpu.memory_space<semaphore_mem>>, %arg23: memref<32x128xf32, #tpu.memory_space<vmem>>, %arg24: memref<8x512xf32, #tpu.memory_space<vmem>>, %arg25: memref<8x4608xbf16, #tpu.memory_space<vmem>>) attributes {dimension_semantics = [], scalar_prefetch = 0 : i64, scratch_operands = 6 : i64, tpu.core_type = #tpu.core_type<tc>} {
    %c0_i32 = arith.constant 0 : i32
    %0 = tpu.memref_slice %arg22[%c0_i32] : memref<2x!tpu.dma_semaphore, #tpu.memory_space<semaphore_mem>> -> memref<1x!tpu.dma_semaphore, #tpu.memory_space<semaphore_mem>>
    %1 = tpu.memref_squeeze %0 : memref<1x!tpu.dma_semaphore, #tpu.memory_space<semaphore_mem>> -> memref<!tpu.dma_semaphore, #tpu.memory_space<semaphore_mem>>
    tpu.enqueue_dma source(%arg12 : memref<4608x384xbf16, #tpu.memory_space<any>>) target(%arg20 : memref<4608x384xbf16, #tpu.memory_space<vmem>>) target_semaphore(%1 : memref<!tpu.dma_semaphore, #tpu.memory_space<semaphore_mem>>)
    %c1_i32 = arith.constant 1 : i32
    %2 = tpu.memref_slice %arg22[%c1_i32] : memref<2x!tpu.dma_semaphore, #tpu.memory_space<semaphore_mem>> -> memref<1x!tpu.dma_semaphore, #tpu.memory_space<semaphore_mem>>
    %3 = tpu.memref_squeeze %2 : memref<1x!tpu.dma_semaphore, #tpu.memory_space<semaphore_mem>> -> memref<!tpu.dma_semaphore, #tpu.memory_space<semaphore_mem>>
    tpu.enqueue_dma source(%arg15 : memref<3456x128xbf16, #tpu.memory_space<any>>) target(%arg21 : memref<3456x128xbf16, #tpu.memory_space<vmem>>) target_semaphore(%3 : memref<!tpu.dma_semaphore, #tpu.memory_space<semaphore_mem>>)
    %c0 = arith.constant 0 : index
    %c0_0 = arith.constant 0 : index
    %4 = vector.load %arg0[%c0, %c0_0] : memref<8x32xf32, #tpu.memory_space<vmem>>, vector<8x32xf32>
    %c0_1 = arith.constant 0 : index
    %c0_2 = arith.constant 0 : index
    %5 = vector.load %arg5[%c0_1, %c0_2] : memref<32x128xf32, #tpu.memory_space<vmem>>, vector<32x128xf32>
    %cst = arith.constant dense<0.000000e+00> : vector<8x128xf32>
    %6 = tpu.matmul %4, %5, %cst {dimension_numbers = #tpu.dot_dimension_numbers<[1], [0], [0], [1], [0, 0, 1, 1], [], []>} : vector<8x32xf32>, vector<32x128xf32>, vector<8x128xf32> -> vector<8x128xf32>
    %c0_3 = arith.constant 0 : index
    %c0_4 = arith.constant 0 : index
    %7 = vector.load %arg6[%c0_3, %c0_4] : memref<1x128xf32, #tpu.memory_space<vmem>>, vector<1x128xf32>
    %8 = vector.broadcast %7 : vector<1x128xf32> to vector<8x128xf32>
    %9 = arith.addf %6, %8 : vector<8x128xf32>
    %cst_5 = arith.constant 0.000000e+00 : f32
    %10 = vector.broadcast %cst_5 : f32 to vector<8x128xf32>
    %11 = arith.maximumf %9, %10 : vector<8x128xf32>
    %c0_6 = arith.constant 0 : index
    %c0_7 = arith.constant 0 : index
    %12 = vector.load %arg1[%c0_6, %c0_7] : memref<8x128xf32, #tpu.memory_space<vmem>>, vector<8x128xf32>
    %c0_8 = arith.constant 0 : index
    %c0_9 = arith.constant 0 : index
    %13 = vector.load %arg2[%c0_8, %c0_9] : memref<8x128xf32, #tpu.memory_space<vmem>>, vector<8x128xf32>
    %c0_10 = arith.constant 0 : index
    %c0_11 = arith.constant 0 : index
    %14 = vector.load %arg3[%c0_10, %c0_11] : memref<8x128xf32, #tpu.memory_space<vmem>>, vector<8x128xf32>
    %c0_12 = arith.constant 0 : index
    %c0_13 = arith.constant 0 : index
    %15 = vector.load %arg23[%c0_12, %c0_13] : memref<32x128xf32, #tpu.memory_space<vmem>>, vector<8x128xf32>
    tpu.vector_store %arg23[%c0_12, %c0_13], %11 {strides = array<i32>} : memref<32x128xf32, #tpu.memory_space<vmem>>, vector<8x128xf32>,
    %c8 = arith.constant 8 : index
    %c0_14 = arith.constant 0 : index
    %16 = vector.load %arg23[%c8, %c0_14] : memref<32x128xf32, #tpu.memory_space<vmem>>, vector<8x128xf32>
    tpu.vector_store %arg23[%c8, %c0_14], %12 {strides = array<i32>} : memref<32x128xf32, #tpu.memory_space<vmem>>, vector<8x128xf32>,
    %c16 = arith.constant 16 : index
    %c0_15 = arith.constant 0 : index
    %17 = vector.load %arg23[%c16, %c0_15] : memref<32x128xf32, #tpu.memory_space<vmem>>, vector<8x128xf32>
    tpu.vector_store %arg23[%c16, %c0_15], %13 {strides = array<i32>} : memref<32x128xf32, #tpu.memory_space<vmem>>, vector<8x128xf32>,
    %c24 = arith.constant 24 : index
    %c0_16 = arith.constant 0 : index
    %18 = vector.load %arg23[%c24, %c0_16] : memref<32x128xf32, #tpu.memory_space<vmem>>, vector<8x128xf32>
    tpu.vector_store %arg23[%c24, %c0_16], %14 {strides = array<i32>} : memref<32x128xf32, #tpu.memory_space<vmem>>, vector<8x128xf32>,
    %c0_17 = arith.constant 0 : index
    %c0_18 = arith.constant 0 : index
    %19 = vector.load %arg23[%c0_17, %c0_18] : memref<32x128xf32, #tpu.memory_space<vmem>>, vector<32x128xf32>
    %c0_19 = arith.constant 0 : index
    %c0_20 = arith.constant 0 : index
    %20 = vector.load %arg7[%c0_19, %c0_20] : memref<128x256xf32, #tpu.memory_space<vmem>>, vector<128x256xf32>
    %cst_21 = arith.constant dense<0.000000e+00> : vector<32x256xf32>
    %21 = tpu.matmul %19, %20, %cst_21 {dimension_numbers = #tpu.dot_dimension_numbers<[1], [0], [0], [1], [0, 0, 1, 1], [], []>} : vector<32x128xf32>, vector<128x256xf32>, vector<32x256xf32> -> vector<32x256xf32>
    %c0_22 = arith.constant 0 : index
    %c0_23 = arith.constant 0 : index
    %22 = vector.load %arg8[%c0_22, %c0_23] : memref<1x256xf32, #tpu.memory_space<vmem>>, vector<1x256xf32>
    %23 = vector.broadcast %22 : vector<1x256xf32> to vector<32x256xf32>
    %24 = arith.addf %21, %23 : vector<32x256xf32>
    %cst_24 = arith.constant 0.000000e+00 : f32
    %25 = vector.broadcast %cst_24 : f32 to vector<32x256xf32>
    %26 = arith.maximumf %24, %25 : vector<32x256xf32>
    %c0_25 = arith.constant 0 : index
    %c0_26 = arith.constant 0 : index
    %27 = vector.load %arg9[%c0_25, %c0_26] : memref<256x4xf32, #tpu.memory_space<vmem>>, vector<256x4xf32>
    %cst_27 = arith.constant dense<0.000000e+00> : vector<32x4xf32>
    %28 = tpu.matmul %26, %27, %cst_27 {dimension_numbers = #tpu.dot_dimension_numbers<[1], [0], [0], [1], [0, 0, 1, 1], [], []>} : vector<32x256xf32>, vector<256x4xf32>, vector<32x4xf32> -> vector<32x4xf32>
    %c0_28 = arith.constant 0 : index
    %c0_29 = arith.constant 0 : index
    %29 = vector.load %arg10[%c0_28, %c0_29] : memref<1x4xf32, #tpu.memory_space<vmem>>, vector<1x4xf32>
    %30 = vector.broadcast %29 : vector<1x4xf32> to vector<32x4xf32>
    %31 = arith.addf %28, %30 : vector<32x4xf32>
    %32 = vector.extract_strided_slice %31 {offsets = [0, 0], sizes = [8, 1], strides = [1, 1]} : vector<32x4xf32> to vector<8x1xf32>
    %33 = vector.extract_strided_slice %31 {offsets = [8, 1], sizes = [8, 1], strides = [1, 1]} : vector<32x4xf32> to vector<8x1xf32>
    %34 = vector.extract_strided_slice %31 {offsets = [16, 2], sizes = [8, 1], strides = [1, 1]} : vector<32x4xf32> to vector<8x1xf32>
    %35 = vector.extract_strided_slice %31 {offsets = [24, 3], sizes = [8, 1], strides = [1, 1]} : vector<32x4xf32> to vector<8x1xf32>
    %36 = arith.maximumf %32, %33 : vector<8x1xf32>
    %37 = arith.maximumf %34, %35 : vector<8x1xf32>
    %38 = arith.maximumf %36, %37 : vector<8x1xf32>
    %39 = arith.subf %32, %38 : vector<8x1xf32>
    %40 = math.exp %39 : vector<8x1xf32>
    %41 = arith.subf %33, %38 : vector<8x1xf32>
    %42 = math.exp %41 : vector<8x1xf32>
    %43 = arith.subf %34, %38 : vector<8x1xf32>
    %44 = math.exp %43 : vector<8x1xf32>
    %45 = arith.subf %35, %38 : vector<8x1xf32>
    %46 = math.exp %45 : vector<8x1xf32>
    %47 = arith.addf %40, %42 : vector<8x1xf32>
    %48 = arith.addf %47, %44 : vector<8x1xf32>
    %49 = arith.addf %48, %46 : vector<8x1xf32>
    %cst_30 = arith.constant 1.000000e+00 : f32
    %50 = vector.broadcast %cst_30 : f32 to vector<8x1xf32>
    %51 = arith.divf %50, %49 : vector<8x1xf32>
    %c0_31 = arith.constant 0 : index
    %c0_32 = arith.constant 0 : index
    %52 = vector.load %arg11[%c0_31, %c0_32] : memref<1x4xf32, #tpu.memory_space<vmem>>, vector<1x4xf32>
    %53 = arith.mulf %40, %51 : vector<8x1xf32>
    %54 = vector.extract_strided_slice %52 {offsets = [0, 0], sizes = [1, 1], strides = [1, 1]} : vector<1x4xf32> to vector<1x1xf32>
    %55 = vector.broadcast %54 : vector<1x1xf32> to vector<8x1xf32>
    %56 = arith.mulf %53, %55 : vector<8x1xf32>
    %57 = vector.broadcast %56 : vector<8x1xf32> to vector<8x128xf32>
    %58 = arith.mulf %57, %11 : vector<8x128xf32>
    %c0_33 = arith.constant 0 : index
    %c0_34 = arith.constant 0 : index
    %59 = vector.load %arg24[%c0_33, %c0_34] : memref<8x512xf32, #tpu.memory_space<vmem>>, vector<8x128xf32>
    tpu.vector_store %arg24[%c0_33, %c0_34], %58 {strides = array<i32>} : memref<8x512xf32, #tpu.memory_space<vmem>>, vector<8x128xf32>,
    %60 = arith.mulf %42, %51 : vector<8x1xf32>
    %61 = vector.extract_strided_slice %52 {offsets = [0, 1], sizes = [1, 1], strides = [1, 1]} : vector<1x4xf32> to vector<1x1xf32>
    %62 = vector.broadcast %61 : vector<1x1xf32> to vector<8x1xf32>
    %63 = arith.mulf %60, %62 : vector<8x1xf32>
    %64 = vector.broadcast %63 : vector<8x1xf32> to vector<8x128xf32>
    %65 = arith.mulf %64, %12 : vector<8x128xf32>
    %c0_35 = arith.constant 0 : index
    %c128 = arith.constant 128 : index
    %66 = vector.load %arg24[%c0_35, %c128] : memref<8x512xf32, #tpu.memory_space<vmem>>, vector<8x128xf32>
    tpu.vector_store %arg24[%c0_35, %c128], %65 {strides = array<i32>} : memref<8x512xf32, #tpu.memory_space<vmem>>, vector<8x128xf32>,
    %67 = arith.mulf %44, %51 : vector<8x1xf32>
    %68 = vector.extract_strided_slice %52 {offsets = [0, 2], sizes = [1, 1], strides = [1, 1]} : vector<1x4xf32> to vector<1x1xf32>
    %69 = vector.broadcast %68 : vector<1x1xf32> to vector<8x1xf32>
    %70 = arith.mulf %67, %69 : vector<8x1xf32>
    %71 = vector.broadcast %70 : vector<8x1xf32> to vector<8x128xf32>
    %72 = arith.mulf %71, %13 : vector<8x128xf32>
    %c0_36 = arith.constant 0 : index
    %c256 = arith.constant 256 : index
    %73 = vector.load %arg24[%c0_36, %c256] : memref<8x512xf32, #tpu.memory_space<vmem>>, vector<8x128xf32>
    tpu.vector_store %arg24[%c0_36, %c256], %72 {strides = array<i32>} : memref<8x512xf32, #tpu.memory_space<vmem>>, vector<8x128xf32>,
    %74 = arith.mulf %46, %51 : vector<8x1xf32>
    %75 = vector.extract_strided_slice %52 {offsets = [0, 3], sizes = [1, 1], strides = [1, 1]} : vector<1x4xf32> to vector<1x1xf32>
    %76 = vector.broadcast %75 : vector<1x1xf32> to vector<8x1xf32>
    %77 = arith.mulf %74, %76 : vector<8x1xf32>
    %78 = vector.broadcast %77 : vector<8x1xf32> to vector<8x128xf32>
    %79 = arith.mulf %78, %14 : vector<8x128xf32>
    %c0_37 = arith.constant 0 : index
    %c384 = arith.constant 384 : index
    %80 = vector.load %arg24[%c0_37, %c384] : memref<8x512xf32, #tpu.memory_space<vmem>>, vector<8x128xf32>
    tpu.vector_store %arg24[%c0_37, %c384], %79 {strides = array<i32>} : memref<8x512xf32, #tpu.memory_space<vmem>>, vector<8x128xf32>,
    %c0_38 = arith.constant 0 : index
    %c0_39 = arith.constant 0 : index
    %81 = vector.load %arg24[%c0_38, %c0_39] : memref<8x512xf32, #tpu.memory_space<vmem>>, vector<8x512xf32>
    %c0_i32_40 = arith.constant 0 : i32
    %82 = tpu.memref_slice %arg22[%c0_i32_40] : memref<2x!tpu.dma_semaphore, #tpu.memory_space<semaphore_mem>> -> memref<1x!tpu.dma_semaphore, #tpu.memory_space<semaphore_mem>>
    %83 = tpu.memref_squeeze %82 : memref<1x!tpu.dma_semaphore, #tpu.memory_space<semaphore_mem>> -> memref<!tpu.dma_semaphore, #tpu.memory_space<semaphore_mem>>
    tpu.wait_dma2 semaphore(%83 : memref<!tpu.dma_semaphore, #tpu.memory_space<semaphore_mem>>) src(%arg12 : memref<4608x384xbf16, #tpu.memory_space<any>>) dst(%arg20 : memref<4608x384xbf16, #tpu.memory_space<vmem>>)
    %cst_41 = arith.constant 0.000000e+00 : f32
    %84 = vector.broadcast %cst_41 : f32 to vector<8x512xf32>
    %85 = arith.subf %84, %81 : vector<8x512xf32>
    %86 = math.exp %85 : vector<8x512xf32>
    %cst_42 = arith.constant 1.000000e+00 : f32
    %87 = vector.broadcast %cst_42 : f32 to vector<8x512xf32>
    %88 = arith.addf %87, %86 : vector<8x512xf32>
    %cst_43 = arith.constant 1.000000e+00 : f32
    %89 = vector.broadcast %cst_43 : f32 to vector<8x512xf32>
    %90 = arith.divf %89, %88 : vector<8x512xf32>
    %91 = arith.mulf %81, %90 : vector<8x512xf32>
    %92 = arith.truncf %91 : vector<8x512xf32> to vector<8x512xbf16>
    %c0_44 = arith.constant 0 : index
    %c0_45 = arith.constant 0 : index
    %93 = vector.load %arg25[%c0_44, %c0_45] : memref<8x4608xbf16, #tpu.memory_space<vmem>>, vector<8x512xbf16>
    tpu.vector_store %arg25[%c0_44, %c0_45], %92 {strides = array<i32>} : memref<8x4608xbf16, #tpu.memory_space<vmem>>, vector<8x512xbf16>,
    %cst_46 = arith.constant -2.200000e+00 : f32
    %94 = vector.broadcast %cst_46 : f32 to vector<8x512xf32>
    %95 = arith.subf %81, %94 : vector<8x512xf32>
    %cst_47 = arith.constant -1.800000e+00 : f32
    %96 = vector.broadcast %cst_47 : f32 to vector<8x512xf32>
    %97 = arith.subf %81, %96 : vector<8x512xf32>
    %cst_48 = arith.constant -1.400000e+00 : f32
    %98 = vector.broadcast %cst_48 : f32 to vector<8x512xf32>
    %99 = arith.subf %81, %98 : vector<8x512xf32>
    %cst_49 = arith.constant -1.000000e+00 : f32
    %100 = vector.broadcast %cst_49 : f32 to vector<8x512xf32>
    %101 = arith.subf %81, %100 : vector<8x512xf32>
    %cst_50 = arith.constant -6.000000e-01 : f32
    %102 = vector.broadcast %cst_50 : f32 to vector<8x512xf32>
    %103 = arith.subf %81, %102 : vector<8x512xf32>
    %cst_51 = arith.constant -2.000000e-01 : f32
    %104 = vector.broadcast %cst_51 : f32 to vector<8x512xf32>
    %105 = arith.subf %81, %104 : vector<8x512xf32>
    %cst_52 = arith.constant 2.000000e-01 : f32
    %106 = vector.broadcast %cst_52 : f32 to vector<8x512xf32>
    %107 = arith.subf %81, %106 : vector<8x512xf32>
    %cst_53 = arith.constant 6.000000e-01 : f32
    %108 = vector.broadcast %cst_53 : f32 to vector<8x512xf32>
    %109 = arith.subf %81, %108 : vector<8x512xf32>
    %cst_54 = arith.constant 1.000000e+00 : f32
    %110 = vector.broadcast %cst_54 : f32 to vector<8x512xf32>
    %111 = arith.subf %81, %110 : vector<8x512xf32>
    %cst_55 = arith.constant 1.400000e+00 : f32
    %112 = vector.broadcast %cst_55 : f32 to vector<8x512xf32>
    %113 = arith.subf %81, %112 : vector<8x512xf32>
    %cst_56 = arith.constant 1.800000e+00 : f32
    %114 = vector.broadcast %cst_56 : f32 to vector<8x512xf32>
    %115 = arith.subf %81, %114 : vector<8x512xf32>
    %cst_57 = arith.constant 2.200000e+00 : f32
    %116 = vector.broadcast %cst_57 : f32 to vector<8x512xf32>
    %117 = arith.subf %81, %116 : vector<8x512xf32>
    %cst_58 = arith.constant 0.000000e+00 : f32
    %118 = vector.broadcast %cst_58 : f32 to vector<8x512xf32>
    %119 = arith.cmpf oge, %95, %118 : vector<8x512xf32>
    %cst_59 = arith.constant 0.000000e+00 : f32
    %120 = vector.broadcast %cst_59 : f32 to vector<8x512xf32>
    %121 = arith.cmpf olt, %97, %120 : vector<8x512xf32>
    %122 = arith.andi %119, %121 : vector<8x512xi1>
    %cst_60 = arith.constant 1.000000e+00 : f32
    %cst_61 = arith.constant 0.000000e+00 : f32
    %123 = vector.broadcast %cst_60 : f32 to vector<8x512xf32>
    %124 = vector.broadcast %cst_61 : f32 to vector<8x512xf32>
    %125 = arith.select %122, %123, %124 : vector<8x512xi1>, vector<8x512xf32>
    %cst_62 = arith.constant 0.000000e+00 : f32
    %126 = vector.broadcast %cst_62 : f32 to vector<8x512xf32>
    %127 = arith.cmpf oge, %97, %126 : vector<8x512xf32>
    %cst_63 = arith.constant 0.000000e+00 : f32
    %128 = vector.broadcast %cst_63 : f32 to vector<8x512xf32>
    %129 = arith.cmpf olt, %99, %128 : vector<8x512xf32>
    %130 = arith.andi %127, %129 : vector<8x512xi1>
    %cst_64 = arith.constant 1.000000e+00 : f32
    %cst_65 = arith.constant 0.000000e+00 : f32
    %131 = vector.broadcast %cst_64 : f32 to vector<8x512xf32>
    %132 = vector.broadcast %cst_65 : f32 to vector<8x512xf32>
    %133 = arith.select %130, %131, %132 : vector<8x512xi1>, vector<8x512xf32>
    %cst_66 = arith.constant 0.000000e+00 : f32
    %134 = vector.broadcast %cst_66 : f32 to vector<8x512xf32>
    %135 = arith.cmpf oge, %99, %134 : vector<8x512xf32>
    %cst_67 = arith.constant 0.000000e+00 : f32
    %136 = vector.broadcast %cst_67 : f32 to vector<8x512xf32>
    %137 = arith.cmpf olt, %101, %136 : vector<8x512xf32>
    %138 = arith.andi %135, %137 : vector<8x512xi1>
    %cst_68 = arith.constant 1.000000e+00 : f32
    %cst_69 = arith.constant 0.000000e+00 : f32
    %139 = vector.broadcast %cst_68 : f32 to vector<8x512xf32>
    %140 = vector.broadcast %cst_69 : f32 to vector<8x512xf32>
    %141 = arith.select %138, %139, %140 : vector<8x512xi1>, vector<8x512xf32>
    %cst_70 = arith.constant 0.000000e+00 : f32
    %142 = vector.broadcast %cst_70 : f32 to vector<8x512xf32>
    %143 = arith.cmpf oge, %101, %142 : vector<8x512xf32>
    %cst_71 = arith.constant 0.000000e+00 : f32
    %144 = vector.broadcast %cst_71 : f32 to vector<8x512xf32>
    %145 = arith.cmpf olt, %103, %144 : vector<8x512xf32>
    %146 = arith.andi %143, %145 : vector<8x512xi1>
    %cst_72 = arith.constant 1.000000e+00 : f32
    %cst_73 = arith.constant 0.000000e+00 : f32
    %147 = vector.broadcast %cst_72 : f32 to vector<8x512xf32>
    %148 = vector.broadcast %cst_73 : f32 to vector<8x512xf32>
    %149 = arith.select %146, %147, %148 : vector<8x512xi1>, vector<8x512xf32>
    %cst_74 = arith.constant 0.000000e+00 : f32
    %150 = vector.broadcast %cst_74 : f32 to vector<8x512xf32>
    %151 = arith.cmpf oge, %103, %150 : vector<8x512xf32>
    %cst_75 = arith.constant 0.000000e+00 : f32
    %152 = vector.broadcast %cst_75 : f32 to vector<8x512xf32>
    %153 = arith.cmpf olt, %105, %152 : vector<8x512xf32>
    %154 = arith.andi %151, %153 : vector<8x512xi1>
    %cst_76 = arith.constant 1.000000e+00 : f32
    %cst_77 = arith.constant 0.000000e+00 : f32
    %155 = vector.broadcast %cst_76 : f32 to vector<8x512xf32>
    %156 = vector.broadcast %cst_77 : f32 to vector<8x512xf32>
    %157 = arith.select %154, %155, %156 : vector<8x512xi1>, vector<8x512xf32>
    %cst_78 = arith.constant 0.000000e+00 : f32
    %158 = vector.broadcast %cst_78 : f32 to vector<8x512xf32>
    %159 = arith.cmpf oge, %105, %158 : vector<8x512xf32>
    %cst_79 = arith.constant 0.000000e+00 : f32
    %160 = vector.broadcast %cst_79 : f32 to vector<8x512xf32>
    %161 = arith.cmpf olt, %107, %160 : vector<8x512xf32>
    %162 = arith.andi %159, %161 : vector<8x512xi1>
    %cst_80 = arith.constant 1.000000e+00 : f32
    %cst_81 = arith.constant 0.000000e+00 : f32
    %163 = vector.broadcast %cst_80 : f32 to vector<8x512xf32>
    %164 = vector.broadcast %cst_81 : f32 to vector<8x512xf32>
    %165 = arith.select %162, %163, %164 : vector<8x512xi1>, vector<8x512xf32>
    %cst_82 = arith.constant 0.000000e+00 : f32
    %166 = vector.broadcast %cst_82 : f32 to vector<8x512xf32>
    %167 = arith.cmpf oge, %107, %166 : vector<8x512xf32>
    %cst_83 = arith.constant 0.000000e+00 : f32
    %168 = vector.broadcast %cst_83 : f32 to vector<8x512xf32>
    %169 = arith.cmpf olt, %109, %168 : vector<8x512xf32>
    %170 = arith.andi %167, %169 : vector<8x512xi1>
    %cst_84 = arith.constant 1.000000e+00 : f32
    %cst_85 = arith.constant 0.000000e+00 : f32
    %171 = vector.broadcast %cst_84 : f32 to vector<8x512xf32>
    %172 = vector.broadcast %cst_85 : f32 to vector<8x512xf32>
    %173 = arith.select %170, %171, %172 : vector<8x512xi1>, vector<8x512xf32>
    %cst_86 = arith.constant 0.000000e+00 : f32
    %174 = vector.broadcast %cst_86 : f32 to vector<8x512xf32>
    %175 = arith.cmpf oge, %109, %174 : vector<8x512xf32>
    %cst_87 = arith.constant 0.000000e+00 : f32
    %176 = vector.broadcast %cst_87 : f32 to vector<8x512xf32>
    %177 = arith.cmpf olt, %111, %176 : vector<8x512xf32>
    %178 = arith.andi %175, %177 : vector<8x512xi1>
    %cst_88 = arith.constant 1.000000e+00 : f32
    %cst_89 = arith.constant 0.000000e+00 : f32
    %179 = vector.broadcast %cst_88 : f32 to vector<8x512xf32>
    %180 = vector.broadcast %cst_89 : f32 to vector<8x512xf32>
    %181 = arith.select %178, %179, %180 : vector<8x512xi1>, vector<8x512xf32>
    %cst_90 = arith.constant 0.000000e+00 : f32
    %182 = vector.broadcast %cst_90 : f32 to vector<8x512xf32>
    %183 = arith.cmpf oge, %111, %182 : vector<8x512xf32>
    %cst_91 = arith.constant 0.000000e+00 : f32
    %184 = vector.broadcast %cst_91 : f32 to vector<8x512xf32>
    %185 = arith.cmpf olt, %113, %184 : vector<8x512xf32>
    %186 = arith.andi %183, %185 : vector<8x512xi1>
    %cst_92 = arith.constant 1.000000e+00 : f32
    %cst_93 = arith.constant 0.000000e+00 : f32
    %187 = vector.broadcast %cst_92 : f32 to vector<8x512xf32>
    %188 = vector.broadcast %cst_93 : f32 to vector<8x512xf32>
    %189 = arith.select %186, %187, %188 : vector<8x512xi1>, vector<8x512xf32>
    %cst_94 = arith.constant 0.000000e+00 : f32
    %190 = vector.broadcast %cst_94 : f32 to vector<8x512xf32>
    %191 = arith.cmpf oge, %113, %190 : vector<8x512xf32>
    %cst_95 = arith.constant 0.000000e+00 : f32
    %192 = vector.broadcast %cst_95 : f32 to vector<8x512xf32>
    %193 = arith.cmpf olt, %115, %192 : vector<8x512xf32>
    %194 = arith.andi %191, %193 : vector<8x512xi1>
    %cst_96 = arith.constant 1.000000e+00 : f32
    %cst_97 = arith.constant 0.000000e+00 : f32
    %195 = vector.broadcast %cst_96 : f32 to vector<8x512xf32>
    %196 = vector.broadcast %cst_97 : f32 to vector<8x512xf32>
    %197 = arith.select %194, %195, %196 : vector<8x512xi1>, vector<8x512xf32>
    %cst_98 = arith.constant 0.000000e+00 : f32
    %198 = vector.broadcast %cst_98 : f32 to vector<8x512xf32>
    %199 = arith.cmpf oge, %115, %198 : vector<8x512xf32>
    %cst_99 = arith.constant 0.000000e+00 : f32
    %200 = vector.broadcast %cst_99 : f32 to vector<8x512xf32>
    %201 = arith.cmpf olt, %117, %200 : vector<8x512xf32>
    %202 = arith.andi %199, %201 : vector<8x512xi1>
    %cst_100 = arith.constant 1.000000e+00 : f32
    %cst_101 = arith.constant 0.000000e+00 : f32
    %203 = vector.broadcast %cst_100 : f32 to vector<8x512xf32>
    %204 = vector.broadcast %cst_101 : f32 to vector<8x512xf32>
    %205 = arith.select %202, %203, %204 : vector<8x512xi1>, vector<8x512xf32>
    %206 = arith.mulf %95, %125 : vector<8x512xf32>
    %207 = arith.mulf %97, %133 : vector<8x512xf32>
    %208 = arith.mulf %99, %141 : vector<8x512xf32>
    %209 = arith.mulf %101, %149 : vector<8x512xf32>
    %210 = arith.mulf %103, %157 : vector<8x512xf32>
    %211 = arith.mulf %105, %165 : vector<8x512xf32>
    %212 = arith.mulf %107, %173 : vector<8x512xf32>
    %213 = arith.mulf %109, %181 : vector<8x512xf32>
    %214 = arith.mulf %111, %189 : vector<8x512xf32>
    %215 = arith.mulf %113, %197 : vector<8x512xf32>
    %216 = arith.mulf %115, %205 : vector<8x512xf32>
    %cst_102 = arith.constant 4.000000e-01 : f32
    %217 = vector.broadcast %cst_102 : f32 to vector<8x512xf32>
    %218 = arith.mulf %217, %133 : vector<8x512xf32>
    %219 = arith.addf %206, %218 : vector<8x512xf32>
    %220 = arith.subf %219, %207 : vector<8x512xf32>
    %cst_103 = arith.constant 2.500000e+00 : f32
    %221 = vector.broadcast %cst_103 : f32 to vector<8x512xf32>
    %222 = arith.mulf %220, %221 : vector<8x512xf32>
    %cst_104 = arith.constant 4.000000e-01 : f32
    %223 = vector.broadcast %cst_104 : f32 to vector<8x512xf32>
    %224 = arith.mulf %223, %141 : vector<8x512xf32>
    %225 = arith.addf %207, %224 : vector<8x512xf32>
    %226 = arith.subf %225, %208 : vector<8x512xf32>
    %cst_105 = arith.constant 2.500000e+00 : f32
    %227 = vector.broadcast %cst_105 : f32 to vector<8x512xf32>
    %228 = arith.mulf %226, %227 : vector<8x512xf32>
    %cst_106 = arith.constant 4.000000e-01 : f32
    %229 = vector.broadcast %cst_106 : f32 to vector<8x512xf32>
    %230 = arith.mulf %229, %149 : vector<8x512xf32>
    %231 = arith.addf %208, %230 : vector<8x512xf32>
    %232 = arith.subf %231, %209 : vector<8x512xf32>
    %cst_107 = arith.constant 2.500000e+00 : f32
    %233 = vector.broadcast %cst_107 : f32 to vector<8x512xf32>
    %234 = arith.mulf %232, %233 : vector<8x512xf32>
    %cst_108 = arith.constant 4.000000e-01 : f32
    %235 = vector.broadcast %cst_108 : f32 to vector<8x512xf32>
    %236 = arith.mulf %235, %157 : vector<8x512xf32>
    %237 = arith.addf %209, %236 : vector<8x512xf32>
    %238 = arith.subf %237, %210 : vector<8x512xf32>
    %cst_109 = arith.constant 2.500000e+00 : f32
    %239 = vector.broadcast %cst_109 : f32 to vector<8x512xf32>
    %240 = arith.mulf %238, %239 : vector<8x512xf32>
    %cst_110 = arith.constant 4.000000e-01 : f32
    %241 = vector.broadcast %cst_110 : f32 to vector<8x512xf32>
    %242 = arith.mulf %241, %165 : vector<8x512xf32>
    %243 = arith.addf %210, %242 : vector<8x512xf32>
    %244 = arith.subf %243, %211 : vector<8x512xf32>
    %cst_111 = arith.constant 2.500000e+00 : f32
    %245 = vector.broadcast %cst_111 : f32 to vector<8x512xf32>
    %246 = arith.mulf %244, %245 : vector<8x512xf32>
    %cst_112 = arith.constant 4.000000e-01 : f32
    %247 = vector.broadcast %cst_112 : f32 to vector<8x512xf32>
    %248 = arith.mulf %247, %173 : vector<8x512xf32>
    %249 = arith.addf %211, %248 : vector<8x512xf32>
    %250 = arith.subf %249, %212 : vector<8x512xf32>
    %cst_113 = arith.constant 2.500000e+00 : f32
    %251 = vector.broadcast %cst_113 : f32 to vector<8x512xf32>
    %252 = arith.mulf %250, %251 : vector<8x512xf32>
    %cst_114 = arith.constant 4.000000e-01 : f32
    %253 = vector.broadcast %cst_114 : f32 to vector<8x512xf32>
    %254 = arith.mulf %253, %181 : vector<8x512xf32>
    %255 = arith.addf %212, %254 : vector<8x512xf32>
    %256 = arith.subf %255, %213 : vector<8x512xf32>
    %cst_115 = arith.constant 2.500000e+00 : f32
    %257 = vector.broadcast %cst_115 : f32 to vector<8x512xf32>
    %258 = arith.mulf %256, %257 : vector<8x512xf32>
    %cst_116 = arith.constant 4.000000e-01 : f32
    %259 = vector.broadcast %cst_116 : f32 to vector<8x512xf32>
    %260 = arith.mulf %259, %189 : vector<8x512xf32>
    %261 = arith.addf %213, %260 : vector<8x512xf32>
    %262 = arith.subf %261, %214 : vector<8x512xf32>
    %cst_117 = arith.constant 2.500000e+00 : f32
    %263 = vector.broadcast %cst_117 : f32 to vector<8x512xf32>
    %264 = arith.mulf %262, %263 : vector<8x512xf32>
    %cst_118 = arith.constant 4.000000e-01 : f32
    %265 = vector.broadcast %cst_118 : f32 to vector<8x512xf32>
    %266 = arith.mulf %265, %197 : vector<8x512xf32>
    %267 = arith.addf %214, %266 : vector<8x512xf32>
    %268 = arith.subf %267, %215 : vector<8x512xf32>
    %cst_119 = arith.constant 2.500000e+00 : f32
    %269 = vector.broadcast %cst_119 : f32 to vector<8x512xf32>
    %270 = arith.mulf %268, %269 : vector<8x512xf32>
    %cst_120 = arith.constant 4.000000e-01 : f32
    %271 = vector.broadcast %cst_120 : f32 to vector<8x512xf32>
    %272 = arith.mulf %271, %205 : vector<8x512xf32>
    %273 = arith.addf %215, %272 : vector<8x512xf32>
    %274 = arith.subf %273, %216 : vector<8x512xf32>
    %cst_121 = arith.constant 2.500000e+00 : f32
    %275 = vector.broadcast %cst_121 : f32 to vector<8x512xf32>
    %276 = arith.mulf %274, %275 : vector<8x512xf32>
    %277 = arith.mulf %95, %222 : vector<8x512xf32>
    %278 = arith.mulf %97, %228 : vector<8x512xf32>
    %279 = arith.mulf %99, %234 : vector<8x512xf32>
    %280 = arith.mulf %101, %240 : vector<8x512xf32>
    %281 = arith.mulf %103, %246 : vector<8x512xf32>
    %282 = arith.mulf %105, %252 : vector<8x512xf32>
    %283 = arith.mulf %107, %258 : vector<8x512xf32>
    %284 = arith.mulf %109, %264 : vector<8x512xf32>
    %285 = arith.mulf %111, %270 : vector<8x512xf32>
    %286 = arith.mulf %113, %276 : vector<8x512xf32>
    %cst_122 = arith.constant 8.000000e-01 : f32
    %287 = vector.broadcast %cst_122 : f32 to vector<8x512xf32>
    %288 = arith.mulf %287, %228 : vector<8x512xf32>
    %289 = arith.addf %277, %288 : vector<8x512xf32>
    %290 = arith.subf %289, %278 : vector<8x512xf32>
    %cst_123 = arith.constant 1.250000e+00 : f32
    %291 = vector.broadcast %cst_123 : f32 to vector<8x512xf32>
    %292 = arith.mulf %290, %291 : vector<8x512xf32>
    %cst_124 = arith.constant 8.000000e-01 : f32
    %293 = vector.broadcast %cst_124 : f32 to vector<8x512xf32>
    %294 = arith.mulf %293, %234 : vector<8x512xf32>
    %295 = arith.addf %278, %294 : vector<8x512xf32>
    %296 = arith.subf %295, %279 : vector<8x512xf32>
    %cst_125 = arith.constant 1.250000e+00 : f32
    %297 = vector.broadcast %cst_125 : f32 to vector<8x512xf32>
    %298 = arith.mulf %296, %297 : vector<8x512xf32>
    %cst_126 = arith.constant 8.000000e-01 : f32
    %299 = vector.broadcast %cst_126 : f32 to vector<8x512xf32>
    %300 = arith.mulf %299, %240 : vector<8x512xf32>
    %301 = arith.addf %279, %300 : vector<8x512xf32>
    %302 = arith.subf %301, %280 : vector<8x512xf32>
    %cst_127 = arith.constant 1.250000e+00 : f32
    %303 = vector.broadcast %cst_127 : f32 to vector<8x512xf32>
    %304 = arith.mulf %302, %303 : vector<8x512xf32>
    %cst_128 = arith.constant 8.000000e-01 : f32
    %305 = vector.broadcast %cst_128 : f32 to vector<8x512xf32>
    %306 = arith.mulf %305, %246 : vector<8x512xf32>
    %307 = arith.addf %280, %306 : vector<8x512xf32>
    %308 = arith.subf %307, %281 : vector<8x512xf32>
    %cst_129 = arith.constant 1.250000e+00 : f32
    %309 = vector.broadcast %cst_129 : f32 to vector<8x512xf32>
    %310 = arith.mulf %308, %309 : vector<8x512xf32>
    %cst_130 = arith.constant 8.000000e-01 : f32
    %311 = vector.broadcast %cst_130 : f32 to vector<8x512xf32>
    %312 = arith.mulf %311, %252 : vector<8x512xf32>
    %313 = arith.addf %281, %312 : vector<8x512xf32>
    %314 = arith.subf %313, %282 : vector<8x512xf32>
    %cst_131 = arith.constant 1.250000e+00 : f32
    %315 = vector.broadcast %cst_131 : f32 to vector<8x512xf32>
    %316 = arith.mulf %314, %315 : vector<8x512xf32>
    %cst_132 = arith.constant 8.000000e-01 : f32
    %317 = vector.broadcast %cst_132 : f32 to vector<8x512xf32>
    %318 = arith.mulf %317, %258 : vector<8x512xf32>
    %319 = arith.addf %282, %318 : vector<8x512xf32>
    %320 = arith.subf %319, %283 : vector<8x512xf32>
    %cst_133 = arith.constant 1.250000e+00 : f32
    %321 = vector.broadcast %cst_133 : f32 to vector<8x512xf32>
    %322 = arith.mulf %320, %321 : vector<8x512xf32>
    %cst_134 = arith.constant 8.000000e-01 : f32
    %323 = vector.broadcast %cst_134 : f32 to vector<8x512xf32>
    %324 = arith.mulf %323, %264 : vector<8x512xf32>
    %325 = arith.addf %283, %324 : vector<8x512xf32>
    %326 = arith.subf %325, %284 : vector<8x512xf32>
    %cst_135 = arith.constant 1.250000e+00 : f32
    %327 = vector.broadcast %cst_135 : f32 to vector<8x512xf32>
    %328 = arith.mulf %326, %327 : vector<8x512xf32>
    %cst_136 = arith.constant 8.000000e-01 : f32
    %329 = vector.broadcast %cst_136 : f32 to vector<8x512xf32>
    %330 = arith.mulf %329, %270 : vector<8x512xf32>
    %331 = arith.addf %284, %330 : vector<8x512xf32>
    %332 = arith.subf %331, %285 : vector<8x512xf32>
    %cst_137 = arith.constant 1.250000e+00 : f32
    %333 = vector.broadcast %cst_137 : f32 to vector<8x512xf32>
    %334 = arith.mulf %332, %333 : vector<8x512xf32>
    %cst_138 = arith.constant 8.000000e-01 : f32
    %335 = vector.broadcast %cst_138 : f32 to vector<8x512xf32>
    %336 = arith.mulf %335, %276 : vector<8x512xf32>
    %337 = arith.addf %285, %336 : vector<8x512xf32>
    %338 = arith.subf %337, %286 : vector<8x512xf32>
    %cst_139 = arith.constant 1.250000e+00 : f32
    %339 = vector.broadcast %cst_139 : f32 to vector<8x512xf32>
    %340 = arith.mulf %338, %339 : vector<8x512xf32>
    %341 = arith.mulf %95, %292 : vector<8x512xf32>
    %342 = arith.mulf %97, %298 : vector<8x512xf32>
    %343 = arith.mulf %99, %304 : vector<8x512xf32>
    %344 = arith.mulf %101, %310 : vector<8x512xf32>
    %345 = arith.mulf %103, %316 : vector<8x512xf32>
    %346 = arith.mulf %105, %322 : vector<8x512xf32>
    %347 = arith.mulf %107, %328 : vector<8x512xf32>
    %348 = arith.mulf %109, %334 : vector<8x512xf32>
    %349 = arith.mulf %111, %340 : vector<8x512xf32>
    %cst_140 = arith.constant 1.200000e+00 : f32
    %350 = vector.broadcast %cst_140 : f32 to vector<8x512xf32>
    %351 = arith.mulf %350, %298 : vector<8x512xf32>
    %352 = arith.addf %341, %351 : vector<8x512xf32>
    %353 = arith.subf %352, %342 : vector<8x512xf32>
    %cst_141 = arith.constant 0.833333313 : f32
    %354 = vector.broadcast %cst_141 : f32 to vector<8x512xf32>
    %355 = arith.mulf %353, %354 : vector<8x512xf32>
    %cst_142 = arith.constant 1.200000e+00 : f32
    %356 = vector.broadcast %cst_142 : f32 to vector<8x512xf32>
    %357 = arith.mulf %356, %304 : vector<8x512xf32>
    %358 = arith.addf %342, %357 : vector<8x512xf32>
    %359 = arith.subf %358, %343 : vector<8x512xf32>
    %cst_143 = arith.constant 0.833333313 : f32
    %360 = vector.broadcast %cst_143 : f32 to vector<8x512xf32>
    %361 = arith.mulf %359, %360 : vector<8x512xf32>
    %cst_144 = arith.constant 1.200000e+00 : f32
    %362 = vector.broadcast %cst_144 : f32 to vector<8x512xf32>
    %363 = arith.mulf %362, %310 : vector<8x512xf32>
    %364 = arith.addf %343, %363 : vector<8x512xf32>
    %365 = arith.subf %364, %344 : vector<8x512xf32>
    %cst_145 = arith.constant 0.833333313 : f32
    %366 = vector.broadcast %cst_145 : f32 to vector<8x512xf32>
    %367 = arith.mulf %365, %366 : vector<8x512xf32>
    %cst_146 = arith.constant 1.200000e+00 : f32
    %368 = vector.broadcast %cst_146 : f32 to vector<8x512xf32>
    %369 = arith.mulf %368, %316 : vector<8x512xf32>
    %370 = arith.addf %344, %369 : vector<8x512xf32>
    %371 = arith.subf %370, %345 : vector<8x512xf32>
    %cst_147 = arith.constant 0.833333313 : f32
    %372 = vector.broadcast %cst_147 : f32 to vector<8x512xf32>
    %373 = arith.mulf %371, %372 : vector<8x512xf32>
    %cst_148 = arith.constant 1.200000e+00 : f32
    %374 = vector.broadcast %cst_148 : f32 to vector<8x512xf32>
    %375 = arith.mulf %374, %322 : vector<8x512xf32>
    %376 = arith.addf %345, %375 : vector<8x512xf32>
    %377 = arith.subf %376, %346 : vector<8x512xf32>
    %cst_149 = arith.constant 0.833333313 : f32
    %378 = vector.broadcast %cst_149 : f32 to vector<8x512xf32>
    %379 = arith.mulf %377, %378 : vector<8x512xf32>
    %cst_150 = arith.constant 1.200000e+00 : f32
    %380 = vector.broadcast %cst_150 : f32 to vector<8x512xf32>
    %381 = arith.mulf %380, %328 : vector<8x512xf32>
    %382 = arith.addf %346, %381 : vector<8x512xf32>
    %383 = arith.subf %382, %347 : vector<8x512xf32>
    %cst_151 = arith.constant 0.833333313 : f32
    %384 = vector.broadcast %cst_151 : f32 to vector<8x512xf32>
    %385 = arith.mulf %383, %384 : vector<8x512xf32>
    %cst_152 = arith.constant 1.200000e+00 : f32
    %386 = vector.broadcast %cst_152 : f32 to vector<8x512xf32>
    %387 = arith.mulf %386, %334 : vector<8x512xf32>
    %388 = arith.addf %347, %387 : vector<8x512xf32>
    %389 = arith.subf %388, %348 : vector<8x512xf32>
    %cst_153 = arith.constant 0.833333313 : f32
    %390 = vector.broadcast %cst_153 : f32 to vector<8x512xf32>
    %391 = arith.mulf %389, %390 : vector<8x512xf32>
    %cst_154 = arith.constant 1.200000e+00 : f32
    %392 = vector.broadcast %cst_154 : f32 to vector<8x512xf32>
    %393 = arith.mulf %392, %340 : vector<8x512xf32>
    %394 = arith.addf %348, %393 : vector<8x512xf32>
    %395 = arith.subf %394, %349 : vector<8x512xf32>
    %cst_155 = arith.constant 0.833333313 : f32
    %396 = vector.broadcast %cst_155 : f32 to vector<8x512xf32>
    %397 = arith.mulf %395, %396 : vector<8x512xf32>
    %398 = arith.truncf %355 : vector<8x512xf32> to vector<8x512xbf16>
    %c0_156 = arith.constant 0 : index
    %c512 = arith.constant 512 : index
    %399 = vector.load %arg25[%c0_156, %c512] : memref<8x4608xbf16, #tpu.memory_space<vmem>>, vector<8x512xbf16>
    tpu.vector_store %arg25[%c0_156, %c512], %398 {strides = array<i32>} : memref<8x4608xbf16, #tpu.memory_space<vmem>>, vector<8x512xbf16>,
    %400 = arith.truncf %361 : vector<8x512xf32> to vector<8x512xbf16>
    %c0_157 = arith.constant 0 : index
    %c1024 = arith.constant 1024 : index
    %401 = vector.load %arg25[%c0_157, %c1024] : memref<8x4608xbf16, #tpu.memory_space<vmem>>, vector<8x512xbf16>
    tpu.vector_store %arg25[%c0_157, %c1024], %400 {strides = array<i32>} : memref<8x4608xbf16, #tpu.memory_space<vmem>>, vector<8x512xbf16>,
    %402 = arith.truncf %367 : vector<8x512xf32> to vector<8x512xbf16>
    %c0_158 = arith.constant 0 : index
    %c1536 = arith.constant 1536 : index
    %403 = vector.load %arg25[%c0_158, %c1536] : memref<8x4608xbf16, #tpu.memory_space<vmem>>, vector<8x512xbf16>
    tpu.vector_store %arg25[%c0_158, %c1536], %402 {strides = array<i32>} : memref<8x4608xbf16, #tpu.memory_space<vmem>>, vector<8x512xbf16>,
    %404 = arith.truncf %373 : vector<8x512xf32> to vector<8x512xbf16>
    %c0_159 = arith.constant 0 : index
    %c2048 = arith.constant 2048 : index
    %405 = vector.load %arg25[%c0_159, %c2048] : memref<8x4608xbf16, #tpu.memory_space<vmem>>, vector<8x512xbf16>
    tpu.vector_store %arg25[%c0_159, %c2048], %404 {strides = array<i32>} : memref<8x4608xbf16, #tpu.memory_space<vmem>>, vector<8x512xbf16>,
    %406 = arith.truncf %379 : vector<8x512xf32> to vector<8x512xbf16>
    %c0_160 = arith.constant 0 : index
    %c2560 = arith.constant 2560 : index
    %407 = vector.load %arg25[%c0_160, %c2560] : memref<8x4608xbf16, #tpu.memory_space<vmem>>, vector<8x512xbf16>
    tpu.vector_store %arg25[%c0_160, %c2560], %406 {strides = array<i32>} : memref<8x4608xbf16, #tpu.memory_space<vmem>>, vector<8x512xbf16>,
    %408 = arith.truncf %385 : vector<8x512xf32> to vector<8x512xbf16>
    %c0_161 = arith.constant 0 : index
    %c3072 = arith.constant 3072 : index
    %409 = vector.load %arg25[%c0_161, %c3072] : memref<8x4608xbf16, #tpu.memory_space<vmem>>, vector<8x512xbf16>
    tpu.vector_store %arg25[%c0_161, %c3072], %408 {strides = array<i32>} : memref<8x4608xbf16, #tpu.memory_space<vmem>>, vector<8x512xbf16>,
    %410 = arith.truncf %391 : vector<8x512xf32> to vector<8x512xbf16>
    %c0_162 = arith.constant 0 : index
    %c3584 = arith.constant 3584 : index
    %411 = vector.load %arg25[%c0_162, %c3584] : memref<8x4608xbf16, #tpu.memory_space<vmem>>, vector<8x512xbf16>
    tpu.vector_store %arg25[%c0_162, %c3584], %410 {strides = array<i32>} : memref<8x4608xbf16, #tpu.memory_space<vmem>>, vector<8x512xbf16>,
    %412 = arith.truncf %397 : vector<8x512xf32> to vector<8x512xbf16>
    %c0_163 = arith.constant 0 : index
    %c4096 = arith.constant 4096 : index
    %413 = vector.load %arg25[%c0_163, %c4096] : memref<8x4608xbf16, #tpu.memory_space<vmem>>, vector<8x512xbf16>
    tpu.vector_store %arg25[%c0_163, %c4096], %412 {strides = array<i32>} : memref<8x4608xbf16, #tpu.memory_space<vmem>>, vector<8x512xbf16>,
    %c0_164 = arith.constant 0 : index
    %c0_165 = arith.constant 0 : index
    %414 = vector.load %arg25[%c0_164, %c0_165] : memref<8x4608xbf16, #tpu.memory_space<vmem>>, vector<8x4608xbf16>
    %c0_166 = arith.constant 0 : index
    %c0_167 = arith.constant 0 : index
    %415 = vector.load %arg20[%c0_166, %c0_167] : memref<4608x384xbf16, #tpu.memory_space<vmem>>, vector<4608x384xbf16>
    %cst_168 = arith.constant dense<0.000000e+00> : vector<8x384xf32>
    %416 = tpu.matmul %414, %415, %cst_168 {dimension_numbers = #tpu.dot_dimension_numbers<[1], [0], [0], [1], [0, 0, 1, 1], [], []>} : vector<8x4608xbf16>, vector<4608x384xbf16>, vector<8x384xf32> -> vector<8x384xf32>
    %cst_169 = arith.constant 0.000000e+00 : f32
    %417 = vector.broadcast %cst_169 : f32 to vector<8x384xf32>
    %418 = arith.maximumf %416, %417 : vector<8x384xf32>
    %cst_170 = arith.constant dense<0.000000e+00> : vector<384xf32>
    %419 = vector.multi_reduction <add>, %418, %cst_170 [0] : vector<8x384xf32> to vector<384xf32>
    %420 = vector.shape_cast %419 : vector<384xf32> to vector<1x384xf32>
    %cst_171 = arith.constant 8.000000e+00 : f32
    %421 = vector.broadcast %cst_171 : f32 to vector<1x384xf32>
    %422 = arith.divf %420, %421 : vector<1x384xf32>
    %423 = vector.broadcast %422 : vector<1x384xf32> to vector<8x384xf32>
    %424 = arith.subf %418, %423 : vector<8x384xf32>
    %425 = arith.mulf %424, %424 : vector<8x384xf32>
    %cst_172 = arith.constant dense<0.000000e+00> : vector<384xf32>
    %426 = vector.multi_reduction <add>, %425, %cst_172 [0] : vector<8x384xf32> to vector<384xf32>
    %427 = vector.shape_cast %426 : vector<384xf32> to vector<1x384xf32>
    %cst_173 = arith.constant 8.000000e+00 : f32
    %428 = vector.broadcast %cst_173 : f32 to vector<1x384xf32>
    %429 = arith.divf %427, %428 : vector<1x384xf32>
    %c0_174 = arith.constant 0 : index
    %c0_175 = arith.constant 0 : index
    %430 = vector.load %arg13[%c0_174, %c0_175] : memref<1x384xf32, #tpu.memory_space<vmem>>, vector<1x384xf32>
    %431 = vector.broadcast %422 : vector<1x384xf32> to vector<8x384xf32>
    %432 = arith.subf %418, %431 : vector<8x384xf32>
    %433 = vector.broadcast %430 : vector<1x384xf32> to vector<8x384xf32>
    %434 = arith.mulf %433, %432 : vector<8x384xf32>
    %cst_176 = arith.constant 9.99999974E-6 : f32
    %435 = vector.broadcast %cst_176 : f32 to vector<1x384xf32>
    %436 = arith.addf %429, %435 : vector<1x384xf32>
    %437 = math.rsqrt %436 : vector<1x384xf32>
    %438 = vector.broadcast %437 : vector<1x384xf32> to vector<8x384xf32>
    %439 = arith.mulf %434, %438 : vector<8x384xf32>
    %c0_177 = arith.constant 0 : index
    %c0_178 = arith.constant 0 : index
    %440 = vector.load %arg14[%c0_177, %c0_178] : memref<1x384xf32, #tpu.memory_space<vmem>>, vector<1x384xf32>
    %441 = vector.broadcast %440 : vector<1x384xf32> to vector<8x384xf32>
    %442 = arith.addf %439, %441 : vector<8x384xf32>
    %c1_i32_179 = arith.constant 1 : i32
    %443 = tpu.memref_slice %arg22[%c1_i32_179] : memref<2x!tpu.dma_semaphore, #tpu.memory_space<semaphore_mem>> -> memref<1x!tpu.dma_semaphore, #tpu.memory_space<semaphore_mem>>
    %444 = tpu.memref_squeeze %443 : memref<1x!tpu.dma_semaphore, #tpu.memory_space<semaphore_mem>> -> memref<!tpu.dma_semaphore, #tpu.memory_space<semaphore_mem>>
    tpu.wait_dma2 semaphore(%444 : memref<!tpu.dma_semaphore, #tpu.memory_space<semaphore_mem>>) src(%arg15 : memref<3456x128xbf16, #tpu.memory_space<any>>) dst(%arg21 : memref<3456x128xbf16, #tpu.memory_space<vmem>>)
    %cst_180 = arith.constant 0.000000e+00 : f32
    %445 = vector.broadcast %cst_180 : f32 to vector<8x384xf32>
    %446 = arith.subf %445, %442 : vector<8x384xf32>
    %447 = math.exp %446 : vector<8x384xf32>
    %cst_181 = arith.constant 1.000000e+00 : f32
    %448 = vector.broadcast %cst_181 : f32 to vector<8x384xf32>
    %449 = arith.addf %448, %447 : vector<8x384xf32>
    %cst_182 = arith.constant 1.000000e+00 : f32
    %450 = vector.broadcast %cst_182 : f32 to vector<8x384xf32>
    %451 = arith.divf %450, %449 : vector<8x384xf32>
    %452 = arith.mulf %442, %451 : vector<8x384xf32>
    %453 = arith.truncf %452 : vector<8x384xf32> to vector<8x384xbf16>
    %c0_183 = arith.constant 0 : index
    %c0_184 = arith.constant 0 : index
    %454 = vector.load %arg25[%c0_183, %c0_184] : memref<8x4608xbf16, #tpu.memory_space<vmem>>, vector<8x384xbf16>
    tpu.vector_store %arg25[%c0_183, %c0_184], %453 {strides = array<i32>} : memref<8x4608xbf16, #tpu.memory_space<vmem>>, vector<8x384xbf16>,
    %cst_185 = arith.constant -2.200000e+00 : f32
    %455 = vector.broadcast %cst_185 : f32 to vector<8x384xf32>
    %456 = arith.subf %442, %455 : vector<8x384xf32>
    %cst_186 = arith.constant -1.800000e+00 : f32
    %457 = vector.broadcast %cst_186 : f32 to vector<8x384xf32>
    %458 = arith.subf %442, %457 : vector<8x384xf32>
    %cst_187 = arith.constant -1.400000e+00 : f32
    %459 = vector.broadcast %cst_187 : f32 to vector<8x384xf32>
    %460 = arith.subf %442, %459 : vector<8x384xf32>
    %cst_188 = arith.constant -1.000000e+00 : f32
    %461 = vector.broadcast %cst_188 : f32 to vector<8x384xf32>
    %462 = arith.subf %442, %461 : vector<8x384xf32>
    %cst_189 = arith.constant -6.000000e-01 : f32
    %463 = vector.broadcast %cst_189 : f32 to vector<8x384xf32>
    %464 = arith.subf %442, %463 : vector<8x384xf32>
    %cst_190 = arith.constant -2.000000e-01 : f32
    %465 = vector.broadcast %cst_190 : f32 to vector<8x384xf32>
    %466 = arith.subf %442, %465 : vector<8x384xf32>
    %cst_191 = arith.constant 2.000000e-01 : f32
    %467 = vector.broadcast %cst_191 : f32 to vector<8x384xf32>
    %468 = arith.subf %442, %467 : vector<8x384xf32>
    %cst_192 = arith.constant 6.000000e-01 : f32
    %469 = vector.broadcast %cst_192 : f32 to vector<8x384xf32>
    %470 = arith.subf %442, %469 : vector<8x384xf32>
    %cst_193 = arith.constant 1.000000e+00 : f32
    %471 = vector.broadcast %cst_193 : f32 to vector<8x384xf32>
    %472 = arith.subf %442, %471 : vector<8x384xf32>
    %cst_194 = arith.constant 1.400000e+00 : f32
    %473 = vector.broadcast %cst_194 : f32 to vector<8x384xf32>
    %474 = arith.subf %442, %473 : vector<8x384xf32>
    %cst_195 = arith.constant 1.800000e+00 : f32
    %475 = vector.broadcast %cst_195 : f32 to vector<8x384xf32>
    %476 = arith.subf %442, %475 : vector<8x384xf32>
    %cst_196 = arith.constant 2.200000e+00 : f32
    %477 = vector.broadcast %cst_196 : f32 to vector<8x384xf32>
    %478 = arith.subf %442, %477 : vector<8x384xf32>
    %cst_197 = arith.constant 0.000000e+00 : f32
    %479 = vector.broadcast %cst_197 : f32 to vector<8x384xf32>
    %480 = arith.cmpf oge, %456, %479 : vector<8x384xf32>
    %cst_198 = arith.constant 0.000000e+00 : f32
    %481 = vector.broadcast %cst_198 : f32 to vector<8x384xf32>
    %482 = arith.cmpf olt, %458, %481 : vector<8x384xf32>
    %483 = arith.andi %480, %482 : vector<8x384xi1>
    %cst_199 = arith.constant 1.000000e+00 : f32
    %cst_200 = arith.constant 0.000000e+00 : f32
    %484 = vector.broadcast %cst_199 : f32 to vector<8x384xf32>
    %485 = vector.broadcast %cst_200 : f32 to vector<8x384xf32>
    %486 = arith.select %483, %484, %485 : vector<8x384xi1>, vector<8x384xf32>
    %cst_201 = arith.constant 0.000000e+00 : f32
    %487 = vector.broadcast %cst_201 : f32 to vector<8x384xf32>
    %488 = arith.cmpf oge, %458, %487 : vector<8x384xf32>
    %cst_202 = arith.constant 0.000000e+00 : f32
    %489 = vector.broadcast %cst_202 : f32 to vector<8x384xf32>
    %490 = arith.cmpf olt, %460, %489 : vector<8x384xf32>
    %491 = arith.andi %488, %490 : vector<8x384xi1>
    %cst_203 = arith.constant 1.000000e+00 : f32
    %cst_204 = arith.constant 0.000000e+00 : f32
    %492 = vector.broadcast %cst_203 : f32 to vector<8x384xf32>
    %493 = vector.broadcast %cst_204 : f32 to vector<8x384xf32>
    %494 = arith.select %491, %492, %493 : vector<8x384xi1>, vector<8x384xf32>
    %cst_205 = arith.constant 0.000000e+00 : f32
    %495 = vector.broadcast %cst_205 : f32 to vector<8x384xf32>
    %496 = arith.cmpf oge, %460, %495 : vector<8x384xf32>
    %cst_206 = arith.constant 0.000000e+00 : f32
    %497 = vector.broadcast %cst_206 : f32 to vector<8x384xf32>
    %498 = arith.cmpf olt, %462, %497 : vector<8x384xf32>
    %499 = arith.andi %496, %498 : vector<8x384xi1>
    %cst_207 = arith.constant 1.000000e+00 : f32
    %cst_208 = arith.constant 0.000000e+00 : f32
    %500 = vector.broadcast %cst_207 : f32 to vector<8x384xf32>
    %501 = vector.broadcast %cst_208 : f32 to vector<8x384xf32>
    %502 = arith.select %499, %500, %501 : vector<8x384xi1>, vector<8x384xf32>
    %cst_209 = arith.constant 0.000000e+00 : f32
    %503 = vector.broadcast %cst_209 : f32 to vector<8x384xf32>
    %504 = arith.cmpf oge, %462, %503 : vector<8x384xf32>
    %cst_210 = arith.constant 0.000000e+00 : f32
    %505 = vector.broadcast %cst_210 : f32 to vector<8x384xf32>
    %506 = arith.cmpf olt, %464, %505 : vector<8x384xf32>
    %507 = arith.andi %504, %506 : vector<8x384xi1>
    %cst_211 = arith.constant 1.000000e+00 : f32
    %cst_212 = arith.constant 0.000000e+00 : f32
    %508 = vector.broadcast %cst_211 : f32 to vector<8x384xf32>
    %509 = vector.broadcast %cst_212 : f32 to vector<8x384xf32>
    %510 = arith.select %507, %508, %509 : vector<8x384xi1>, vector<8x384xf32>
    %cst_213 = arith.constant 0.000000e+00 : f32
    %511 = vector.broadcast %cst_213 : f32 to vector<8x384xf32>
    %512 = arith.cmpf oge, %464, %511 : vector<8x384xf32>
    %cst_214 = arith.constant 0.000000e+00 : f32
    %513 = vector.broadcast %cst_214 : f32 to vector<8x384xf32>
    %514 = arith.cmpf olt, %466, %513 : vector<8x384xf32>
    %515 = arith.andi %512, %514 : vector<8x384xi1>
    %cst_215 = arith.constant 1.000000e+00 : f32
    %cst_216 = arith.constant 0.000000e+00 : f32
    %516 = vector.broadcast %cst_215 : f32 to vector<8x384xf32>
    %517 = vector.broadcast %cst_216 : f32 to vector<8x384xf32>
    %518 = arith.select %515, %516, %517 : vector<8x384xi1>, vector<8x384xf32>
    %cst_217 = arith.constant 0.000000e+00 : f32
    %519 = vector.broadcast %cst_217 : f32 to vector<8x384xf32>
    %520 = arith.cmpf oge, %466, %519 : vector<8x384xf32>
    %cst_218 = arith.constant 0.000000e+00 : f32
    %521 = vector.broadcast %cst_218 : f32 to vector<8x384xf32>
    %522 = arith.cmpf olt, %468, %521 : vector<8x384xf32>
    %523 = arith.andi %520, %522 : vector<8x384xi1>
    %cst_219 = arith.constant 1.000000e+00 : f32
    %cst_220 = arith.constant 0.000000e+00 : f32
    %524 = vector.broadcast %cst_219 : f32 to vector<8x384xf32>
    %525 = vector.broadcast %cst_220 : f32 to vector<8x384xf32>
    %526 = arith.select %523, %524, %525 : vector<8x384xi1>, vector<8x384xf32>
    %cst_221 = arith.constant 0.000000e+00 : f32
    %527 = vector.broadcast %cst_221 : f32 to vector<8x384xf32>
    %528 = arith.cmpf oge, %468, %527 : vector<8x384xf32>
    %cst_222 = arith.constant 0.000000e+00 : f32
    %529 = vector.broadcast %cst_222 : f32 to vector<8x384xf32>
    %530 = arith.cmpf olt, %470, %529 : vector<8x384xf32>
    %531 = arith.andi %528, %530 : vector<8x384xi1>
    %cst_223 = arith.constant 1.000000e+00 : f32
    %cst_224 = arith.constant 0.000000e+00 : f32
    %532 = vector.broadcast %cst_223 : f32 to vector<8x384xf32>
    %533 = vector.broadcast %cst_224 : f32 to vector<8x384xf32>
    %534 = arith.select %531, %532, %533 : vector<8x384xi1>, vector<8x384xf32>
    %cst_225 = arith.constant 0.000000e+00 : f32
    %535 = vector.broadcast %cst_225 : f32 to vector<8x384xf32>
    %536 = arith.cmpf oge, %470, %535 : vector<8x384xf32>
    %cst_226 = arith.constant 0.000000e+00 : f32
    %537 = vector.broadcast %cst_226 : f32 to vector<8x384xf32>
    %538 = arith.cmpf olt, %472, %537 : vector<8x384xf32>
    %539 = arith.andi %536, %538 : vector<8x384xi1>
    %cst_227 = arith.constant 1.000000e+00 : f32
    %cst_228 = arith.constant 0.000000e+00 : f32
    %540 = vector.broadcast %cst_227 : f32 to vector<8x384xf32>
    %541 = vector.broadcast %cst_228 : f32 to vector<8x384xf32>
    %542 = arith.select %539, %540, %541 : vector<8x384xi1>, vector<8x384xf32>
    %cst_229 = arith.constant 0.000000e+00 : f32
    %543 = vector.broadcast %cst_229 : f32 to vector<8x384xf32>
    %544 = arith.cmpf oge, %472, %543 : vector<8x384xf32>
    %cst_230 = arith.constant 0.000000e+00 : f32
    %545 = vector.broadcast %cst_230 : f32 to vector<8x384xf32>
    %546 = arith.cmpf olt, %474, %545 : vector<8x384xf32>
    %547 = arith.andi %544, %546 : vector<8x384xi1>
    %cst_231 = arith.constant 1.000000e+00 : f32
    %cst_232 = arith.constant 0.000000e+00 : f32
    %548 = vector.broadcast %cst_231 : f32 to vector<8x384xf32>
    %549 = vector.broadcast %cst_232 : f32 to vector<8x384xf32>
    %550 = arith.select %547, %548, %549 : vector<8x384xi1>, vector<8x384xf32>
    %cst_233 = arith.constant 0.000000e+00 : f32
    %551 = vector.broadcast %cst_233 : f32 to vector<8x384xf32>
    %552 = arith.cmpf oge, %474, %551 : vector<8x384xf32>
    %cst_234 = arith.constant 0.000000e+00 : f32
    %553 = vector.broadcast %cst_234 : f32 to vector<8x384xf32>
    %554 = arith.cmpf olt, %476, %553 : vector<8x384xf32>
    %555 = arith.andi %552, %554 : vector<8x384xi1>
    %cst_235 = arith.constant 1.000000e+00 : f32
    %cst_236 = arith.constant 0.000000e+00 : f32
    %556 = vector.broadcast %cst_235 : f32 to vector<8x384xf32>
    %557 = vector.broadcast %cst_236 : f32 to vector<8x384xf32>
    %558 = arith.select %555, %556, %557 : vector<8x384xi1>, vector<8x384xf32>
    %cst_237 = arith.constant 0.000000e+00 : f32
    %559 = vector.broadcast %cst_237 : f32 to vector<8x384xf32>
    %560 = arith.cmpf oge, %476, %559 : vector<8x384xf32>
    %cst_238 = arith.constant 0.000000e+00 : f32
    %561 = vector.broadcast %cst_238 : f32 to vector<8x384xf32>
    %562 = arith.cmpf olt, %478, %561 : vector<8x384xf32>
    %563 = arith.andi %560, %562 : vector<8x384xi1>
    %cst_239 = arith.constant 1.000000e+00 : f32
    %cst_240 = arith.constant 0.000000e+00 : f32
    %564 = vector.broadcast %cst_239 : f32 to vector<8x384xf32>
    %565 = vector.broadcast %cst_240 : f32 to vector<8x384xf32>
    %566 = arith.select %563, %564, %565 : vector<8x384xi1>, vector<8x384xf32>
    %567 = arith.mulf %456, %486 : vector<8x384xf32>
    %568 = arith.mulf %458, %494 : vector<8x384xf32>
    %569 = arith.mulf %460, %502 : vector<8x384xf32>
    %570 = arith.mulf %462, %510 : vector<8x384xf32>
    %571 = arith.mulf %464, %518 : vector<8x384xf32>
    %572 = arith.mulf %466, %526 : vector<8x384xf32>
    %573 = arith.mulf %468, %534 : vector<8x384xf32>
    %574 = arith.mulf %470, %542 : vector<8x384xf32>
    %575 = arith.mulf %472, %550 : vector<8x384xf32>
    %576 = arith.mulf %474, %558 : vector<8x384xf32>
    %577 = arith.mulf %476, %566 : vector<8x384xf32>
    %cst_241 = arith.constant 4.000000e-01 : f32
    %578 = vector.broadcast %cst_241 : f32 to vector<8x384xf32>
    %579 = arith.mulf %578, %494 : vector<8x384xf32>
    %580 = arith.addf %567, %579 : vector<8x384xf32>
    %581 = arith.subf %580, %568 : vector<8x384xf32>
    %cst_242 = arith.constant 2.500000e+00 : f32
    %582 = vector.broadcast %cst_242 : f32 to vector<8x384xf32>
    %583 = arith.mulf %581, %582 : vector<8x384xf32>
    %cst_243 = arith.constant 4.000000e-01 : f32
    %584 = vector.broadcast %cst_243 : f32 to vector<8x384xf32>
    %585 = arith.mulf %584, %502 : vector<8x384xf32>
    %586 = arith.addf %568, %585 : vector<8x384xf32>
    %587 = arith.subf %586, %569 : vector<8x384xf32>
    %cst_244 = arith.constant 2.500000e+00 : f32
    %588 = vector.broadcast %cst_244 : f32 to vector<8x384xf32>
    %589 = arith.mulf %587, %588 : vector<8x384xf32>
    %cst_245 = arith.constant 4.000000e-01 : f32
    %590 = vector.broadcast %cst_245 : f32 to vector<8x384xf32>
    %591 = arith.mulf %590, %510 : vector<8x384xf32>
    %592 = arith.addf %569, %591 : vector<8x384xf32>
    %593 = arith.subf %592, %570 : vector<8x384xf32>
    %cst_246 = arith.constant 2.500000e+00 : f32
    %594 = vector.broadcast %cst_246 : f32 to vector<8x384xf32>
    %595 = arith.mulf %593, %594 : vector<8x384xf32>
    %cst_247 = arith.constant 4.000000e-01 : f32
    %596 = vector.broadcast %cst_247 : f32 to vector<8x384xf32>
    %597 = arith.mulf %596, %518 : vector<8x384xf32>
    %598 = arith.addf %570, %597 : vector<8x384xf32>
    %599 = arith.subf %598, %571 : vector<8x384xf32>
    %cst_248 = arith.constant 2.500000e+00 : f32
    %600 = vector.broadcast %cst_248 : f32 to vector<8x384xf32>
    %601 = arith.mulf %599, %600 : vector<8x384xf32>
    %cst_249 = arith.constant 4.000000e-01 : f32
    %602 = vector.broadcast %cst_249 : f32 to vector<8x384xf32>
    %603 = arith.mulf %602, %526 : vector<8x384xf32>
    %604 = arith.addf %571, %603 : vector<8x384xf32>
    %605 = arith.subf %604, %572 : vector<8x384xf32>
    %cst_250 = arith.constant 2.500000e+00 : f32
    %606 = vector.broadcast %cst_250 : f32 to vector<8x384xf32>
    %607 = arith.mulf %605, %606 : vector<8x384xf32>
    %cst_251 = arith.constant 4.000000e-01 : f32
    %608 = vector.broadcast %cst_251 : f32 to vector<8x384xf32>
    %609 = arith.mulf %608, %534 : vector<8x384xf32>
    %610 = arith.addf %572, %609 : vector<8x384xf32>
    %611 = arith.subf %610, %573 : vector<8x384xf32>
    %cst_252 = arith.constant 2.500000e+00 : f32
    %612 = vector.broadcast %cst_252 : f32 to vector<8x384xf32>
    %613 = arith.mulf %611, %612 : vector<8x384xf32>
    %cst_253 = arith.constant 4.000000e-01 : f32
    %614 = vector.broadcast %cst_253 : f32 to vector<8x384xf32>
    %615 = arith.mulf %614, %542 : vector<8x384xf32>
    %616 = arith.addf %573, %615 : vector<8x384xf32>
    %617 = arith.subf %616, %574 : vector<8x384xf32>
    %cst_254 = arith.constant 2.500000e+00 : f32
    %618 = vector.broadcast %cst_254 : f32 to vector<8x384xf32>
    %619 = arith.mulf %617, %618 : vector<8x384xf32>
    %cst_255 = arith.constant 4.000000e-01 : f32
    %620 = vector.broadcast %cst_255 : f32 to vector<8x384xf32>
    %621 = arith.mulf %620, %550 : vector<8x384xf32>
    %622 = arith.addf %574, %621 : vector<8x384xf32>
    %623 = arith.subf %622, %575 : vector<8x384xf32>
    %cst_256 = arith.constant 2.500000e+00 : f32
    %624 = vector.broadcast %cst_256 : f32 to vector<8x384xf32>
    %625 = arith.mulf %623, %624 : vector<8x384xf32>
    %cst_257 = arith.constant 4.000000e-01 : f32
    %626 = vector.broadcast %cst_257 : f32 to vector<8x384xf32>
    %627 = arith.mulf %626, %558 : vector<8x384xf32>
    %628 = arith.addf %575, %627 : vector<8x384xf32>
    %629 = arith.subf %628, %576 : vector<8x384xf32>
    %cst_258 = arith.constant 2.500000e+00 : f32
    %630 = vector.broadcast %cst_258 : f32 to vector<8x384xf32>
    %631 = arith.mulf %629, %630 : vector<8x384xf32>
    %cst_259 = arith.constant 4.000000e-01 : f32
    %632 = vector.broadcast %cst_259 : f32 to vector<8x384xf32>
    %633 = arith.mulf %632, %566 : vector<8x384xf32>
    %634 = arith.addf %576, %633 : vector<8x384xf32>
    %635 = arith.subf %634, %577 : vector<8x384xf32>
    %cst_260 = arith.constant 2.500000e+00 : f32
    %636 = vector.broadcast %cst_260 : f32 to vector<8x384xf32>
    %637 = arith.mulf %635, %636 : vector<8x384xf32>
    %638 = arith.mulf %456, %583 : vector<8x384xf32>
    %639 = arith.mulf %458, %589 : vector<8x384xf32>
    %640 = arith.mulf %460, %595 : vector<8x384xf32>
    %641 = arith.mulf %462, %601 : vector<8x384xf32>
    %642 = arith.mulf %464, %607 : vector<8x384xf32>
    %643 = arith.mulf %466, %613 : vector<8x384xf32>
    %644 = arith.mulf %468, %619 : vector<8x384xf32>
    %645 = arith.mulf %470, %625 : vector<8x384xf32>
    %646 = arith.mulf %472, %631 : vector<8x384xf32>
    %647 = arith.mulf %474, %637 : vector<8x384xf32>
    %cst_261 = arith.constant 8.000000e-01 : f32
    %648 = vector.broadcast %cst_261 : f32 to vector<8x384xf32>
    %649 = arith.mulf %648, %589 : vector<8x384xf32>
    %650 = arith.addf %638, %649 : vector<8x384xf32>
    %651 = arith.subf %650, %639 : vector<8x384xf32>
    %cst_262 = arith.constant 1.250000e+00 : f32
    %652 = vector.broadcast %cst_262 : f32 to vector<8x384xf32>
    %653 = arith.mulf %651, %652 : vector<8x384xf32>
    %cst_263 = arith.constant 8.000000e-01 : f32
    %654 = vector.broadcast %cst_263 : f32 to vector<8x384xf32>
    %655 = arith.mulf %654, %595 : vector<8x384xf32>
    %656 = arith.addf %639, %655 : vector<8x384xf32>
    %657 = arith.subf %656, %640 : vector<8x384xf32>
    %cst_264 = arith.constant 1.250000e+00 : f32
    %658 = vector.broadcast %cst_264 : f32 to vector<8x384xf32>
    %659 = arith.mulf %657, %658 : vector<8x384xf32>
    %cst_265 = arith.constant 8.000000e-01 : f32
    %660 = vector.broadcast %cst_265 : f32 to vector<8x384xf32>
    %661 = arith.mulf %660, %601 : vector<8x384xf32>
    %662 = arith.addf %640, %661 : vector<8x384xf32>
    %663 = arith.subf %662, %641 : vector<8x384xf32>
    %cst_266 = arith.constant 1.250000e+00 : f32
    %664 = vector.broadcast %cst_266 : f32 to vector<8x384xf32>
    %665 = arith.mulf %663, %664 : vector<8x384xf32>
    %cst_267 = arith.constant 8.000000e-01 : f32
    %666 = vector.broadcast %cst_267 : f32 to vector<8x384xf32>
    %667 = arith.mulf %666, %607 : vector<8x384xf32>
    %668 = arith.addf %641, %667 : vector<8x384xf32>
    %669 = arith.subf %668, %642 : vector<8x384xf32>
    %cst_268 = arith.constant 1.250000e+00 : f32
    %670 = vector.broadcast %cst_268 : f32 to vector<8x384xf32>
    %671 = arith.mulf %669, %670 : vector<8x384xf32>
    %cst_269 = arith.constant 8.000000e-01 : f32
    %672 = vector.broadcast %cst_269 : f32 to vector<8x384xf32>
    %673 = arith.mulf %672, %613 : vector<8x384xf32>
    %674 = arith.addf %642, %673 : vector<8x384xf32>
    %675 = arith.subf %674, %643 : vector<8x384xf32>
    %cst_270 = arith.constant 1.250000e+00 : f32
    %676 = vector.broadcast %cst_270 : f32 to vector<8x384xf32>
    %677 = arith.mulf %675, %676 : vector<8x384xf32>
    %cst_271 = arith.constant 8.000000e-01 : f32
    %678 = vector.broadcast %cst_271 : f32 to vector<8x384xf32>
    %679 = arith.mulf %678, %619 : vector<8x384xf32>
    %680 = arith.addf %643, %679 : vector<8x384xf32>
    %681 = arith.subf %680, %644 : vector<8x384xf32>
    %cst_272 = arith.constant 1.250000e+00 : f32
    %682 = vector.broadcast %cst_272 : f32 to vector<8x384xf32>
    %683 = arith.mulf %681, %682 : vector<8x384xf32>
    %cst_273 = arith.constant 8.000000e-01 : f32
    %684 = vector.broadcast %cst_273 : f32 to vector<8x384xf32>
    %685 = arith.mulf %684, %625 : vector<8x384xf32>
    %686 = arith.addf %644, %685 : vector<8x384xf32>
    %687 = arith.subf %686, %645 : vector<8x384xf32>
    %cst_274 = arith.constant 1.250000e+00 : f32
    %688 = vector.broadcast %cst_274 : f32 to vector<8x384xf32>
    %689 = arith.mulf %687, %688 : vector<8x384xf32>
    %cst_275 = arith.constant 8.000000e-01 : f32
    %690 = vector.broadcast %cst_275 : f32 to vector<8x384xf32>
    %691 = arith.mulf %690, %631 : vector<8x384xf32>
    %692 = arith.addf %645, %691 : vector<8x384xf32>
    %693 = arith.subf %692, %646 : vector<8x384xf32>
    %cst_276 = arith.constant 1.250000e+00 : f32
    %694 = vector.broadcast %cst_276 : f32 to vector<8x384xf32>
    %695 = arith.mulf %693, %694 : vector<8x384xf32>
    %cst_277 = arith.constant 8.000000e-01 : f32
    %696 = vector.broadcast %cst_277 : f32 to vector<8x384xf32>
    %697 = arith.mulf %696, %637 : vector<8x384xf32>
    %698 = arith.addf %646, %697 : vector<8x384xf32>
    %699 = arith.subf %698, %647 : vector<8x384xf32>
    %cst_278 = arith.constant 1.250000e+00 : f32
    %700 = vector.broadcast %cst_278 : f32 to vector<8x384xf32>
    %701 = arith.mulf %699, %700 : vector<8x384xf32>
    %702 = arith.mulf %456, %653 : vector<8x384xf32>
    %703 = arith.mulf %458, %659 : vector<8x384xf32>
    %704 = arith.mulf %460, %665 : vector<8x384xf32>
    %705 = arith.mulf %462, %671 : vector<8x384xf32>
    %706 = arith.mulf %464, %677 : vector<8x384xf32>
    %707 = arith.mulf %466, %683 : vector<8x384xf32>
    %708 = arith.mulf %468, %689 : vector<8x384xf32>
    %709 = arith.mulf %470, %695 : vector<8x384xf32>
    %710 = arith.mulf %472, %701 : vector<8x384xf32>
    %cst_279 = arith.constant 1.200000e+00 : f32
    %711 = vector.broadcast %cst_279 : f32 to vector<8x384xf32>
    %712 = arith.mulf %711, %659 : vector<8x384xf32>
    %713 = arith.addf %702, %712 : vector<8x384xf32>
    %714 = arith.subf %713, %703 : vector<8x384xf32>
    %cst_280 = arith.constant 0.833333313 : f32
    %715 = vector.broadcast %cst_280 : f32 to vector<8x384xf32>
    %716 = arith.mulf %714, %715 : vector<8x384xf32>
    %cst_281 = arith.constant 1.200000e+00 : f32
    %717 = vector.broadcast %cst_281 : f32 to vector<8x384xf32>
    %718 = arith.mulf %717, %665 : vector<8x384xf32>
    %719 = arith.addf %703, %718 : vector<8x384xf32>
    %720 = arith.subf %719, %704 : vector<8x384xf32>
    %cst_282 = arith.constant 0.833333313 : f32
    %721 = vector.broadcast %cst_282 : f32 to vector<8x384xf32>
    %722 = arith.mulf %720, %721 : vector<8x384xf32>
    %cst_283 = arith.constant 1.200000e+00 : f32
    %723 = vector.broadcast %cst_283 : f32 to vector<8x384xf32>
    %724 = arith.mulf %723, %671 : vector<8x384xf32>
    %725 = arith.addf %704, %724 : vector<8x384xf32>
    %726 = arith.subf %725, %705 : vector<8x384xf32>
    %cst_284 = arith.constant 0.833333313 : f32
    %727 = vector.broadcast %cst_284 : f32 to vector<8x384xf32>
    %728 = arith.mulf %726, %727 : vector<8x384xf32>
    %cst_285 = arith.constant 1.200000e+00 : f32
    %729 = vector.broadcast %cst_285 : f32 to vector<8x384xf32>
    %730 = arith.mulf %729, %677 : vector<8x384xf32>
    %731 = arith.addf %705, %730 : vector<8x384xf32>
    %732 = arith.subf %731, %706 : vector<8x384xf32>
    %cst_286 = arith.constant 0.833333313 : f32
    %733 = vector.broadcast %cst_286 : f32 to vector<8x384xf32>
    %734 = arith.mulf %732, %733 : vector<8x384xf32>
    %cst_287 = arith.constant 1.200000e+00 : f32
    %735 = vector.broadcast %cst_287 : f32 to vector<8x384xf32>
    %736 = arith.mulf %735, %683 : vector<8x384xf32>
    %737 = arith.addf %706, %736 : vector<8x384xf32>
    %738 = arith.subf %737, %707 : vector<8x384xf32>
    %cst_288 = arith.constant 0.833333313 : f32
    %739 = vector.broadcast %cst_288 : f32 to vector<8x384xf32>
    %740 = arith.mulf %738, %739 : vector<8x384xf32>
    %cst_289 = arith.constant 1.200000e+00 : f32
    %741 = vector.broadcast %cst_289 : f32 to vector<8x384xf32>
    %742 = arith.mulf %741, %689 : vector<8x384xf32>
    %743 = arith.addf %707, %742 : vector<8x384xf32>
    %744 = arith.subf %743, %708 : vector<8x384xf32>
    %cst_290 = arith.constant 0.833333313 : f32
    %745 = vector.broadcast %cst_290 : f32 to vector<8x384xf32>
    %746 = arith.mulf %744, %745 : vector<8x384xf32>
    %cst_291 = arith.constant 1.200000e+00 : f32
    %747 = vector.broadcast %cst_291 : f32 to vector<8x384xf32>
    %748 = arith.mulf %747, %695 : vector<8x384xf32>
    %749 = arith.addf %708, %748 : vector<8x384xf32>
    %750 = arith.subf %749, %709 : vector<8x384xf32>
    %cst_292 = arith.constant 0.833333313 : f32
    %751 = vector.broadcast %cst_292 : f32 to vector<8x384xf32>
    %752 = arith.mulf %750, %751 : vector<8x384xf32>
    %cst_293 = arith.constant 1.200000e+00 : f32
    %753 = vector.broadcast %cst_293 : f32 to vector<8x384xf32>
    %754 = arith.mulf %753, %701 : vector<8x384xf32>
    %755 = arith.addf %709, %754 : vector<8x384xf32>
    %756 = arith.subf %755, %710 : vector<8x384xf32>
    %cst_294 = arith.constant 0.833333313 : f32
    %757 = vector.broadcast %cst_294 : f32 to vector<8x384xf32>
    %758 = arith.mulf %756, %757 : vector<8x384xf32>
    %759 = arith.truncf %716 : vector<8x384xf32> to vector<8x384xbf16>
    %c0_295 = arith.constant 0 : index
    %c384_296 = arith.constant 384 : index
    %760 = vector.load %arg25[%c0_295, %c384_296] : memref<8x4608xbf16, #tpu.memory_space<vmem>>, vector<8x384xbf16>
    tpu.vector_store %arg25[%c0_295, %c384_296], %759 {strides = array<i32>} : memref<8x4608xbf16, #tpu.memory_space<vmem>>, vector<8x384xbf16>,
    %761 = arith.truncf %722 : vector<8x384xf32> to vector<8x384xbf16>
    %c0_297 = arith.constant 0 : index
    %c768 = arith.constant 768 : index
    %762 = vector.load %arg25[%c0_297, %c768] : memref<8x4608xbf16, #tpu.memory_space<vmem>>, vector<8x384xbf16>
    tpu.vector_store %arg25[%c0_297, %c768], %761 {strides = array<i32>} : memref<8x4608xbf16, #tpu.memory_space<vmem>>, vector<8x384xbf16>,
    %763 = arith.truncf %728 : vector<8x384xf32> to vector<8x384xbf16>
    %c0_298 = arith.constant 0 : index
    %c1152 = arith.constant 1152 : index
    %764 = vector.load %arg25[%c0_298, %c1152] : memref<8x4608xbf16, #tpu.memory_space<vmem>>, vector<8x384xbf16>
    tpu.vector_store %arg25[%c0_298, %c1152], %763 {strides = array<i32>} : memref<8x4608xbf16, #tpu.memory_space<vmem>>, vector<8x384xbf16>,
    %765 = arith.truncf %734 : vector<8x384xf32> to vector<8x384xbf16>
    %c0_299 = arith.constant 0 : index
    %c1536_300 = arith.constant 1536 : index
    %766 = vector.load %arg25[%c0_299, %c1536_300] : memref<8x4608xbf16, #tpu.memory_space<vmem>>, vector<8x384xbf16>
    tpu.vector_store %arg25[%c0_299, %c1536_300], %765 {strides = array<i32>} : memref<8x4608xbf16, #tpu.memory_space<vmem>>, vector<8x384xbf16>,
    %767 = arith.truncf %740 : vector<8x384xf32> to vector<8x384xbf16>
    %c0_301 = arith.constant 0 : index
    %c1920 = arith.constant 1920 : index
    %768 = vector.load %arg25[%c0_301, %c1920] : memref<8x4608xbf16, #tpu.memory_space<vmem>>, vector<8x384xbf16>
    tpu.vector_store %arg25[%c0_301, %c1920], %767 {strides = array<i32>} : memref<8x4608xbf16, #tpu.memory_space<vmem>>, vector<8x384xbf16>,
    %769 = arith.truncf %746 : vector<8x384xf32> to vector<8x384xbf16>
    %c0_302 = arith.constant 0 : index
    %c2304 = arith.constant 2304 : index
    %770 = vector.load %arg25[%c0_302, %c2304] : memref<8x4608xbf16, #tpu.memory_space<vmem>>, vector<8x384xbf16>
    tpu.vector_store %arg25[%c0_302, %c2304], %769 {strides = array<i32>} : memref<8x4608xbf16, #tpu.memory_space<vmem>>, vector<8x384xbf16>,
    %771 = arith.truncf %752 : vector<8x384xf32> to vector<8x384xbf16>
    %c0_303 = arith.constant 0 : index
    %c2688 = arith.constant 2688 : index
    %772 = vector.load %arg25[%c0_303, %c2688] : memref<8x4608xbf16, #tpu.memory_space<vmem>>, vector<8x384xbf16>
    tpu.vector_store %arg25[%c0_303, %c2688], %771 {strides = array<i32>} : memref<8x4608xbf16, #tpu.memory_space<vmem>>, vector<8x384xbf16>,
    %773 = arith.truncf %758 : vector<8x384xf32> to vector<8x384xbf16>
    %c0_304 = arith.constant 0 : index
    %c3072_305 = arith.constant 3072 : index
    %774 = vector.load %arg25[%c0_304, %c3072_305] : memref<8x4608xbf16, #tpu.memory_space<vmem>>, vector<8x384xbf16>
    tpu.vector_store %arg25[%c0_304, %c3072_305], %773 {strides = array<i32>} : memref<8x4608xbf16, #tpu.memory_space<vmem>>, vector<8x384xbf16>,
    %c0_306 = arith.constant 0 : index
    %c0_307 = arith.constant 0 : index
    %775 = vector.load %arg25[%c0_306, %c0_307] : memref<8x4608xbf16, #tpu.memory_space<vmem>>, vector<8x3456xbf16>
    %c0_308 = arith.constant 0 : index
    %c0_309 = arith.constant 0 : index
    %776 = vector.load %arg21[%c0_308, %c0_309] : memref<3456x128xbf16, #tpu.memory_space<vmem>>, vector<3456x128xbf16>
    %cst_310 = arith.constant dense<0.000000e+00> : vector<8x128xf32>
    %777 = tpu.matmul %775, %776, %cst_310 {dimension_numbers = #tpu.dot_dimension_numbers<[1], [0], [0], [1], [0, 0, 1, 1], [], []>} : vector<8x3456xbf16>, vector<3456x128xbf16>, vector<8x128xf32> -> vector<8x128xf32>
    %cst_311 = arith.constant 0.000000e+00 : f32
    %778 = vector.broadcast %cst_311 : f32 to vector<8x128xf32>
    %779 = arith.maximumf %777, %778 : vector<8x128xf32>
    %cst_312 = arith.constant 0.000000e+00 : f32
    %780 = vector.broadcast %cst_312 : f32 to vector<8x128xf32>
    %781 = arith.subf %780, %779 : vector<8x128xf32>
    %782 = math.exp %781 : vector<8x128xf32>
    %cst_313 = arith.constant 1.000000e+00 : f32
    %783 = vector.broadcast %cst_313 : f32 to vector<8x128xf32>
    %784 = arith.addf %783, %782 : vector<8x128xf32>
    %cst_314 = arith.constant 1.000000e+00 : f32
    %785 = vector.broadcast %cst_314 : f32 to vector<8x128xf32>
    %786 = arith.divf %785, %784 : vector<8x128xf32>
    %787 = arith.mulf %779, %786 : vector<8x128xf32>
    %788 = arith.truncf %787 : vector<8x128xf32> to vector<8x128xbf16>
    %c0_315 = arith.constant 0 : index
    %c0_316 = arith.constant 0 : index
    %789 = vector.load %arg25[%c0_315, %c0_316] : memref<8x4608xbf16, #tpu.memory_space<vmem>>, vector<8x128xbf16>
    tpu.vector_store %arg25[%c0_315, %c0_316], %788 {strides = array<i32>} : memref<8x4608xbf16, #tpu.memory_space<vmem>>, vector<8x128xbf16>,
    %cst_317 = arith.constant -2.200000e+00 : f32
    %790 = vector.broadcast %cst_317 : f32 to vector<8x128xf32>
    %791 = arith.subf %779, %790 : vector<8x128xf32>
    %cst_318 = arith.constant -1.800000e+00 : f32
    %792 = vector.broadcast %cst_318 : f32 to vector<8x128xf32>
    %793 = arith.subf %779, %792 : vector<8x128xf32>
    %cst_319 = arith.constant -1.400000e+00 : f32
    %794 = vector.broadcast %cst_319 : f32 to vector<8x128xf32>
    %795 = arith.subf %779, %794 : vector<8x128xf32>
    %cst_320 = arith.constant -1.000000e+00 : f32
    %796 = vector.broadcast %cst_320 : f32 to vector<8x128xf32>
    %797 = arith.subf %779, %796 : vector<8x128xf32>
    %cst_321 = arith.constant -6.000000e-01 : f32
    %798 = vector.broadcast %cst_321 : f32 to vector<8x128xf32>
    %799 = arith.subf %779, %798 : vector<8x128xf32>
    %cst_322 = arith.constant -2.000000e-01 : f32
    %800 = vector.broadcast %cst_322 : f32 to vector<8x128xf32>
    %801 = arith.subf %779, %800 : vector<8x128xf32>
    %cst_323 = arith.constant 2.000000e-01 : f32
    %802 = vector.broadcast %cst_323 : f32 to vector<8x128xf32>
    %803 = arith.subf %779, %802 : vector<8x128xf32>
    %cst_324 = arith.constant 6.000000e-01 : f32
    %804 = vector.broadcast %cst_324 : f32 to vector<8x128xf32>
    %805 = arith.subf %779, %804 : vector<8x128xf32>
    %cst_325 = arith.constant 1.000000e+00 : f32
    %806 = vector.broadcast %cst_325 : f32 to vector<8x128xf32>
    %807 = arith.subf %779, %806 : vector<8x128xf32>
    %cst_326 = arith.constant 1.400000e+00 : f32
    %808 = vector.broadcast %cst_326 : f32 to vector<8x128xf32>
    %809 = arith.subf %779, %808 : vector<8x128xf32>
    %cst_327 = arith.constant 1.800000e+00 : f32
    %810 = vector.broadcast %cst_327 : f32 to vector<8x128xf32>
    %811 = arith.subf %779, %810 : vector<8x128xf32>
    %cst_328 = arith.constant 2.200000e+00 : f32
    %812 = vector.broadcast %cst_328 : f32 to vector<8x128xf32>
    %813 = arith.subf %779, %812 : vector<8x128xf32>
    %cst_329 = arith.constant 0.000000e+00 : f32
    %814 = vector.broadcast %cst_329 : f32 to vector<8x128xf32>
    %815 = arith.cmpf oge, %791, %814 : vector<8x128xf32>
    %cst_330 = arith.constant 0.000000e+00 : f32
    %816 = vector.broadcast %cst_330 : f32 to vector<8x128xf32>
    %817 = arith.cmpf olt, %793, %816 : vector<8x128xf32>
    %818 = arith.andi %815, %817 : vector<8x128xi1>
    %cst_331 = arith.constant 1.000000e+00 : f32
    %cst_332 = arith.constant 0.000000e+00 : f32
    %819 = vector.broadcast %cst_331 : f32 to vector<8x128xf32>
    %820 = vector.broadcast %cst_332 : f32 to vector<8x128xf32>
    %821 = arith.select %818, %819, %820 : vector<8x128xi1>, vector<8x128xf32>
    %cst_333 = arith.constant 0.000000e+00 : f32
    %822 = vector.broadcast %cst_333 : f32 to vector<8x128xf32>
    %823 = arith.cmpf oge, %793, %822 : vector<8x128xf32>
    %cst_334 = arith.constant 0.000000e+00 : f32
    %824 = vector.broadcast %cst_334 : f32 to vector<8x128xf32>
    %825 = arith.cmpf olt, %795, %824 : vector<8x128xf32>
    %826 = arith.andi %823, %825 : vector<8x128xi1>
    %cst_335 = arith.constant 1.000000e+00 : f32
    %cst_336 = arith.constant 0.000000e+00 : f32
    %827 = vector.broadcast %cst_335 : f32 to vector<8x128xf32>
    %828 = vector.broadcast %cst_336 : f32 to vector<8x128xf32>
    %829 = arith.select %826, %827, %828 : vector<8x128xi1>, vector<8x128xf32>
    %cst_337 = arith.constant 0.000000e+00 : f32
    %830 = vector.broadcast %cst_337 : f32 to vector<8x128xf32>
    %831 = arith.cmpf oge, %795, %830 : vector<8x128xf32>
    %cst_338 = arith.constant 0.000000e+00 : f32
    %832 = vector.broadcast %cst_338 : f32 to vector<8x128xf32>
    %833 = arith.cmpf olt, %797, %832 : vector<8x128xf32>
    %834 = arith.andi %831, %833 : vector<8x128xi1>
    %cst_339 = arith.constant 1.000000e+00 : f32
    %cst_340 = arith.constant 0.000000e+00 : f32
    %835 = vector.broadcast %cst_339 : f32 to vector<8x128xf32>
    %836 = vector.broadcast %cst_340 : f32 to vector<8x128xf32>
    %837 = arith.select %834, %835, %836 : vector<8x128xi1>, vector<8x128xf32>
    %cst_341 = arith.constant 0.000000e+00 : f32
    %838 = vector.broadcast %cst_341 : f32 to vector<8x128xf32>
    %839 = arith.cmpf oge, %797, %838 : vector<8x128xf32>
    %cst_342 = arith.constant 0.000000e+00 : f32
    %840 = vector.broadcast %cst_342 : f32 to vector<8x128xf32>
    %841 = arith.cmpf olt, %799, %840 : vector<8x128xf32>
    %842 = arith.andi %839, %841 : vector<8x128xi1>
    %cst_343 = arith.constant 1.000000e+00 : f32
    %cst_344 = arith.constant 0.000000e+00 : f32
    %843 = vector.broadcast %cst_343 : f32 to vector<8x128xf32>
    %844 = vector.broadcast %cst_344 : f32 to vector<8x128xf32>
    %845 = arith.select %842, %843, %844 : vector<8x128xi1>, vector<8x128xf32>
    %cst_345 = arith.constant 0.000000e+00 : f32
    %846 = vector.broadcast %cst_345 : f32 to vector<8x128xf32>
    %847 = arith.cmpf oge, %799, %846 : vector<8x128xf32>
    %cst_346 = arith.constant 0.000000e+00 : f32
    %848 = vector.broadcast %cst_346 : f32 to vector<8x128xf32>
    %849 = arith.cmpf olt, %801, %848 : vector<8x128xf32>
    %850 = arith.andi %847, %849 : vector<8x128xi1>
    %cst_347 = arith.constant 1.000000e+00 : f32
    %cst_348 = arith.constant 0.000000e+00 : f32
    %851 = vector.broadcast %cst_347 : f32 to vector<8x128xf32>
    %852 = vector.broadcast %cst_348 : f32 to vector<8x128xf32>
    %853 = arith.select %850, %851, %852 : vector<8x128xi1>, vector<8x128xf32>
    %cst_349 = arith.constant 0.000000e+00 : f32
    %854 = vector.broadcast %cst_349 : f32 to vector<8x128xf32>
    %855 = arith.cmpf oge, %801, %854 : vector<8x128xf32>
    %cst_350 = arith.constant 0.000000e+00 : f32
    %856 = vector.broadcast %cst_350 : f32 to vector<8x128xf32>
    %857 = arith.cmpf olt, %803, %856 : vector<8x128xf32>
    %858 = arith.andi %855, %857 : vector<8x128xi1>
    %cst_351 = arith.constant 1.000000e+00 : f32
    %cst_352 = arith.constant 0.000000e+00 : f32
    %859 = vector.broadcast %cst_351 : f32 to vector<8x128xf32>
    %860 = vector.broadcast %cst_352 : f32 to vector<8x128xf32>
    %861 = arith.select %858, %859, %860 : vector<8x128xi1>, vector<8x128xf32>
    %cst_353 = arith.constant 0.000000e+00 : f32
    %862 = vector.broadcast %cst_353 : f32 to vector<8x128xf32>
    %863 = arith.cmpf oge, %803, %862 : vector<8x128xf32>
    %cst_354 = arith.constant 0.000000e+00 : f32
    %864 = vector.broadcast %cst_354 : f32 to vector<8x128xf32>
    %865 = arith.cmpf olt, %805, %864 : vector<8x128xf32>
    %866 = arith.andi %863, %865 : vector<8x128xi1>
    %cst_355 = arith.constant 1.000000e+00 : f32
    %cst_356 = arith.constant 0.000000e+00 : f32
    %867 = vector.broadcast %cst_355 : f32 to vector<8x128xf32>
    %868 = vector.broadcast %cst_356 : f32 to vector<8x128xf32>
    %869 = arith.select %866, %867, %868 : vector<8x128xi1>, vector<8x128xf32>
    %cst_357 = arith.constant 0.000000e+00 : f32
    %870 = vector.broadcast %cst_357 : f32 to vector<8x128xf32>
    %871 = arith.cmpf oge, %805, %870 : vector<8x128xf32>
    %cst_358 = arith.constant 0.000000e+00 : f32
    %872 = vector.broadcast %cst_358 : f32 to vector<8x128xf32>
    %873 = arith.cmpf olt, %807, %872 : vector<8x128xf32>
    %874 = arith.andi %871, %873 : vector<8x128xi1>
    %cst_359 = arith.constant 1.000000e+00 : f32
    %cst_360 = arith.constant 0.000000e+00 : f32
    %875 = vector.broadcast %cst_359 : f32 to vector<8x128xf32>
    %876 = vector.broadcast %cst_360 : f32 to vector<8x128xf32>
    %877 = arith.select %874, %875, %876 : vector<8x128xi1>, vector<8x128xf32>
    %cst_361 = arith.constant 0.000000e+00 : f32
    %878 = vector.broadcast %cst_361 : f32 to vector<8x128xf32>
    %879 = arith.cmpf oge, %807, %878 : vector<8x128xf32>
    %cst_362 = arith.constant 0.000000e+00 : f32
    %880 = vector.broadcast %cst_362 : f32 to vector<8x128xf32>
    %881 = arith.cmpf olt, %809, %880 : vector<8x128xf32>
    %882 = arith.andi %879, %881 : vector<8x128xi1>
    %cst_363 = arith.constant 1.000000e+00 : f32
    %cst_364 = arith.constant 0.000000e+00 : f32
    %883 = vector.broadcast %cst_363 : f32 to vector<8x128xf32>
    %884 = vector.broadcast %cst_364 : f32 to vector<8x128xf32>
    %885 = arith.select %882, %883, %884 : vector<8x128xi1>, vector<8x128xf32>
    %cst_365 = arith.constant 0.000000e+00 : f32
    %886 = vector.broadcast %cst_365 : f32 to vector<8x128xf32>
    %887 = arith.cmpf oge, %809, %886 : vector<8x128xf32>
    %cst_366 = arith.constant 0.000000e+00 : f32
    %888 = vector.broadcast %cst_366 : f32 to vector<8x128xf32>
    %889 = arith.cmpf olt, %811, %888 : vector<8x128xf32>
    %890 = arith.andi %887, %889 : vector<8x128xi1>
    %cst_367 = arith.constant 1.000000e+00 : f32
    %cst_368 = arith.constant 0.000000e+00 : f32
    %891 = vector.broadcast %cst_367 : f32 to vector<8x128xf32>
    %892 = vector.broadcast %cst_368 : f32 to vector<8x128xf32>
    %893 = arith.select %890, %891, %892 : vector<8x128xi1>, vector<8x128xf32>
    %cst_369 = arith.constant 0.000000e+00 : f32
    %894 = vector.broadcast %cst_369 : f32 to vector<8x128xf32>
    %895 = arith.cmpf oge, %811, %894 : vector<8x128xf32>
    %cst_370 = arith.constant 0.000000e+00 : f32
    %896 = vector.broadcast %cst_370 : f32 to vector<8x128xf32>
    %897 = arith.cmpf olt, %813, %896 : vector<8x128xf32>
    %898 = arith.andi %895, %897 : vector<8x128xi1>
    %cst_371 = arith.constant 1.000000e+00 : f32
    %cst_372 = arith.constant 0.000000e+00 : f32
    %899 = vector.broadcast %cst_371 : f32 to vector<8x128xf32>
    %900 = vector.broadcast %cst_372 : f32 to vector<8x128xf32>
    %901 = arith.select %898, %899, %900 : vector<8x128xi1>, vector<8x128xf32>
    %902 = arith.mulf %791, %821 : vector<8x128xf32>
    %903 = arith.mulf %793, %829 : vector<8x128xf32>
    %904 = arith.mulf %795, %837 : vector<8x128xf32>
    %905 = arith.mulf %797, %845 : vector<8x128xf32>
    %906 = arith.mulf %799, %853 : vector<8x128xf32>
    %907 = arith.mulf %801, %861 : vector<8x128xf32>
    %908 = arith.mulf %803, %869 : vector<8x128xf32>
    %909 = arith.mulf %805, %877 : vector<8x128xf32>
    %910 = arith.mulf %807, %885 : vector<8x128xf32>
    %911 = arith.mulf %809, %893 : vector<8x128xf32>
    %912 = arith.mulf %811, %901 : vector<8x128xf32>
    %cst_373 = arith.constant 4.000000e-01 : f32
    %913 = vector.broadcast %cst_373 : f32 to vector<8x128xf32>
    %914 = arith.mulf %913, %829 : vector<8x128xf32>
    %915 = arith.addf %902, %914 : vector<8x128xf32>
    %916 = arith.subf %915, %903 : vector<8x128xf32>
    %cst_374 = arith.constant 2.500000e+00 : f32
    %917 = vector.broadcast %cst_374 : f32 to vector<8x128xf32>
    %918 = arith.mulf %916, %917 : vector<8x128xf32>
    %cst_375 = arith.constant 4.000000e-01 : f32
    %919 = vector.broadcast %cst_375 : f32 to vector<8x128xf32>
    %920 = arith.mulf %919, %837 : vector<8x128xf32>
    %921 = arith.addf %903, %920 : vector<8x128xf32>
    %922 = arith.subf %921, %904 : vector<8x128xf32>
    %cst_376 = arith.constant 2.500000e+00 : f32
    %923 = vector.broadcast %cst_376 : f32 to vector<8x128xf32>
    %924 = arith.mulf %922, %923 : vector<8x128xf32>
    %cst_377 = arith.constant 4.000000e-01 : f32
    %925 = vector.broadcast %cst_377 : f32 to vector<8x128xf32>
    %926 = arith.mulf %925, %845 : vector<8x128xf32>
    %927 = arith.addf %904, %926 : vector<8x128xf32>
    %928 = arith.subf %927, %905 : vector<8x128xf32>
    %cst_378 = arith.constant 2.500000e+00 : f32
    %929 = vector.broadcast %cst_378 : f32 to vector<8x128xf32>
    %930 = arith.mulf %928, %929 : vector<8x128xf32>
    %cst_379 = arith.constant 4.000000e-01 : f32
    %931 = vector.broadcast %cst_379 : f32 to vector<8x128xf32>
    %932 = arith.mulf %931, %853 : vector<8x128xf32>
    %933 = arith.addf %905, %932 : vector<8x128xf32>
    %934 = arith.subf %933, %906 : vector<8x128xf32>
    %cst_380 = arith.constant 2.500000e+00 : f32
    %935 = vector.broadcast %cst_380 : f32 to vector<8x128xf32>
    %936 = arith.mulf %934, %935 : vector<8x128xf32>
    %cst_381 = arith.constant 4.000000e-01 : f32
    %937 = vector.broadcast %cst_381 : f32 to vector<8x128xf32>
    %938 = arith.mulf %937, %861 : vector<8x128xf32>
    %939 = arith.addf %906, %938 : vector<8x128xf32>
    %940 = arith.subf %939, %907 : vector<8x128xf32>
    %cst_382 = arith.constant 2.500000e+00 : f32
    %941 = vector.broadcast %cst_382 : f32 to vector<8x128xf32>
    %942 = arith.mulf %940, %941 : vector<8x128xf32>
    %cst_383 = arith.constant 4.000000e-01 : f32
    %943 = vector.broadcast %cst_383 : f32 to vector<8x128xf32>
    %944 = arith.mulf %943, %869 : vector<8x128xf32>
    %945 = arith.addf %907, %944 : vector<8x128xf32>
    %946 = arith.subf %945, %908 : vector<8x128xf32>
    %cst_384 = arith.constant 2.500000e+00 : f32
    %947 = vector.broadcast %cst_384 : f32 to vector<8x128xf32>
    %948 = arith.mulf %946, %947 : vector<8x128xf32>
    %cst_385 = arith.constant 4.000000e-01 : f32
    %949 = vector.broadcast %cst_385 : f32 to vector<8x128xf32>
    %950 = arith.mulf %949, %877 : vector<8x128xf32>
    %951 = arith.addf %908, %950 : vector<8x128xf32>
    %952 = arith.subf %951, %909 : vector<8x128xf32>
    %cst_386 = arith.constant 2.500000e+00 : f32
    %953 = vector.broadcast %cst_386 : f32 to vector<8x128xf32>
    %954 = arith.mulf %952, %953 : vector<8x128xf32>
    %cst_387 = arith.constant 4.000000e-01 : f32
    %955 = vector.broadcast %cst_387 : f32 to vector<8x128xf32>
    %956 = arith.mulf %955, %885 : vector<8x128xf32>
    %957 = arith.addf %909, %956 : vector<8x128xf32>
    %958 = arith.subf %957, %910 : vector<8x128xf32>
    %cst_388 = arith.constant 2.500000e+00 : f32
    %959 = vector.broadcast %cst_388 : f32 to vector<8x128xf32>
    %960 = arith.mulf %958, %959 : vector<8x128xf32>
    %cst_389 = arith.constant 4.000000e-01 : f32
    %961 = vector.broadcast %cst_389 : f32 to vector<8x128xf32>
    %962 = arith.mulf %961, %893 : vector<8x128xf32>
    %963 = arith.addf %910, %962 : vector<8x128xf32>
    %964 = arith.subf %963, %911 : vector<8x128xf32>
    %cst_390 = arith.constant 2.500000e+00 : f32
    %965 = vector.broadcast %cst_390 : f32 to vector<8x128xf32>
    %966 = arith.mulf %964, %965 : vector<8x128xf32>
    %cst_391 = arith.constant 4.000000e-01 : f32
    %967 = vector.broadcast %cst_391 : f32 to vector<8x128xf32>
    %968 = arith.mulf %967, %901 : vector<8x128xf32>
    %969 = arith.addf %911, %968 : vector<8x128xf32>
    %970 = arith.subf %969, %912 : vector<8x128xf32>
    %cst_392 = arith.constant 2.500000e+00 : f32
    %971 = vector.broadcast %cst_392 : f32 to vector<8x128xf32>
    %972 = arith.mulf %970, %971 : vector<8x128xf32>
    %973 = arith.mulf %791, %918 : vector<8x128xf32>
    %974 = arith.mulf %793, %924 : vector<8x128xf32>
    %975 = arith.mulf %795, %930 : vector<8x128xf32>
    %976 = arith.mulf %797, %936 : vector<8x128xf32>
    %977 = arith.mulf %799, %942 : vector<8x128xf32>
    %978 = arith.mulf %801, %948 : vector<8x128xf32>
    %979 = arith.mulf %803, %954 : vector<8x128xf32>
    %980 = arith.mulf %805, %960 : vector<8x128xf32>
    %981 = arith.mulf %807, %966 : vector<8x128xf32>
    %982 = arith.mulf %809, %972 : vector<8x128xf32>
    %cst_393 = arith.constant 8.000000e-01 : f32
    %983 = vector.broadcast %cst_393 : f32 to vector<8x128xf32>
    %984 = arith.mulf %983, %924 : vector<8x128xf32>
    %985 = arith.addf %973, %984 : vector<8x128xf32>
    %986 = arith.subf %985, %974 : vector<8x128xf32>
    %cst_394 = arith.constant 1.250000e+00 : f32
    %987 = vector.broadcast %cst_394 : f32 to vector<8x128xf32>
    %988 = arith.mulf %986, %987 : vector<8x128xf32>
    %cst_395 = arith.constant 8.000000e-01 : f32
    %989 = vector.broadcast %cst_395 : f32 to vector<8x128xf32>
    %990 = arith.mulf %989, %930 : vector<8x128xf32>
    %991 = arith.addf %974, %990 : vector<8x128xf32>
    %992 = arith.subf %991, %975 : vector<8x128xf32>
    %cst_396 = arith.constant 1.250000e+00 : f32
    %993 = vector.broadcast %cst_396 : f32 to vector<8x128xf32>
    %994 = arith.mulf %992, %993 : vector<8x128xf32>
    %cst_397 = arith.constant 8.000000e-01 : f32
    %995 = vector.broadcast %cst_397 : f32 to vector<8x128xf32>
    %996 = arith.mulf %995, %936 : vector<8x128xf32>
    %997 = arith.addf %975, %996 : vector<8x128xf32>
    %998 = arith.subf %997, %976 : vector<8x128xf32>
    %cst_398 = arith.constant 1.250000e+00 : f32
    %999 = vector.broadcast %cst_398 : f32 to vector<8x128xf32>
    %1000 = arith.mulf %998, %999 : vector<8x128xf32>
    %cst_399 = arith.constant 8.000000e-01 : f32
    %1001 = vector.broadcast %cst_399 : f32 to vector<8x128xf32>
    %1002 = arith.mulf %1001, %942 : vector<8x128xf32>
    %1003 = arith.addf %976, %1002 : vector<8x128xf32>
    %1004 = arith.subf %1003, %977 : vector<8x128xf32>
    %cst_400 = arith.constant 1.250000e+00 : f32
    %1005 = vector.broadcast %cst_400 : f32 to vector<8x128xf32>
    %1006 = arith.mulf %1004, %1005 : vector<8x128xf32>
    %cst_401 = arith.constant 8.000000e-01 : f32
    %1007 = vector.broadcast %cst_401 : f32 to vector<8x128xf32>
    %1008 = arith.mulf %1007, %948 : vector<8x128xf32>
    %1009 = arith.addf %977, %1008 : vector<8x128xf32>
    %1010 = arith.subf %1009, %978 : vector<8x128xf32>
    %cst_402 = arith.constant 1.250000e+00 : f32
    %1011 = vector.broadcast %cst_402 : f32 to vector<8x128xf32>
    %1012 = arith.mulf %1010, %1011 : vector<8x128xf32>
    %cst_403 = arith.constant 8.000000e-01 : f32
    %1013 = vector.broadcast %cst_403 : f32 to vector<8x128xf32>
    %1014 = arith.mulf %1013, %954 : vector<8x128xf32>
    %1015 = arith.addf %978, %1014 : vector<8x128xf32>
    %1016 = arith.subf %1015, %979 : vector<8x128xf32>
    %cst_404 = arith.constant 1.250000e+00 : f32
    %1017 = vector.broadcast %cst_404 : f32 to vector<8x128xf32>
    %1018 = arith.mulf %1016, %1017 : vector<8x128xf32>
    %cst_405 = arith.constant 8.000000e-01 : f32
    %1019 = vector.broadcast %cst_405 : f32 to vector<8x128xf32>
    %1020 = arith.mulf %1019, %960 : vector<8x128xf32>
    %1021 = arith.addf %979, %1020 : vector<8x128xf32>
    %1022 = arith.subf %1021, %980 : vector<8x128xf32>
    %cst_406 = arith.constant 1.250000e+00 : f32
    %1023 = vector.broadcast %cst_406 : f32 to vector<8x128xf32>
    %1024 = arith.mulf %1022, %1023 : vector<8x128xf32>
    %cst_407 = arith.constant 8.000000e-01 : f32
    %1025 = vector.broadcast %cst_407 : f32 to vector<8x128xf32>
    %1026 = arith.mulf %1025, %966 : vector<8x128xf32>
    %1027 = arith.addf %980, %1026 : vector<8x128xf32>
    %1028 = arith.subf %1027, %981 : vector<8x128xf32>
    %cst_408 = arith.constant 1.250000e+00 : f32
    %1029 = vector.broadcast %cst_408 : f32 to vector<8x128xf32>
    %1030 = arith.mulf %1028, %1029 : vector<8x128xf32>
    %cst_409 = arith.constant 8.000000e-01 : f32
    %1031 = vector.broadcast %cst_409 : f32 to vector<8x128xf32>
    %1032 = arith.mulf %1031, %972 : vector<8x128xf32>
    %1033 = arith.addf %981, %1032 : vector<8x128xf32>
    %1034 = arith.subf %1033, %982 : vector<8x128xf32>
    %cst_410 = arith.constant 1.250000e+00 : f32
    %1035 = vector.broadcast %cst_410 : f32 to vector<8x128xf32>
    %1036 = arith.mulf %1034, %1035 : vector<8x128xf32>
    %1037 = arith.mulf %791, %988 : vector<8x128xf32>
    %1038 = arith.mulf %793, %994 : vector<8x128xf32>
    %1039 = arith.mulf %795, %1000 : vector<8x128xf32>
    %1040 = arith.mulf %797, %1006 : vector<8x128xf32>
    %1041 = arith.mulf %799, %1012 : vector<8x128xf32>
    %1042 = arith.mulf %801, %1018 : vector<8x128xf32>
    %1043 = arith.mulf %803, %1024 : vector<8x128xf32>
    %1044 = arith.mulf %805, %1030 : vector<8x128xf32>
    %1045 = arith.mulf %807, %1036 : vector<8x128xf32>
    %cst_411 = arith.constant 1.200000e+00 : f32
    %1046 = vector.broadcast %cst_411 : f32 to vector<8x128xf32>
    %1047 = arith.mulf %1046, %994 : vector<8x128xf32>
    %1048 = arith.addf %1037, %1047 : vector<8x128xf32>
    %1049 = arith.subf %1048, %1038 : vector<8x128xf32>
    %cst_412 = arith.constant 0.833333313 : f32
    %1050 = vector.broadcast %cst_412 : f32 to vector<8x128xf32>
    %1051 = arith.mulf %1049, %1050 : vector<8x128xf32>
    %cst_413 = arith.constant 1.200000e+00 : f32
    %1052 = vector.broadcast %cst_413 : f32 to vector<8x128xf32>
    %1053 = arith.mulf %1052, %1000 : vector<8x128xf32>
    %1054 = arith.addf %1038, %1053 : vector<8x128xf32>
    %1055 = arith.subf %1054, %1039 : vector<8x128xf32>
    %cst_414 = arith.constant 0.833333313 : f32
    %1056 = vector.broadcast %cst_414 : f32 to vector<8x128xf32>
    %1057 = arith.mulf %1055, %1056 : vector<8x128xf32>
    %cst_415 = arith.constant 1.200000e+00 : f32
    %1058 = vector.broadcast %cst_415 : f32 to vector<8x128xf32>
    %1059 = arith.mulf %1058, %1006 : vector<8x128xf32>
    %1060 = arith.addf %1039, %1059 : vector<8x128xf32>
    %1061 = arith.subf %1060, %1040 : vector<8x128xf32>
    %cst_416 = arith.constant 0.833333313 : f32
    %1062 = vector.broadcast %cst_416 : f32 to vector<8x128xf32>
    %1063 = arith.mulf %1061, %1062 : vector<8x128xf32>
    %cst_417 = arith.constant 1.200000e+00 : f32
    %1064 = vector.broadcast %cst_417 : f32 to vector<8x128xf32>
    %1065 = arith.mulf %1064, %1012 : vector<8x128xf32>
    %1066 = arith.addf %1040, %1065 : vector<8x128xf32>
    %1067 = arith.subf %1066, %1041 : vector<8x128xf32>
    %cst_418 = arith.constant 0.833333313 : f32
    %1068 = vector.broadcast %cst_418 : f32 to vector<8x128xf32>
    %1069 = arith.mulf %1067, %1068 : vector<8x128xf32>
    %cst_419 = arith.constant 1.200000e+00 : f32
    %1070 = vector.broadcast %cst_419 : f32 to vector<8x128xf32>
    %1071 = arith.mulf %1070, %1018 : vector<8x128xf32>
    %1072 = arith.addf %1041, %1071 : vector<8x128xf32>
    %1073 = arith.subf %1072, %1042 : vector<8x128xf32>
    %cst_420 = arith.constant 0.833333313 : f32
    %1074 = vector.broadcast %cst_420 : f32 to vector<8x128xf32>
    %1075 = arith.mulf %1073, %1074 : vector<8x128xf32>
    %cst_421 = arith.constant 1.200000e+00 : f32
    %1076 = vector.broadcast %cst_421 : f32 to vector<8x128xf32>
    %1077 = arith.mulf %1076, %1024 : vector<8x128xf32>
    %1078 = arith.addf %1042, %1077 : vector<8x128xf32>
    %1079 = arith.subf %1078, %1043 : vector<8x128xf32>
    %cst_422 = arith.constant 0.833333313 : f32
    %1080 = vector.broadcast %cst_422 : f32 to vector<8x128xf32>
    %1081 = arith.mulf %1079, %1080 : vector<8x128xf32>
    %cst_423 = arith.constant 1.200000e+00 : f32
    %1082 = vector.broadcast %cst_423 : f32 to vector<8x128xf32>
    %1083 = arith.mulf %1082, %1030 : vector<8x128xf32>
    %1084 = arith.addf %1043, %1083 : vector<8x128xf32>
    %1085 = arith.subf %1084, %1044 : vector<8x128xf32>
    %cst_424 = arith.constant 0.833333313 : f32
    %1086 = vector.broadcast %cst_424 : f32 to vector<8x128xf32>
    %1087 = arith.mulf %1085, %1086 : vector<8x128xf32>
    %cst_425 = arith.constant 1.200000e+00 : f32
    %1088 = vector.broadcast %cst_425 : f32 to vector<8x128xf32>
    %1089 = arith.mulf %1088, %1036 : vector<8x128xf32>
    %1090 = arith.addf %1044, %1089 : vector<8x128xf32>
    %1091 = arith.subf %1090, %1045 : vector<8x128xf32>
    %cst_426 = arith.constant 0.833333313 : f32
    %1092 = vector.broadcast %cst_426 : f32 to vector<8x128xf32>
    %1093 = arith.mulf %1091, %1092 : vector<8x128xf32>
    %1094 = arith.truncf %1051 : vector<8x128xf32> to vector<8x128xbf16>
    %c0_427 = arith.constant 0 : index
    %c128_428 = arith.constant 128 : index
    %1095 = vector.load %arg25[%c0_427, %c128_428] : memref<8x4608xbf16, #tpu.memory_space<vmem>>, vector<8x128xbf16>
    tpu.vector_store %arg25[%c0_427, %c128_428], %1094 {strides = array<i32>} : memref<8x4608xbf16, #tpu.memory_space<vmem>>, vector<8x128xbf16>,
    %1096 = arith.truncf %1057 : vector<8x128xf32> to vector<8x128xbf16>
    %c0_429 = arith.constant 0 : index
    %c256_430 = arith.constant 256 : index
    %1097 = vector.load %arg25[%c0_429, %c256_430] : memref<8x4608xbf16, #tpu.memory_space<vmem>>, vector<8x128xbf16>
    tpu.vector_store %arg25[%c0_429, %c256_430], %1096 {strides = array<i32>} : memref<8x4608xbf16, #tpu.memory_space<vmem>>, vector<8x128xbf16>,
    %1098 = arith.truncf %1063 : vector<8x128xf32> to vector<8x128xbf16>
    %c0_431 = arith.constant 0 : index
    %c384_432 = arith.constant 384 : index
    %1099 = vector.load %arg25[%c0_431, %c384_432] : memref<8x4608xbf16, #tpu.memory_space<vmem>>, vector<8x128xbf16>
    tpu.vector_store %arg25[%c0_431, %c384_432], %1098 {strides = array<i32>} : memref<8x4608xbf16, #tpu.memory_space<vmem>>, vector<8x128xbf16>,
    %1100 = arith.truncf %1069 : vector<8x128xf32> to vector<8x128xbf16>
    %c0_433 = arith.constant 0 : index
    %c512_434 = arith.constant 512 : index
    %1101 = vector.load %arg25[%c0_433, %c512_434] : memref<8x4608xbf16, #tpu.memory_space<vmem>>, vector<8x128xbf16>
    tpu.vector_store %arg25[%c0_433, %c512_434], %1100 {strides = array<i32>} : memref<8x4608xbf16, #tpu.memory_space<vmem>>, vector<8x128xbf16>,
    %1102 = arith.truncf %1075 : vector<8x128xf32> to vector<8x128xbf16>
    %c0_435 = arith.constant 0 : index
    %c640 = arith.constant 640 : index
    %1103 = vector.load %arg25[%c0_435, %c640] : memref<8x4608xbf16, #tpu.memory_space<vmem>>, vector<8x128xbf16>
    tpu.vector_store %arg25[%c0_435, %c640], %1102 {strides = array<i32>} : memref<8x4608xbf16, #tpu.memory_space<vmem>>, vector<8x128xbf16>,
    %1104 = arith.truncf %1081 : vector<8x128xf32> to vector<8x128xbf16>
    %c0_436 = arith.constant 0 : index
    %c768_437 = arith.constant 768 : index
    %1105 = vector.load %arg25[%c0_436, %c768_437] : memref<8x4608xbf16, #tpu.memory_space<vmem>>, vector<8x128xbf16>
    tpu.vector_store %arg25[%c0_436, %c768_437], %1104 {strides = array<i32>} : memref<8x4608xbf16, #tpu.memory_space<vmem>>, vector<8x128xbf16>,
    %1106 = arith.truncf %1087 : vector<8x128xf32> to vector<8x128xbf16>
    %c0_438 = arith.constant 0 : index
    %c896 = arith.constant 896 : index
    %1107 = vector.load %arg25[%c0_438, %c896] : memref<8x4608xbf16, #tpu.memory_space<vmem>>, vector<8x128xbf16>
    tpu.vector_store %arg25[%c0_438, %c896], %1106 {strides = array<i32>} : memref<8x4608xbf16, #tpu.memory_space<vmem>>, vector<8x128xbf16>,
    %1108 = arith.truncf %1093 : vector<8x128xf32> to vector<8x128xbf16>
    %c0_439 = arith.constant 0 : index
    %c1024_440 = arith.constant 1024 : index
    %1109 = vector.load %arg25[%c0_439, %c1024_440] : memref<8x4608xbf16, #tpu.memory_space<vmem>>, vector<8x128xbf16>
    tpu.vector_store %arg25[%c0_439, %c1024_440], %1108 {strides = array<i32>} : memref<8x4608xbf16, #tpu.memory_space<vmem>>, vector<8x128xbf16>,
    %c0_441 = arith.constant 0 : index
    %c0_442 = arith.constant 0 : index
    %1110 = vector.load %arg25[%c0_441, %c0_442] : memref<8x4608xbf16, #tpu.memory_space<vmem>>, vector<8x1152xbf16>
    %c0_443 = arith.constant 0 : index
    %c0_444 = arith.constant 0 : index
    %1111 = vector.load %arg16[%c0_443, %c0_444] : memref<1152x8xbf16, #tpu.memory_space<vmem>>, vector<1152x8xbf16>
    %cst_445 = arith.constant dense<0.000000e+00> : vector<8x8xf32>
    %1112 = tpu.matmul %1110, %1111, %cst_445 {dimension_numbers = #tpu.dot_dimension_numbers<[1], [0], [0], [1], [0, 0, 1, 1], [], []>} : vector<8x1152xbf16>, vector<1152x8xbf16>, vector<8x8xf32> -> vector<8x8xf32>
    %cst_446 = arith.constant 0.000000e+00 : f32
    %1113 = vector.broadcast %cst_446 : f32 to vector<8x8xf32>
    %1114 = arith.maximumf %1112, %1113 : vector<8x8xf32>
    %c0_447 = arith.constant 0 : index
    %c0_448 = arith.constant 0 : index
    %1115 = vector.load %arg17[%c0_447, %c0_448] : memref<9x8xf32, #tpu.memory_space<vmem>>, vector<9x8xf32>
    %cst_449 = arith.constant 0.000000e+00 : f32
    %1116 = vector.broadcast %cst_449 : f32 to vector<8x8xf32>
    %1117 = arith.subf %1116, %1114 : vector<8x8xf32>
    %1118 = math.exp %1117 : vector<8x8xf32>
    %cst_450 = arith.constant 1.000000e+00 : f32
    %1119 = vector.broadcast %cst_450 : f32 to vector<8x8xf32>
    %1120 = arith.addf %1119, %1118 : vector<8x8xf32>
    %cst_451 = arith.constant 1.000000e+00 : f32
    %1121 = vector.broadcast %cst_451 : f32 to vector<8x8xf32>
    %1122 = arith.divf %1121, %1120 : vector<8x8xf32>
    %1123 = arith.mulf %1114, %1122 : vector<8x8xf32>
    %1124 = vector.extract_strided_slice %1115 {offsets = [0, 0], sizes = [1, 8], strides = [1, 1]} : vector<9x8xf32> to vector<1x8xf32>
    %1125 = vector.broadcast %1124 : vector<1x8xf32> to vector<8x8xf32>
    %1126 = arith.mulf %1123, %1125 : vector<8x8xf32>
    %cst_452 = arith.constant -2.200000e+00 : f32
    %1127 = vector.broadcast %cst_452 : f32 to vector<8x8xf32>
    %1128 = arith.subf %1114, %1127 : vector<8x8xf32>
    %cst_453 = arith.constant -1.800000e+00 : f32
    %1129 = vector.broadcast %cst_453 : f32 to vector<8x8xf32>
    %1130 = arith.subf %1114, %1129 : vector<8x8xf32>
    %cst_454 = arith.constant -1.400000e+00 : f32
    %1131 = vector.broadcast %cst_454 : f32 to vector<8x8xf32>
    %1132 = arith.subf %1114, %1131 : vector<8x8xf32>
    %cst_455 = arith.constant -1.000000e+00 : f32
    %1133 = vector.broadcast %cst_455 : f32 to vector<8x8xf32>
    %1134 = arith.subf %1114, %1133 : vector<8x8xf32>
    %cst_456 = arith.constant -6.000000e-01 : f32
    %1135 = vector.broadcast %cst_456 : f32 to vector<8x8xf32>
    %1136 = arith.subf %1114, %1135 : vector<8x8xf32>
    %cst_457 = arith.constant -2.000000e-01 : f32
    %1137 = vector.broadcast %cst_457 : f32 to vector<8x8xf32>
    %1138 = arith.subf %1114, %1137 : vector<8x8xf32>
    %cst_458 = arith.constant 2.000000e-01 : f32
    %1139 = vector.broadcast %cst_458 : f32 to vector<8x8xf32>
    %1140 = arith.subf %1114, %1139 : vector<8x8xf32>
    %cst_459 = arith.constant 6.000000e-01 : f32
    %1141 = vector.broadcast %cst_459 : f32 to vector<8x8xf32>
    %1142 = arith.subf %1114, %1141 : vector<8x8xf32>
    %cst_460 = arith.constant 1.000000e+00 : f32
    %1143 = vector.broadcast %cst_460 : f32 to vector<8x8xf32>
    %1144 = arith.subf %1114, %1143 : vector<8x8xf32>
    %cst_461 = arith.constant 1.400000e+00 : f32
    %1145 = vector.broadcast %cst_461 : f32 to vector<8x8xf32>
    %1146 = arith.subf %1114, %1145 : vector<8x8xf32>
    %cst_462 = arith.constant 1.800000e+00 : f32
    %1147 = vector.broadcast %cst_462 : f32 to vector<8x8xf32>
    %1148 = arith.subf %1114, %1147 : vector<8x8xf32>
    %cst_463 = arith.constant 2.200000e+00 : f32
    %1149 = vector.broadcast %cst_463 : f32 to vector<8x8xf32>
    %1150 = arith.subf %1114, %1149 : vector<8x8xf32>
    %cst_464 = arith.constant 0.000000e+00 : f32
    %1151 = vector.broadcast %cst_464 : f32 to vector<8x8xf32>
    %1152 = arith.cmpf oge, %1128, %1151 : vector<8x8xf32>
    %cst_465 = arith.constant 0.000000e+00 : f32
    %1153 = vector.broadcast %cst_465 : f32 to vector<8x8xf32>
    %1154 = arith.cmpf olt, %1130, %1153 : vector<8x8xf32>
    %1155 = arith.andi %1152, %1154 : vector<8x8xi1>
    %cst_466 = arith.constant 1.000000e+00 : f32
    %cst_467 = arith.constant 0.000000e+00 : f32
    %1156 = vector.broadcast %cst_466 : f32 to vector<8x8xf32>
    %1157 = vector.broadcast %cst_467 : f32 to vector<8x8xf32>
    %1158 = arith.select %1155, %1156, %1157 : vector<8x8xi1>, vector<8x8xf32>
    %cst_468 = arith.constant 0.000000e+00 : f32
    %1159 = vector.broadcast %cst_468 : f32 to vector<8x8xf32>
    %1160 = arith.cmpf oge, %1130, %1159 : vector<8x8xf32>
    %cst_469 = arith.constant 0.000000e+00 : f32
    %1161 = vector.broadcast %cst_469 : f32 to vector<8x8xf32>
    %1162 = arith.cmpf olt, %1132, %1161 : vector<8x8xf32>
    %1163 = arith.andi %1160, %1162 : vector<8x8xi1>
    %cst_470 = arith.constant 1.000000e+00 : f32
    %cst_471 = arith.constant 0.000000e+00 : f32
    %1164 = vector.broadcast %cst_470 : f32 to vector<8x8xf32>
    %1165 = vector.broadcast %cst_471 : f32 to vector<8x8xf32>
    %1166 = arith.select %1163, %1164, %1165 : vector<8x8xi1>, vector<8x8xf32>
    %cst_472 = arith.constant 0.000000e+00 : f32
    %1167 = vector.broadcast %cst_472 : f32 to vector<8x8xf32>
    %1168 = arith.cmpf oge, %1132, %1167 : vector<8x8xf32>
    %cst_473 = arith.constant 0.000000e+00 : f32
    %1169 = vector.broadcast %cst_473 : f32 to vector<8x8xf32>
    %1170 = arith.cmpf olt, %1134, %1169 : vector<8x8xf32>
    %1171 = arith.andi %1168, %1170 : vector<8x8xi1>
    %cst_474 = arith.constant 1.000000e+00 : f32
    %cst_475 = arith.constant 0.000000e+00 : f32
    %1172 = vector.broadcast %cst_474 : f32 to vector<8x8xf32>
    %1173 = vector.broadcast %cst_475 : f32 to vector<8x8xf32>
    %1174 = arith.select %1171, %1172, %1173 : vector<8x8xi1>, vector<8x8xf32>
    %cst_476 = arith.constant 0.000000e+00 : f32
    %1175 = vector.broadcast %cst_476 : f32 to vector<8x8xf32>
    %1176 = arith.cmpf oge, %1134, %1175 : vector<8x8xf32>
    %cst_477 = arith.constant 0.000000e+00 : f32
    %1177 = vector.broadcast %cst_477 : f32 to vector<8x8xf32>
    %1178 = arith.cmpf olt, %1136, %1177 : vector<8x8xf32>
    %1179 = arith.andi %1176, %1178 : vector<8x8xi1>
    %cst_478 = arith.constant 1.000000e+00 : f32
    %cst_479 = arith.constant 0.000000e+00 : f32
    %1180 = vector.broadcast %cst_478 : f32 to vector<8x8xf32>
    %1181 = vector.broadcast %cst_479 : f32 to vector<8x8xf32>
    %1182 = arith.select %1179, %1180, %1181 : vector<8x8xi1>, vector<8x8xf32>
    %cst_480 = arith.constant 0.000000e+00 : f32
    %1183 = vector.broadcast %cst_480 : f32 to vector<8x8xf32>
    %1184 = arith.cmpf oge, %1136, %1183 : vector<8x8xf32>
    %cst_481 = arith.constant 0.000000e+00 : f32
    %1185 = vector.broadcast %cst_481 : f32 to vector<8x8xf32>
    %1186 = arith.cmpf olt, %1138, %1185 : vector<8x8xf32>
    %1187 = arith.andi %1184, %1186 : vector<8x8xi1>
    %cst_482 = arith.constant 1.000000e+00 : f32
    %cst_483 = arith.constant 0.000000e+00 : f32
    %1188 = vector.broadcast %cst_482 : f32 to vector<8x8xf32>
    %1189 = vector.broadcast %cst_483 : f32 to vector<8x8xf32>
    %1190 = arith.select %1187, %1188, %1189 : vector<8x8xi1>, vector<8x8xf32>
    %cst_484 = arith.constant 0.000000e+00 : f32
    %1191 = vector.broadcast %cst_484 : f32 to vector<8x8xf32>
    %1192 = arith.cmpf oge, %1138, %1191 : vector<8x8xf32>
    %cst_485 = arith.constant 0.000000e+00 : f32
    %1193 = vector.broadcast %cst_485 : f32 to vector<8x8xf32>
    %1194 = arith.cmpf olt, %1140, %1193 : vector<8x8xf32>
    %1195 = arith.andi %1192, %1194 : vector<8x8xi1>
    %cst_486 = arith.constant 1.000000e+00 : f32
    %cst_487 = arith.constant 0.000000e+00 : f32
    %1196 = vector.broadcast %cst_486 : f32 to vector<8x8xf32>
    %1197 = vector.broadcast %cst_487 : f32 to vector<8x8xf32>
    %1198 = arith.select %1195, %1196, %1197 : vector<8x8xi1>, vector<8x8xf32>
    %cst_488 = arith.constant 0.000000e+00 : f32
    %1199 = vector.broadcast %cst_488 : f32 to vector<8x8xf32>
    %1200 = arith.cmpf oge, %1140, %1199 : vector<8x8xf32>
    %cst_489 = arith.constant 0.000000e+00 : f32
    %1201 = vector.broadcast %cst_489 : f32 to vector<8x8xf32>
    %1202 = arith.cmpf olt, %1142, %1201 : vector<8x8xf32>
    %1203 = arith.andi %1200, %1202 : vector<8x8xi1>
    %cst_490 = arith.constant 1.000000e+00 : f32
    %cst_491 = arith.constant 0.000000e+00 : f32
    %1204 = vector.broadcast %cst_490 : f32 to vector<8x8xf32>
    %1205 = vector.broadcast %cst_491 : f32 to vector<8x8xf32>
    %1206 = arith.select %1203, %1204, %1205 : vector<8x8xi1>, vector<8x8xf32>
    %cst_492 = arith.constant 0.000000e+00 : f32
    %1207 = vector.broadcast %cst_492 : f32 to vector<8x8xf32>
    %1208 = arith.cmpf oge, %1142, %1207 : vector<8x8xf32>
    %cst_493 = arith.constant 0.000000e+00 : f32
    %1209 = vector.broadcast %cst_493 : f32 to vector<8x8xf32>
    %1210 = arith.cmpf olt, %1144, %1209 : vector<8x8xf32>
    %1211 = arith.andi %1208, %1210 : vector<8x8xi1>
    %cst_494 = arith.constant 1.000000e+00 : f32
    %cst_495 = arith.constant 0.000000e+00 : f32
    %1212 = vector.broadcast %cst_494 : f32 to vector<8x8xf32>
    %1213 = vector.broadcast %cst_495 : f32 to vector<8x8xf32>
    %1214 = arith.select %1211, %1212, %1213 : vector<8x8xi1>, vector<8x8xf32>
    %cst_496 = arith.constant 0.000000e+00 : f32
    %1215 = vector.broadcast %cst_496 : f32 to vector<8x8xf32>
    %1216 = arith.cmpf oge, %1144, %1215 : vector<8x8xf32>
    %cst_497 = arith.constant 0.000000e+00 : f32
    %1217 = vector.broadcast %cst_497 : f32 to vector<8x8xf32>
    %1218 = arith.cmpf olt, %1146, %1217 : vector<8x8xf32>
    %1219 = arith.andi %1216, %1218 : vector<8x8xi1>
    %cst_498 = arith.constant 1.000000e+00 : f32
    %cst_499 = arith.constant 0.000000e+00 : f32
    %1220 = vector.broadcast %cst_498 : f32 to vector<8x8xf32>
    %1221 = vector.broadcast %cst_499 : f32 to vector<8x8xf32>
    %1222 = arith.select %1219, %1220, %1221 : vector<8x8xi1>, vector<8x8xf32>
    %cst_500 = arith.constant 0.000000e+00 : f32
    %1223 = vector.broadcast %cst_500 : f32 to vector<8x8xf32>
    %1224 = arith.cmpf oge, %1146, %1223 : vector<8x8xf32>
    %cst_501 = arith.constant 0.000000e+00 : f32
    %1225 = vector.broadcast %cst_501 : f32 to vector<8x8xf32>
    %1226 = arith.cmpf olt, %1148, %1225 : vector<8x8xf32>
    %1227 = arith.andi %1224, %1226 : vector<8x8xi1>
    %cst_502 = arith.constant 1.000000e+00 : f32
    %cst_503 = arith.constant 0.000000e+00 : f32
    %1228 = vector.broadcast %cst_502 : f32 to vector<8x8xf32>
    %1229 = vector.broadcast %cst_503 : f32 to vector<8x8xf32>
    %1230 = arith.select %1227, %1228, %1229 : vector<8x8xi1>, vector<8x8xf32>
    %cst_504 = arith.constant 0.000000e+00 : f32
    %1231 = vector.broadcast %cst_504 : f32 to vector<8x8xf32>
    %1232 = arith.cmpf oge, %1148, %1231 : vector<8x8xf32>
    %cst_505 = arith.constant 0.000000e+00 : f32
    %1233 = vector.broadcast %cst_505 : f32 to vector<8x8xf32>
    %1234 = arith.cmpf olt, %1150, %1233 : vector<8x8xf32>
    %1235 = arith.andi %1232, %1234 : vector<8x8xi1>
    %cst_506 = arith.constant 1.000000e+00 : f32
    %cst_507 = arith.constant 0.000000e+00 : f32
    %1236 = vector.broadcast %cst_506 : f32 to vector<8x8xf32>
    %1237 = vector.broadcast %cst_507 : f32 to vector<8x8xf32>
    %1238 = arith.select %1235, %1236, %1237 : vector<8x8xi1>, vector<8x8xf32>
    %1239 = arith.mulf %1128, %1158 : vector<8x8xf32>
    %1240 = arith.mulf %1130, %1166 : vector<8x8xf32>
    %1241 = arith.mulf %1132, %1174 : vector<8x8xf32>
    %1242 = arith.mulf %1134, %1182 : vector<8x8xf32>
    %1243 = arith.mulf %1136, %1190 : vector<8x8xf32>
    %1244 = arith.mulf %1138, %1198 : vector<8x8xf32>
    %1245 = arith.mulf %1140, %1206 : vector<8x8xf32>
    %1246 = arith.mulf %1142, %1214 : vector<8x8xf32>
    %1247 = arith.mulf %1144, %1222 : vector<8x8xf32>
    %1248 = arith.mulf %1146, %1230 : vector<8x8xf32>
    %1249 = arith.mulf %1148, %1238 : vector<8x8xf32>
    %cst_508 = arith.constant 4.000000e-01 : f32
    %1250 = vector.broadcast %cst_508 : f32 to vector<8x8xf32>
    %1251 = arith.mulf %1250, %1166 : vector<8x8xf32>
    %1252 = arith.addf %1239, %1251 : vector<8x8xf32>
    %1253 = arith.subf %1252, %1240 : vector<8x8xf32>
    %cst_509 = arith.constant 2.500000e+00 : f32
    %1254 = vector.broadcast %cst_509 : f32 to vector<8x8xf32>
    %1255 = arith.mulf %1253, %1254 : vector<8x8xf32>
    %cst_510 = arith.constant 4.000000e-01 : f32
    %1256 = vector.broadcast %cst_510 : f32 to vector<8x8xf32>
    %1257 = arith.mulf %1256, %1174 : vector<8x8xf32>
    %1258 = arith.addf %1240, %1257 : vector<8x8xf32>
    %1259 = arith.subf %1258, %1241 : vector<8x8xf32>
    %cst_511 = arith.constant 2.500000e+00 : f32
    %1260 = vector.broadcast %cst_511 : f32 to vector<8x8xf32>
    %1261 = arith.mulf %1259, %1260 : vector<8x8xf32>
    %cst_512 = arith.constant 4.000000e-01 : f32
    %1262 = vector.broadcast %cst_512 : f32 to vector<8x8xf32>
    %1263 = arith.mulf %1262, %1182 : vector<8x8xf32>
    %1264 = arith.addf %1241, %1263 : vector<8x8xf32>
    %1265 = arith.subf %1264, %1242 : vector<8x8xf32>
    %cst_513 = arith.constant 2.500000e+00 : f32
    %1266 = vector.broadcast %cst_513 : f32 to vector<8x8xf32>
    %1267 = arith.mulf %1265, %1266 : vector<8x8xf32>
    %cst_514 = arith.constant 4.000000e-01 : f32
    %1268 = vector.broadcast %cst_514 : f32 to vector<8x8xf32>
    %1269 = arith.mulf %1268, %1190 : vector<8x8xf32>
    %1270 = arith.addf %1242, %1269 : vector<8x8xf32>
    %1271 = arith.subf %1270, %1243 : vector<8x8xf32>
    %cst_515 = arith.constant 2.500000e+00 : f32
    %1272 = vector.broadcast %cst_515 : f32 to vector<8x8xf32>
    %1273 = arith.mulf %1271, %1272 : vector<8x8xf32>
    %cst_516 = arith.constant 4.000000e-01 : f32
    %1274 = vector.broadcast %cst_516 : f32 to vector<8x8xf32>
    %1275 = arith.mulf %1274, %1198 : vector<8x8xf32>
    %1276 = arith.addf %1243, %1275 : vector<8x8xf32>
    %1277 = arith.subf %1276, %1244 : vector<8x8xf32>
    %cst_517 = arith.constant 2.500000e+00 : f32
    %1278 = vector.broadcast %cst_517 : f32 to vector<8x8xf32>
    %1279 = arith.mulf %1277, %1278 : vector<8x8xf32>
    %cst_518 = arith.constant 4.000000e-01 : f32
    %1280 = vector.broadcast %cst_518 : f32 to vector<8x8xf32>
    %1281 = arith.mulf %1280, %1206 : vector<8x8xf32>
    %1282 = arith.addf %1244, %1281 : vector<8x8xf32>
    %1283 = arith.subf %1282, %1245 : vector<8x8xf32>
    %cst_519 = arith.constant 2.500000e+00 : f32
    %1284 = vector.broadcast %cst_519 : f32 to vector<8x8xf32>
    %1285 = arith.mulf %1283, %1284 : vector<8x8xf32>
    %cst_520 = arith.constant 4.000000e-01 : f32
    %1286 = vector.broadcast %cst_520 : f32 to vector<8x8xf32>
    %1287 = arith.mulf %1286, %1214 : vector<8x8xf32>
    %1288 = arith.addf %1245, %1287 : vector<8x8xf32>
    %1289 = arith.subf %1288, %1246 : vector<8x8xf32>
    %cst_521 = arith.constant 2.500000e+00 : f32
    %1290 = vector.broadcast %cst_521 : f32 to vector<8x8xf32>
    %1291 = arith.mulf %1289, %1290 : vector<8x8xf32>
    %cst_522 = arith.constant 4.000000e-01 : f32
    %1292 = vector.broadcast %cst_522 : f32 to vector<8x8xf32>
    %1293 = arith.mulf %1292, %1222 : vector<8x8xf32>
    %1294 = arith.addf %1246, %1293 : vector<8x8xf32>
    %1295 = arith.subf %1294, %1247 : vector<8x8xf32>
    %cst_523 = arith.constant 2.500000e+00 : f32
    %1296 = vector.broadcast %cst_523 : f32 to vector<8x8xf32>
    %1297 = arith.mulf %1295, %1296 : vector<8x8xf32>
    %cst_524 = arith.constant 4.000000e-01 : f32
    %1298 = vector.broadcast %cst_524 : f32 to vector<8x8xf32>
    %1299 = arith.mulf %1298, %1230 : vector<8x8xf32>
    %1300 = arith.addf %1247, %1299 : vector<8x8xf32>
    %1301 = arith.subf %1300, %1248 : vector<8x8xf32>
    %cst_525 = arith.constant 2.500000e+00 : f32
    %1302 = vector.broadcast %cst_525 : f32 to vector<8x8xf32>
    %1303 = arith.mulf %1301, %1302 : vector<8x8xf32>
    %cst_526 = arith.constant 4.000000e-01 : f32
    %1304 = vector.broadcast %cst_526 : f32 to vector<8x8xf32>
    %1305 = arith.mulf %1304, %1238 : vector<8x8xf32>
    %1306 = arith.addf %1248, %1305 : vector<8x8xf32>
    %1307 = arith.subf %1306, %1249 : vector<8x8xf32>
    %cst_527 = arith.constant 2.500000e+00 : f32
    %1308 = vector.broadcast %cst_527 : f32 to vector<8x8xf32>
    %1309 = arith.mulf %1307, %1308 : vector<8x8xf32>
    %1310 = arith.mulf %1128, %1255 : vector<8x8xf32>
    %1311 = arith.mulf %1130, %1261 : vector<8x8xf32>
    %1312 = arith.mulf %1132, %1267 : vector<8x8xf32>
    %1313 = arith.mulf %1134, %1273 : vector<8x8xf32>
    %1314 = arith.mulf %1136, %1279 : vector<8x8xf32>
    %1315 = arith.mulf %1138, %1285 : vector<8x8xf32>
    %1316 = arith.mulf %1140, %1291 : vector<8x8xf32>
    %1317 = arith.mulf %1142, %1297 : vector<8x8xf32>
    %1318 = arith.mulf %1144, %1303 : vector<8x8xf32>
    %1319 = arith.mulf %1146, %1309 : vector<8x8xf32>
    %cst_528 = arith.constant 8.000000e-01 : f32
    %1320 = vector.broadcast %cst_528 : f32 to vector<8x8xf32>
    %1321 = arith.mulf %1320, %1261 : vector<8x8xf32>
    %1322 = arith.addf %1310, %1321 : vector<8x8xf32>
    %1323 = arith.subf %1322, %1311 : vector<8x8xf32>
    %cst_529 = arith.constant 1.250000e+00 : f32
    %1324 = vector.broadcast %cst_529 : f32 to vector<8x8xf32>
    %1325 = arith.mulf %1323, %1324 : vector<8x8xf32>
    %cst_530 = arith.constant 8.000000e-01 : f32
    %1326 = vector.broadcast %cst_530 : f32 to vector<8x8xf32>
    %1327 = arith.mulf %1326, %1267 : vector<8x8xf32>
    %1328 = arith.addf %1311, %1327 : vector<8x8xf32>
    %1329 = arith.subf %1328, %1312 : vector<8x8xf32>
    %cst_531 = arith.constant 1.250000e+00 : f32
    %1330 = vector.broadcast %cst_531 : f32 to vector<8x8xf32>
    %1331 = arith.mulf %1329, %1330 : vector<8x8xf32>
    %cst_532 = arith.constant 8.000000e-01 : f32
    %1332 = vector.broadcast %cst_532 : f32 to vector<8x8xf32>
    %1333 = arith.mulf %1332, %1273 : vector<8x8xf32>
    %1334 = arith.addf %1312, %1333 : vector<8x8xf32>
    %1335 = arith.subf %1334, %1313 : vector<8x8xf32>
    %cst_533 = arith.constant 1.250000e+00 : f32
    %1336 = vector.broadcast %cst_533 : f32 to vector<8x8xf32>
    %1337 = arith.mulf %1335, %1336 : vector<8x8xf32>
    %cst_534 = arith.constant 8.000000e-01 : f32
    %1338 = vector.broadcast %cst_534 : f32 to vector<8x8xf32>
    %1339 = arith.mulf %1338, %1279 : vector<8x8xf32>
    %1340 = arith.addf %1313, %1339 : vector<8x8xf32>
    %1341 = arith.subf %1340, %1314 : vector<8x8xf32>
    %cst_535 = arith.constant 1.250000e+00 : f32
    %1342 = vector.broadcast %cst_535 : f32 to vector<8x8xf32>
    %1343 = arith.mulf %1341, %1342 : vector<8x8xf32>
    %cst_536 = arith.constant 8.000000e-01 : f32
    %1344 = vector.broadcast %cst_536 : f32 to vector<8x8xf32>
    %1345 = arith.mulf %1344, %1285 : vector<8x8xf32>
    %1346 = arith.addf %1314, %1345 : vector<8x8xf32>
    %1347 = arith.subf %1346, %1315 : vector<8x8xf32>
    %cst_537 = arith.constant 1.250000e+00 : f32
    %1348 = vector.broadcast %cst_537 : f32 to vector<8x8xf32>
    %1349 = arith.mulf %1347, %1348 : vector<8x8xf32>
    %cst_538 = arith.constant 8.000000e-01 : f32
    %1350 = vector.broadcast %cst_538 : f32 to vector<8x8xf32>
    %1351 = arith.mulf %1350, %1291 : vector<8x8xf32>
    %1352 = arith.addf %1315, %1351 : vector<8x8xf32>
    %1353 = arith.subf %1352, %1316 : vector<8x8xf32>
    %cst_539 = arith.constant 1.250000e+00 : f32
    %1354 = vector.broadcast %cst_539 : f32 to vector<8x8xf32>
    %1355 = arith.mulf %1353, %1354 : vector<8x8xf32>
    %cst_540 = arith.constant 8.000000e-01 : f32
    %1356 = vector.broadcast %cst_540 : f32 to vector<8x8xf32>
    %1357 = arith.mulf %1356, %1297 : vector<8x8xf32>
    %1358 = arith.addf %1316, %1357 : vector<8x8xf32>
    %1359 = arith.subf %1358, %1317 : vector<8x8xf32>
    %cst_541 = arith.constant 1.250000e+00 : f32
    %1360 = vector.broadcast %cst_541 : f32 to vector<8x8xf32>
    %1361 = arith.mulf %1359, %1360 : vector<8x8xf32>
    %cst_542 = arith.constant 8.000000e-01 : f32
    %1362 = vector.broadcast %cst_542 : f32 to vector<8x8xf32>
    %1363 = arith.mulf %1362, %1303 : vector<8x8xf32>
    %1364 = arith.addf %1317, %1363 : vector<8x8xf32>
    %1365 = arith.subf %1364, %1318 : vector<8x8xf32>
    %cst_543 = arith.constant 1.250000e+00 : f32
    %1366 = vector.broadcast %cst_543 : f32 to vector<8x8xf32>
    %1367 = arith.mulf %1365, %1366 : vector<8x8xf32>
    %cst_544 = arith.constant 8.000000e-01 : f32
    %1368 = vector.broadcast %cst_544 : f32 to vector<8x8xf32>
    %1369 = arith.mulf %1368, %1309 : vector<8x8xf32>
    %1370 = arith.addf %1318, %1369 : vector<8x8xf32>
    %1371 = arith.subf %1370, %1319 : vector<8x8xf32>
    %cst_545 = arith.constant 1.250000e+00 : f32
    %1372 = vector.broadcast %cst_545 : f32 to vector<8x8xf32>
    %1373 = arith.mulf %1371, %1372 : vector<8x8xf32>
    %1374 = arith.mulf %1128, %1325 : vector<8x8xf32>
    %1375 = arith.mulf %1130, %1331 : vector<8x8xf32>
    %1376 = arith.mulf %1132, %1337 : vector<8x8xf32>
    %1377 = arith.mulf %1134, %1343 : vector<8x8xf32>
    %1378 = arith.mulf %1136, %1349 : vector<8x8xf32>
    %1379 = arith.mulf %1138, %1355 : vector<8x8xf32>
    %1380 = arith.mulf %1140, %1361 : vector<8x8xf32>
    %1381 = arith.mulf %1142, %1367 : vector<8x8xf32>
    %1382 = arith.mulf %1144, %1373 : vector<8x8xf32>
    %cst_546 = arith.constant 1.200000e+00 : f32
    %1383 = vector.broadcast %cst_546 : f32 to vector<8x8xf32>
    %1384 = arith.mulf %1383, %1331 : vector<8x8xf32>
    %1385 = arith.addf %1374, %1384 : vector<8x8xf32>
    %1386 = arith.subf %1385, %1375 : vector<8x8xf32>
    %cst_547 = arith.constant 0.833333313 : f32
    %1387 = vector.broadcast %cst_547 : f32 to vector<8x8xf32>
    %1388 = arith.mulf %1386, %1387 : vector<8x8xf32>
    %cst_548 = arith.constant 1.200000e+00 : f32
    %1389 = vector.broadcast %cst_548 : f32 to vector<8x8xf32>
    %1390 = arith.mulf %1389, %1337 : vector<8x8xf32>
    %1391 = arith.addf %1375, %1390 : vector<8x8xf32>
    %1392 = arith.subf %1391, %1376 : vector<8x8xf32>
    %cst_549 = arith.constant 0.833333313 : f32
    %1393 = vector.broadcast %cst_549 : f32 to vector<8x8xf32>
    %1394 = arith.mulf %1392, %1393 : vector<8x8xf32>
    %cst_550 = arith.constant 1.200000e+00 : f32
    %1395 = vector.broadcast %cst_550 : f32 to vector<8x8xf32>
    %1396 = arith.mulf %1395, %1343 : vector<8x8xf32>
    %1397 = arith.addf %1376, %1396 : vector<8x8xf32>
    %1398 = arith.subf %1397, %1377 : vector<8x8xf32>
    %cst_551 = arith.constant 0.833333313 : f32
    %1399 = vector.broadcast %cst_551 : f32 to vector<8x8xf32>
    %1400 = arith.mulf %1398, %1399 : vector<8x8xf32>
    %cst_552 = arith.constant 1.200000e+00 : f32
    %1401 = vector.broadcast %cst_552 : f32 to vector<8x8xf32>
    %1402 = arith.mulf %1401, %1349 : vector<8x8xf32>
    %1403 = arith.addf %1377, %1402 : vector<8x8xf32>
    %1404 = arith.subf %1403, %1378 : vector<8x8xf32>
    %cst_553 = arith.constant 0.833333313 : f32
    %1405 = vector.broadcast %cst_553 : f32 to vector<8x8xf32>
    %1406 = arith.mulf %1404, %1405 : vector<8x8xf32>
    %cst_554 = arith.constant 1.200000e+00 : f32
    %1407 = vector.broadcast %cst_554 : f32 to vector<8x8xf32>
    %1408 = arith.mulf %1407, %1355 : vector<8x8xf32>
    %1409 = arith.addf %1378, %1408 : vector<8x8xf32>
    %1410 = arith.subf %1409, %1379 : vector<8x8xf32>
    %cst_555 = arith.constant 0.833333313 : f32
    %1411 = vector.broadcast %cst_555 : f32 to vector<8x8xf32>
    %1412 = arith.mulf %1410, %1411 : vector<8x8xf32>
    %cst_556 = arith.constant 1.200000e+00 : f32
    %1413 = vector.broadcast %cst_556 : f32 to vector<8x8xf32>
    %1414 = arith.mulf %1413, %1361 : vector<8x8xf32>
    %1415 = arith.addf %1379, %1414 : vector<8x8xf32>
    %1416 = arith.subf %1415, %1380 : vector<8x8xf32>
    %cst_557 = arith.constant 0.833333313 : f32
    %1417 = vector.broadcast %cst_557 : f32 to vector<8x8xf32>
    %1418 = arith.mulf %1416, %1417 : vector<8x8xf32>
    %cst_558 = arith.constant 1.200000e+00 : f32
    %1419 = vector.broadcast %cst_558 : f32 to vector<8x8xf32>
    %1420 = arith.mulf %1419, %1367 : vector<8x8xf32>
    %1421 = arith.addf %1380, %1420 : vector<8x8xf32>
    %1422 = arith.subf %1421, %1381 : vector<8x8xf32>
    %cst_559 = arith.constant 0.833333313 : f32
    %1423 = vector.broadcast %cst_559 : f32 to vector<8x8xf32>
    %1424 = arith.mulf %1422, %1423 : vector<8x8xf32>
    %cst_560 = arith.constant 1.200000e+00 : f32
    %1425 = vector.broadcast %cst_560 : f32 to vector<8x8xf32>
    %1426 = arith.mulf %1425, %1373 : vector<8x8xf32>
    %1427 = arith.addf %1381, %1426 : vector<8x8xf32>
    %1428 = arith.subf %1427, %1382 : vector<8x8xf32>
    %cst_561 = arith.constant 0.833333313 : f32
    %1429 = vector.broadcast %cst_561 : f32 to vector<8x8xf32>
    %1430 = arith.mulf %1428, %1429 : vector<8x8xf32>
    %1431 = vector.extract_strided_slice %1115 {offsets = [1, 0], sizes = [1, 8], strides = [1, 1]} : vector<9x8xf32> to vector<1x8xf32>
    %1432 = vector.broadcast %1431 : vector<1x8xf32> to vector<8x8xf32>
    %1433 = arith.mulf %1388, %1432 : vector<8x8xf32>
    %1434 = arith.addf %1126, %1433 : vector<8x8xf32>
    %1435 = vector.extract_strided_slice %1115 {offsets = [2, 0], sizes = [1, 8], strides = [1, 1]} : vector<9x8xf32> to vector<1x8xf32>
    %1436 = vector.broadcast %1435 : vector<1x8xf32> to vector<8x8xf32>
    %1437 = arith.mulf %1394, %1436 : vector<8x8xf32>
    %1438 = arith.addf %1434, %1437 : vector<8x8xf32>
    %1439 = vector.extract_strided_slice %1115 {offsets = [3, 0], sizes = [1, 8], strides = [1, 1]} : vector<9x8xf32> to vector<1x8xf32>
    %1440 = vector.broadcast %1439 : vector<1x8xf32> to vector<8x8xf32>
    %1441 = arith.mulf %1400, %1440 : vector<8x8xf32>
    %1442 = arith.addf %1438, %1441 : vector<8x8xf32>
    %1443 = vector.extract_strided_slice %1115 {offsets = [4, 0], sizes = [1, 8], strides = [1, 1]} : vector<9x8xf32> to vector<1x8xf32>
    %1444 = vector.broadcast %1443 : vector<1x8xf32> to vector<8x8xf32>
    %1445 = arith.mulf %1406, %1444 : vector<8x8xf32>
    %1446 = arith.addf %1442, %1445 : vector<8x8xf32>
    %1447 = vector.extract_strided_slice %1115 {offsets = [5, 0], sizes = [1, 8], strides = [1, 1]} : vector<9x8xf32> to vector<1x8xf32>
    %1448 = vector.broadcast %1447 : vector<1x8xf32> to vector<8x8xf32>
    %1449 = arith.mulf %1412, %1448 : vector<8x8xf32>
    %1450 = arith.addf %1446, %1449 : vector<8x8xf32>
    %1451 = vector.extract_strided_slice %1115 {offsets = [6, 0], sizes = [1, 8], strides = [1, 1]} : vector<9x8xf32> to vector<1x8xf32>
    %1452 = vector.broadcast %1451 : vector<1x8xf32> to vector<8x8xf32>
    %1453 = arith.mulf %1418, %1452 : vector<8x8xf32>
    %1454 = arith.addf %1450, %1453 : vector<8x8xf32>
    %1455 = vector.extract_strided_slice %1115 {offsets = [7, 0], sizes = [1, 8], strides = [1, 1]} : vector<9x8xf32> to vector<1x8xf32>
    %1456 = vector.broadcast %1455 : vector<1x8xf32> to vector<8x8xf32>
    %1457 = arith.mulf %1424, %1456 : vector<8x8xf32>
    %1458 = arith.addf %1454, %1457 : vector<8x8xf32>
    %1459 = vector.extract_strided_slice %1115 {offsets = [8, 0], sizes = [1, 8], strides = [1, 1]} : vector<9x8xf32> to vector<1x8xf32>
    %1460 = vector.broadcast %1459 : vector<1x8xf32> to vector<8x8xf32>
    %1461 = arith.mulf %1430, %1460 : vector<8x8xf32>
    %1462 = arith.addf %1458, %1461 : vector<8x8xf32>
    %cst_562 = arith.constant dense<0.000000e+00> : vector<8xf32>
    %1463 = vector.multi_reduction <add>, %1462, %cst_562 [1] : vector<8x8xf32> to vector<8xf32>
    %1464 = vector.shape_cast %1463 : vector<8xf32> to vector<8x1xf32>
    %c0_563 = arith.constant 0 : index
    %c0_564 = arith.constant 0 : index
    %1465 = vector.load %arg4[%c0_563, %c0_564] : memref<8x2xf32, #tpu.memory_space<vmem>>, vector<8x2xf32>
    %c0_565 = arith.constant 0 : index
    %c0_566 = arith.constant 0 : index
    %1466 = vector.load %arg18[%c0_565, %c0_566] : memref<9x2xf32, #tpu.memory_space<vmem>>, vector<9x2xf32>
    %cst_567 = arith.constant 0.000000e+00 : f32
    %1467 = vector.broadcast %cst_567 : f32 to vector<8x2xf32>
    %1468 = arith.subf %1467, %1465 : vector<8x2xf32>
    %1469 = math.exp %1468 : vector<8x2xf32>
    %cst_568 = arith.constant 1.000000e+00 : f32
    %1470 = vector.broadcast %cst_568 : f32 to vector<8x2xf32>
    %1471 = arith.addf %1470, %1469 : vector<8x2xf32>
    %cst_569 = arith.constant 1.000000e+00 : f32
    %1472 = vector.broadcast %cst_569 : f32 to vector<8x2xf32>
    %1473 = arith.divf %1472, %1471 : vector<8x2xf32>
    %1474 = arith.mulf %1465, %1473 : vector<8x2xf32>
    %1475 = vector.extract_strided_slice %1466 {offsets = [0, 0], sizes = [1, 2], strides = [1, 1]} : vector<9x2xf32> to vector<1x2xf32>
    %1476 = vector.broadcast %1475 : vector<1x2xf32> to vector<8x2xf32>
    %1477 = arith.mulf %1474, %1476 : vector<8x2xf32>
    %cst_570 = arith.constant -2.200000e+00 : f32
    %1478 = vector.broadcast %cst_570 : f32 to vector<8x2xf32>
    %1479 = arith.subf %1465, %1478 : vector<8x2xf32>
    %cst_571 = arith.constant -1.800000e+00 : f32
    %1480 = vector.broadcast %cst_571 : f32 to vector<8x2xf32>
    %1481 = arith.subf %1465, %1480 : vector<8x2xf32>
    %cst_572 = arith.constant -1.400000e+00 : f32
    %1482 = vector.broadcast %cst_572 : f32 to vector<8x2xf32>
    %1483 = arith.subf %1465, %1482 : vector<8x2xf32>
    %cst_573 = arith.constant -1.000000e+00 : f32
    %1484 = vector.broadcast %cst_573 : f32 to vector<8x2xf32>
    %1485 = arith.subf %1465, %1484 : vector<8x2xf32>
    %cst_574 = arith.constant -6.000000e-01 : f32
    %1486 = vector.broadcast %cst_574 : f32 to vector<8x2xf32>
    %1487 = arith.subf %1465, %1486 : vector<8x2xf32>
    %cst_575 = arith.constant -2.000000e-01 : f32
    %1488 = vector.broadcast %cst_575 : f32 to vector<8x2xf32>
    %1489 = arith.subf %1465, %1488 : vector<8x2xf32>
    %cst_576 = arith.constant 2.000000e-01 : f32
    %1490 = vector.broadcast %cst_576 : f32 to vector<8x2xf32>
    %1491 = arith.subf %1465, %1490 : vector<8x2xf32>
    %cst_577 = arith.constant 6.000000e-01 : f32
    %1492 = vector.broadcast %cst_577 : f32 to vector<8x2xf32>
    %1493 = arith.subf %1465, %1492 : vector<8x2xf32>
    %cst_578 = arith.constant 1.000000e+00 : f32
    %1494 = vector.broadcast %cst_578 : f32 to vector<8x2xf32>
    %1495 = arith.subf %1465, %1494 : vector<8x2xf32>
    %cst_579 = arith.constant 1.400000e+00 : f32
    %1496 = vector.broadcast %cst_579 : f32 to vector<8x2xf32>
    %1497 = arith.subf %1465, %1496 : vector<8x2xf32>
    %cst_580 = arith.constant 1.800000e+00 : f32
    %1498 = vector.broadcast %cst_580 : f32 to vector<8x2xf32>
    %1499 = arith.subf %1465, %1498 : vector<8x2xf32>
    %cst_581 = arith.constant 2.200000e+00 : f32
    %1500 = vector.broadcast %cst_581 : f32 to vector<8x2xf32>
    %1501 = arith.subf %1465, %1500 : vector<8x2xf32>
    %cst_582 = arith.constant 0.000000e+00 : f32
    %1502 = vector.broadcast %cst_582 : f32 to vector<8x2xf32>
    %1503 = arith.cmpf oge, %1479, %1502 : vector<8x2xf32>
    %cst_583 = arith.constant 0.000000e+00 : f32
    %1504 = vector.broadcast %cst_583 : f32 to vector<8x2xf32>
    %1505 = arith.cmpf olt, %1481, %1504 : vector<8x2xf32>
    %1506 = arith.andi %1503, %1505 : vector<8x2xi1>
    %cst_584 = arith.constant 1.000000e+00 : f32
    %cst_585 = arith.constant 0.000000e+00 : f32
    %1507 = vector.broadcast %cst_584 : f32 to vector<8x2xf32>
    %1508 = vector.broadcast %cst_585 : f32 to vector<8x2xf32>
    %1509 = arith.select %1506, %1507, %1508 : vector<8x2xi1>, vector<8x2xf32>
    %cst_586 = arith.constant 0.000000e+00 : f32
    %1510 = vector.broadcast %cst_586 : f32 to vector<8x2xf32>
    %1511 = arith.cmpf oge, %1481, %1510 : vector<8x2xf32>
    %cst_587 = arith.constant 0.000000e+00 : f32
    %1512 = vector.broadcast %cst_587 : f32 to vector<8x2xf32>
    %1513 = arith.cmpf olt, %1483, %1512 : vector<8x2xf32>
    %1514 = arith.andi %1511, %1513 : vector<8x2xi1>
    %cst_588 = arith.constant 1.000000e+00 : f32
    %cst_589 = arith.constant 0.000000e+00 : f32
    %1515 = vector.broadcast %cst_588 : f32 to vector<8x2xf32>
    %1516 = vector.broadcast %cst_589 : f32 to vector<8x2xf32>
    %1517 = arith.select %1514, %1515, %1516 : vector<8x2xi1>, vector<8x2xf32>
    %cst_590 = arith.constant 0.000000e+00 : f32
    %1518 = vector.broadcast %cst_590 : f32 to vector<8x2xf32>
    %1519 = arith.cmpf oge, %1483, %1518 : vector<8x2xf32>
    %cst_591 = arith.constant 0.000000e+00 : f32
    %1520 = vector.broadcast %cst_591 : f32 to vector<8x2xf32>
    %1521 = arith.cmpf olt, %1485, %1520 : vector<8x2xf32>
    %1522 = arith.andi %1519, %1521 : vector<8x2xi1>
    %cst_592 = arith.constant 1.000000e+00 : f32
    %cst_593 = arith.constant 0.000000e+00 : f32
    %1523 = vector.broadcast %cst_592 : f32 to vector<8x2xf32>
    %1524 = vector.broadcast %cst_593 : f32 to vector<8x2xf32>
    %1525 = arith.select %1522, %1523, %1524 : vector<8x2xi1>, vector<8x2xf32>
    %cst_594 = arith.constant 0.000000e+00 : f32
    %1526 = vector.broadcast %cst_594 : f32 to vector<8x2xf32>
    %1527 = arith.cmpf oge, %1485, %1526 : vector<8x2xf32>
    %cst_595 = arith.constant 0.000000e+00 : f32
    %1528 = vector.broadcast %cst_595 : f32 to vector<8x2xf32>
    %1529 = arith.cmpf olt, %1487, %1528 : vector<8x2xf32>
    %1530 = arith.andi %1527, %1529 : vector<8x2xi1>
    %cst_596 = arith.constant 1.000000e+00 : f32
    %cst_597 = arith.constant 0.000000e+00 : f32
    %1531 = vector.broadcast %cst_596 : f32 to vector<8x2xf32>
    %1532 = vector.broadcast %cst_597 : f32 to vector<8x2xf32>
    %1533 = arith.select %1530, %1531, %1532 : vector<8x2xi1>, vector<8x2xf32>
    %cst_598 = arith.constant 0.000000e+00 : f32
    %1534 = vector.broadcast %cst_598 : f32 to vector<8x2xf32>
    %1535 = arith.cmpf oge, %1487, %1534 : vector<8x2xf32>
    %cst_599 = arith.constant 0.000000e+00 : f32
    %1536 = vector.broadcast %cst_599 : f32 to vector<8x2xf32>
    %1537 = arith.cmpf olt, %1489, %1536 : vector<8x2xf32>
    %1538 = arith.andi %1535, %1537 : vector<8x2xi1>
    %cst_600 = arith.constant 1.000000e+00 : f32
    %cst_601 = arith.constant 0.000000e+00 : f32
    %1539 = vector.broadcast %cst_600 : f32 to vector<8x2xf32>
    %1540 = vector.broadcast %cst_601 : f32 to vector<8x2xf32>
    %1541 = arith.select %1538, %1539, %1540 : vector<8x2xi1>, vector<8x2xf32>
    %cst_602 = arith.constant 0.000000e+00 : f32
    %1542 = vector.broadcast %cst_602 : f32 to vector<8x2xf32>
    %1543 = arith.cmpf oge, %1489, %1542 : vector<8x2xf32>
    %cst_603 = arith.constant 0.000000e+00 : f32
    %1544 = vector.broadcast %cst_603 : f32 to vector<8x2xf32>
    %1545 = arith.cmpf olt, %1491, %1544 : vector<8x2xf32>
    %1546 = arith.andi %1543, %1545 : vector<8x2xi1>
    %cst_604 = arith.constant 1.000000e+00 : f32
    %cst_605 = arith.constant 0.000000e+00 : f32
    %1547 = vector.broadcast %cst_604 : f32 to vector<8x2xf32>
    %1548 = vector.broadcast %cst_605 : f32 to vector<8x2xf32>
    %1549 = arith.select %1546, %1547, %1548 : vector<8x2xi1>, vector<8x2xf32>
    %cst_606 = arith.constant 0.000000e+00 : f32
    %1550 = vector.broadcast %cst_606 : f32 to vector<8x2xf32>
    %1551 = arith.cmpf oge, %1491, %1550 : vector<8x2xf32>
    %cst_607 = arith.constant 0.000000e+00 : f32
    %1552 = vector.broadcast %cst_607 : f32 to vector<8x2xf32>
    %1553 = arith.cmpf olt, %1493, %1552 : vector<8x2xf32>
    %1554 = arith.andi %1551, %1553 : vector<8x2xi1>
    %cst_608 = arith.constant 1.000000e+00 : f32
    %cst_609 = arith.constant 0.000000e+00 : f32
    %1555 = vector.broadcast %cst_608 : f32 to vector<8x2xf32>
    %1556 = vector.broadcast %cst_609 : f32 to vector<8x2xf32>
    %1557 = arith.select %1554, %1555, %1556 : vector<8x2xi1>, vector<8x2xf32>
    %cst_610 = arith.constant 0.000000e+00 : f32
    %1558 = vector.broadcast %cst_610 : f32 to vector<8x2xf32>
    %1559 = arith.cmpf oge, %1493, %1558 : vector<8x2xf32>
    %cst_611 = arith.constant 0.000000e+00 : f32
    %1560 = vector.broadcast %cst_611 : f32 to vector<8x2xf32>
    %1561 = arith.cmpf olt, %1495, %1560 : vector<8x2xf32>
    %1562 = arith.andi %1559, %1561 : vector<8x2xi1>
    %cst_612 = arith.constant 1.000000e+00 : f32
    %cst_613 = arith.constant 0.000000e+00 : f32
    %1563 = vector.broadcast %cst_612 : f32 to vector<8x2xf32>
    %1564 = vector.broadcast %cst_613 : f32 to vector<8x2xf32>
    %1565 = arith.select %1562, %1563, %1564 : vector<8x2xi1>, vector<8x2xf32>
    %cst_614 = arith.constant 0.000000e+00 : f32
    %1566 = vector.broadcast %cst_614 : f32 to vector<8x2xf32>
    %1567 = arith.cmpf oge, %1495, %1566 : vector<8x2xf32>
    %cst_615 = arith.constant 0.000000e+00 : f32
    %1568 = vector.broadcast %cst_615 : f32 to vector<8x2xf32>
    %1569 = arith.cmpf olt, %1497, %1568 : vector<8x2xf32>
    %1570 = arith.andi %1567, %1569 : vector<8x2xi1>
    %cst_616 = arith.constant 1.000000e+00 : f32
    %cst_617 = arith.constant 0.000000e+00 : f32
    %1571 = vector.broadcast %cst_616 : f32 to vector<8x2xf32>
    %1572 = vector.broadcast %cst_617 : f32 to vector<8x2xf32>
    %1573 = arith.select %1570, %1571, %1572 : vector<8x2xi1>, vector<8x2xf32>
    %cst_618 = arith.constant 0.000000e+00 : f32
    %1574 = vector.broadcast %cst_618 : f32 to vector<8x2xf32>
    %1575 = arith.cmpf oge, %1497, %1574 : vector<8x2xf32>
    %cst_619 = arith.constant 0.000000e+00 : f32
    %1576 = vector.broadcast %cst_619 : f32 to vector<8x2xf32>
    %1577 = arith.cmpf olt, %1499, %1576 : vector<8x2xf32>
    %1578 = arith.andi %1575, %1577 : vector<8x2xi1>
    %cst_620 = arith.constant 1.000000e+00 : f32
    %cst_621 = arith.constant 0.000000e+00 : f32
    %1579 = vector.broadcast %cst_620 : f32 to vector<8x2xf32>
    %1580 = vector.broadcast %cst_621 : f32 to vector<8x2xf32>
    %1581 = arith.select %1578, %1579, %1580 : vector<8x2xi1>, vector<8x2xf32>
    %cst_622 = arith.constant 0.000000e+00 : f32
    %1582 = vector.broadcast %cst_622 : f32 to vector<8x2xf32>
    %1583 = arith.cmpf oge, %1499, %1582 : vector<8x2xf32>
    %cst_623 = arith.constant 0.000000e+00 : f32
    %1584 = vector.broadcast %cst_623 : f32 to vector<8x2xf32>
    %1585 = arith.cmpf olt, %1501, %1584 : vector<8x2xf32>
    %1586 = arith.andi %1583, %1585 : vector<8x2xi1>
    %cst_624 = arith.constant 1.000000e+00 : f32
    %cst_625 = arith.constant 0.000000e+00 : f32
    %1587 = vector.broadcast %cst_624 : f32 to vector<8x2xf32>
    %1588 = vector.broadcast %cst_625 : f32 to vector<8x2xf32>
    %1589 = arith.select %1586, %1587, %1588 : vector<8x2xi1>, vector<8x2xf32>
    %1590 = arith.mulf %1479, %1509 : vector<8x2xf32>
    %1591 = arith.mulf %1481, %1517 : vector<8x2xf32>
    %1592 = arith.mulf %1483, %1525 : vector<8x2xf32>
    %1593 = arith.mulf %1485, %1533 : vector<8x2xf32>
    %1594 = arith.mulf %1487, %1541 : vector<8x2xf32>
    %1595 = arith.mulf %1489, %1549 : vector<8x2xf32>
    %1596 = arith.mulf %1491, %1557 : vector<8x2xf32>
    %1597 = arith.mulf %1493, %1565 : vector<8x2xf32>
    %1598 = arith.mulf %1495, %1573 : vector<8x2xf32>
    %1599 = arith.mulf %1497, %1581 : vector<8x2xf32>
    %1600 = arith.mulf %1499, %1589 : vector<8x2xf32>
    %cst_626 = arith.constant 4.000000e-01 : f32
    %1601 = vector.broadcast %cst_626 : f32 to vector<8x2xf32>
    %1602 = arith.mulf %1601, %1517 : vector<8x2xf32>
    %1603 = arith.addf %1590, %1602 : vector<8x2xf32>
    %1604 = arith.subf %1603, %1591 : vector<8x2xf32>
    %cst_627 = arith.constant 2.500000e+00 : f32
    %1605 = vector.broadcast %cst_627 : f32 to vector<8x2xf32>
    %1606 = arith.mulf %1604, %1605 : vector<8x2xf32>
    %cst_628 = arith.constant 4.000000e-01 : f32
    %1607 = vector.broadcast %cst_628 : f32 to vector<8x2xf32>
    %1608 = arith.mulf %1607, %1525 : vector<8x2xf32>
    %1609 = arith.addf %1591, %1608 : vector<8x2xf32>
    %1610 = arith.subf %1609, %1592 : vector<8x2xf32>
    %cst_629 = arith.constant 2.500000e+00 : f32
    %1611 = vector.broadcast %cst_629 : f32 to vector<8x2xf32>
    %1612 = arith.mulf %1610, %1611 : vector<8x2xf32>
    %cst_630 = arith.constant 4.000000e-01 : f32
    %1613 = vector.broadcast %cst_630 : f32 to vector<8x2xf32>
    %1614 = arith.mulf %1613, %1533 : vector<8x2xf32>
    %1615 = arith.addf %1592, %1614 : vector<8x2xf32>
    %1616 = arith.subf %1615, %1593 : vector<8x2xf32>
    %cst_631 = arith.constant 2.500000e+00 : f32
    %1617 = vector.broadcast %cst_631 : f32 to vector<8x2xf32>
    %1618 = arith.mulf %1616, %1617 : vector<8x2xf32>
    %cst_632 = arith.constant 4.000000e-01 : f32
    %1619 = vector.broadcast %cst_632 : f32 to vector<8x2xf32>
    %1620 = arith.mulf %1619, %1541 : vector<8x2xf32>
    %1621 = arith.addf %1593, %1620 : vector<8x2xf32>
    %1622 = arith.subf %1621, %1594 : vector<8x2xf32>
    %cst_633 = arith.constant 2.500000e+00 : f32
    %1623 = vector.broadcast %cst_633 : f32 to vector<8x2xf32>
    %1624 = arith.mulf %1622, %1623 : vector<8x2xf32>
    %cst_634 = arith.constant 4.000000e-01 : f32
    %1625 = vector.broadcast %cst_634 : f32 to vector<8x2xf32>
    %1626 = arith.mulf %1625, %1549 : vector<8x2xf32>
    %1627 = arith.addf %1594, %1626 : vector<8x2xf32>
    %1628 = arith.subf %1627, %1595 : vector<8x2xf32>
    %cst_635 = arith.constant 2.500000e+00 : f32
    %1629 = vector.broadcast %cst_635 : f32 to vector<8x2xf32>
    %1630 = arith.mulf %1628, %1629 : vector<8x2xf32>
    %cst_636 = arith.constant 4.000000e-01 : f32
    %1631 = vector.broadcast %cst_636 : f32 to vector<8x2xf32>
    %1632 = arith.mulf %1631, %1557 : vector<8x2xf32>
    %1633 = arith.addf %1595, %1632 : vector<8x2xf32>
    %1634 = arith.subf %1633, %1596 : vector<8x2xf32>
    %cst_637 = arith.constant 2.500000e+00 : f32
    %1635 = vector.broadcast %cst_637 : f32 to vector<8x2xf32>
    %1636 = arith.mulf %1634, %1635 : vector<8x2xf32>
    %cst_638 = arith.constant 4.000000e-01 : f32
    %1637 = vector.broadcast %cst_638 : f32 to vector<8x2xf32>
    %1638 = arith.mulf %1637, %1565 : vector<8x2xf32>
    %1639 = arith.addf %1596, %1638 : vector<8x2xf32>
    %1640 = arith.subf %1639, %1597 : vector<8x2xf32>
    %cst_639 = arith.constant 2.500000e+00 : f32
    %1641 = vector.broadcast %cst_639 : f32 to vector<8x2xf32>
    %1642 = arith.mulf %1640, %1641 : vector<8x2xf32>
    %cst_640 = arith.constant 4.000000e-01 : f32
    %1643 = vector.broadcast %cst_640 : f32 to vector<8x2xf32>
    %1644 = arith.mulf %1643, %1573 : vector<8x2xf32>
    %1645 = arith.addf %1597, %1644 : vector<8x2xf32>
    %1646 = arith.subf %1645, %1598 : vector<8x2xf32>
    %cst_641 = arith.constant 2.500000e+00 : f32
    %1647 = vector.broadcast %cst_641 : f32 to vector<8x2xf32>
    %1648 = arith.mulf %1646, %1647 : vector<8x2xf32>
    %cst_642 = arith.constant 4.000000e-01 : f32
    %1649 = vector.broadcast %cst_642 : f32 to vector<8x2xf32>
    %1650 = arith.mulf %1649, %1581 : vector<8x2xf32>
    %1651 = arith.addf %1598, %1650 : vector<8x2xf32>
    %1652 = arith.subf %1651, %1599 : vector<8x2xf32>
    %cst_643 = arith.constant 2.500000e+00 : f32
    %1653 = vector.broadcast %cst_643 : f32 to vector<8x2xf32>
    %1654 = arith.mulf %1652, %1653 : vector<8x2xf32>
    %cst_644 = arith.constant 4.000000e-01 : f32
    %1655 = vector.broadcast %cst_644 : f32 to vector<8x2xf32>
    %1656 = arith.mulf %1655, %1589 : vector<8x2xf32>
    %1657 = arith.addf %1599, %1656 : vector<8x2xf32>
    %1658 = arith.subf %1657, %1600 : vector<8x2xf32>
    %cst_645 = arith.constant 2.500000e+00 : f32
    %1659 = vector.broadcast %cst_645 : f32 to vector<8x2xf32>
    %1660 = arith.mulf %1658, %1659 : vector<8x2xf32>
    %1661 = arith.mulf %1479, %1606 : vector<8x2xf32>
    %1662 = arith.mulf %1481, %1612 : vector<8x2xf32>
    %1663 = arith.mulf %1483, %1618 : vector<8x2xf32>
    %1664 = arith.mulf %1485, %1624 : vector<8x2xf32>
    %1665 = arith.mulf %1487, %1630 : vector<8x2xf32>
    %1666 = arith.mulf %1489, %1636 : vector<8x2xf32>
    %1667 = arith.mulf %1491, %1642 : vector<8x2xf32>
    %1668 = arith.mulf %1493, %1648 : vector<8x2xf32>
    %1669 = arith.mulf %1495, %1654 : vector<8x2xf32>
    %1670 = arith.mulf %1497, %1660 : vector<8x2xf32>
    %cst_646 = arith.constant 8.000000e-01 : f32
    %1671 = vector.broadcast %cst_646 : f32 to vector<8x2xf32>
    %1672 = arith.mulf %1671, %1612 : vector<8x2xf32>
    %1673 = arith.addf %1661, %1672 : vector<8x2xf32>
    %1674 = arith.subf %1673, %1662 : vector<8x2xf32>
    %cst_647 = arith.constant 1.250000e+00 : f32
    %1675 = vector.broadcast %cst_647 : f32 to vector<8x2xf32>
    %1676 = arith.mulf %1674, %1675 : vector<8x2xf32>
    %cst_648 = arith.constant 8.000000e-01 : f32
    %1677 = vector.broadcast %cst_648 : f32 to vector<8x2xf32>
    %1678 = arith.mulf %1677, %1618 : vector<8x2xf32>
    %1679 = arith.addf %1662, %1678 : vector<8x2xf32>
    %1680 = arith.subf %1679, %1663 : vector<8x2xf32>
    %cst_649 = arith.constant 1.250000e+00 : f32
    %1681 = vector.broadcast %cst_649 : f32 to vector<8x2xf32>
    %1682 = arith.mulf %1680, %1681 : vector<8x2xf32>
    %cst_650 = arith.constant 8.000000e-01 : f32
    %1683 = vector.broadcast %cst_650 : f32 to vector<8x2xf32>
    %1684 = arith.mulf %1683, %1624 : vector<8x2xf32>
    %1685 = arith.addf %1663, %1684 : vector<8x2xf32>
    %1686 = arith.subf %1685, %1664 : vector<8x2xf32>
    %cst_651 = arith.constant 1.250000e+00 : f32
    %1687 = vector.broadcast %cst_651 : f32 to vector<8x2xf32>
    %1688 = arith.mulf %1686, %1687 : vector<8x2xf32>
    %cst_652 = arith.constant 8.000000e-01 : f32
    %1689 = vector.broadcast %cst_652 : f32 to vector<8x2xf32>
    %1690 = arith.mulf %1689, %1630 : vector<8x2xf32>
    %1691 = arith.addf %1664, %1690 : vector<8x2xf32>
    %1692 = arith.subf %1691, %1665 : vector<8x2xf32>
    %cst_653 = arith.constant 1.250000e+00 : f32
    %1693 = vector.broadcast %cst_653 : f32 to vector<8x2xf32>
    %1694 = arith.mulf %1692, %1693 : vector<8x2xf32>
    %cst_654 = arith.constant 8.000000e-01 : f32
    %1695 = vector.broadcast %cst_654 : f32 to vector<8x2xf32>
    %1696 = arith.mulf %1695, %1636 : vector<8x2xf32>
    %1697 = arith.addf %1665, %1696 : vector<8x2xf32>
    %1698 = arith.subf %1697, %1666 : vector<8x2xf32>
    %cst_655 = arith.constant 1.250000e+00 : f32
    %1699 = vector.broadcast %cst_655 : f32 to vector<8x2xf32>
    %1700 = arith.mulf %1698, %1699 : vector<8x2xf32>
    %cst_656 = arith.constant 8.000000e-01 : f32
    %1701 = vector.broadcast %cst_656 : f32 to vector<8x2xf32>
    %1702 = arith.mulf %1701, %1642 : vector<8x2xf32>
    %1703 = arith.addf %1666, %1702 : vector<8x2xf32>
    %1704 = arith.subf %1703, %1667 : vector<8x2xf32>
    %cst_657 = arith.constant 1.250000e+00 : f32
    %1705 = vector.broadcast %cst_657 : f32 to vector<8x2xf32>
    %1706 = arith.mulf %1704, %1705 : vector<8x2xf32>
    %cst_658 = arith.constant 8.000000e-01 : f32
    %1707 = vector.broadcast %cst_658 : f32 to vector<8x2xf32>
    %1708 = arith.mulf %1707, %1648 : vector<8x2xf32>
    %1709 = arith.addf %1667, %1708 : vector<8x2xf32>
    %1710 = arith.subf %1709, %1668 : vector<8x2xf32>
    %cst_659 = arith.constant 1.250000e+00 : f32
    %1711 = vector.broadcast %cst_659 : f32 to vector<8x2xf32>
    %1712 = arith.mulf %1710, %1711 : vector<8x2xf32>
    %cst_660 = arith.constant 8.000000e-01 : f32
    %1713 = vector.broadcast %cst_660 : f32 to vector<8x2xf32>
    %1714 = arith.mulf %1713, %1654 : vector<8x2xf32>
    %1715 = arith.addf %1668, %1714 : vector<8x2xf32>
    %1716 = arith.subf %1715, %1669 : vector<8x2xf32>
    %cst_661 = arith.constant 1.250000e+00 : f32
    %1717 = vector.broadcast %cst_661 : f32 to vector<8x2xf32>
    %1718 = arith.mulf %1716, %1717 : vector<8x2xf32>
    %cst_662 = arith.constant 8.000000e-01 : f32
    %1719 = vector.broadcast %cst_662 : f32 to vector<8x2xf32>
    %1720 = arith.mulf %1719, %1660 : vector<8x2xf32>
    %1721 = arith.addf %1669, %1720 : vector<8x2xf32>
    %1722 = arith.subf %1721, %1670 : vector<8x2xf32>
    %cst_663 = arith.constant 1.250000e+00 : f32
    %1723 = vector.broadcast %cst_663 : f32 to vector<8x2xf32>
    %1724 = arith.mulf %1722, %1723 : vector<8x2xf32>
    %1725 = arith.mulf %1479, %1676 : vector<8x2xf32>
    %1726 = arith.mulf %1481, %1682 : vector<8x2xf32>
    %1727 = arith.mulf %1483, %1688 : vector<8x2xf32>
    %1728 = arith.mulf %1485, %1694 : vector<8x2xf32>
    %1729 = arith.mulf %1487, %1700 : vector<8x2xf32>
    %1730 = arith.mulf %1489, %1706 : vector<8x2xf32>
    %1731 = arith.mulf %1491, %1712 : vector<8x2xf32>
    %1732 = arith.mulf %1493, %1718 : vector<8x2xf32>
    %1733 = arith.mulf %1495, %1724 : vector<8x2xf32>
    %cst_664 = arith.constant 1.200000e+00 : f32
    %1734 = vector.broadcast %cst_664 : f32 to vector<8x2xf32>
    %1735 = arith.mulf %1734, %1682 : vector<8x2xf32>
    %1736 = arith.addf %1725, %1735 : vector<8x2xf32>
    %1737 = arith.subf %1736, %1726 : vector<8x2xf32>
    %cst_665 = arith.constant 0.833333313 : f32
    %1738 = vector.broadcast %cst_665 : f32 to vector<8x2xf32>
    %1739 = arith.mulf %1737, %1738 : vector<8x2xf32>
    %cst_666 = arith.constant 1.200000e+00 : f32
    %1740 = vector.broadcast %cst_666 : f32 to vector<8x2xf32>
    %1741 = arith.mulf %1740, %1688 : vector<8x2xf32>
    %1742 = arith.addf %1726, %1741 : vector<8x2xf32>
    %1743 = arith.subf %1742, %1727 : vector<8x2xf32>
    %cst_667 = arith.constant 0.833333313 : f32
    %1744 = vector.broadcast %cst_667 : f32 to vector<8x2xf32>
    %1745 = arith.mulf %1743, %1744 : vector<8x2xf32>
    %cst_668 = arith.constant 1.200000e+00 : f32
    %1746 = vector.broadcast %cst_668 : f32 to vector<8x2xf32>
    %1747 = arith.mulf %1746, %1694 : vector<8x2xf32>
    %1748 = arith.addf %1727, %1747 : vector<8x2xf32>
    %1749 = arith.subf %1748, %1728 : vector<8x2xf32>
    %cst_669 = arith.constant 0.833333313 : f32
    %1750 = vector.broadcast %cst_669 : f32 to vector<8x2xf32>
    %1751 = arith.mulf %1749, %1750 : vector<8x2xf32>
    %cst_670 = arith.constant 1.200000e+00 : f32
    %1752 = vector.broadcast %cst_670 : f32 to vector<8x2xf32>
    %1753 = arith.mulf %1752, %1700 : vector<8x2xf32>
    %1754 = arith.addf %1728, %1753 : vector<8x2xf32>
    %1755 = arith.subf %1754, %1729 : vector<8x2xf32>
    %cst_671 = arith.constant 0.833333313 : f32
    %1756 = vector.broadcast %cst_671 : f32 to vector<8x2xf32>
    %1757 = arith.mulf %1755, %1756 : vector<8x2xf32>
    %cst_672 = arith.constant 1.200000e+00 : f32
    %1758 = vector.broadcast %cst_672 : f32 to vector<8x2xf32>
    %1759 = arith.mulf %1758, %1706 : vector<8x2xf32>
    %1760 = arith.addf %1729, %1759 : vector<8x2xf32>
    %1761 = arith.subf %1760, %1730 : vector<8x2xf32>
    %cst_673 = arith.constant 0.833333313 : f32
    %1762 = vector.broadcast %cst_673 : f32 to vector<8x2xf32>
    %1763 = arith.mulf %1761, %1762 : vector<8x2xf32>
    %cst_674 = arith.constant 1.200000e+00 : f32
    %1764 = vector.broadcast %cst_674 : f32 to vector<8x2xf32>
    %1765 = arith.mulf %1764, %1712 : vector<8x2xf32>
    %1766 = arith.addf %1730, %1765 : vector<8x2xf32>
    %1767 = arith.subf %1766, %1731 : vector<8x2xf32>
    %cst_675 = arith.constant 0.833333313 : f32
    %1768 = vector.broadcast %cst_675 : f32 to vector<8x2xf32>
    %1769 = arith.mulf %1767, %1768 : vector<8x2xf32>
    %cst_676 = arith.constant 1.200000e+00 : f32
    %1770 = vector.broadcast %cst_676 : f32 to vector<8x2xf32>
    %1771 = arith.mulf %1770, %1718 : vector<8x2xf32>
    %1772 = arith.addf %1731, %1771 : vector<8x2xf32>
    %1773 = arith.subf %1772, %1732 : vector<8x2xf32>
    %cst_677 = arith.constant 0.833333313 : f32
    %1774 = vector.broadcast %cst_677 : f32 to vector<8x2xf32>
    %1775 = arith.mulf %1773, %1774 : vector<8x2xf32>
    %cst_678 = arith.constant 1.200000e+00 : f32
    %1776 = vector.broadcast %cst_678 : f32 to vector<8x2xf32>
    %1777 = arith.mulf %1776, %1724 : vector<8x2xf32>
    %1778 = arith.addf %1732, %1777 : vector<8x2xf32>
    %1779 = arith.subf %1778, %1733 : vector<8x2xf32>
    %cst_679 = arith.constant 0.833333313 : f32
    %1780 = vector.broadcast %cst_679 : f32 to vector<8x2xf32>
    %1781 = arith.mulf %1779, %1780 : vector<8x2xf32>
    %1782 = vector.extract_strided_slice %1466 {offsets = [1, 0], sizes = [1, 2], strides = [1, 1]} : vector<9x2xf32> to vector<1x2xf32>
    %1783 = vector.broadcast %1782 : vector<1x2xf32> to vector<8x2xf32>
    %1784 = arith.mulf %1739, %1783 : vector<8x2xf32>
    %1785 = arith.addf %1477, %1784 : vector<8x2xf32>
    %1786 = vector.extract_strided_slice %1466 {offsets = [2, 0], sizes = [1, 2], strides = [1, 1]} : vector<9x2xf32> to vector<1x2xf32>
    %1787 = vector.broadcast %1786 : vector<1x2xf32> to vector<8x2xf32>
    %1788 = arith.mulf %1745, %1787 : vector<8x2xf32>
    %1789 = arith.addf %1785, %1788 : vector<8x2xf32>
    %1790 = vector.extract_strided_slice %1466 {offsets = [3, 0], sizes = [1, 2], strides = [1, 1]} : vector<9x2xf32> to vector<1x2xf32>
    %1791 = vector.broadcast %1790 : vector<1x2xf32> to vector<8x2xf32>
    %1792 = arith.mulf %1751, %1791 : vector<8x2xf32>
    %1793 = arith.addf %1789, %1792 : vector<8x2xf32>
    %1794 = vector.extract_strided_slice %1466 {offsets = [4, 0], sizes = [1, 2], strides = [1, 1]} : vector<9x2xf32> to vector<1x2xf32>
    %1795 = vector.broadcast %1794 : vector<1x2xf32> to vector<8x2xf32>
    %1796 = arith.mulf %1757, %1795 : vector<8x2xf32>
    %1797 = arith.addf %1793, %1796 : vector<8x2xf32>
    %1798 = vector.extract_strided_slice %1466 {offsets = [5, 0], sizes = [1, 2], strides = [1, 1]} : vector<9x2xf32> to vector<1x2xf32>
    %1799 = vector.broadcast %1798 : vector<1x2xf32> to vector<8x2xf32>
    %1800 = arith.mulf %1763, %1799 : vector<8x2xf32>
    %1801 = arith.addf %1797, %1800 : vector<8x2xf32>
    %1802 = vector.extract_strided_slice %1466 {offsets = [6, 0], sizes = [1, 2], strides = [1, 1]} : vector<9x2xf32> to vector<1x2xf32>
    %1803 = vector.broadcast %1802 : vector<1x2xf32> to vector<8x2xf32>
    %1804 = arith.mulf %1769, %1803 : vector<8x2xf32>
    %1805 = arith.addf %1801, %1804 : vector<8x2xf32>
    %1806 = vector.extract_strided_slice %1466 {offsets = [7, 0], sizes = [1, 2], strides = [1, 1]} : vector<9x2xf32> to vector<1x2xf32>
    %1807 = vector.broadcast %1806 : vector<1x2xf32> to vector<8x2xf32>
    %1808 = arith.mulf %1775, %1807 : vector<8x2xf32>
    %1809 = arith.addf %1805, %1808 : vector<8x2xf32>
    %1810 = vector.extract_strided_slice %1466 {offsets = [8, 0], sizes = [1, 2], strides = [1, 1]} : vector<9x2xf32> to vector<1x2xf32>
    %1811 = vector.broadcast %1810 : vector<1x2xf32> to vector<8x2xf32>
    %1812 = arith.mulf %1781, %1811 : vector<8x2xf32>
    %1813 = arith.addf %1809, %1812 : vector<8x2xf32>
    %cst_680 = arith.constant dense<0.000000e+00> : vector<8xf32>
    %1814 = vector.multi_reduction <add>, %1813, %cst_680 [1] : vector<8x2xf32> to vector<8xf32>
    %1815 = vector.shape_cast %1814 : vector<8xf32> to vector<8x1xf32>
    %1816 = arith.addf %1464, %1815 : vector<8x1xf32>
    %cst_681 = arith.constant 0.000000e+00 : f32
    %1817 = vector.broadcast %cst_681 : f32 to vector<8x1xf32>
    %1818 = arith.subf %1817, %1816 : vector<8x1xf32>
    %1819 = math.exp %1818 : vector<8x1xf32>
    %cst_682 = arith.constant 1.000000e+00 : f32
    %1820 = vector.broadcast %cst_682 : f32 to vector<8x1xf32>
    %1821 = arith.addf %1820, %1819 : vector<8x1xf32>
    %cst_683 = arith.constant 1.000000e+00 : f32
    %1822 = vector.broadcast %cst_683 : f32 to vector<8x1xf32>
    %1823 = arith.divf %1822, %1821 : vector<8x1xf32>
    %c0_684 = arith.constant 0 : index
    %c0_685 = arith.constant 0 : index
    %1824 = vector.load %arg19[%c0_684, %c0_685] : memref<8x1xf32, #tpu.memory_space<vmem>>, vector<8x1xf32>
    tpu.vector_store %arg19[%c0_684, %c0_685], %1823 {strides = array<i32>} : memref<8x1xf32, #tpu.memory_space<vmem>>, vector<8x1xf32>,
    return
  }
}

</mosaic_0001>

<llo_original>
// kernel: cmodel_forward.1
$region0: #{cmodel_forward.1}
  #allocation0 [shape = 'u32[]', space=smem, size = 0x4, offset = 0x4, fixed_abs, tag = 'smem constant byte address 0x4 - core index']
  #allocation1 [shape = 'u32[144,128]{1,0:T(1,128)}', space=vmem, size = 0x12000, scoped, tag = 'internal scratch']
  #allocation2 [shape = 'bf16[4608,384]{1,0:T(16,128)(2,1)}', space=vmem, size = 0x360000, scoped, tag = 'scratch operand']
  #allocation3 [shape = 'bf16[3456,128]{1,0:T(16,128)(2,1)}', space=vmem, size = 0xd8000, scoped, tag = 'scratch operand']
  #allocation4 [shape = 's32[2]{0}', space=sflag, size = 0x8, scoped, tag = 'scratch operand']
  #allocation5 [shape = 'f32[32,128]{1,0:T(8,128)}', space=vmem, size = 0x4000, scoped, tag = 'scratch operand']
  #allocation6 [shape = 'f32[8,512]{1,0:T(8,128)}', space=vmem, size = 0x4000, scoped, tag = 'scratch operand']
  #allocation7 [shape = 'bf16[8,4608]{1,0:T(8,128)(2,1)}', space=vmem, size = 0x12000, scoped, tag = 'scratch operand']
  #allocation25 [shape = 's32[]', space=sflag, size = 0x4, offset = 0, fixed_abs, tag = 'sflag constant byte address 0x0 - dummy sync flag']
  #allocation27 [shape = 's32[]', space=sflag, size = 0x4, offset = 0, fixed_abs, tag = 'sflag constant byte address 0x0 - dummy sync flag']
  #allocation28 [shape = 's32[]', space=sflag, size = 0x4, offset = 0, fixed_abs, tag = 'sflag constant byte address 0x0 - dummy sync flag']
  #allocation29 [shape = 'u32[]', space=smem, size = 0x4, offset = 0x44, fixed_abs, tag = 'smem constant byte address 0x44 - assertion arg 0']
  #allocation30 [shape = 'u32[]', space=smem, size = 0x4, offset = 0x48, fixed_abs, tag = 'smem constant byte address 0x48 - assertion arg 1']
  %s0 = inlined_call_operand.hbm [shape: f32[8,32], index: 0, kind: input, shape index: {}]
  %s1 = inlined_call_operand.hbm [shape: f32[8,128], index: 1, kind: input, shape index: {}]
  %s2 = inlined_call_operand.hbm [shape: f32[8,128], index: 2, kind: input, shape index: {}]
  %s3 = inlined_call_operand.hbm [shape: f32[8,128], index: 3, kind: input, shape index: {}]
  %s4 = inlined_call_operand.vmem [shape: f32[8,2], index: 4, kind: input, shape index: {}]
  %s5 = inlined_call_operand.hbm [shape: f32[32,128], index: 5, kind: input, shape index: {}]
  %s6 = inlined_call_operand.hbm [shape: f32[1,128], index: 6, kind: input, shape index: {}]
  %s7 = inlined_call_operand.hbm [shape: f32[128,256], index: 7, kind: input, shape index: {}]
  %s8 = inlined_call_operand.hbm [shape: f32[1,256], index: 8, kind: input, shape index: {}]
  %s9 = inlined_call_operand.vmem [shape: f32[256,4], index: 9, kind: input, shape index: {}]
  %s10 = inlined_call_operand.hbm [shape: f32[1,4], index: 10, kind: input, shape index: {}]
  %s11 = inlined_call_operand.vmem [shape: f32[1,4], index: 11, kind: input, shape index: {}]
  %s12 = inlined_call_operand.hbm [shape: bf16[4608,384], index: 12, kind: input, shape index: {}]
  %s13 = inlined_call_operand.hbm [shape: f32[1,384], index: 13, kind: input, shape index: {}]
  %s14 = inlined_call_operand.hbm [shape: f32[1,384], index: 14, kind: input, shape index: {}]
  %s15 = inlined_call_operand.hbm [shape: bf16[3456,128], index: 15, kind: input, shape index: {}]
  %s16 = inlined_call_operand.vmem [shape: bf16[1152,8], index: 16, kind: input, shape index: {}]
  %s17 = inlined_call_operand.vmem [shape: f32[9,8], index: 17, kind: input, shape index: {}]
  %s18 = inlined_call_operand.vmem [shape: f32[9,2], index: 18, kind: input, shape index: {}]
  %s19 = inlined_call_operand.vmem [shape: f32[8,1], index: 19, kind: output, shape index: {}]
  %s20 = sld [smem:[#allocation0]]
  $region126: #{cmodel_forward.1} parent=0
    _
  %s22 = ssub.s32 1, %s20
  %s23 = scalar_select 0, %s22, %s20
  $region1: #{cmodel_forward.1} parent=0
    #allocation8 [shape = 'u8[4096]{0}', space=vmem, size = 0x1000, scoped, tag = 'input window, operand 0, single buffered']
    #allocation9 [shape = 's32[1]{0}', space=sflag, size = 0x4, scoped, tag = 'scoped memory for cmodel_forward.1']
    #allocation10 [shape = 'u8[4096]{0}', space=vmem, size = 0x1000, scoped, tag = 'input window, operand 1, single buffered']
    #allocation11 [shape = 's32[1]{0}', space=sflag, size = 0x4, scoped, tag = 'scoped memory for cmodel_forward.1']
    #allocation12 [shape = 'u8[4096]{0}', space=vmem, size = 0x1000, scoped, tag = 'input window, operand 2, single buffered']
    #allocation13 [shape = 'u8[4096]{0}', space=vmem, size = 0x1000, scoped, tag = 'input window, operand 3, single buffered']
    #allocation14 [shape = 's32[1]{0}', space=sflag, size = 0x4, scoped, tag = 'scoped memory for cmodel_forward.1']
    #allocation15 [shape = 'u8[16384]{0}', space=vmem, size = 0x4000, scoped, tag = 'input window, operand 5, single buffered']
    #allocation16 [shape = 'u8[512]{0}', space=vmem, size = 0x400, scoped, tag = 'input window, operand 6, single buffered']
    #allocation17 [shape = 's32[1]{0}', space=sflag, size = 0x4, scoped, tag = 'scoped memory for cmodel_forward.1']
    #allocation18 [shape = 'u8[131072]{0}', space=vmem, size = 0x20000, scoped, tag = 'input window, operand 7, single buffered']
    #allocation19 [shape = 'u8[1024]{0}', space=vmem, size = 0x400, scoped, tag = 'input window, operand 8, single buffered']
    #allocation20 [shape = 's32[1]{0}', space=sflag, size = 0x4, scoped, tag = 'scoped memory for cmodel_forward.1']
    #allocation21 [shape = 'u8[512]{0}', space=vmem, size = 0x400, scoped, tag = 'input window, operand 10, single buffered']
    #allocation22 [shape = 'u8[1536]{0}', space=vmem, size = 0x800, scoped, tag = 'input window, operand 13, single buffered']
    #allocation23 [shape = 's32[1]{0}', space=sflag, size = 0x4, scoped, tag = 'scoped memory for cmodel_forward.1']
    #allocation24 [shape = 'u8[1536]{0}', space=vmem, size = 0x800, scoped, tag = 'input window, operand 14, single buffered']
    #allocation26 [shape = 'u32[9]{0}', space=smem, size = 0x24, scoped, tag = 'DMA stride descriptor']
    %24 = vsyncpa [#allocation9], 0
    %25 = vsyncpa [#allocation11], 0
    %26 = vsyncpa [#allocation14], 0
    %27 = vsyncpa [#allocation17], 0
    %28 = vsyncpa [#allocation20], 0
    %29 = vsyncpa [#allocation23], 0
    // Predicated region
    $region2: #{cmodel_forward.1} parent=1 // pred_check
      _
    $region3: #{cmodel_forward.1} parent=1 // pred_check_branch
      %31 = sbr.rel (0) target = $region5
    $region4: #{cmodel_forward.1} parent=1 // pred_region
      %s33 = ssub.s32 128, 128
      %34 = vsyncadd [#allocation9], %s33
      %s36 = sshll.u32 [#allocation8], 4
      %s37 = int_to_ptr.vmem [resolvable:$true] %s36
      %39 = dma.hbm_to_vmem [thread:$0]  %s0, 128, %s37, [#allocation9]
    $region5: #{cmodel_forward.1} parent=1 // pred_fallthru
      _
    // Predicated region
    $region6: #{cmodel_forward.1} parent=1 // pred_check
      _
    $region7: #{cmodel_forward.1} parent=1 // pred_check_branch
      %41 = sbr.rel (0) target = $region9
    $region8: #{cmodel_forward.1} parent=1 // pred_region
      %s43 = ssub.s32 128, 128
      %44 = vsyncadd [#allocation11], %s43
      %s46 = sshll.u32 [#allocation10], 4
      %s47 = int_to_ptr.vmem [resolvable:$true] %s46
      %49 = dma.hbm_to_vmem [thread:$0]  %s1, 128, %s47, [#allocation11]
    $region9: #{cmodel_forward.1} parent=1 // pred_fallthru
      _
    // Predicated region
    $region10: #{cmodel_forward.1} parent=1 // pred_check
      _
    $region11: #{cmodel_forward.1} parent=1 // pred_check_branch
      %51 = sbr.rel (0) target = $region13
    $region12: #{cmodel_forward.1} parent=1 // pred_region
      %s53 = ssub.s32 128, 128
      %54 = vsyncadd [#allocation11], %s53
      %s56 = sshll.u32 [#allocation12], 4
      %s57 = int_to_ptr.vmem [resolvable:$true] %s56
      %59 = dma.hbm_to_vmem [thread:$0]  %s2, 128, %s57, [#allocation11]
    $region13: #{cmodel_forward.1} parent=1 // pred_fallthru
      _
    // Predicated region
    $region14: #{cmodel_forward.1} parent=1 // pred_check
      _
    $region15: #{cmodel_forward.1} parent=1 // pred_check_branch
      %61 = sbr.rel (0) target = $region17
    $region16: #{cmodel_forward.1} parent=1 // pred_region
      %s63 = ssub.s32 128, 128
      %64 = vsyncadd [#allocation14], %s63
      %s66 = sshll.u32 [#allocation13], 4
      %s67 = int_to_ptr.vmem [resolvable:$true] %s66
      %69 = dma.hbm_to_vmem [thread:$0]  %s3, 128, %s67, [#allocation14]
    $region17: #{cmodel_forward.1} parent=1 // pred_fallthru
      _
    // Predicated region
    $region18: #{cmodel_forward.1} parent=1 // pred_check
      _
    $region19: #{cmodel_forward.1} parent=1 // pred_check_branch
      %71 = sbr.rel (0) target = $region21
    $region20: #{cmodel_forward.1} parent=1 // pred_region
      _
    $region21: #{cmodel_forward.1} parent=1 // pred_fallthru
      _
    // Predicated region
    $region22: #{cmodel_forward.1} parent=1 // pred_check
      _
    $region23: #{cmodel_forward.1} parent=1 // pred_check_branch
      %73 = sbr.rel (0) target = $region25
    $region24: #{cmodel_forward.1} parent=1 // pred_region
      %s75 = ssub.s32 512, 512
      %76 = vsyncadd [#allocation14], %s75
      %s77 = sshll.u32 [#allocation15], 4
      %s78 = int_to_ptr.vmem [resolvable:$true] %s77
      %83 = dma.hbm_to_vmem [thread:$0]  %s5, 512, %s78, [#allocation14], 128, 128, 8
    $region25: #{cmodel_forward.1} parent=1 // pred_fallthru
      _
    // Predicated region
    $region26: #{cmodel_forward.1} parent=1 // pred_check
      _
    $region27: #{cmodel_forward.1} parent=1 // pred_check_branch
      %85 = sbr.rel (0) target = $region29
    $region28: #{cmodel_forward.1} parent=1 // pred_region
      %s87 = ssub.s32 16, 16
      %88 = vsyncadd [#allocation17], %s87
      %s90 = sshll.u32 [#allocation16], 4
      %s91 = int_to_ptr.vmem [resolvable:$true] %s90
      %93 = dma.hbm_to_vmem [thread:$0]  %s6, 16, %s91, [#allocation17]
    $region29: #{cmodel_forward.1} parent=1 // pred_fallthru
      _
    // Predicated region
    $region30: #{cmodel_forward.1} parent=1 // pred_check
      _
    $region31: #{cmodel_forward.1} parent=1 // pred_check_branch
      %95 = sbr.rel (0) target = $region33
    $region32: #{cmodel_forward.1} parent=1 // pred_region
      %s97 = ssub.s32 4096, 4096
      %98 = vsyncadd [#allocation17], %s97
      %s99 = sshll.u32 [#allocation18], 4
      %s100 = int_to_ptr.vmem [resolvable:$true] %s99
      %105 = dma.hbm_to_vmem [thread:$0]  %s7, 4096, %s100, [#allocation17], 256, 256, 16
    $region33: #{cmodel_forward.1} parent=1 // pred_fallthru
      _
    // Predicated region
    $region34: #{cmodel_forward.1} parent=1 // pred_check
      _
    $region35: #{cmodel_forward.1} parent=1 // pred_check_branch
      %107 = sbr.rel (0) target = $region37
    $region36: #{cmodel_forward.1} parent=1 // pred_region
      %s109 = ssub.s32 32, 32
      %110 = vsyncadd [#allocation20], %s109
      %s112 = sshll.u32 [#allocation19], 4
      %s113 = int_to_ptr.vmem [resolvable:$true] %s112
      %115 = dma.hbm_to_vmem [thread:$0]  %s8, 32, %s113, [#allocation20]
    $region37: #{cmodel_forward.1} parent=1 // pred_fallthru
      _
    // Predicated region
    $region38: #{cmodel_forward.1} parent=1 // pred_check
      _
    $region39: #{cmodel_forward.1} parent=1 // pred_check_branch
      %117 = sbr.rel (0) target = $region41
    $region40: #{cmodel_forward.1} parent=1 // pred_region
      _
    $region41: #{cmodel_forward.1} parent=1 // pred_fallthru
      _
    // Predicated region
    $region42: #{cmodel_forward.1} parent=1 // pred_check
      _
    $region43: #{cmodel_forward.1} parent=1 // pred_check_branch
      %119 = sbr.rel (0) target = $region45
    $region44: #{cmodel_forward.1} parent=1 // pred_region
      %s121 = ssub.s32 16, 16
      %122 = vsyncadd [#allocation20], %s121
      %s124 = sshll.u32 [#allocation21], 4
      %s125 = int_to_ptr.vmem [resolvable:$true] %s124
      %127 = dma.hbm_to_vmem [thread:$0]  %s10, 16, %s125, [#allocation20]
    $region45: #{cmodel_forward.1} parent=1 // pred_fallthru
      _
    // Predicated region
    $region46: #{cmodel_forward.1} parent=1 // pred_check
      _
    $region47: #{cmodel_forward.1} parent=1 // pred_check_branch
      %129 = sbr.rel (0) target = $region49
    $region48: #{cmodel_forward.1} parent=1 // pred_region
      _
    $region49: #{cmodel_forward.1} parent=1 // pred_fallthru
      _
    // Predicated region
    $region50: #{cmodel_forward.1} parent=1 // pred_check
      _
    $region51: #{cmodel_forward.1} parent=1 // pred_check_branch
      %131 = sbr.rel (0) target = $region53
    $region52: #{cmodel_forward.1} parent=1 // pred_region
      %s133 = ssub.s32 48, 48
      %134 = vsyncadd [#allocation23], %s133
      %s136 = sshll.u32 [#allocation22], 4
      %s137 = int_to_ptr.vmem [resolvable:$true] %s136
      %139 = dma.hbm_to_vmem [thread:$0]  %s13, 48, %s137, [#allocation23]
    $region53: #{cmodel_forward.1} parent=1 // pred_fallthru
      _
    // Predicated region
    $region54: #{cmodel_forward.1} parent=1 // pred_check
      _
    $region55: #{cmodel_forward.1} parent=1 // pred_check_branch
      %141 = sbr.rel (0) target = $region57
    $region56: #{cmodel_forward.1} parent=1 // pred_region
      %s143 = ssub.s32 48, 48
      %144 = vsyncadd [#allocation23], %s143
      %s146 = sshll.u32 [#allocation24], 4
      %s147 = int_to_ptr.vmem [resolvable:$true] %s146
      %149 = dma.hbm_to_vmem [thread:$0]  %s14, 48, %s147, [#allocation23]
    $region57: #{cmodel_forward.1} parent=1 // pred_fallthru
      _
    // Predicated region
    $region58: #{cmodel_forward.1} parent=1 // pred_check
      _
    $region59: #{cmodel_forward.1} parent=1 // pred_check_branch
      %151 = sbr.rel (0) target = $region61
    $region60: #{cmodel_forward.1} parent=1 // pred_region
      _
    $region61: #{cmodel_forward.1} parent=1 // pred_fallthru
      _
    // Predicated region
    $region62: #{cmodel_forward.1} parent=1 // pred_check
      _
    $region63: #{cmodel_forward.1} parent=1 // pred_check_branch
      %153 = sbr.rel (0) target = $region65
    $region64: #{cmodel_forward.1} parent=1 // pred_region
      _
    $region65: #{cmodel_forward.1} parent=1 // pred_fallthru
      _
    // Predicated region
    $region66: #{cmodel_forward.1} parent=1 // pred_check
      _
    $region67: #{cmodel_forward.1} parent=1 // pred_check_branch
      %155 = sbr.rel (0) target = $region69
    $region68: #{cmodel_forward.1} parent=1 // pred_region
      _
    $region69: #{cmodel_forward.1} parent=1 // pred_fallthru
      _
    // Predicated region
    $region70: #{cmodel_forward.1} parent=1 // pred_check
      _
    $region71: #{cmodel_forward.1} parent=1 // pred_check_branch
      %157 = sbr.rel (0) target = $region73
    $region72: #{cmodel_forward.1} parent=1 // pred_region
      %158 = dma.done [#allocation9], 128
    $region73: #{cmodel_forward.1} parent=1 // pred_fallthru
      _
    // Predicated region
    $region74: #{cmodel_forward.1} parent=1 // pred_check
      _
    $region75: #{cmodel_forward.1} parent=1 // pred_check_branch
      %160 = sbr.rel (0) target = $region77
    $region76: #{cmodel_forward.1} parent=1 // pred_region
      %161 = dma.done [#allocation11], 128
    $region77: #{cmodel_forward.1} parent=1 // pred_fallthru
      _
    // Predicated region
    $region78: #{cmodel_forward.1} parent=1 // pred_check
      _
    $region79: #{cmodel_forward.1} parent=1 // pred_check_branch
      %163 = sbr.rel (0) target = $region81
    $region80: #{cmodel_forward.1} parent=1 // pred_region
      %164 = dma.done [#allocation11], 128
    $region81: #{cmodel_forward.1} parent=1 // pred_fallthru
      _
    // Predicated region
    $region82: #{cmodel_forward.1} parent=1 // pred_check
      _
    $region83: #{cmodel_forward.1} parent=1 // pred_check_branch
      %166 = sbr.rel (0) target = $region85
    $region84: #{cmodel_forward.1} parent=1 // pred_region
      %167 = dma.done [#allocation14], 128
    $region85: #{cmodel_forward.1} parent=1 // pred_fallthru
      _
    // Predicated region
    $region86: #{cmodel_forward.1} parent=1 // pred_check
      _
    $region87: #{cmodel_forward.1} parent=1 // pred_check_branch
      %169 = sbr.rel (0) target = $region89
    $region88: #{cmodel_forward.1} parent=1 // pred_region
      %170 = dma.done [#allocation14], 512
    $region89: #{cmodel_forward.1} parent=1 // pred_fallthru
      _
    // Predicated region
    $region90: #{cmodel_forward.1} parent=1 // pred_check
      _
    $region91: #{cmodel_forward.1} parent=1 // pred_check_branch
      %172 = sbr.rel (0) target = $region93
    $region92: #{cmodel_forward.1} parent=1 // pred_region
      %173 = dma.done [#allocation17], 16
    $region93: #{cmodel_forward.1} parent=1 // pred_fallthru
      _
    // Predicated region
    $region94: #{cmodel_forward.1} parent=1 // pred_check
      _
    $region95: #{cmodel_forward.1} parent=1 // pred_check_branch
      %175 = sbr.rel (0) target = $region97
    $region96: #{cmodel_forward.1} parent=1 // pred_region
      %176 = dma.done [#allocation17], 4096
    $region97: #{cmodel_forward.1} parent=1 // pred_fallthru
      _
    // Predicated region
    $region98: #{cmodel_forward.1} parent=1 // pred_check
      _
    $region99: #{cmodel_forward.1} parent=1 // pred_check_branch
      %178 = sbr.rel (0) target = $region101
    $region100: #{cmodel_forward.1} parent=1 // pred_region
      %179 = dma.done [#allocation20], 32
    $region101: #{cmodel_forward.1} parent=1 // pred_fallthru
      _
    // Predicated region
    $region102: #{cmodel_forward.1} parent=1 // pred_check
      _
    $region103: #{cmodel_forward.1} parent=1 // pred_check_branch
      %181 = sbr.rel (0) target = $region105
    $region104: #{cmodel_forward.1} parent=1 // pred_region
      %182 = dma.done [#allocation20], 16
    $region105: #{cmodel_forward.1} parent=1 // pred_fallthru
      _
    // Predicated region
    $region106: #{cmodel_forward.1} parent=1 // pred_check
      _
    $region107: #{cmodel_forward.1} parent=1 // pred_check_branch
      %184 = sbr.rel (0) target = $region109
    $region108: #{cmodel_forward.1} parent=1 // pred_region
      %185 = dma.done [#allocation23], 48
    $region109: #{cmodel_forward.1} parent=1 // pred_fallthru
      _
    // Predicated region
    $region110: #{cmodel_forward.1} parent=1 // pred_check
      _
    $region111: #{cmodel_forward.1} parent=1 // pred_check_branch
      %187 = sbr.rel (0) target = $region113
    $region112: #{cmodel_forward.1} parent=1 // pred_region
      %188 = dma.done [#allocation23], 48
    $region113: #{cmodel_forward.1} parent=1 // pred_fallthru
      _
    %s191 = sshll.u32 1, 14
    %s192 = sxor.u32 4294967295, %s191
    %s194 = sld [smem:[#allocation0]]
    %s195 = sadd.s32 2, %s194
    %s197 = sshll.u32 7, 26
    %s198 = sxor.u32 4294967295, %s197
    %s199 = sand.u32 0, %s198
    %s200 = sshll.u32 %s195, 26
    %s201 = sor.u32 %s199, %s200
    %s202 = sshll.u32 [#allocation2], 4
    %s203 = int_to_ptr.vmem [resolvable:$true] %s202
    %206 = sst [smem:[#allocation26]] 384
    %s207 = scalar_lea.smem [#allocation26], 1
    %208 = sst [smem:[%s207]] 384
    %s209 = scalar_lea.smem [#allocation26], 2
    %210 = sst [smem:[%s209]] 3
    %s211 = scalar_lea.smem [#allocation26], 3
    %212 = sst [smem:[%s211]] 64
    %s213 = scalar_lea.smem [#allocation26], 4
    %214 = sst [smem:[%s213]] 128
    %s215 = scalar_lea.smem [#allocation26], 5
    %216 = sst [smem:[%s215]] 2
    %s217 = scalar_lea.smem [#allocation26], 6
    %218 = sst [smem:[%s217]] 192
    %s219 = scalar_lea.smem [#allocation26], 7
    %220 = sst [smem:[%s219]] 64
    %s221 = scalar_lea.smem [#allocation26], 8
    %222 = sst [smem:[%s221]] 4
    %224 = dma.general %s12, 110592, %s203, [#allocation4], [#allocation25], [#allocation26], %s201, 0
    %s225 = scalar_lea.sflag [#allocation4], 1
    // Predicated region
    $region114: #{cmodel_forward.1} parent=1 // pred_check
      _
    $region115: #{cmodel_forward.1} parent=1 // pred_check_branch
      %227 = sbr.rel target = $region117
    $region116: #{cmodel_forward.1} parent=1 // pred_region
      %228 = sst [smem:[#allocation29]] [#allocation28]
      %229 = sst [smem:[#allocation30]] [#allocation27]
    $region117: #{cmodel_forward.1} parent=1 // pred_fallthru
      _
    %231 = shalt.err (0)
    %s233 = sshll.u32 [#allocation3], 4
    %s234 = int_to_ptr.vmem [resolvable:$true] %s233
    %236 = dma.hbm_to_vmem [thread:$0]  %s15, 27648, %s234, %s225
    %v237 = vld [vmem:[#allocation8] sm:$0xff]
    %v238 = vld [vmem:[#allocation15] sm:$0xff]
    %v239 = vld [vmem:[#allocation15 + $0x8] sm:$0xff]
    %v240 = vld [vmem:[#allocation15 + $0x10] sm:$0xff]
    %v241 = vld [vmem:[#allocation15 + $0x18] sm:$0xff]
    %v242 = vld [vmem:[#allocation16] sm:$0x1]
    %v244 = vlaneseq
    %v245 = vshrl.u32 %v244, 7
    %v246 = vsub.s32 0, %v245
    %v247 = vrot.slane %v242, %v246
    %vm249 = vcmask 261120
    %v251 = vsel %vm249, %v237, 0
    %253 = vmatprep.subr.mxu0 0.0
    %254 = vmatpush1.msra.mxu0 %v238
    %255 = vmatprep.subr.mxu0 0.0
    %256 = vmatpush1.msra.mxu0 %v239
    %257 = vmatprep.subr.mxu0 0.0
    %258 = vmatpush1.msra.mxu0 %v240
    %259 = vmatprep.subr.mxu0 0.0
    %260 = vmatpush1.msra.mxu0 %v241
    %261 = vmatprep.subr.mxu0 0.0
    %262 = vmatpush1.msra.mxu0 0.0
    %263 = vmatprep.subr.mxu0 0.0
    %264 = vmatpush1.msra.mxu0 0.0
    %265 = vmatprep.subr.mxu0 0.0
    %266 = vmatpush1.msra.mxu0 0.0
    %267 = vmatprep.subr.mxu0 0.0
    %268 = vmatpush1.msra.mxu0 0.0
    %269 = vmatprep.subr.mxu0 0.0
    %270 = vmatpush1.msra.mxu0 0.0
    %271 = vmatprep.subr.mxu0 0.0
    %272 = vmatpush1.msra.mxu0 0.0
    %273 = vmatprep.subr.mxu0 0.0
    %274 = vmatpush1.msra.mxu0 0.0
    %275 = vmatprep.subr.mxu0 0.0
    %276 = vmatpush1.msra.mxu0 0.0
    %277 = vmatprep.subr.mxu0 0.0
    %278 = vmatpush1.msra.mxu0 0.0
    %279 = vmatprep.subr.mxu0 0.0
    %280 = vmatpush1.msra.mxu0 0.0
    %281 = vmatprep.subr.mxu0 0.0
    %282 = vmatpush1.msra.mxu0 0.0
    %283 = vmatprep.subr.mxu0 0.0
    %284 = vmatpush1.msra.mxu0 0.0
    %285 = vmatprep.subr.mxu0 0.0
    %286 = vmatpush1.msra.mxu0 0.0
    %287 = vmatprep.subr.mxu0 0.0
    %288 = vmatpush1.msra.mxu0 0.0
    %289 = vmatprep.subr.mxu0 0.0
    %290 = vmatpush1.msra.mxu0 0.0
    %291 = vmatprep.subr.mxu0 0.0
    %292 = vmatpush1.msra.mxu0 0.0
    %293 = vmatprep.subr.mxu0 0.0
    %294 = vmatpush1.msra.mxu0 0.0
    %295 = vmatprep.subr.mxu0 0.0
    %296 = vmatpush1.msra.mxu0 0.0
    %297 = vmatprep.subr.mxu0 0.0
    %298 = vmatpush1.msra.mxu0 0.0
    %299 = vmatprep.subr.mxu0 0.0
    %300 = vmatpush1.msra.mxu0 0.0
    %301 = vmatprep.subr.mxu0 0.0
    %302 = vmatpush1.msra.mxu0 0.0
    %303 = vmatprep.subr.mxu0 0.0
    %304 = vmatpush1.msra.mxu0 0.0
    %305 = vmatprep.subr.mxu0 0.0
    %306 = vmatpush1.msra.mxu0 0.0
    %307 = vmatprep.subr.mxu0 0.0
    %308 = vmatpush1.msra.mxu0 0.0
    %309 = vmatprep.subr.mxu0 0.0
    %310 = vmatpush1.msra.mxu0 0.0
    %311 = vmatprep.subr.mxu0 0.0
    %312 = vmatpush1.msra.mxu0 0.0
    %313 = vmatprep.subr.mxu0 0.0
    %314 = vmatpush1.msra.mxu0 0.0
    %315 = vmatprep.subr.mxu0 0.0
    %316 = vmatpush1.msra.mxu0 0.0
    %317 = vmatprep.mubr.f32.mxu0 0.0
    %318 = vmatmul.mubr.f32.gmra.mrb[0].mxu0 %v251
    %v319 = vpop.f32.mrb[0].mxu0
    %v320 = vadd.f32 %v247, %v319
    %v321 = vpop.f32.mrb[0].mxu0
    %322 = vdwg.mxu0
    %v323 = vmax.f32 %v320, 0.0
    %v324 = vld [vmem:[#allocation10] sm:$0xff]
    %v325 = vld [vmem:[#allocation12] sm:$0xff]
    %v326 = vld [vmem:[#allocation13] sm:$0xff]
    %327 = vst [vmem:[#allocation5] sm:$0xff] %v323
    %328 = vst [vmem:[#allocation5 + $0x8] sm:$0xff] %v324
    %329 = vst [vmem:[#allocation5 + $0x10] sm:$0xff] %v325
    %330 = vst [vmem:[#allocation5 + $0x18] sm:$0xff] %v326
    %v331 = vld [vmem:[#allocation5] sm:$0xff]
    %v332 = vld [vmem:[#allocation5 + $0x8] sm:$0xff]
    %v333 = vld [vmem:[#allocation5 + $0x10] sm:$0xff]
    %v334 = vld [vmem:[#allocation5 + $0x18] sm:$0xff]
    %v335 = vld [vmem:[#allocation18] sm:$0xff]
    %v336 = vld [vmem:[#allocation18 + $0x8] sm:$0xff]
    %v337 = vld [vmem:[#allocation18 + $0x10] sm:$0xff]
    %v338 = vld [vmem:[#allocation18 + $0x18] sm:$0xff]
    %v339 = vld [vmem:[#allocation18 + $0x20] sm:$0xff]
    %v340 = vld [vmem:[#allocation18 + $0x28] sm:$0xff]
    %v341 = vld [vmem:[#allocation18 + $0x30] sm:$0xff]
    %v342 = vld [vmem:[#allocation18 + $0x38] sm:$0xff]
    %v343 = vld [vmem:[#allocation18 + $0x40] sm:$0xff]
    %v344 = vld [vmem:[#allocation18 + $0x48] sm:$0xff]
    %v345 = vld [vmem:[#allocation18 + $0x50] sm:$0xff]
    %v346 = vld [vmem:[#allocation18 + $0x58] sm:$0xff]
    %v347 = vld [vmem:[#allocation18 + $0x60] sm:$0xff]
    %v348 = vld [vmem:[#allocation18 + $0x68] sm:$0xff]
    %v349 = vld [vmem:[#allocation18 + $0x70] sm:$0xff]
    %v350 = vld [vmem:[#allocation18 + $0x78] sm:$0xff]
    %v351 = vld [vmem:[#allocation18 + $0x80] sm:$0xff]
    %v352 = vld [vmem:[#allocation18 + $0x88] sm:$0xff]
    %v353 = vld [vmem:[#allocation18 + $0x90] sm:$0xff]
    %v354 = vld [vmem:[#allocation18 + $0x98] sm:$0xff]
    %v355 = vld [vmem:[#allocation18 + $0xa0] sm:$0xff]
    %v356 = vld [vmem:[#allocation18 + $0xa8] sm:$0xff]
    %v357 = vld [vmem:[#allocation18 + $0xb0] sm:$0xff]
    %v358 = vld [vmem:[#allocation18 + $0xb8] sm:$0xff]
    %v359 = vld [vmem:[#allocation18 + $0xc0] sm:$0xff]
    %v360 = vld [vmem:[#allocation18 + $0xc8] sm:$0xff]
    %v361 = vld [vmem:[#allocation18 + $0xd0] sm:$0xff]
    %v362 = vld [vmem:[#allocation18 + $0xd8] sm:$0xff]
    %v363 = vld [vmem:[#allocation18 + $0xe0] sm:$0xff]
    %v364 = vld [vmem:[#allocation18 + $0xe8] sm:$0xff]
    %v365 = vld [vmem:[#allocation18 + $0xf0] sm:$0xff]
    %v366 = vld [vmem:[#allocation18 + $0xf8] sm:$0xff]
    %v367 = vld [vmem:[#allocation19] sm:$0x3]
    %v369 = vlaneseq
    %v370 = vshrl.u32 %v369, 7
    %v371 = vsub.s32 0, %v370
    %v372 = vrot.slane %v367, %v371
    %v373 = vlaneseq
    %v374 = vshrl.u32 %v373, 7
    %v375 = vsub.s32 1, %v374
    %v376 = vrot.slane %v367, %v375
    %379 = vmatprep.subr.mxu0 %v336
    %380 = vmatpush1.msra.mxu0 %v335
    %381 = vmatprep.subr.mxu0 %v338
    %382 = vmatpush1.msra.mxu0 %v337
    %383 = vmatprep.subr.mxu0 %v340
    %384 = vmatpush1.msra.mxu0 %v339
    %385 = vmatprep.subr.mxu0 %v342
    %386 = vmatpush1.msra.mxu0 %v341
    %387 = vmatprep.subr.mxu0 %v344
    %388 = vmatpush1.msra.mxu0 %v343
    %389 = vmatprep.subr.mxu0 %v346
    %390 = vmatpush1.msra.mxu0 %v345
    %391 = vmatprep.subr.mxu0 %v348
    %392 = vmatpush1.msra.mxu0 %v347
    %393 = vmatprep.subr.mxu0 %v350
    %394 = vmatpush1.msra.mxu0 %v349
    %395 = vmatprep.subr.mxu0 %v352
    %396 = vmatpush1.msra.mxu0 %v351
    %397 = vmatprep.subr.mxu0 %v354
    %398 = vmatpush1.msra.mxu0 %v353
    %399 = vmatprep.subr.mxu0 %v356
    %400 = vmatpush1.msra.mxu0 %v355
    %401 = vmatprep.subr.mxu0 %v358
    %402 = vmatpush1.msra.mxu0 %v357
    %403 = vmatprep.subr.mxu0 %v360
    %404 = vmatpush1.msra.mxu0 %v359
    %405 = vmatprep.subr.mxu0 %v362
    %406 = vmatpush1.msra.mxu0 %v361
    %407 = vmatprep.subr.mxu0 %v364
    %408 = vmatpush1.msra.mxu0 %v363
    %409 = vmatprep.subr.mxu0 %v366
    %410 = vmatpush1.msra.mxu0 %v365
    %411 = vmatprep.subr.mxu0 0.0
    %412 = vmatpush1.msra.mxu0 0.0
    %413 = vmatprep.subr.mxu0 0.0
    %414 = vmatpush1.msra.mxu0 0.0
    %415 = vmatprep.subr.mxu0 0.0
    %416 = vmatpush1.msra.mxu0 0.0
    %417 = vmatprep.subr.mxu0 0.0
    %418 = vmatpush1.msra.mxu0 0.0
    %419 = vmatprep.subr.mxu0 0.0
    %420 = vmatpush1.msra.mxu0 0.0
    %421 = vmatprep.subr.mxu0 0.0
    %422 = vmatpush1.msra.mxu0 0.0
    %423 = vmatprep.subr.mxu0 0.0
    %424 = vmatpush1.msra.mxu0 0.0
    %425 = vmatprep.subr.mxu0 0.0
    %426 = vmatpush1.msra.mxu0 0.0
    %427 = vmatprep.subr.mxu0 0.0
    %428 = vmatpush1.msra.mxu0 0.0
    %429 = vmatprep.subr.mxu0 0.0
    %430 = vmatpush1.msra.mxu0 0.0
    %431 = vmatprep.subr.mxu0 0.0
    %432 = vmatpush1.msra.mxu0 0.0
    %433 = vmatprep.subr.mxu0 0.0
    %434 = vmatpush1.msra.mxu0 0.0
    %435 = vmatprep.subr.mxu0 0.0
    %436 = vmatpush1.msra.mxu0 0.0
    %437 = vmatprep.subr.mxu0 0.0
    %438 = vmatpush1.msra.mxu0 0.0
    %439 = vmatprep.subr.mxu0 0.0
    %440 = vmatpush1.msra.mxu0 0.0
    %441 = vmatprep.subr.mxu0 0.0
    %442 = vmatpush1.msra.mxu0 0.0
    %443 = vmatprep.mubr.f32.mxu0 0.0
    %444 = vmatmul.mubr.f32.gmra.mrb[0].mxu0 %v331
    %v445 = vpop.f32.mrb[0].mxu0
    %v446 = vadd.f32 %v372, %v445
    %v447 = vpop.f32.mrb[0].mxu0
    %v448 = vadd.f32 %v376, %v447
    %449 = vmatprep.mubr.f32.mxu0 0.0
    %450 = vmatmul.mubr.f32.gmra.mrb[0].mxu0 %v332
    %v451 = vpop.f32.mrb[0].mxu0
    %v452 = vadd.f32 %v372, %v451
    %v453 = vpop.f32.mrb[0].mxu0
    %v454 = vadd.f32 %v376, %v453
    %455 = vmatprep.mubr.f32.mxu0 0.0
    %456 = vmatmul.mubr.f32.gmra.mrb[0].mxu0 %v333
    %v457 = vpop.f32.mrb[0].mxu0
    %v458 = vadd.f32 %v372, %v457
    %v459 = vpop.f32.mrb[0].mxu0
    %v460 = vadd.f32 %v376, %v459
    %461 = vmatprep.mubr.f32.mxu0 0.0
    %462 = vmatmul.mubr.f32.gmra.mrb[0].mxu0 %v334
    %v463 = vpop.f32.mrb[0].mxu0
    %v464 = vadd.f32 %v372, %v463
    %v465 = vpop.f32.mrb[0].mxu0
    %v466 = vadd.f32 %v376, %v465
    %467 = vdwg.mxu0
    %v468 = vmax.f32 %v446, 0.0
    %v469 = vmax.f32 %v448, 0.0
    %v470 = vmax.f32 %v452, 0.0
    %v471 = vmax.f32 %v454, 0.0
    %v472 = vmax.f32 %v458, 0.0
    %v473 = vmax.f32 %v460, 0.0
    %v474 = vmax.f32 %v464, 0.0
    %v475 = vmax.f32 %v466, 0.0
    %v476 = vld [vmem:[%s9] sm:$0xff]
    %v477 = vld [vmem:[%s9 + $0x8] sm:$0xff]
    %v478 = vld [vmem:[%s9 + $0x10] sm:$0xff]
    %v479 = vld [vmem:[%s9 + $0x18] sm:$0xff]
    %v480 = vld [vmem:[%s9 + $0x20] sm:$0xff]
    %v481 = vld [vmem:[%s9 + $0x28] sm:$0xff]
    %v482 = vld [vmem:[%s9 + $0x30] sm:$0xff]
    %v483 = vld [vmem:[%s9 + $0x38] sm:$0xff]
    %v484 = vld [vmem:[%s9 + $0x40] sm:$0xff]
    %v485 = vld [vmem:[%s9 + $0x48] sm:$0xff]
    %v486 = vld [vmem:[%s9 + $0x50] sm:$0xff]
    %v487 = vld [vmem:[%s9 + $0x58] sm:$0xff]
    %v488 = vld [vmem:[%s9 + $0x60] sm:$0xff]
    %v489 = vld [vmem:[%s9 + $0x68] sm:$0xff]
    %v490 = vld [vmem:[%s9 + $0x70] sm:$0xff]
    %v491 = vld [vmem:[%s9 + $0x78] sm:$0xff]
    %v492 = vld [vmem:[%s9 + $0x80] sm:$0xff]
    %v493 = vld [vmem:[%s9 + $0x88] sm:$0xff]
    %v494 = vld [vmem:[%s9 + $0x90] sm:$0xff]
    %v495 = vld [vmem:[%s9 + $0x98] sm:$0xff]
    %v496 = vld [vmem:[%s9 + $0xa0] sm:$0xff]
    %v497 = vld [vmem:[%s9 + $0xa8] sm:$0xff]
    %v498 = vld [vmem:[%s9 + $0xb0] sm:$0xff]
    %v499 = vld [vmem:[%s9 + $0xb8] sm:$0xff]
    %v500 = vld [vmem:[%s9 + $0xc0] sm:$0xff]
    %v501 = vld [vmem:[%s9 + $0xc8] sm:$0xff]
    %v502 = vld [vmem:[%s9 + $0xd0] sm:$0xff]
    %v503 = vld [vmem:[%s9 + $0xd8] sm:$0xff]
    %v504 = vld [vmem:[%s9 + $0xe0] sm:$0xff]
    %v505 = vld [vmem:[%s9 + $0xe8] sm:$0xff]
    %v506 = vld [vmem:[%s9 + $0xf0] sm:$0xff]
    %v507 = vld [vmem:[%s9 + $0xf8] sm:$0xff]
    %v508 = vld [vmem:[#allocation21] sm:$0x1]
    %v510 = vlaneseq
    %v511 = vshrl.u32 %v510, 7
    %v512 = vsub.s32 0, %v511
    %v513 = vrot.slane %v508, %v512
    %515 = vmatprep.subr.mxu0 0.0
    %516 = vmatpush1.msra.mxu0 %v476
    %517 = vmatprep.subr.mxu0 0.0
    %518 = vmatpush1.msra.mxu0 %v477
    %519 = vmatprep.subr.mxu0 0.0
    %520 = vmatpush1.msra.mxu0 %v478
    %521 = vmatprep.subr.mxu0 0.0
    %522 = vmatpush1.msra.mxu0 %v479
    %523 = vmatprep.subr.mxu0 0.0
    %524 = vmatpush1.msra.mxu0 %v480
    %525 = vmatprep.subr.mxu0 0.0
    %526 = vmatpush1.msra.mxu0 %v481
    %527 = vmatprep.subr.mxu0 0.0
    %528 = vmatpush1.msra.mxu0 %v482
    %529 = vmatprep.subr.mxu0 0.0
    %530 = vmatpush1.msra.mxu0 %v483
    %531 = vmatprep.subr.mxu0 0.0
    %532 = vmatpush1.msra.mxu0 %v484
    %533 = vmatprep.subr.mxu0 0.0
    %534 = vmatpush1.msra.mxu0 %v485
    %535 = vmatprep.subr.mxu0 0.0
    %536 = vmatpush1.msra.mxu0 %v486
    %537 = vmatprep.subr.mxu0 0.0
    %538 = vmatpush1.msra.mxu0 %v487
    %539 = vmatprep.subr.mxu0 0.0
    %540 = vmatpush1.msra.mxu0 %v488
    %541 = vmatprep.subr.mxu0 0.0
    %542 = vmatpush1.msra.mxu0 %v489
    %543 = vmatprep.subr.mxu0 0.0
    %544 = vmatpush1.msra.mxu0 %v490
    %545 = vmatprep.subr.mxu0 0.0
    %546 = vmatpush1.msra.mxu0 %v491
    %547 = vmatprep.subr.mxu0 0.0
    %548 = vmatpush1.msra.mxu0 %v492
    %549 = vmatprep.subr.mxu0 0.0
    %550 = vmatpush1.msra.mxu0 %v493
    %551 = vmatprep.subr.mxu0 0.0
    %552 = vmatpush1.msra.mxu0 %v494
    %553 = vmatprep.subr.mxu0 0.0
    %554 = vmatpush1.msra.mxu0 %v495
    %555 = vmatprep.subr.mxu0 0.0
    %556 = vmatpush1.msra.mxu0 %v496
    %557 = vmatprep.subr.mxu0 0.0
    %558 = vmatpush1.msra.mxu0 %v497
    %559 = vmatprep.subr.mxu0 0.0
    %560 = vmatpush1.msra.mxu0 %v498
    %561 = vmatprep.subr.mxu0 0.0
    %562 = vmatpush1.msra.mxu0 %v499
    %563 = vmatprep.subr.mxu0 0.0
    %564 = vmatpush1.msra.mxu0 %v500
    %565 = vmatprep.subr.mxu0 0.0
    %566 = vmatpush1.msra.mxu0 %v501
    %567 = vmatprep.subr.mxu0 0.0
    %568 = vmatpush1.msra.mxu0 %v502
    %569 = vmatprep.subr.mxu0 0.0
    %570 = vmatpush1.msra.mxu0 %v503
    %571 = vmatprep.subr.mxu0 0.0
    %572 = vmatpush1.msra.mxu0 %v504
    %573 = vmatprep.subr.mxu0 0.0
    %574 = vmatpush1.msra.mxu0 %v505
    %575 = vmatprep.subr.mxu0 0.0
    %576 = vmatpush1.msra.mxu0 %v506
    %577 = vmatprep.subr.mxu0 0.0
    %578 = vmatpush1.msra.mxu0 %v507
    %579 = vmatprep.mubr.f32.mxu0 %v469
    %580 = vmatmul.mubr.f32.gmra.mrb[0].mxu0 %v468
    %v581 = vpop.f32.mrb[0].mxu0
    %v582 = vadd.f32 %v513, %v581
    %v583 = vpop.f32.mrb[0].mxu0
    %584 = vmatprep.mubr.f32.mxu0 %v471
    %585 = vmatmul.mubr.f32.gmra.mrb[0].mxu0 %v470
    %v586 = vpop.f32.mrb[0].mxu0
    %v587 = vadd.f32 %v513, %v586
    %v588 = vpop.f32.mrb[0].mxu0
    %589 = vmatprep.mubr.f32.mxu0 %v473
    %590 = vmatmul.mubr.f32.gmra.mrb[0].mxu0 %v472
    %v591 = vpop.f32.mrb[0].mxu0
    %v592 = vadd.f32 %v513, %v591
    %v593 = vpop.f32.mrb[0].mxu0
    %594 = vmatprep.mubr.f32.mxu0 %v475
    %595 = vmatmul.mubr.f32.gmra.mrb[0].mxu0 %v474
    %v596 = vpop.f32.mrb[0].mxu0
    %v597 = vadd.f32 %v513, %v596
    %v598 = vpop.f32.mrb[0].mxu0
    %599 = vdwg.mxu0
    %601 = vrot.lane.b32.xlu0 %v587, 127
    %v602 = vpop.permute.xlu0 %601
    %v604 = vmax.f32 %v582, %v602
    %606 = vrot.lane.b32.xlu0 %v597, 127
    %v607 = vpop.permute.xlu0 %606
    %v609 = vmax.f32 %v592, %v607
    %611 = vrot.lane.b32.xlu0 %v609, 126
    %v612 = vpop.permute.xlu0 %611
    %v614 = vmax.f32 %v604, %v612
    %v615 = vsub.f32 %v582, %v614
    %v616 = vmul.f32 %v615, 1.442695
    %v617 = vpow.pop %v616
    %619 = vrot.lane.b32.xlu0 %v614, 1
    %v620 = vpop.permute.xlu0 %619
    %v622 = vsub.f32 %v587, %v620
    %v623 = vmul.f32 %v622, 1.442695
    %v624 = vpow.pop %v623
    %625 = vrot.lane.b32.xlu0 %v614, 2
    %v626 = vpop.permute.xlu0 %625
    %v628 = vsub.f32 %v592, %v626
    %v629 = vmul.f32 %v628, 1.442695
    %v630 = vpow.pop %v629
    %631 = vrot.lane.b32.xlu0 %v614, 3
    %v632 = vpop.permute.xlu0 %631
    %v634 = vsub.f32 %v597, %v632
    %v635 = vmul.f32 %v634, 1.442695
    %v636 = vpow.pop %v635
    %638 = vrot.lane.b32.xlu0 %v624, 127
    %v639 = vpop.permute.xlu0 %638
    %v641 = vadd.f32 %v617, %v639
    %643 = vrot.lane.b32.xlu0 %v630, 126
    %v644 = vpop.permute.xlu0 %643
    %v646 = vadd.f32 %v641, %v644
    %648 = vrot.lane.b32.xlu0 %v636, 125
    %v649 = vpop.permute.xlu0 %648
    %v651 = vadd.f32 %v646, %v649
    %v652 = vrcp.pop %v651
    %v653 = vmul.f32 1.0, %v652
    %v654 = vld [vmem:[%s11] sm:$0x1]
    %v655 = vmul.f32 %v617, %v653
    %v657 = vlaneseq
    %v658 = vshrl.u32 %v657, 7
    %v659 = vsub.s32 0, %v658
    %v660 = vrot.slane %v654, %v659
    %v662 = vmul.f32 %v655, %v660
    %664 = vset.pattern.permute.xlu0 0
    %665 = vperm.xlu0 %664, %v662
    %v666 = vpop.permute.xlu0 %665
    %v668 = vmul.f32 %v666, %v323
    %669 = vst [vmem:[#allocation6] sm:$0xff] %v668
    %671 = vrot.lane.b32.xlu0 %v653, 1
    %v672 = vpop.permute.xlu0 %671
    %v674 = vmul.f32 %v624, %v672
    %v675 = vmul.f32 %v674, %v660
    %677 = vset.pattern.permute.xlu0 1
    %678 = vperm.xlu0 %677, %v675
    %v679 = vpop.permute.xlu0 %678
    %v681 = vmul.f32 %v679, %v324
    %682 = vst [vmem:[#allocation6 + $0x8] sm:$0xff] %v681
    %683 = vrot.lane.b32.xlu0 %v653, 2
    %v684 = vpop.permute.xlu0 %683
    %v686 = vmul.f32 %v630, %v684
    %v687 = vmul.f32 %v686, %v660
    %689 = vset.pattern.permute.xlu0 2
    %690 = vperm.xlu0 %689, %v687
    %v691 = vpop.permute.xlu0 %690
    %v693 = vmul.f32 %v691, %v325
    %694 = vst [vmem:[#allocation6 + $0x10] sm:$0xff] %v693
    %695 = vrot.lane.b32.xlu0 %v653, 3
    %v696 = vpop.permute.xlu0 %695
    %v698 = vmul.f32 %v636, %v696
    %v699 = vmul.f32 %v698, %v660
    %701 = vset.pattern.permute.xlu0 3
    %702 = vperm.xlu0 %701, %v699
    %v703 = vpop.permute.xlu0 %702
    %v705 = vmul.f32 %v703, %v326
    %706 = vst [vmem:[#allocation6 + $0x18] sm:$0xff] %v705
    %v707 = vld [vmem:[#allocation6] sm:$0xff]
    %v708 = vld [vmem:[#allocation6 + $0x8] sm:$0xff]
    %v709 = vld [vmem:[#allocation6 + $0x10] sm:$0xff]
    %v710 = vld [vmem:[#allocation6 + $0x18] sm:$0xff]
    %s711 = smul.u32 4, 576
    %s712 = smul.u32 %s711, 3
    %s713 = sshll.u32 %s712, 4
    %714 = dma.done [#allocation4], %s713
    %v715 = vsub.f32 0.0, %v707
    %v716 = vsub.f32 0.0, %v708
    %v717 = vsub.f32 0.0, %v709
    %v718 = vsub.f32 0.0, %v710
    %v719 = vmul.f32 %v715, 1.442695
    %v720 = vpow.pop %v719
    %v721 = vmul.f32 %v716, 1.442695
    %v722 = vpow.pop %v721
    %v723 = vmul.f32 %v717, 1.442695
    %v724 = vpow.pop %v723
    %v725 = vmul.f32 %v718, 1.442695
    %v726 = vpow.pop %v725
    %v727 = vadd.f32 %v720, 1.0
    %v728 = vadd.f32 %v722, 1.0
    %v729 = vadd.f32 %v724, 1.0
    %v730 = vadd.f32 %v726, 1.0
    %v731 = vrcp.pop %v727
    %v732 = vmul.f32 1.0, %v731
    %v733 = vrcp.pop %v728
    %v734 = vmul.f32 1.0, %v733
    %v735 = vrcp.pop %v729
    %v736 = vmul.f32 1.0, %v735
    %v737 = vrcp.pop %v730
    %v738 = vmul.f32 1.0, %v737
    %v739 = vmul.f32 %v707, %v732
    %v740 = vmul.f32 %v708, %v734
    %v741 = vmul.f32 %v709, %v736
    %v742 = vmul.f32 %v710, %v738
    %v743 = vpack.c.bf16 %v739, %v739
    %v744 = vpack.c.bf16 %v740, %v740
    %v745 = vpack.c.bf16 %v741, %v741
    %v746 = vpack.c.bf16 %v742, %v742
    %v751 = vunpack.c.l.b16 %v743
    %v752 = vunpack.c.l.b16 %v744
    %v753 = vunpack.c.l.b16 %v745
    %v754 = vunpack.c.l.b16 %v746
    %v755 = vpack.c.b16 %v752, %v751
    %v756 = vpack.c.b16 %v754, %v753
    %759 = vst [vmem:[#allocation7] sm:$0xff] %v755
    %760 = vst [vmem:[#allocation7 + $0x8] sm:$0xff] %v756
    %v761 = vsub.f32 %v707, -2.2
    %v762 = vsub.f32 %v708, -2.2
    %v763 = vsub.f32 %v709, -2.2
    %v764 = vsub.f32 %v710, -2.2
    %v765 = vsub.f32 %v707, -1.8
    %v766 = vsub.f32 %v708, -1.8
    %v767 = vsub.f32 %v709, -1.8
    %v768 = vsub.f32 %v710, -1.8
    %v769 = vsub.f32 %v707, -1.4
    %v770 = vsub.f32 %v708, -1.4
    %v771 = vsub.f32 %v709, -1.4
    %v772 = vsub.f32 %v710, -1.4
    %v773 = vsub.f32 %v707, -1.0
    %v774 = vsub.f32 %v708, -1.0
    %v775 = vsub.f32 %v709, -1.0
    %v776 = vsub.f32 %v710, -1.0
    %v777 = vsub.f32 %v707, -0.6
    %v778 = vsub.f32 %v708, -0.6
    %v779 = vsub.f32 %v709, -0.6
    %v780 = vsub.f32 %v710, -0.6
    %v781 = vsub.f32 %v707, -0.2
    %v782 = vsub.f32 %v708, -0.2
    %v783 = vsub.f32 %v709, -0.2
    %v784 = vsub.f32 %v710, -0.2
    %v785 = vsub.f32 %v707, 0.2
    %v786 = vsub.f32 %v708, 0.2
    %v787 = vsub.f32 %v709, 0.2
    %v788 = vsub.f32 %v710, 0.2
    %v789 = vsub.f32 %v707, 0.6
    %v790 = vsub.f32 %v708, 0.6
    %v791 = vsub.f32 %v709, 0.6
    %v792 = vsub.f32 %v710, 0.6
    %v793 = vsub.f32 %v707, 1.0
    %v794 = vsub.f32 %v708, 1.0
    %v795 = vsub.f32 %v709, 1.0
    %v796 = vsub.f32 %v710, 1.0
    %v797 = vsub.f32 %v707, 1.4
    %v798 = vsub.f32 %v708, 1.4
    %v799 = vsub.f32 %v709, 1.4
    %v800 = vsub.f32 %v710, 1.4
    %v801 = vsub.f32 %v707, 1.8
    %v802 = vsub.f32 %v708, 1.8
    %v803 = vsub.f32 %v709, 1.8
    %v804 = vsub.f32 %v710, 1.8
    %v805 = vsub.f32 %v707, 2.2
    %v806 = vsub.f32 %v708, 2.2
    %v807 = vsub.f32 %v709, 2.2
    %v808 = vsub.f32 %v710, 2.2
    %vm809 = vcmp.ge.f32.partialorder %v761, 0.0
    %vm810 = vcmp.ge.f32.partialorder %v762, 0.0
    %vm811 = vcmp.ge.f32.partialorder %v763, 0.0
    %vm812 = vcmp.ge.f32.partialorder %v764, 0.0
    %vm813 = vcmp.lt.f32.partialorder %v765, 0.0
    %vm814 = vcmp.lt.f32.partialorder %v766, 0.0
    %vm815 = vcmp.lt.f32.partialorder %v767, 0.0
    %vm816 = vcmp.lt.f32.partialorder %v768, 0.0
    %vm817 = vmand %vm809, %vm813
    %vm818 = vmand %vm810, %vm814
    %vm819 = vmand %vm811, %vm815
    %vm820 = vmand %vm812, %vm816
    %v821 = vsel %vm817, 1.0, 0.0
    %v822 = vsel %vm818, 1.0, 0.0
    %v823 = vsel %vm819, 1.0, 0.0
    %v824 = vsel %vm820, 1.0, 0.0
    %vm825 = vcmp.ge.f32.partialorder %v765, 0.0
    %vm826 = vcmp.ge.f32.partialorder %v766, 0.0
    %vm827 = vcmp.ge.f32.partialorder %v767, 0.0
    %vm828 = vcmp.ge.f32.partialorder %v768, 0.0
    %vm829 = vcmp.lt.f32.partialorder %v769, 0.0
    %vm830 = vcmp.lt.f32.partialorder %v770, 0.0
    %vm831 = vcmp.lt.f32.partialorder %v771, 0.0
    %vm832 = vcmp.lt.f32.partialorder %v772, 0.0
    %vm833 = vmand %vm825, %vm829
    %vm834 = vmand %vm826, %vm830
    %vm835 = vmand %vm827, %vm831
    %vm836 = vmand %vm828, %vm832
    %v837 = vsel %vm833, 1.0, 0.0
    %v838 = vsel %vm834, 1.0, 0.0
    %v839 = vsel %vm835, 1.0, 0.0
    %v840 = vsel %vm836, 1.0, 0.0
    %vm841 = vcmp.ge.f32.partialorder %v769, 0.0
    %vm842 = vcmp.ge.f32.partialorder %v770, 0.0
    %vm843 = vcmp.ge.f32.partialorder %v771, 0.0
    %vm844 = vcmp.ge.f32.partialorder %v772, 0.0
    %vm845 = vcmp.lt.f32.partialorder %v773, 0.0
    %vm846 = vcmp.lt.f32.partialorder %v774, 0.0
    %vm847 = vcmp.lt.f32.partialorder %v775, 0.0
    %vm848 = vcmp.lt.f32.partialorder %v776, 0.0
    %vm849 = vmand %vm841, %vm845
    %vm850 = vmand %vm842, %vm846
    %vm851 = vmand %vm843, %vm847
    %vm852 = vmand %vm844, %vm848
    %v853 = vsel %vm849, 1.0, 0.0
    %v854 = vsel %vm850, 1.0, 0.0
    %v855 = vsel %vm851, 1.0, 0.0
    %v856 = vsel %vm852, 1.0, 0.0
    %vm857 = vcmp.ge.f32.partialorder %v773, 0.0
    %vm858 = vcmp.ge.f32.partialorder %v774, 0.0
    %vm859 = vcmp.ge.f32.partialorder %v775, 0.0
    %vm860 = vcmp.ge.f32.partialorder %v776, 0.0
    %vm861 = vcmp.lt.f32.partialorder %v777, 0.0
    %vm862 = vcmp.lt.f32.partialorder %v778, 0.0
    %vm863 = vcmp.lt.f32.partialorder %v779, 0.0
    %vm864 = vcmp.lt.f32.partialorder %v780, 0.0
    %vm865 = vmand %vm857, %vm861
    %vm866 = vmand %vm858, %vm862
    %vm867 = vmand %vm859, %vm863
    %vm868 = vmand %vm860, %vm864
    %v869 = vsel %vm865, 1.0, 0.0
    %v870 = vsel %vm866, 1.0, 0.0
    %v871 = vsel %vm867, 1.0, 0.0
    %v872 = vsel %vm868, 1.0, 0.0
    %vm873 = vcmp.ge.f32.partialorder %v777, 0.0
    %vm874 = vcmp.ge.f32.partialorder %v778, 0.0
    %vm875 = vcmp.ge.f32.partialorder %v779, 0.0
    %vm876 = vcmp.ge.f32.partialorder %v780, 0.0
    %vm877 = vcmp.lt.f32.partialorder %v781, 0.0
    %vm878 = vcmp.lt.f32.partialorder %v782, 0.0
    %vm879 = vcmp.lt.f32.partialorder %v783, 0.0
    %vm880 = vcmp.lt.f32.partialorder %v784, 0.0
    %vm881 = vmand %vm873, %vm877
    %vm882 = vmand %vm874, %vm878
    %vm883 = vmand %vm875, %vm879
    %vm884 = vmand %vm876, %vm880
    %v885 = vsel %vm881, 1.0, 0.0
    %v886 = vsel %vm882, 1.0, 0.0
    %v887 = vsel %vm883, 1.0, 0.0
    %v888 = vsel %vm884, 1.0, 0.0
    %vm889 = vcmp.ge.f32.partialorder %v781, 0.0
    %vm890 = vcmp.ge.f32.partialorder %v782, 0.0
    %vm891 = vcmp.ge.f32.partialorder %v783, 0.0
    %vm892 = vcmp.ge.f32.partialorder %v784, 0.0
    %vm893 = vcmp.lt.f32.partialorder %v785, 0.0
    %vm894 = vcmp.lt.f32.partialorder %v786, 0.0
    %vm895 = vcmp.lt.f32.partialorder %v787, 0.0
    %vm896 = vcmp.lt.f32.partialorder %v788, 0.0
    %vm897 = vmand %vm889, %vm893
    %vm898 = vmand %vm890, %vm894
    %vm899 = vmand %vm891, %vm895
    %vm900 = vmand %vm892, %vm896
    %v901 = vsel %vm897, 1.0, 0.0
    %v902 = vsel %vm898, 1.0, 0.0
    %v903 = vsel %vm899, 1.0, 0.0
    %v904 = vsel %vm900, 1.0, 0.0
    %vm905 = vcmp.ge.f32.partialorder %v785, 0.0
    %vm906 = vcmp.ge.f32.partialorder %v786, 0.0
    %vm907 = vcmp.ge.f32.partialorder %v787, 0.0
    %vm908 = vcmp.ge.f32.partialorder %v788, 0.0
    %vm909 = vcmp.lt.f32.partialorder %v789, 0.0
    %vm910 = vcmp.lt.f32.partialorder %v790, 0.0
    %vm911 = vcmp.lt.f32.partialorder %v791, 0.0
    %vm912 = vcmp.lt.f32.partialorder %v792, 0.0
    %vm913 = vmand %vm905, %vm909
    %vm914 = vmand %vm906, %vm910
    %vm915 = vmand %vm907, %vm911
    %vm916 = vmand %vm908, %vm912
    %v917 = vsel %vm913, 1.0, 0.0
    %v918 = vsel %vm914, 1.0, 0.0
    %v919 = vsel %vm915, 1.0, 0.0
    %v920 = vsel %vm916, 1.0, 0.0
    %vm921 = vcmp.ge.f32.partialorder %v789, 0.0
    %vm922 = vcmp.ge.f32.partialorder %v790, 0.0
    %vm923 = vcmp.ge.f32.partialorder %v791, 0.0
    %vm924 = vcmp.ge.f32.partialorder %v792, 0.0
    %vm925 = vcmp.lt.f32.partialorder %v793, 0.0
    %vm926 = vcmp.lt.f32.partialorder %v794, 0.0
    %vm927 = vcmp.lt.f32.partialorder %v795, 0.0
    %vm928 = vcmp.lt.f32.partialorder %v796, 0.0
    %vm929 = vmand %vm921, %vm925
    %vm930 = vmand %vm922, %vm926
    %vm931 = vmand %vm923, %vm927
    %vm932 = vmand %vm924, %vm928
    %v933 = vsel %vm929, 1.0, 0.0
    %v934 = vsel %vm930, 1.0, 0.0
    %v935 = vsel %vm931, 1.0, 0.0
    %v936 = vsel %vm932, 1.0, 0.0
    %vm937 = vcmp.ge.f32.partialorder %v793, 0.0
    %vm938 = vcmp.ge.f32.partialorder %v794, 0.0
    %vm939 = vcmp.ge.f32.partialorder %v795, 0.0
    %vm940 = vcmp.ge.f32.partialorder %v796, 0.0
    %vm941 = vcmp.lt.f32.partialorder %v797, 0.0
    %vm942 = vcmp.lt.f32.partialorder %v798, 0.0
    %vm943 = vcmp.lt.f32.partialorder %v799, 0.0
    %vm944 = vcmp.lt.f32.partialorder %v800, 0.0
    %vm945 = vmand %vm937, %vm941
    %vm946 = vmand %vm938, %vm942
    %vm947 = vmand %vm939, %vm943
    %vm948 = vmand %vm940, %vm944
    %v949 = vsel %vm945, 1.0, 0.0
    %v950 = vsel %vm946, 1.0, 0.0
    %v951 = vsel %vm947, 1.0, 0.0
    %v952 = vsel %vm948, 1.0, 0.0
    %vm953 = vcmp.ge.f32.partialorder %v797, 0.0
    %vm954 = vcmp.ge.f32.partialorder %v798, 0.0
    %vm955 = vcmp.ge.f32.partialorder %v799, 0.0
    %vm956 = vcmp.ge.f32.partialorder %v800, 0.0
    %vm957 = vcmp.lt.f32.partialorder %v801, 0.0
    %vm958 = vcmp.lt.f32.partialorder %v802, 0.0
    %vm959 = vcmp.lt.f32.partialorder %v803, 0.0
    %vm960 = vcmp.lt.f32.partialorder %v804, 0.0
    %vm961 = vmand %vm953, %vm957
    %vm962 = vmand %vm954, %vm958
    %vm963 = vmand %vm955, %vm959
    %vm964 = vmand %vm956, %vm960
    %v965 = vsel %vm961, 1.0, 0.0
    %v966 = vsel %vm962, 1.0, 0.0
    %v967 = vsel %vm963, 1.0, 0.0
    %v968 = vsel %vm964, 1.0, 0.0
    %vm969 = vcmp.ge.f32.partialorder %v801, 0.0
    %vm970 = vcmp.ge.f32.partialorder %v802, 0.0
    %vm971 = vcmp.ge.f32.partialorder %v803, 0.0
    %vm972 = vcmp.ge.f32.partialorder %v804, 0.0
    %vm973 = vcmp.lt.f32.partialorder %v805, 0.0
    %vm974 = vcmp.lt.f32.partialorder %v806, 0.0
    %vm975 = vcmp.lt.f32.partialorder %v807, 0.0
    %vm976 = vcmp.lt.f32.partialorder %v808, 0.0
    %vm977 = vmand %vm969, %vm973
    %vm978 = vmand %vm970, %vm974
    %vm979 = vmand %vm971, %vm975
    %vm980 = vmand %vm972, %vm976
    %v981 = vsel %vm977, 1.0, 0.0
    %v982 = vsel %vm978, 1.0, 0.0
    %v983 = vsel %vm979, 1.0, 0.0
    %v984 = vsel %vm980, 1.0, 0.0
    %v985 = vmul.f32 %v761, %v821
    %v986 = vmul.f32 %v762, %v822
    %v987 = vmul.f32 %v763, %v823
    %v988 = vmul.f32 %v764, %v824
    %v989 = vmul.f32 %v765, %v837
    %v990 = vmul.f32 %v766, %v838
    %v991 = vmul.f32 %v767, %v839
    %v992 = vmul.f32 %v768, %v840
    %v993 = vmul.f32 %v769, %v853
    %v994 = vmul.f32 %v770, %v854
    %v995 = vmul.f32 %v771, %v855
    %v996 = vmul.f32 %v772, %v856
    %v997 = vmul.f32 %v773, %v869
    %v998 = vmul.f32 %v774, %v870
    %v999 = vmul.f32 %v775, %v871
    %v1000 = vmul.f32 %v776, %v872
    %v1001 = vmul.f32 %v777, %v885
    %v1002 = vmul.f32 %v778, %v886
    %v1003 = vmul.f32 %v779, %v887
    %v1004 = vmul.f32 %v780, %v888
    %v1005 = vmul.f32 %v781, %v901
    %v1006 = vmul.f32 %v782, %v902
    %v1007 = vmul.f32 %v783, %v903
    %v1008 = vmul.f32 %v784, %v904
    %v1009 = vmul.f32 %v785, %v917
    %v1010 = vmul.f32 %v786, %v918
    %v1011 = vmul.f32 %v787, %v919
    %v1012 = vmul.f32 %v788, %v920
    %v1013 = vmul.f32 %v789, %v933
    %v1014 = vmul.f32 %v790, %v934
    %v1015 = vmul.f32 %v791, %v935
    %v1016 = vmul.f32 %v792, %v936
    %v1017 = vmul.f32 %v793, %v949
    %v1018 = vmul.f32 %v794, %v950
    %v1019 = vmul.f32 %v795, %v951
    %v1020 = vmul.f32 %v796, %v952
    %v1021 = vmul.f32 %v797, %v965
    %v1022 = vmul.f32 %v798, %v966
    %v1023 = vmul.f32 %v799, %v967
    %v1024 = vmul.f32 %v800, %v968
    %v1025 = vmul.f32 %v801, %v981
    %v1026 = vmul.f32 %v802, %v982
    %v1027 = vmul.f32 %v803, %v983
    %v1028 = vmul.f32 %v804, %v984
    %v1029 = vmul.f32 %v837, 0.4
    %v1030 = vmul.f32 %v838, 0.4
    %v1031 = vmul.f32 %v839, 0.4
    %v1032 = vmul.f32 %v840, 0.4
    %v1033 = vadd.f32 %v985, %v1029
    %v1034 = vadd.f32 %v986, %v1030
    %v1035 = vadd.f32 %v987, %v1031
    %v1036 = vadd.f32 %v988, %v1032
    %v1037 = vsub.f32 %v1033, %v989
    %v1038 = vsub.f32 %v1034, %v990
    %v1039 = vsub.f32 %v1035, %v991
    %v1040 = vsub.f32 %v1036, %v992
    %v1041 = vmul.f32 %v1037, 2.5
    %v1042 = vmul.f32 %v1038, 2.5
    %v1043 = vmul.f32 %v1039, 2.5
    %v1044 = vmul.f32 %v1040, 2.5
    %v1045 = vmul.f32 %v853, 0.4
    %v1046 = vmul.f32 %v854, 0.4
    %v1047 = vmul.f32 %v855, 0.4
    %v1048 = vmul.f32 %v856, 0.4
    %v1049 = vadd.f32 %v989, %v1045
    %v1050 = vadd.f32 %v990, %v1046
    %v1051 = vadd.f32 %v991, %v1047
    %v1052 = vadd.f32 %v992, %v1048
    %v1053 = vsub.f32 %v1049, %v993
    %v1054 = vsub.f32 %v1050, %v994
    %v1055 = vsub.f32 %v1051, %v995
    %v1056 = vsub.f32 %v1052, %v996
    %v1057 = vmul.f32 %v1053, 2.5
    %v1058 = vmul.f32 %v1054, 2.5
    %v1059 = vmul.f32 %v1055, 2.5
    %v1060 = vmul.f32 %v1056, 2.5
    %v1061 = vmul.f32 %v869, 0.4
    %v1062 = vmul.f32 %v870, 0.4
    %v1063 = vmul.f32 %v871, 0.4
    %v1064 = vmul.f32 %v872, 0.4
    %v1065 = vadd.f32 %v993, %v1061
    %v1066 = vadd.f32 %v994, %v1062
    %v1067 = vadd.f32 %v995, %v1063
    %v1068 = vadd.f32 %v996, %v1064
    %v1069 = vsub.f32 %v1065, %v997
    %v1070 = vsub.f32 %v1066, %v998
    %v1071 = vsub.f32 %v1067, %v999
    %v1072 = vsub.f32 %v1068, %v1000
    %v1073 = vmul.f32 %v1069, 2.5
    %v1074 = vmul.f32 %v1070, 2.5
    %v1075 = vmul.f32 %v1071, 2.5
    %v1076 = vmul.f32 %v1072, 2.5
    %v1077 = vmul.f32 %v885, 0.4
    %v1078 = vmul.f32 %v886, 0.4
    %v1079 = vmul.f32 %v887, 0.4
    %v1080 = vmul.f32 %v888, 0.4
    %v1081 = vadd.f32 %v997, %v1077
    %v1082 = vadd.f32 %v998, %v1078
    %v1083 = vadd.f32 %v999, %v1079
    %v1084 = vadd.f32 %v1000, %v1080
    %v1085 = vsub.f32 %v1081, %v1001
    %v1086 = vsub.f32 %v1082, %v1002
    %v1087 = vsub.f32 %v1083, %v1003
    %v1088 = vsub.f32 %v1084, %v1004
    %v1089 = vmul.f32 %v1085, 2.5
    %v1090 = vmul.f32 %v1086, 2.5
    %v1091 = vmul.f32 %v1087, 2.5
    %v1092 = vmul.f32 %v1088, 2.5
    %v1093 = vmul.f32 %v901, 0.4
    %v1094 = vmul.f32 %v902, 0.4
    %v1095 = vmul.f32 %v903, 0.4
    %v1096 = vmul.f32 %v904, 0.4
    %v1097 = vadd.f32 %v1001, %v1093
    %v1098 = vadd.f32 %v1002, %v1094
    %v1099 = vadd.f32 %v1003, %v1095
    %v1100 = vadd.f32 %v1004, %v1096
    %v1101 = vsub.f32 %v1097, %v1005
    %v1102 = vsub.f32 %v1098, %v1006
    %v1103 = vsub.f32 %v1099, %v1007
    %v1104 = vsub.f32 %v1100, %v1008
    %v1105 = vmul.f32 %v1101, 2.5
    %v1106 = vmul.f32 %v1102, 2.5
    %v1107 = vmul.f32 %v1103, 2.5
    %v1108 = vmul.f32 %v1104, 2.5
    %v1109 = vmul.f32 %v917, 0.4
    %v1110 = vmul.f32 %v918, 0.4
    %v1111 = vmul.f32 %v919, 0.4
    %v1112 = vmul.f32 %v920, 0.4
    %v1113 = vadd.f32 %v1005, %v1109
    %v1114 = vadd.f32 %v1006, %v1110
    %v1115 = vadd.f32 %v1007, %v1111
    %v1116 = vadd.f32 %v1008, %v1112
    %v1117 = vsub.f32 %v1113, %v1009
    %v1118 = vsub.f32 %v1114, %v1010
    %v1119 = vsub.f32 %v1115, %v1011
    %v1120 = vsub.f32 %v1116, %v1012
    %v1121 = vmul.f32 %v1117, 2.5
    %v1122 = vmul.f32 %v1118, 2.5
    %v1123 = vmul.f32 %v1119, 2.5
    %v1124 = vmul.f32 %v1120, 2.5
    %v1125 = vmul.f32 %v933, 0.4
    %v1126 = vmul.f32 %v934, 0.4
    %v1127 = vmul.f32 %v935, 0.4
    %v1128 = vmul.f32 %v936, 0.4
    %v1129 = vadd.f32 %v1009, %v1125
    %v1130 = vadd.f32 %v1010, %v1126
    %v1131 = vadd.f32 %v1011, %v1127
    %v1132 = vadd.f32 %v1012, %v1128
    %v1133 = vsub.f32 %v1129, %v1013
    %v1134 = vsub.f32 %v1130, %v1014
    %v1135 = vsub.f32 %v1131, %v1015
    %v1136 = vsub.f32 %v1132, %v1016
    %v1137 = vmul.f32 %v1133, 2.5
    %v1138 = vmul.f32 %v1134, 2.5
    %v1139 = vmul.f32 %v1135, 2.5
    %v1140 = vmul.f32 %v1136, 2.5
    %v1141 = vmul.f32 %v949, 0.4
    %v1142 = vmul.f32 %v950, 0.4
    %v1143 = vmul.f32 %v951, 0.4
    %v1144 = vmul.f32 %v952, 0.4
    %v1145 = vadd.f32 %v1013, %v1141
    %v1146 = vadd.f32 %v1014, %v1142
    %v1147 = vadd.f32 %v1015, %v1143
    %v1148 = vadd.f32 %v1016, %v1144
    %v1149 = vsub.f32 %v1145, %v1017
    %v1150 = vsub.f32 %v1146, %v1018
    %v1151 = vsub.f32 %v1147, %v1019
    %v1152 = vsub.f32 %v1148, %v1020
    %v1153 = vmul.f32 %v1149, 2.5
    %v1154 = vmul.f32 %v1150, 2.5
    %v1155 = vmul.f32 %v1151, 2.5
    %v1156 = vmul.f32 %v1152, 2.5
    %v1157 = vmul.f32 %v965, 0.4
    %v1158 = vmul.f32 %v966, 0.4
    %v1159 = vmul.f32 %v967, 0.4
    %v1160 = vmul.f32 %v968, 0.4
    %v1161 = vadd.f32 %v1017, %v1157
    %v1162 = vadd.f32 %v1018, %v1158
    %v1163 = vadd.f32 %v1019, %v1159
    %v1164 = vadd.f32 %v1020, %v1160
    %v1165 = vsub.f32 %v1161, %v1021
    %v1166 = vsub.f32 %v1162, %v1022
    %v1167 = vsub.f32 %v1163, %v1023
    %v1168 = vsub.f32 %v1164, %v1024
    %v1169 = vmul.f32 %v1165, 2.5
    %v1170 = vmul.f32 %v1166, 2.5
    %v1171 = vmul.f32 %v1167, 2.5
    %v1172 = vmul.f32 %v1168, 2.5
    %v1173 = vmul.f32 %v981, 0.4
    %v1174 = vmul.f32 %v982, 0.4
    %v1175 = vmul.f32 %v983, 0.4
    %v1176 = vmul.f32 %v984, 0.4
    %v1177 = vadd.f32 %v1021, %v1173
    %v1178 = vadd.f32 %v1022, %v1174
    %v1179 = vadd.f32 %v1023, %v1175
    %v1180 = vadd.f32 %v1024, %v1176
    %v1181 = vsub.f32 %v1177, %v1025
    %v1182 = vsub.f32 %v1178, %v1026
    %v1183 = vsub.f32 %v1179, %v1027
    %v1184 = vsub.f32 %v1180, %v1028
    %v1185 = vmul.f32 %v1181, 2.5
    %v1186 = vmul.f32 %v1182, 2.5
    %v1187 = vmul.f32 %v1183, 2.5
    %v1188 = vmul.f32 %v1184, 2.5
    %v1189 = vmul.f32 %v761, %v1041
    %v1190 = vmul.f32 %v762, %v1042
    %v1191 = vmul.f32 %v763, %v1043
    %v1192 = vmul.f32 %v764, %v1044
    %v1193 = vmul.f32 %v765, %v1057
    %v1194 = vmul.f32 %v766, %v1058
    %v1195 = vmul.f32 %v767, %v1059
    %v1196 = vmul.f32 %v768, %v1060
    %v1197 = vmul.f32 %v769, %v1073
    %v1198 = vmul.f32 %v770, %v1074
    %v1199 = vmul.f32 %v771, %v1075
    %v1200 = vmul.f32 %v772, %v1076
    %v1201 = vmul.f32 %v773, %v1089
    %v1202 = vmul.f32 %v774, %v1090
    %v1203 = vmul.f32 %v775, %v1091
    %v1204 = vmul.f32 %v776, %v1092
    %v1205 = vmul.f32 %v777, %v1105
    %v1206 = vmul.f32 %v778, %v1106
    %v1207 = vmul.f32 %v779, %v1107
    %v1208 = vmul.f32 %v780, %v1108
    %v1209 = vmul.f32 %v781, %v1121
    %v1210 = vmul.f32 %v782, %v1122
    %v1211 = vmul.f32 %v783, %v1123
    %v1212 = vmul.f32 %v784, %v1124
    %v1213 = vmul.f32 %v785, %v1137
    %v1214 = vmul.f32 %v786, %v1138
    %v1215 = vmul.f32 %v787, %v1139
    %v1216 = vmul.f32 %v788, %v1140
    %v1217 = vmul.f32 %v789, %v1153
    %v1218 = vmul.f32 %v790, %v1154
    %v1219 = vmul.f32 %v791, %v1155
    %v1220 = vmul.f32 %v792, %v1156
    %v1221 = vmul.f32 %v793, %v1169
    %v1222 = vmul.f32 %v794, %v1170
    %v1223 = vmul.f32 %v795, %v1171
    %v1224 = vmul.f32 %v796, %v1172
    %v1225 = vmul.f32 %v797, %v1185
    %v1226 = vmul.f32 %v798, %v1186
    %v1227 = vmul.f32 %v799, %v1187
    %v1228 = vmul.f32 %v800, %v1188
    %v1229 = vmul.f32 %v1057, 0.8
    %v1230 = vmul.f32 %v1058, 0.8
    %v1231 = vmul.f32 %v1059, 0.8
    %v1232 = vmul.f32 %v1060, 0.8
    %v1233 = vadd.f32 %v1189, %v1229
    %v1234 = vadd.f32 %v1190, %v1230
    %v1235 = vadd.f32 %v1191, %v1231
    %v1236 = vadd.f32 %v1192, %v1232
    %v1237 = vsub.f32 %v1233, %v1193
    %v1238 = vsub.f32 %v1234, %v1194
    %v1239 = vsub.f32 %v1235, %v1195
    %v1240 = vsub.f32 %v1236, %v1196
    %v1241 = vmul.f32 %v1237, 1.25
    %v1242 = vmul.f32 %v1238, 1.25
    %v1243 = vmul.f32 %v1239, 1.25
    %v1244 = vmul.f32 %v1240, 1.25
    %v1245 = vmul.f32 %v1073, 0.8
    %v1246 = vmul.f32 %v1074, 0.8
    %v1247 = vmul.f32 %v1075, 0.8
    %v1248 = vmul.f32 %v1076, 0.8
    %v1249 = vadd.f32 %v1193, %v1245
    %v1250 = vadd.f32 %v1194, %v1246
    %v1251 = vadd.f32 %v1195, %v1247
    %v1252 = vadd.f32 %v1196, %v1248
    %v1253 = vsub.f32 %v1249, %v1197
    %v1254 = vsub.f32 %v1250, %v1198
    %v1255 = vsub.f32 %v1251, %v1199
    %v1256 = vsub.f32 %v1252, %v1200
    %v1257 = vmul.f32 %v1253, 1.25
    %v1258 = vmul.f32 %v1254, 1.25
    %v1259 = vmul.f32 %v1255, 1.25
    %v1260 = vmul.f32 %v1256, 1.25
    %v1261 = vmul.f32 %v1089, 0.8
    %v1262 = vmul.f32 %v1090, 0.8
    %v1263 = vmul.f32 %v1091, 0.8
    %v1264 = vmul.f32 %v1092, 0.8
    %v1265 = vadd.f32 %v1197, %v1261
    %v1266 = vadd.f32 %v1198, %v1262
    %v1267 = vadd.f32 %v1199, %v1263
    %v1268 = vadd.f32 %v1200, %v1264
    %v1269 = vsub.f32 %v1265, %v1201
    %v1270 = vsub.f32 %v1266, %v1202
    %v1271 = vsub.f32 %v1267, %v1203
    %v1272 = vsub.f32 %v1268, %v1204
    %v1273 = vmul.f32 %v1269, 1.25
    %v1274 = vmul.f32 %v1270, 1.25
    %v1275 = vmul.f32 %v1271, 1.25
    %v1276 = vmul.f32 %v1272, 1.25
    %v1277 = vmul.f32 %v1105, 0.8
    %v1278 = vmul.f32 %v1106, 0.8
    %v1279 = vmul.f32 %v1107, 0.8
    %v1280 = vmul.f32 %v1108, 0.8
    %v1281 = vadd.f32 %v1201, %v1277
    %v1282 = vadd.f32 %v1202, %v1278
    %v1283 = vadd.f32 %v1203, %v1279
    %v1284 = vadd.f32 %v1204, %v1280
    %v1285 = vsub.f32 %v1281, %v1205
    %v1286 = vsub.f32 %v1282, %v1206
    %v1287 = vsub.f32 %v1283, %v1207
    %v1288 = vsub.f32 %v1284, %v1208
    %v1289 = vmul.f32 %v1285, 1.25
    %v1290 = vmul.f32 %v1286, 1.25
    %v1291 = vmul.f32 %v1287, 1.25
    %v1292 = vmul.f32 %v1288, 1.25
    %v1293 = vmul.f32 %v1121, 0.8
    %v1294 = vmul.f32 %v1122, 0.8
    %v1295 = vmul.f32 %v1123, 0.8
    %v1296 = vmul.f32 %v1124, 0.8
    %v1297 = vadd.f32 %v1205, %v1293
    %v1298 = vadd.f32 %v1206, %v1294
    %v1299 = vadd.f32 %v1207, %v1295
    %v1300 = vadd.f32 %v1208, %v1296
    %v1301 = vsub.f32 %v1297, %v1209
    %v1302 = vsub.f32 %v1298, %v1210
    %v1303 = vsub.f32 %v1299, %v1211
    %v1304 = vsub.f32 %v1300, %v1212
    %v1305 = vmul.f32 %v1301, 1.25
    %v1306 = vmul.f32 %v1302, 1.25
    %v1307 = vmul.f32 %v1303, 1.25
    %v1308 = vmul.f32 %v1304, 1.25
    %v1309 = vmul.f32 %v1137, 0.8
    %v1310 = vmul.f32 %v1138, 0.8
    %v1311 = vmul.f32 %v1139, 0.8
    %v1312 = vmul.f32 %v1140, 0.8
    %v1313 = vadd.f32 %v1209, %v1309
    %v1314 = vadd.f32 %v1210, %v1310
    %v1315 = vadd.f32 %v1211, %v1311
    %v1316 = vadd.f32 %v1212, %v1312
    %v1317 = vsub.f32 %v1313, %v1213
    %v1318 = vsub.f32 %v1314, %v1214
    %v1319 = vsub.f32 %v1315, %v1215
    %v1320 = vsub.f32 %v1316, %v1216
    %v1321 = vmul.f32 %v1317, 1.25
    %v1322 = vmul.f32 %v1318, 1.25
    %v1323 = vmul.f32 %v1319, 1.25
    %v1324 = vmul.f32 %v1320, 1.25
    %v1325 = vmul.f32 %v1153, 0.8
    %v1326 = vmul.f32 %v1154, 0.8
    %v1327 = vmul.f32 %v1155, 0.8
    %v1328 = vmul.f32 %v1156, 0.8
    %v1329 = vadd.f32 %v1213, %v1325
    %v1330 = vadd.f32 %v1214, %v1326
    %v1331 = vadd.f32 %v1215, %v1327
    %v1332 = vadd.f32 %v1216, %v1328
    %v1333 = vsub.f32 %v1329, %v1217
    %v1334 = vsub.f32 %v1330, %v1218
    %v1335 = vsub.f32 %v1331, %v1219
    %v1336 = vsub.f32 %v1332, %v1220
    %v1337 = vmul.f32 %v1333, 1.25
    %v1338 = vmul.f32 %v1334, 1.25
    %v1339 = vmul.f32 %v1335, 1.25
    %v1340 = vmul.f32 %v1336, 1.25
    %v1341 = vmul.f32 %v1169, 0.8
    %v1342 = vmul.f32 %v1170, 0.8
    %v1343 = vmul.f32 %v1171, 0.8
    %v1344 = vmul.f32 %v1172, 0.8
    %v1345 = vadd.f32 %v1217, %v1341
    %v1346 = vadd.f32 %v1218, %v1342
    %v1347 = vadd.f32 %v1219, %v1343
    %v1348 = vadd.f32 %v1220, %v1344
    %v1349 = vsub.f32 %v1345, %v1221
    %v1350 = vsub.f32 %v1346, %v1222
    %v1351 = vsub.f32 %v1347, %v1223
    %v1352 = vsub.f32 %v1348, %v1224
    %v1353 = vmul.f32 %v1349, 1.25
    %v1354 = vmul.f32 %v1350, 1.25
    %v1355 = vmul.f32 %v1351, 1.25
    %v1356 = vmul.f32 %v1352, 1.25
    %v1357 = vmul.f32 %v1185, 0.8
    %v1358 = vmul.f32 %v1186, 0.8
    %v1359 = vmul.f32 %v1187, 0.8
    %v1360 = vmul.f32 %v1188, 0.8
    %v1361 = vadd.f32 %v1221, %v1357
    %v1362 = vadd.f32 %v1222, %v1358
    %v1363 = vadd.f32 %v1223, %v1359
    %v1364 = vadd.f32 %v1224, %v1360
    %v1365 = vsub.f32 %v1361, %v1225
    %v1366 = vsub.f32 %v1362, %v1226
    %v1367 = vsub.f32 %v1363, %v1227
    %v1368 = vsub.f32 %v1364, %v1228
    %v1369 = vmul.f32 %v1365, 1.25
    %v1370 = vmul.f32 %v1366, 1.25
    %v1371 = vmul.f32 %v1367, 1.25
    %v1372 = vmul.f32 %v1368, 1.25
    %v1373 = vmul.f32 %v761, %v1241
    %v1374 = vmul.f32 %v762, %v1242
    %v1375 = vmul.f32 %v763, %v1243
    %v1376 = vmul.f32 %v764, %v1244
    %v1377 = vmul.f32 %v765, %v1257
    %v1378 = vmul.f32 %v766, %v1258
    %v1379 = vmul.f32 %v767, %v1259
    %v1380 = vmul.f32 %v768, %v1260
    %v1381 = vmul.f32 %v769, %v1273
    %v1382 = vmul.f32 %v770, %v1274
    %v1383 = vmul.f32 %v771, %v1275
    %v1384 = vmul.f32 %v772, %v1276
    %v1385 = vmul.f32 %v773, %v1289
    %v1386 = vmul.f32 %v774, %v1290
    %v1387 = vmul.f32 %v775, %v1291
    %v1388 = vmul.f32 %v776, %v1292
    %v1389 = vmul.f32 %v777, %v1305
    %v1390 = vmul.f32 %v778, %v1306
    %v1391 = vmul.f32 %v779, %v1307
    %v1392 = vmul.f32 %v780, %v1308
    %v1393 = vmul.f32 %v781, %v1321
    %v1394 = vmul.f32 %v782, %v1322
    %v1395 = vmul.f32 %v783, %v1323
    %v1396 = vmul.f32 %v784, %v1324
    %v1397 = vmul.f32 %v785, %v1337
    %v1398 = vmul.f32 %v786, %v1338
    %v1399 = vmul.f32 %v787, %v1339
    %v1400 = vmul.f32 %v788, %v1340
    %v1401 = vmul.f32 %v789, %v1353
    %v1402 = vmul.f32 %v790, %v1354
    %v1403 = vmul.f32 %v791, %v1355
    %v1404 = vmul.f32 %v792, %v1356
    %v1405 = vmul.f32 %v793, %v1369
    %v1406 = vmul.f32 %v794, %v1370
    %v1407 = vmul.f32 %v795, %v1371
    %v1408 = vmul.f32 %v796, %v1372
    %v1409 = vmul.f32 %v1257, 1.2
    %v1410 = vmul.f32 %v1258, 1.2
    %v1411 = vmul.f32 %v1259, 1.2
    %v1412 = vmul.f32 %v1260, 1.2
    %v1413 = vadd.f32 %v1373, %v1409
    %v1414 = vadd.f32 %v1374, %v1410
    %v1415 = vadd.f32 %v1375, %v1411
    %v1416 = vadd.f32 %v1376, %v1412
    %v1417 = vsub.f32 %v1413, %v1377
    %v1418 = vsub.f32 %v1414, %v1378
    %v1419 = vsub.f32 %v1415, %v1379
    %v1420 = vsub.f32 %v1416, %v1380
    %v1421 = vmul.f32 %v1417, 0.8333333
    %v1422 = vmul.f32 %v1418, 0.8333333
    %v1423 = vmul.f32 %v1419, 0.8333333
    %v1424 = vmul.f32 %v1420, 0.8333333
    %v1425 = vmul.f32 %v1273, 1.2
    %v1426 = vmul.f32 %v1274, 1.2
    %v1427 = vmul.f32 %v1275, 1.2
    %v1428 = vmul.f32 %v1276, 1.2
    %v1429 = vadd.f32 %v1377, %v1425
    %v1430 = vadd.f32 %v1378, %v1426
    %v1431 = vadd.f32 %v1379, %v1427
    %v1432 = vadd.f32 %v1380, %v1428
    %v1433 = vsub.f32 %v1429, %v1381
    %v1434 = vsub.f32 %v1430, %v1382
    %v1435 = vsub.f32 %v1431, %v1383
    %v1436 = vsub.f32 %v1432, %v1384
    %v1437 = vmul.f32 %v1433, 0.8333333
    %v1438 = vmul.f32 %v1434, 0.8333333
    %v1439 = vmul.f32 %v1435, 0.8333333
    %v1440 = vmul.f32 %v1436, 0.8333333
    %v1441 = vmul.f32 %v1289, 1.2
    %v1442 = vmul.f32 %v1290, 1.2
    %v1443 = vmul.f32 %v1291, 1.2
    %v1444 = vmul.f32 %v1292, 1.2
    %v1445 = vadd.f32 %v1381, %v1441
    %v1446 = vadd.f32 %v1382, %v1442
    %v1447 = vadd.f32 %v1383, %v1443
    %v1448 = vadd.f32 %v1384, %v1444
    %v1449 = vsub.f32 %v1445, %v1385
    %v1450 = vsub.f32 %v1446, %v1386
    %v1451 = vsub.f32 %v1447, %v1387
    %v1452 = vsub.f32 %v1448, %v1388
    %v1453 = vmul.f32 %v1449, 0.8333333
    %v1454 = vmul.f32 %v1450, 0.8333333
    %v1455 = vmul.f32 %v1451, 0.8333333
    %v1456 = vmul.f32 %v1452, 0.8333333
    %v1457 = vmul.f32 %v1305, 1.2
    %v1458 = vmul.f32 %v1306, 1.2
    %v1459 = vmul.f32 %v1307, 1.2
    %v1460 = vmul.f32 %v1308, 1.2
    %v1461 = vadd.f32 %v1385, %v1457
    %v1462 = vadd.f32 %v1386, %v1458
    %v1463 = vadd.f32 %v1387, %v1459
    %v1464 = vadd.f32 %v1388, %v1460
    %v1465 = vsub.f32 %v1461, %v1389
    %v1466 = vsub.f32 %v1462, %v1390
    %v1467 = vsub.f32 %v1463, %v1391
    %v1468 = vsub.f32 %v1464, %v1392
    %v1469 = vmul.f32 %v1465, 0.8333333
    %v1470 = vmul.f32 %v1466, 0.8333333
    %v1471 = vmul.f32 %v1467, 0.8333333
    %v1472 = vmul.f32 %v1468, 0.8333333
    %v1473 = vmul.f32 %v1321, 1.2
    %v1474 = vmul.f32 %v1322, 1.2
    %v1475 = vmul.f32 %v1323, 1.2
    %v1476 = vmul.f32 %v1324, 1.2
    %v1477 = vadd.f32 %v1389, %v1473
    %v1478 = vadd.f32 %v1390, %v1474
    %v1479 = vadd.f32 %v1391, %v1475
    %v1480 = vadd.f32 %v1392, %v1476
    %v1481 = vsub.f32 %v1477, %v1393
    %v1482 = vsub.f32 %v1478, %v1394
    %v1483 = vsub.f32 %v1479, %v1395
    %v1484 = vsub.f32 %v1480, %v1396
    %v1485 = vmul.f32 %v1481, 0.8333333
    %v1486 = vmul.f32 %v1482, 0.8333333
    %v1487 = vmul.f32 %v1483, 0.8333333
    %v1488 = vmul.f32 %v1484, 0.8333333
    %v1489 = vmul.f32 %v1337, 1.2
    %v1490 = vmul.f32 %v1338, 1.2
    %v1491 = vmul.f32 %v1339, 1.2
    %v1492 = vmul.f32 %v1340, 1.2
    %v1493 = vadd.f32 %v1393, %v1489
    %v1494 = vadd.f32 %v1394, %v1490
    %v1495 = vadd.f32 %v1395, %v1491
    %v1496 = vadd.f32 %v1396, %v1492
    %v1497 = vsub.f32 %v1493, %v1397
    %v1498 = vsub.f32 %v1494, %v1398
    %v1499 = vsub.f32 %v1495, %v1399
    %v1500 = vsub.f32 %v1496, %v1400
    %v1501 = vmul.f32 %v1497, 0.8333333
    %v1502 = vmul.f32 %v1498, 0.8333333
    %v1503 = vmul.f32 %v1499, 0.8333333
    %v1504 = vmul.f32 %v1500, 0.8333333
    %v1505 = vmul.f32 %v1353, 1.2
    %v1506 = vmul.f32 %v1354, 1.2
    %v1507 = vmul.f32 %v1355, 1.2
    %v1508 = vmul.f32 %v1356, 1.2
    %v1509 = vadd.f32 %v1397, %v1505
    %v1510 = vadd.f32 %v1398, %v1506
    %v1511 = vadd.f32 %v1399, %v1507
    %v1512 = vadd.f32 %v1400, %v1508
    %v1513 = vsub.f32 %v1509, %v1401
    %v1514 = vsub.f32 %v1510, %v1402
    %v1515 = vsub.f32 %v1511, %v1403
    %v1516 = vsub.f32 %v1512, %v1404
    %v1517 = vmul.f32 %v1513, 0.8333333
    %v1518 = vmul.f32 %v1514, 0.8333333
    %v1519 = vmul.f32 %v1515, 0.8333333
    %v1520 = vmul.f32 %v1516, 0.8333333
    %v1521 = vmul.f32 %v1369, 1.2
    %v1522 = vmul.f32 %v1370, 1.2
    %v1523 = vmul.f32 %v1371, 1.2
    %v1524 = vmul.f32 %v1372, 1.2
    %v1525 = vadd.f32 %v1401, %v1521
    %v1526 = vadd.f32 %v1402, %v1522
    %v1527 = vadd.f32 %v1403, %v1523
    %v1528 = vadd.f32 %v1404, %v1524
    %v1529 = vsub.f32 %v1525, %v1405
    %v1530 = vsub.f32 %v1526, %v1406
    %v1531 = vsub.f32 %v1527, %v1407
    %v1532 = vsub.f32 %v1528, %v1408
    %v1533 = vmul.f32 %v1529, 0.8333333
    %v1534 = vmul.f32 %v1530, 0.8333333
    %v1535 = vmul.f32 %v1531, 0.8333333
    %v1536 = vmul.f32 %v1532, 0.8333333
    %v1537 = vpack.c.bf16 %v1421, %v1421
    %v1538 = vpack.c.bf16 %v1422, %v1422
    %v1539 = vpack.c.bf16 %v1423, %v1423
    %v1540 = vpack.c.bf16 %v1424, %v1424
    %v1545 = vunpack.c.l.b16 %v1537
    %v1546 = vunpack.c.l.b16 %v1538
    %v1547 = vunpack.c.l.b16 %v1539
    %v1548 = vunpack.c.l.b16 %v1540
    %v1549 = vpack.c.b16 %v1546, %v1545
    %v1550 = vpack.c.b16 %v1548, %v1547
    %1553 = vst [vmem:[#allocation7 + $0x10] sm:$0xff] %v1549
    %1554 = vst [vmem:[#allocation7 + $0x18] sm:$0xff] %v1550
    %v1555 = vpack.c.bf16 %v1437, %v1437
    %v1556 = vpack.c.bf16 %v1438, %v1438
    %v1557 = vpack.c.bf16 %v1439, %v1439
    %v1558 = vpack.c.bf16 %v1440, %v1440
    %v1563 = vunpack.c.l.b16 %v1555
    %v1564 = vunpack.c.l.b16 %v1556
    %v1565 = vunpack.c.l.b16 %v1557
    %v1566 = vunpack.c.l.b16 %v1558
    %v1567 = vpack.c.b16 %v1564, %v1563
    %v1568 = vpack.c.b16 %v1566, %v1565
    %1571 = vst [vmem:[#allocation7 + $0x20] sm:$0xff] %v1567
    %1572 = vst [vmem:[#allocation7 + $0x28] sm:$0xff] %v1568
    %v1573 = vpack.c.bf16 %v1453, %v1453
    %v1574 = vpack.c.bf16 %v1454, %v1454
    %v1575 = vpack.c.bf16 %v1455, %v1455
    %v1576 = vpack.c.bf16 %v1456, %v1456
    %v1581 = vunpack.c.l.b16 %v1573
    %v1582 = vunpack.c.l.b16 %v1574
    %v1583 = vunpack.c.l.b16 %v1575
    %v1584 = vunpack.c.l.b16 %v1576
    %v1585 = vpack.c.b16 %v1582, %v1581
    %v1586 = vpack.c.b16 %v1584, %v1583
    %1589 = vst [vmem:[#allocation7 + $0x30] sm:$0xff] %v1585
    %1590 = vst [vmem:[#allocation7 + $0x38] sm:$0xff] %v1586
    %v1591 = vpack.c.bf16 %v1469, %v1469
    %v1592 = vpack.c.bf16 %v1470, %v1470
    %v1593 = vpack.c.bf16 %v1471, %v1471
    %v1594 = vpack.c.bf16 %v1472, %v1472
    %v1599 = vunpack.c.l.b16 %v1591
    %v1600 = vunpack.c.l.b16 %v1592
    %v1601 = vunpack.c.l.b16 %v1593
    %v1602 = vunpack.c.l.b16 %v1594
    %v1603 = vpack.c.b16 %v1600, %v1599
    %v1604 = vpack.c.b16 %v1602, %v1601
    %1607 = vst [vmem:[#allocation7 + $0x40] sm:$0xff] %v1603
    %1608 = vst [vmem:[#allocation7 + $0x48] sm:$0xff] %v1604
    %v1609 = vpack.c.bf16 %v1485, %v1485
    %v1610 = vpack.c.bf16 %v1486, %v1486
    %v1611 = vpack.c.bf16 %v1487, %v1487
    %v1612 = vpack.c.bf16 %v1488, %v1488
    %v1617 = vunpack.c.l.b16 %v1609
    %v1618 = vunpack.c.l.b16 %v1610
    %v1619 = vunpack.c.l.b16 %v1611
    %v1620 = vunpack.c.l.b16 %v1612
    %v1621 = vpack.c.b16 %v1618, %v1617
    %v1622 = vpack.c.b16 %v1620, %v1619
    %1625 = vst [vmem:[#allocation7 + $0x50] sm:$0xff] %v1621
    %1626 = vst [vmem:[#allocation7 + $0x58] sm:$0xff] %v1622
    %v1627 = vpack.c.bf16 %v1501, %v1501
    %v1628 = vpack.c.bf16 %v1502, %v1502
    %v1629 = vpack.c.bf16 %v1503, %v1503
    %v1630 = vpack.c.bf16 %v1504, %v1504
    %v1635 = vunpack.c.l.b16 %v1627
    %v1636 = vunpack.c.l.b16 %v1628
    %v1637 = vunpack.c.l.b16 %v1629
    %v1638 = vunpack.c.l.b16 %v1630
    %v1639 = vpack.c.b16 %v1636, %v1635
    %v1640 = vpack.c.b16 %v1638, %v1637
    %1643 = vst [vmem:[#allocation7 + $0x60] sm:$0xff] %v1639
    %1644 = vst [vmem:[#allocation7 + $0x68] sm:$0xff] %v1640
    %v1645 = vpack.c.bf16 %v1517, %v1517
    %v1646 = vpack.c.bf16 %v1518, %v1518
    %v1647 = vpack.c.bf16 %v1519, %v1519
    %v1648 = vpack.c.bf16 %v1520, %v1520
    %v1653 = vunpack.c.l.b16 %v1645
    %v1654 = vunpack.c.l.b16 %v1646
    %v1655 = vunpack.c.l.b16 %v1647
    %v1656 = vunpack.c.l.b16 %v1648
    %v1657 = vpack.c.b16 %v1654, %v1653
    %v1658 = vpack.c.b16 %v1656, %v1655
    %1661 = vst [vmem:[#allocation7 + $0x70] sm:$0xff] %v1657
    %1662 = vst [vmem:[#allocation7 + $0x78] sm:$0xff] %v1658
    %v1663 = vpack.c.bf16 %v1533, %v1533
    %v1664 = vpack.c.bf16 %v1534, %v1534
    %v1665 = vpack.c.bf16 %v1535, %v1535
    %v1666 = vpack.c.bf16 %v1536, %v1536
    %v1671 = vunpack.c.l.b16 %v1663
    %v1672 = vunpack.c.l.b16 %v1664
    %v1673 = vunpack.c.l.b16 %v1665
    %v1674 = vunpack.c.l.b16 %v1666
    %v1675 = vpack.c.b16 %v1672, %v1671
    %v1676 = vpack.c.b16 %v1674, %v1673
    %1679 = vst [vmem:[#allocation7 + $0x80] sm:$0xff] %v1675
    %1680 = vst [vmem:[#allocation7 + $0x88] sm:$0xff] %v1676
    %v1681 = vld [vmem:[#allocation7] sm:$0xff]
    %v1682 = vld [vmem:[#allocation7 + $0x8] sm:$0xff]
    %v1683 = vld [vmem:[#allocation7 + $0x10] sm:$0xff]
    %v1684 = vld [vmem:[#allocation7 + $0x18] sm:$0xff]
    %v1685 = vld [vmem:[#allocation7 + $0x20] sm:$0xff]
    %v1686 = vld [vmem:[#allocation7 + $0x28] sm:$0xff]
    %v1687 = vld [vmem:[#allocation7 + $0x30] sm:$0xff]
    %v1688 = vld [vmem:[#allocation7 + $0x38] sm:$0xff]
    %v1689 = vld [vmem:[#allocation7 + $0x40] sm:$0xff]
    %v1690 = vld [vmem:[#allocation7 + $0x48] sm:$0xff]
    %v1691 = vld [vmem:[#allocation7 + $0x50] sm:$0xff]
    %v1692 = vld [vmem:[#allocation7 + $0x58] sm:$0xff]
    %v1693 = vld [vmem:[#allocation7 + $0x60] sm:$0xff]
    %v1694 = vld [vmem:[#allocation7 + $0x68] sm:$0xff]
    %v1695 = vld [vmem:[#allocation7 + $0x70] sm:$0xff]
    %v1696 = vld [vmem:[#allocation7 + $0x78] sm:$0xff]
    %v1697 = vld [vmem:[#allocation7 + $0x80] sm:$0xff]
    %v1698 = vld [vmem:[#allocation7 + $0x88] sm:$0xff]
    %v1699 = vld [vmem:[#allocation2] sm:$0xff]
    %v1700 = vld [vmem:[#allocation2 + $0x8] sm:$0xff]
    %v1701 = vld [vmem:[#allocation2 + $0x10] sm:$0xff]
    %v1702 = vld [vmem:[#allocation2 + $0x18] sm:$0xff]
    %v1703 = vld [vmem:[#allocation2 + $0x20] sm:$0xff]
    %v1704 = vld [vmem:[#allocation2 + $0x28] sm:$0xff]
    %v1705 = vld [vmem:[#allocation2 + $0x30] sm:$0xff]
    %v1706 = vld [vmem:[#allocation2 + $0x38] sm:$0xff]
    %v1707 = vld [vmem:[#allocation2 + $0x40] sm:$0xff]
    %v1708 = vld [vmem:[#allocation2 + $0x48] sm:$0xff]
    %v1709 = vld [vmem:[#allocation2 + $0x50] sm:$0xff]
    %v1710 = vld [vmem:[#allocation2 + $0x58] sm:$0xff]
    %v1711 = vld [vmem:[#allocation2 + $0x60] sm:$0xff]
    %v1712 = vld [vmem:[#allocation2 + $0x68] sm:$0xff]
    %v1713 = vld [vmem:[#allocation2 + $0x70] sm:$0xff]
    %v1714 = vld [vmem:[#allocation2 + $0x78] sm:$0xff]
    %v1715 = vld [vmem:[#allocation2 + $0x80] sm:$0xff]
    %v1716 = vld [vmem:[#allocation2 + $0x88] sm:$0xff]
    %v1717 = vld [vmem:[#allocation2 + $0x90] sm:$0xff]
    %v1718 = vld [vmem:[#allocation2 + $0x98] sm:$0xff]
    %v1719 = vld [vmem:[#allocation2 + $0xa0] sm:$0xff]
    %v1720 = vld [vmem:[#allocation2 + $0xa8] sm:$0xff]
    %v1721 = vld [vmem:[#allocation2 + $0xb0] sm:$0xff]
    %v1722 = vld [vmem:[#allocation2 + $0xb8] sm:$0xff]
    %v1723 = vld [vmem:[#allocation2 + $0xc0] sm:$0xff]
    %v1724 = vld [vmem:[#allocation2 + $0xc8] sm:$0xff]
    %v1725 = vld [vmem:[#allocation2 + $0xd0] sm:$0xff]
    %v1726 = vld [vmem:[#allocation2 + $0xd8] sm:$0xff]
    %v1727 = vld [vmem:[#allocation2 + $0xe0] sm:$0xff]
    %v1728 = vld [vmem:[#allocation2 + $0xe8] sm:$0xff]
    %v1729 = vld [vmem:[#allocation2 + $0xf0] sm:$0xff]
    %v1730 = vld [vmem:[#allocation2 + $0xf8] sm:$0xff]
    %v1731 = vld [vmem:[#allocation2 + $0x100] sm:$0xff]
    %v1732 = vld [vmem:[#allocation2 + $0x108] sm:$0xff]
    %v1733 = vld [vmem:[#allocation2 + $0x110] sm:$0xff]
    %v1734 = vld [vmem:[#allocation2 + $0x118] sm:$0xff]
    %v1735 = vld [vmem:[#allocation2 + $0x120] sm:$0xff]
    %v1736 = vld [vmem:[#allocation2 + $0x128] sm:$0xff]
    %v1737 = vld [vmem:[#allocation2 + $0x130] sm:$0xff]
    %v1738 = vld [vmem:[#allocation2 + $0x138] sm:$0xff]
    %v1739 = vld [vmem:[#allocation2 + $0x140] sm:$0xff]
    %v1740 = vld [vmem:[#allocation2 + $0x148] sm:$0xff]
    %v1741 = vld [vmem:[#allocation2 + $0x150] sm:$0xff]
    %v1742 = vld [vmem:[#allocation2 + $0x158] sm:$0xff]
    %v1743 = vld [vmem:[#allocation2 + $0x160] sm:$0xff]
    %v1744 = vld [vmem:[#allocation2 + $0x168] sm:$0xff]
    %v1745 = vld [vmem:[#allocation2 + $0x170] sm:$0xff]
    %v1746 = vld [vmem:[#allocation2 + $0x178] sm:$0xff]
    %v1747 = vld [vmem:[#allocation2 + $0x180] sm:$0xff]
    %v1748 = vld [vmem:[#allocation2 + $0x188] sm:$0xff]
    %v1749 = vld [vmem:[#allocation2 + $0x190] sm:$0xff]
    %v1750 = vld [vmem:[#allocation2 + $0x198] sm:$0xff]
    %v1751 = vld [vmem:[#allocation2 + $0x1a0] sm:$0xff]
    %v1752 = vld [vmem:[#allocation2 + $0x1a8] sm:$0xff]
    %v1753 = vld [vmem:[#allocation2 + $0x1b0] sm:$0xff]
    %v1754 = vld [vmem:[#allocation2 + $0x1b8] sm:$0xff]
    %v1755 = vld [vmem:[#allocation2 + $0x1c0] sm:$0xff]
    %v1756 = vld [vmem:[#allocation2 + $0x1c8] sm:$0xff]
    %v1757 = vld [vmem:[#allocation2 + $0x1d0] sm:$0xff]
    %v1758 = vld [vmem:[#allocation2 + $0x1d8] sm:$0xff]
    %v1759 = vld [vmem:[#allocation2 + $0x1e0] sm:$0xff]
    %v1760 = vld [vmem:[#allocation2 + $0x1e8] sm:$0xff]
    %v1761 = vld [vmem:[#allocation2 + $0x1f0] sm:$0xff]
    %v1762 = vld [vmem:[#allocation2 + $0x1f8] sm:$0xff]
    %v1763 = vld [vmem:[#allocation2 + $0x200] sm:$0xff]
    %v1764 = vld [vmem:[#allocation2 + $0x208] sm:$0xff]
    %v1765 = vld [vmem:[#allocation2 + $0x210] sm:$0xff]
    %v1766 = vld [vmem:[#allocation2 + $0x218] sm:$0xff]
    %v1767 = vld [vmem:[#allocation2 + $0x220] sm:$0xff]
    %v1768 = vld [vmem:[#allocation2 + $0x228] sm:$0xff]
    %v1769 = vld [vmem:[#allocation2 + $0x230] sm:$0xff]
    %v1770 = vld [vmem:[#allocation2 + $0x238] sm:$0xff]
    %v1771 = vld [vmem:[#allocation2 + $0x240] sm:$0xff]
    %v1772 = vld [vmem:[#allocation2 + $0x248] sm:$0xff]
    %v1773 = vld [vmem:[#allocation2 + $0x250] sm:$0xff]
    %v1774 = vld [vmem:[#allocation2 + $0x258] sm:$0xff]
    %v1775 = vld [vmem:[#allocation2 + $0x260] sm:$0xff]
    %v1776 = vld [vmem:[#allocation2 + $0x268] sm:$0xff]
    %v1777 = vld [vmem:[#allocation2 + $0x270] sm:$0xff]
    %v1778 = vld [vmem:[#allocation2 + $0x278] sm:$0xff]
    %v1779 = vld [vmem:[#allocation2 + $0x280] sm:$0xff]
    %v1780 = vld [vmem:[#allocation2 + $0x288] sm:$0xff]
    %v1781 = vld [vmem:[#allocation2 + $0x290] sm:$0xff]
    %v1782 = vld [vmem:[#allocation2 + $0x298] sm:$0xff]
    %v1783 = vld [vmem:[#allocation2 + $0x2a0] sm:$0xff]
    %v1784 = vld [vmem:[#allocation2 + $0x2a8] sm:$0xff]
    %v1785 = vld [vmem:[#allocation2 + $0x2b0] sm:$0xff]
    %v1786 = vld [vmem:[#allocation2 + $0x2b8] sm:$0xff]
    %v1787 = vld [vmem:[#allocation2 + $0x2c0] sm:$0xff]
    %v1788 = vld [vmem:[#allocation2 + $0x2c8] sm:$0xff]
    %v1789 = vld [vmem:[#allocation2 + $0x2d0] sm:$0xff]
    %v1790 = vld [vmem:[#allocation2 + $0x2d8] sm:$0xff]
    %v1791 = vld [vmem:[#allocation2 + $0x2e0] sm:$0xff]
    %v1792 = vld [vmem:[#allocation2 + $0x2e8] sm:$0xff]
    %v1793 = vld [vmem:[#allocation2 + $0x2f0] sm:$0xff]
    %v1794 = vld [vmem:[#allocation2 + $0x2f8] sm:$0xff]
    %v1795 = vld [vmem:[#allocation2 + $0x300] sm:$0xff]
    %v1796 = vld [vmem:[#allocation2 + $0x308] sm:$0xff]
    %v1797 = vld [vmem:[#allocation2 + $0x310] sm:$0xff]
    %v1798 = vld [vmem:[#allocation2 + $0x318] sm:$0xff]
    %v1799 = vld [vmem:[#allocation2 + $0x320] sm:$0xff]
    %v1800 = vld [vmem:[#allocation2 + $0x328] sm:$0xff]
    %v1801 = vld [vmem:[#allocation2 + $0x330] sm:$0xff]
    %v1802 = vld [vmem:[#allocation2 + $0x338] sm:$0xff]
    %v1803 = vld [vmem:[#allocation2 + $0x340] sm:$0xff]
    %v1804 = vld [vmem:[#allocation2 + $0x348] sm:$0xff]
    %v1805 = vld [vmem:[#allocation2 + $0x350] sm:$0xff]
    %v1806 = vld [vmem:[#allocation2 + $0x358] sm:$0xff]
    %v1807 = vld [vmem:[#allocation2 + $0x360] sm:$0xff]
    %v1808 = vld [vmem:[#allocation2 + $0x368] sm:$0xff]
    %v1809 = vld [vmem:[#allocation2 + $0x370] sm:$0xff]
    %v1810 = vld [vmem:[#allocation2 + $0x378] sm:$0xff]
    %v1811 = vld [vmem:[#allocation2 + $0x380] sm:$0xff]
    %v1812 = vld [vmem:[#allocation2 + $0x388] sm:$0xff]
    %v1813 = vld [vmem:[#allocation2 + $0x390] sm:$0xff]
    %v1814 = vld [vmem:[#allocation2 + $0x398] sm:$0xff]
    %v1815 = vld [vmem:[#allocation2 + $0x3a0] sm:$0xff]
    %v1816 = vld [vmem:[#allocation2 + $0x3a8] sm:$0xff]
    %v1817 = vld [vmem:[#allocation2 + $0x3b0] sm:$0xff]
    %v1818 = vld [vmem:[#allocation2 + $0x3b8] sm:$0xff]
    %v1819 = vld [vmem:[#allocation2 + $0x3c0] sm:$0xff]
    %v1820 = vld [vmem:[#allocation2 + $0x3c8] sm:$0xff]
    %v1821 = vld [vmem:[#allocation2 + $0x3d0] sm:$0xff]
    %v1822 = vld [vmem:[#allocation2 + $0x3d8] sm:$0xff]
    %v1823 = vld [vmem:[#allocation2 + $0x3e0] sm:$0xff]
    %v1824 = vld [vmem:[#allocation2 + $0x3e8] sm:$0xff]
    %v1825 = vld [vmem:[#allocation2 + $0x3f0] sm:$0xff]
    %v1826 = vld [vmem:[#allocation2 + $0x3f8] sm:$0xff]
    %v1827 = vld [vmem:[#allocation2 + $0x400] sm:$0xff]
    %v1828 = vld [vmem:[#allocation2 + $0x408] sm:$0xff]
    %v1829 = vld [vmem:[#allocation2 + $0x410] sm:$0xff]
    %v1830 = vld [vmem:[#allocation2 + $0x418] sm:$0xff]
    %v1831 = vld [vmem:[#allocation2 + $0x420] sm:$0xff]
    %v1832 = vld [vmem:[#allocation2 + $0x428] sm:$0xff]
    %v1833 = vld [vmem:[#allocation2 + $0x430] sm:$0xff]
    %v1834 = vld [vmem:[#allocation2 + $0x438] sm:$0xff]
    %v1835 = vld [vmem:[#allocation2 + $0x440] sm:$0xff]
    %v1836 = vld [vmem:[#allocation2 + $0x448] sm:$0xff]
    %v1837 = vld [vmem:[#allocation2 + $0x450] sm:$0xff]
    %v1838 = vld [vmem:[#allocation2 + $0x458] sm:$0xff]
    %v1839 = vld [vmem:[#allocation2 + $0x460] sm:$0xff]
    %v1840 = vld [vmem:[#allocation2 + $0x468] sm:$0xff]
    %v1841 = vld [vmem:[#allocation2 + $0x470] sm:$0xff]
    %v1842 = vld [vmem:[#allocation2 + $0x478] sm:$0xff]
    %v1843 = vld [vmem:[#allocation2 + $0x480] sm:$0xff]
    %v1844 = vld [vmem:[#allocation2 + $0x488] sm:$0xff]
    %v1845 = vld [vmem:[#allocation2 + $0x490] sm:$0xff]
    %v1846 = vld [vmem:[#allocation2 + $0x498] sm:$0xff]
    %v1847 = vld [vmem:[#allocation2 + $0x4a0] sm:$0xff]
    %v1848 = vld [vmem:[#allocation2 + $0x4a8] sm:$0xff]
    %v1849 = vld [vmem:[#allocation2 + $0x4b0] sm:$0xff]
    %v1850 = vld [vmem:[#allocation2 + $0x4b8] sm:$0xff]
    %v1851 = vld [vmem:[#allocation2 + $0x4c0] sm:$0xff]
    %v1852 = vld [vmem:[#allocation2 + $0x4c8] sm:$0xff]
    %v1853 = vld [vmem:[#allocation2 + $0x4d0] sm:$0xff]
    %v1854 = vld [vmem:[#allocation2 + $0x4d8] sm:$0xff]
    %v1855 = vld [vmem:[#allocation2 + $0x4e0] sm:$0xff]
    %v1856 = vld [vmem:[#allocation2 + $0x4e8] sm:$0xff]
    %v1857 = vld [vmem:[#allocation2 + $0x4f0] sm:$0xff]
    %v1858 = vld [vmem:[#allocation2 + $0x4f8] sm:$0xff]
    %v1859 = vld [vmem:[#allocation2 + $0x500] sm:$0xff]
    %v1860 = vld [vmem:[#allocation2 + $0x508] sm:$0xff]
    %v1861 = vld [vmem:[#allocation2 + $0x510] sm:$0xff]
    %v1862 = vld [vmem:[#allocation2 + $0x518] sm:$0xff]
    %v1863 = vld [vmem:[#allocation2 + $0x520] sm:$0xff]
    %v1864 = vld [vmem:[#allocation2 + $0x528] sm:$0xff]
    %v1865 = vld [vmem:[#allocation2 + $0x530] sm:$0xff]
    %v1866 = vld [vmem:[#allocation2 + $0x538] sm:$0xff]
    %v1867 = vld [vmem:[#allocation2 + $0x540] sm:$0xff]
    %v1868 = vld [vmem:[#allocation2 + $0x548] sm:$0xff]
    %v1869 = vld [vmem:[#allocation2 + $0x550] sm:$0xff]
    %v1870 = vld [vmem:[#allocation2 + $0x558] sm:$0xff]
    %v1871 = vld [vmem:[#allocation2 + $0x560] sm:$0xff]
    %v1872 = vld [vmem:[#allocation2 + $0x568] sm:$0xff]
    %v1873 = vld [vmem:[#allocation2 + $0x570] sm:$0xff]
    %v1874 = vld [vmem:[#allocation2 + $0x578] sm:$0xff]
    %v1875 = vld [vmem:[#allocation2 + $0x580] sm:$0xff]
    %v1876 = vld [vmem:[#allocation2 + $0x588] sm:$0xff]
    %v1877 = vld [vmem:[#allocation2 + $0x590] sm:$0xff]
    %v1878 = vld [vmem:[#allocation2 + $0x598] sm:$0xff]
    %v1879 = vld [vmem:[#allocation2 + $0x5a0] sm:$0xff]
    %v1880 = vld [vmem:[#allocation2 + $0x5a8] sm:$0xff]
    %v1881 = vld [vmem:[#allocation2 + $0x5b0] sm:$0xff]
    %v1882 = vld [vmem:[#allocation2 + $0x5b8] sm:$0xff]
    %v1883 = vld [vmem:[#allocation2 + $0x5c0] sm:$0xff]
    %v1884 = vld [vmem:[#allocation2 + $0x5c8] sm:$0xff]
    %v1885 = vld [vmem:[#allocation2 + $0x5d0] sm:$0xff]
    %v1886 = vld [vmem:[#allocation2 + $0x5d8] sm:$0xff]
    %v1887 = vld [vmem:[#allocation2 + $0x5e0] sm:$0xff]
    %v1888 = vld [vmem:[#allocation2 + $0x5e8] sm:$0xff]
    %v1889 = vld [vmem:[#allocation2 + $0x5f0] sm:$0xff]
    %v1890 = vld [vmem:[#allocation2 + $0x5f8] sm:$0xff]
    %v1891 = vld [vmem:[#allocation2 + $0x600] sm:$0xff]
    %v1892 = vld [vmem:[#allocation2 + $0x608] sm:$0xff]
    %v1893 = vld [vmem:[#allocation2 + $0x610] sm:$0xff]
    %v1894 = vld [vmem:[#allocation2 + $0x618] sm:$0xff]
    %v1895 = vld [vmem:[#allocation2 + $0x620] sm:$0xff]
    %v1896 = vld [vmem:[#allocation2 + $0x628] sm:$0xff]
    %v1897 = vld [vmem:[#allocation2 + $0x630] sm:$0xff]
    %v1898 = vld [vmem:[#allocation2 + $0x638] sm:$0xff]
    %v1899 = vld [vmem:[#allocation2 + $0x640] sm:$0xff]
    %v1900 = vld [vmem:[#allocation2 + $0x648] sm:$0xff]
    %v1901 = vld [vmem:[#allocation2 + $0x650] sm:$0xff]
    %v1902 = vld [vmem:[#allocation2 + $0x658] sm:$0xff]
    %v1903 = vld [vmem:[#allocation2 + $0x660] sm:$0xff]
    %v1904 = vld [vmem:[#allocation2 + $0x668] sm:$0xff]
    %v1905 = vld [vmem:[#allocation2 + $0x670] sm:$0xff]
    %v1906 = vld [vmem:[#allocation2 + $0x678] sm:$0xff]
    %v1907 = vld [vmem:[#allocation2 + $0x680] sm:$0xff]
    %v1908 = vld [vmem:[#allocation2 + $0x688] sm:$0xff]
    %v1909 = vld [vmem:[#allocation2 + $0x690] sm:$0xff]
    %v1910 = vld [vmem:[#allocation2 + $0x698] sm:$0xff]
    %v1911 = vld [vmem:[#allocation2 + $0x6a0] sm:$0xff]
    %v1912 = vld [vmem:[#allocation2 + $0x6a8] sm:$0xff]
    %v1913 = vld [vmem:[#allocation2 + $0x6b0] sm:$0xff]
    %v1914 = vld [vmem:[#allocation2 + $0x6b8] sm:$0xff]
    %v1915 = vld [vmem:[#allocation2 + $0x6c0] sm:$0xff]
    %v1916 = vld [vmem:[#allocation2 + $0x6c8] sm:$0xff]
    %v1917 = vld [vmem:[#allocation2 + $0x6d0] sm:$0xff]
    %v1918 = vld [vmem:[#allocation2 + $0x6d8] sm:$0xff]
    %v1919 = vld [vmem:[#allocation2 + $0x6e0] sm:$0xff]
    %v1920 = vld [vmem:[#allocation2 + $0x6e8] sm:$0xff]
    %v1921 = vld [vmem:[#allocation2 + $0x6f0] sm:$0xff]
    %v1922 = vld [vmem:[#allocation2 + $0x6f8] sm:$0xff]
    %v1923 = vld [vmem:[#allocation2 + $0x700] sm:$0xff]
    %v1924 = vld [vmem:[#allocation2 + $0x708] sm:$0xff]
    %v1925 = vld [vmem:[#allocation2 + $0x710] sm:$0xff]
    %v1926 = vld [vmem:[#allocation2 + $0x718] sm:$0xff]
    %v1927 = vld [vmem:[#allocation2 + $0x720] sm:$0xff]
    %v1928 = vld [vmem:[#allocation2 + $0x728] sm:$0xff]
    %v1929 = vld [vmem:[#allocation2 + $0x730] sm:$0xff]
    %v1930 = vld [vmem:[#allocation2 + $0x738] sm:$0xff]
    %v1931 = vld [vmem:[#allocation2 + $0x740] sm:$0xff]
    %v1932 = vld [vmem:[#allocation2 + $0x748] sm:$0xff]
    %v1933 = vld [vmem:[#allocation2 + $0x750] sm:$0xff]
    %v1934 = vld [vmem:[#allocation2 + $0x758] sm:$0xff]
    %v1935 = vld [vmem:[#allocation2 + $0x760] sm:$0xff]
    %v1936 = vld [vmem:[#allocation2 + $0x768] sm:$0xff]
    %v1937 = vld [vmem:[#allocation2 + $0x770] sm:$0xff]
    %v1938 = vld [vmem:[#allocation2 + $0x778] sm:$0xff]
    %v1939 = vld [vmem:[#allocation2 + $0x780] sm:$0xff]
    %v1940 = vld [vmem:[#allocation2 + $0x788] sm:$0xff]
    %v1941 = vld [vmem:[#allocation2 + $0x790] sm:$0xff]
    %v1942 = vld [vmem:[#allocation2 + $0x798] sm:$0xff]
    %v1943 = vld [vmem:[#allocation2 + $0x7a0] sm:$0xff]
    %v1944 = vld [vmem:[#allocation2 + $0x7a8] sm:$0xff]
    %v1945 = vld [vmem:[#allocation2 + $0x7b0] sm:$0xff]
    %v1946 = vld [vmem:[#allocation2 + $0x7b8] sm:$0xff]
    %v1947 = vld [vmem:[#allocation2 + $0x7c0] sm:$0xff]
    %v1948 = vld [vmem:[#allocation2 + $0x7c8] sm:$0xff]
    %v1949 = vld [vmem:[#allocation2 + $0x7d0] sm:$0xff]
    %v1950 = vld [vmem:[#allocation2 + $0x7d8] sm:$0xff]
    %v1951 = vld [vmem:[#allocation2 + $0x7e0] sm:$0xff]
    %v1952 = vld [vmem:[#allocation2 + $0x7e8] sm:$0xff]
    %v1953 = vld [vmem:[#allocation2 + $0x7f0] sm:$0xff]
    %v1954 = vld [vmem:[#allocation2 + $0x7f8] sm:$0xff]
    %v1955 = vld [vmem:[#allocation2 + $0x800] sm:$0xff]
    %v1956 = vld [vmem:[#allocation2 + $0x808] sm:$0xff]
    %v1957 = vld [vmem:[#allocation2 + $0x810] sm:$0xff]
    %v1958 = vld [vmem:[#allocation2 + $0x818] sm:$0xff]
    %v1959 = vld [vmem:[#allocation2 + $0x820] sm:$0xff]
    %v1960 = vld [vmem:[#allocation2 + $0x828] sm:$0xff]
    %v1961 = vld [vmem:[#allocation2 + $0x830] sm:$0xff]
    %v1962 = vld [vmem:[#allocation2 + $0x838] sm:$0xff]
    %v1963 = vld [vmem:[#allocation2 + $0x840] sm:$0xff]
    %v1964 = vld [vmem:[#allocation2 + $0x848] sm:$0xff]
    %v1965 = vld [vmem:[#allocation2 + $0x850] sm:$0xff]
    %v1966 = vld [vmem:[#allocation2 + $0x858] sm:$0xff]
    %v1967 = vld [vmem:[#allocation2 + $0x860] sm:$0xff]
    %v1968 = vld [vmem:[#allocation2 + $0x868] sm:$0xff]
    %v1969 = vld [vmem:[#allocation2 + $0x870] sm:$0xff]
    %v1970 = vld [vmem:[#allocation2 + $0x878] sm:$0xff]
    %v1971 = vld [vmem:[#allocation2 + $0x880] sm:$0xff]
    %v1972 = vld [vmem:[#allocation2 + $0x888] sm:$0xff]
    %v1973 = vld [vmem:[#allocation2 + $0x890] sm:$0xff]
    %v1974 = vld [vmem:[#allocation2 + $0x898] sm:$0xff]
    %v1975 = vld [vmem:[#allocation2 + $0x8a0] sm:$0xff]
    %v1976 = vld [vmem:[#allocation2 + $0x8a8] sm:$0xff]
    %v1977 = vld [vmem:[#allocation2 + $0x8b0] sm:$0xff]
    %v1978 = vld [vmem:[#allocation2 + $0x8b8] sm:$0xff]
    %v1979 = vld [vmem:[#allocation2 + $0x8c0] sm:$0xff]
    %v1980 = vld [vmem:[#allocation2 + $0x8c8] sm:$0xff]
    %v1981 = vld [vmem:[#allocation2 + $0x8d0] sm:$0xff]
    %v1982 = vld [vmem:[#allocation2 + $0x8d8] sm:$0xff]
    %v1983 = vld [vmem:[#allocation2 + $0x8e0] sm:$0xff]
    %v1984 = vld [vmem:[#allocation2 + $0x8e8] sm:$0xff]
    %v1985 = vld [vmem:[#allocation2 + $0x8f0] sm:$0xff]
    %v1986 = vld [vmem:[#allocation2 + $0x8f8] sm:$0xff]
    %v1987 = vld [vmem:[#allocation2 + $0x900] sm:$0xff]
    %v1988 = vld [vmem:[#allocation2 + $0x908] sm:$0xff]
    %v1989 = vld [vmem:[#allocation2 + $0x910] sm:$0xff]
    %v1990 = vld [vmem:[#allocation2 + $0x918] sm:$0xff]
    %v1991 = vld [vmem:[#allocation2 + $0x920] sm:$0xff]
    %v1992 = vld [vmem:[#allocation2 + $0x928] sm:$0xff]
    %v1993 = vld [vmem:[#allocation2 + $0x930] sm:$0xff]
    %v1994 = vld [vmem:[#allocation2 + $0x938] sm:$0xff]
    %v1995 = vld [vmem:[#allocation2 + $0x940] sm:$0xff]
    %v1996 = vld [vmem:[#allocation2 + $0x948] sm:$0xff]
    %v1997 = vld [vmem:[#allocation2 + $0x950] sm:$0xff]
    %v1998 = vld [vmem:[#allocation2 + $0x958] sm:$0xff]
    %v1999 = vld [vmem:[#allocation2 + $0x960] sm:$0xff]
    %v2000 = vld [vmem:[#allocation2 + $0x968] sm:$0xff]
    %v2001 = vld [vmem:[#allocation2 + $0x970] sm:$0xff]
    %v2002 = vld [vmem:[#allocation2 + $0x978] sm:$0xff]
    %v2003 = vld [vmem:[#allocation2 + $0x980] sm:$0xff]
    %v2004 = vld [vmem:[#allocation2 + $0x988] sm:$0xff]
    %v2005 = vld [vmem:[#allocation2 + $0x990] sm:$0xff]
    %v2006 = vld [vmem:[#allocation2 + $0x998] sm:$0xff]
    %v2007 = vld [vmem:[#allocation2 + $0x9a0] sm:$0xff]
    %v2008 = vld [vmem:[#allocation2 + $0x9a8] sm:$0xff]
    %v2009 = vld [vmem:[#allocation2 + $0x9b0] sm:$0xff]
    %v2010 = vld [vmem:[#allocation2 + $0x9b8] sm:$0xff]
    %v2011 = vld [vmem:[#allocation2 + $0x9c0] sm:$0xff]
    %v2012 = vld [vmem:[#allocation2 + $0x9c8] sm:$0xff]
    %v2013 = vld [vmem:[#allocation2 + $0x9d0] sm:$0xff]
    %v2014 = vld [vmem:[#allocation2 + $0x9d8] sm:$0xff]
    %v2015 = vld [vmem:[#allocation2 + $0x9e0] sm:$0xff]
    %v2016 = vld [vmem:[#allocation2 + $0x9e8] sm:$0xff]
    %v2017 = vld [vmem:[#allocation2 + $0x9f0] sm:$0xff]
    %v2018 = vld [vmem:[#allocation2 + $0x9f8] sm:$0xff]
    %v2019 = vld [vmem:[#allocation2 + $0xa00] sm:$0xff]
    %v2020 = vld [vmem:[#allocation2 + $0xa08] sm:$0xff]
    %v2021 = vld [vmem:[#allocation2 + $0xa10] sm:$0xff]
    %v2022 = vld [vmem:[#allocation2 + $0xa18] sm:$0xff]
    %v2023 = vld [vmem:[#allocation2 + $0xa20] sm:$0xff]
    %v2024 = vld [vmem:[#allocation2 + $0xa28] sm:$0xff]
    %v2025 = vld [vmem:[#allocation2 + $0xa30] sm:$0xff]
    %v2026 = vld [vmem:[#allocation2 + $0xa38] sm:$0xff]
    %v2027 = vld [vmem:[#allocation2 + $0xa40] sm:$0xff]
    %v2028 = vld [vmem:[#allocation2 + $0xa48] sm:$0xff]
    %v2029 = vld [vmem:[#allocation2 + $0xa50] sm:$0xff]
    %v2030 = vld [vmem:[#allocation2 + $0xa58] sm:$0xff]
    %v2031 = vld [vmem:[#allocation2 + $0xa60] sm:$0xff]
    %v2032 = vld [vmem:[#allocation2 + $0xa68] sm:$0xff]
    %v2033 = vld [vmem:[#allocation2 + $0xa70] sm:$0xff]
    %v2034 = vld [vmem:[#allocation2 + $0xa78] sm:$0xff]
    %v2035 = vld [vmem:[#allocation2 + $0xa80] sm:$0xff]
    %v2036 = vld [vmem:[#allocation2 + $0xa88] sm:$0xff]
    %v2037 = vld [vmem:[#allocation2 + $0xa90] sm:$0xff]
    %v2038 = vld [vmem:[#allocation2 + $0xa98] sm:$0xff]
    %v2039 = vld [vmem:[#allocation2 + $0xaa0] sm:$0xff]
    %v2040 = vld [vmem:[#allocation2 + $0xaa8] sm:$0xff]
    %v2041 = vld [vmem:[#allocation2 + $0xab0] sm:$0xff]
    %v2042 = vld [vmem:[#allocation2 + $0xab8] sm:$0xff]
    %v2043 = vld [vmem:[#allocation2 + $0xac0] sm:$0xff]
    %v2044 = vld [vmem:[#allocation2 + $0xac8] sm:$0xff]
    %v2045 = vld [vmem:[#allocation2 + $0xad0] sm:$0xff]
    %v2046 = vld [vmem:[#allocation2 + $0xad8] sm:$0xff]
    %v2047 = vld [vmem:[#allocation2 + $0xae0] sm:$0xff]
    %v2048 = vld [vmem:[#allocation2 + $0xae8] sm:$0xff]
    %v2049 = vld [vmem:[#allocation2 + $0xaf0] sm:$0xff]
    %v2050 = vld [vmem:[#allocation2 + $0xaf8] sm:$0xff]
    %v2051 = vld [vmem:[#allocation2 + $0xb00] sm:$0xff]
    %v2052 = vld [vmem:[#allocation2 + $0xb08] sm:$0xff]
    %v2053 = vld [vmem:[#allocation2 + $0xb10] sm:$0xff]
    %v2054 = vld [vmem:[#allocation2 + $0xb18] sm:$0xff]
    %v2055 = vld [vmem:[#allocation2 + $0xb20] sm:$0xff]
    %v2056 = vld [vmem:[#allocation2 + $0xb28] sm:$0xff]
    %v2057 = vld [vmem:[#allocation2 + $0xb30] sm:$0xff]
    %v2058 = vld [vmem:[#allocation2 + $0xb38] sm:$0xff]
    %v2059 = vld [vmem:[#allocation2 + $0xb40] sm:$0xff]
    %v2060 = vld [vmem:[#allocation2 + $0xb48] sm:$0xff]
    %v2061 = vld [vmem:[#allocation2 + $0xb50] sm:$0xff]
    %v2062 = vld [vmem:[#allocation2 + $0xb58] sm:$0xff]
    %v2063 = vld [vmem:[#allocation2 + $0xb60] sm:$0xff]
    %v2064 = vld [vmem:[#allocation2 + $0xb68] sm:$0xff]
    %v2065 = vld [vmem:[#allocation2 + $0xb70] sm:$0xff]
    %v2066 = vld [vmem:[#allocation2 + $0xb78] sm:$0xff]
    %v2067 = vld [vmem:[#allocation2 + $0xb80] sm:$0xff]
    %v2068 = vld [vmem:[#allocation2 + $0xb88] sm:$0xff]
    %v2069 = vld [vmem:[#allocation2 + $0xb90] sm:$0xff]
    %v2070 = vld [vmem:[#allocation2 + $0xb98] sm:$0xff]
    %v2071 = vld [vmem:[#allocation2 + $0xba0] sm:$0xff]
    %v2072 = vld [vmem:[#allocation2 + $0xba8] sm:$0xff]
    %v2073 = vld [vmem:[#allocation2 + $0xbb0] sm:$0xff]
    %v2074 = vld [vmem:[#allocation2 + $0xbb8] sm:$0xff]
    %v2075 = vld [vmem:[#allocation2 + $0xbc0] sm:$0xff]
    %v2076 = vld [vmem:[#allocation2 + $0xbc8] sm:$0xff]
    %v2077 = vld [vmem:[#allocation2 + $0xbd0] sm:$0xff]
    %v2078 = vld [vmem:[#allocation2 + $0xbd8] sm:$0xff]
    %v2079 = vld [vmem:[#allocation2 + $0xbe0] sm:$0xff]
    %v2080 = vld [vmem:[#allocation2 + $0xbe8] sm:$0xff]
    %v2081 = vld [vmem:[#allocation2 + $0xbf0] sm:$0xff]
    %v2082 = vld [vmem:[#allocation2 + $0xbf8] sm:$0xff]
    %v2083 = vld [vmem:[#allocation2 + $0xc00] sm:$0xff]
    %v2084 = vld [vmem:[#allocation2 + $0xc08] sm:$0xff]
    %v2085 = vld [vmem:[#allocation2 + $0xc10] sm:$0xff]
    %v2086 = vld [vmem:[#allocation2 + $0xc18] sm:$0xff]
    %v2087 = vld [vmem:[#allocation2 + $0xc20] sm:$0xff]
    %v2088 = vld [vmem:[#allocation2 + $0xc28] sm:$0xff]
    %v2089 = vld [vmem:[#allocation2 + $0xc30] sm:$0xff]
    %v2090 = vld [vmem:[#allocation2 + $0xc38] sm:$0xff]
    %v2091 = vld [vmem:[#allocation2 + $0xc40] sm:$0xff]
    %v2092 = vld [vmem:[#allocation2 + $0xc48] sm:$0xff]
    %v2093 = vld [vmem:[#allocation2 + $0xc50] sm:$0xff]
    %v2094 = vld [vmem:[#allocation2 + $0xc58] sm:$0xff]
    %v2095 = vld [vmem:[#allocation2 + $0xc60] sm:$0xff]
    %v2096 = vld [vmem:[#allocation2 + $0xc68] sm:$0xff]
    %v2097 = vld [vmem:[#allocation2 + $0xc70] sm:$0xff]
    %v2098 = vld [vmem:[#allocation2 + $0xc78] sm:$0xff]
    %v2099 = vld [vmem:[#allocation2 + $0xc80] sm:$0xff]
    %v2100 = vld [vmem:[#allocation2 + $0xc88] sm:$0xff]
    %v2101 = vld [vmem:[#allocation2 + $0xc90] sm:$0xff]
    %v2102 = vld [vmem:[#allocation2 + $0xc98] sm:$0xff]
    %v2103 = vld [vmem:[#allocation2 + $0xca0] sm:$0xff]
    %v2104 = vld [vmem:[#allocation2 + $0xca8] sm:$0xff]
    %v2105 = vld [vmem:[#allocation2 + $0xcb0] sm:$0xff]
    %v2106 = vld [vmem:[#allocation2 + $0xcb8] sm:$0xff]
    %v2107 = vld [vmem:[#allocation2 + $0xcc0] sm:$0xff]
    %v2108 = vld [vmem:[#allocation2 + $0xcc8] sm:$0xff]
    %v2109 = vld [vmem:[#allocation2 + $0xcd0] sm:$0xff]
    %v2110 = vld [vmem:[#allocation2 + $0xcd8] sm:$0xff]
    %v2111 = vld [vmem:[#allocation2 + $0xce0] sm:$0xff]
    %v2112 = vld [vmem:[#allocation2 + $0xce8] sm:$0xff]
    %v2113 = vld [vmem:[#allocation2 + $0xcf0] sm:$0xff]
    %v2114 = vld [vmem:[#allocation2 + $0xcf8] sm:$0xff]
    %v2115 = vld [vmem:[#allocation2 + $0xd00] sm:$0xff]
    %v2116 = vld [vmem:[#allocation2 + $0xd08] sm:$0xff]
    %v2117 = vld [vmem:[#allocation2 + $0xd10] sm:$0xff]
    %v2118 = vld [vmem:[#allocation2 + $0xd18] sm:$0xff]
    %v2119 = vld [vmem:[#allocation2 + $0xd20] sm:$0xff]
    %v2120 = vld [vmem:[#allocation2 + $0xd28] sm:$0xff]
    %v2121 = vld [vmem:[#allocation2 + $0xd30] sm:$0xff]
    %v2122 = vld [vmem:[#allocation2 + $0xd38] sm:$0xff]
    %v2123 = vld [vmem:[#allocation2 + $0xd40] sm:$0xff]
    %v2124 = vld [vmem:[#allocation2 + $0xd48] sm:$0xff]
    %v2125 = vld [vmem:[#allocation2 + $0xd50] sm:$0xff]
    %v2126 = vld [vmem:[#allocation2 + $0xd58] sm:$0xff]
    %v2127 = vld [vmem:[#allocation2 + $0xd60] sm:$0xff]
    %v2128 = vld [vmem:[#allocation2 + $0xd68] sm:$0xff]
    %v2129 = vld [vmem:[#allocation2 + $0xd70] sm:$0xff]
    %v2130 = vld [vmem:[#allocation2 + $0xd78] sm:$0xff]
    %v2131 = vld [vmem:[#allocation2 + $0xd80] sm:$0xff]
    %v2132 = vld [vmem:[#allocation2 + $0xd88] sm:$0xff]
    %v2133 = vld [vmem:[#allocation2 + $0xd90] sm:$0xff]
    %v2134 = vld [vmem:[#allocation2 + $0xd98] sm:$0xff]
    %v2135 = vld [vmem:[#allocation2 + $0xda0] sm:$0xff]
    %v2136 = vld [vmem:[#allocation2 + $0xda8] sm:$0xff]
    %v2137 = vld [vmem:[#allocation2 + $0xdb0] sm:$0xff]
    %v2138 = vld [vmem:[#allocation2 + $0xdb8] sm:$0xff]
    %v2139 = vld [vmem:[#allocation2 + $0xdc0] sm:$0xff]
    %v2140 = vld [vmem:[#allocation2 + $0xdc8] sm:$0xff]
    %v2141 = vld [vmem:[#allocation2 + $0xdd0] sm:$0xff]
    %v2142 = vld [vmem:[#allocation2 + $0xdd8] sm:$0xff]
    %v2143 = vld [vmem:[#allocation2 + $0xde0] sm:$0xff]
    %v2144 = vld [vmem:[#allocation2 + $0xde8] sm:$0xff]
    %v2145 = vld [vmem:[#allocation2 + $0xdf0] sm:$0xff]
    %v2146 = vld [vmem:[#allocation2 + $0xdf8] sm:$0xff]
    %v2147 = vld [vmem:[#allocation2 + $0xe00] sm:$0xff]
    %v2148 = vld [vmem:[#allocation2 + $0xe08] sm:$0xff]
    %v2149 = vld [vmem:[#allocation2 + $0xe10] sm:$0xff]
    %v2150 = vld [vmem:[#allocation2 + $0xe18] sm:$0xff]
    %v2151 = vld [vmem:[#allocation2 + $0xe20] sm:$0xff]
    %v2152 = vld [vmem:[#allocation2 + $0xe28] sm:$0xff]
    %v2153 = vld [vmem:[#allocation2 + $0xe30] sm:$0xff]
    %v2154 = vld [vmem:[#allocation2 + $0xe38] sm:$0xff]
    %v2155 = vld [vmem:[#allocation2 + $0xe40] sm:$0xff]
    %v2156 = vld [vmem:[#allocation2 + $0xe48] sm:$0xff]
    %v2157 = vld [vmem:[#allocation2 + $0xe50] sm:$0xff]
    %v2158 = vld [vmem:[#allocation2 + $0xe58] sm:$0xff]
    %v2159 = vld [vmem:[#allocation2 + $0xe60] sm:$0xff]
    %v2160 = vld [vmem:[#allocation2 + $0xe68] sm:$0xff]
    %v2161 = vld [vmem:[#allocation2 + $0xe70] sm:$0xff]
    %v2162 = vld [vmem:[#allocation2 + $0xe78] sm:$0xff]
    %v2163 = vld [vmem:[#allocation2 + $0xe80] sm:$0xff]
    %v2164 = vld [vmem:[#allocation2 + $0xe88] sm:$0xff]
    %v2165 = vld [vmem:[#allocation2 + $0xe90] sm:$0xff]
    %v2166 = vld [vmem:[#allocation2 + $0xe98] sm:$0xff]
    %v2167 = vld [vmem:[#allocation2 + $0xea0] sm:$0xff]
    %v2168 = vld [vmem:[#allocation2 + $0xea8] sm:$0xff]
    %v2169 = vld [vmem:[#allocation2 + $0xeb0] sm:$0xff]
    %v2170 = vld [vmem:[#allocation2 + $0xeb8] sm:$0xff]
    %v2171 = vld [vmem:[#allocation2 + $0xec0] sm:$0xff]
    %v2172 = vld [vmem:[#allocation2 + $0xec8] sm:$0xff]
    %v2173 = vld [vmem:[#allocation2 + $0xed0] sm:$0xff]
    %v2174 = vld [vmem:[#allocation2 + $0xed8] sm:$0xff]
    %v2175 = vld [vmem:[#allocation2 + $0xee0] sm:$0xff]
    %v2176 = vld [vmem:[#allocation2 + $0xee8] sm:$0xff]
    %v2177 = vld [vmem:[#allocation2 + $0xef0] sm:$0xff]
    %v2178 = vld [vmem:[#allocation2 + $0xef8] sm:$0xff]
    %v2179 = vld [vmem:[#allocation2 + $0xf00] sm:$0xff]
    %v2180 = vld [vmem:[#allocation2 + $0xf08] sm:$0xff]
    %v2181 = vld [vmem:[#allocation2 + $0xf10] sm:$0xff]
    %v2182 = vld [vmem:[#allocation2 + $0xf18] sm:$0xff]
    %v2183 = vld [vmem:[#allocation2 + $0xf20] sm:$0xff]
    %v2184 = vld [vmem:[#allocation2 + $0xf28] sm:$0xff]
    %v2185 = vld [vmem:[#allocation2 + $0xf30] sm:$0xff]
    %v2186 = vld [vmem:[#allocation2 + $0xf38] sm:$0xff]
    %v2187 = vld [vmem:[#allocation2 + $0xf40] sm:$0xff]
    %v2188 = vld [vmem:[#allocation2 + $0xf48] sm:$0xff]
    %v2189 = vld [vmem:[#allocation2 + $0xf50] sm:$0xff]
    %v2190 = vld [vmem:[#allocation2 + $0xf58] sm:$0xff]
    %v2191 = vld [vmem:[#allocation2 + $0xf60] sm:$0xff]
    %v2192 = vld [vmem:[#allocation2 + $0xf68] sm:$0xff]
    %v2193 = vld [vmem:[#allocation2 + $0xf70] sm:$0xff]
    %v2194 = vld [vmem:[#allocation2 + $0xf78] sm:$0xff]
    %v2195 = vld [vmem:[#allocation2 + $0xf80] sm:$0xff]
    %v2196 = vld [vmem:[#allocation2 + $0xf88] sm:$0xff]
    %v2197 = vld [vmem:[#allocation2 + $0xf90] sm:$0xff]
    %v2198 = vld [vmem:[#allocation2 + $0xf98] sm:$0xff]
    %v2199 = vld [vmem:[#allocation2 + $0xfa0] sm:$0xff]
    %v2200 = vld [vmem:[#allocation2 + $0xfa8] sm:$0xff]
    %v2201 = vld [vmem:[#allocation2 + $0xfb0] sm:$0xff]
    %v2202 = vld [vmem:[#allocation2 + $0xfb8] sm:$0xff]
    %v2203 = vld [vmem:[#allocation2 + $0xfc0] sm:$0xff]
    %v2204 = vld [vmem:[#allocation2 + $0xfc8] sm:$0xff]
    %v2205 = vld [vmem:[#allocation2 + $0xfd0] sm:$0xff]
    %v2206 = vld [vmem:[#allocation2 + $0xfd8] sm:$0xff]
    %v2207 = vld [vmem:[#allocation2 + $0xfe0] sm:$0xff]
    %v2208 = vld [vmem:[#allocation2 + $0xfe8] sm:$0xff]
    %v2209 = vld [vmem:[#allocation2 + $0xff0] sm:$0xff]
    %v2210 = vld [vmem:[#allocation2 + $0xff8] sm:$0xff]
    %v2211 = vld [vmem:[#allocation2 + $0x1000] sm:$0xff]
    %v2212 = vld [vmem:[#allocation2 + $0x1008] sm:$0xff]
    %v2213 = vld [vmem:[#allocation2 + $0x1010] sm:$0xff]
    %v2214 = vld [vmem:[#allocation2 + $0x1018] sm:$0xff]
    %v2215 = vld [vmem:[#allocation2 + $0x1020] sm:$0xff]
    %v2216 = vld [vmem:[#allocation2 + $0x1028] sm:$0xff]
    %v2217 = vld [vmem:[#allocation2 + $0x1030] sm:$0xff]
    %v2218 = vld [vmem:[#allocation2 + $0x1038] sm:$0xff]
    %v2219 = vld [vmem:[#allocation2 + $0x1040] sm:$0xff]
    %v2220 = vld [vmem:[#allocation2 + $0x1048] sm:$0xff]
    %v2221 = vld [vmem:[#allocation2 + $0x1050] sm:$0xff]
    %v2222 = vld [vmem:[#allocation2 + $0x1058] sm:$0xff]
    %v2223 = vld [vmem:[#allocation2 + $0x1060] sm:$0xff]
    %v2224 = vld [vmem:[#allocation2 + $0x1068] sm:$0xff]
    %v2225 = vld [vmem:[#allocation2 + $0x1070] sm:$0xff]
    %v2226 = vld [vmem:[#allocation2 + $0x1078] sm:$0xff]
    %v2227 = vld [vmem:[#allocation2 + $0x1080] sm:$0xff]
    %v2228 = vld [vmem:[#allocation2 + $0x1088] sm:$0xff]
    %v2229 = vld [vmem:[#allocation2 + $0x1090] sm:$0xff]
    %v2230 = vld [vmem:[#allocation2 + $0x1098] sm:$0xff]
    %v2231 = vld [vmem:[#allocation2 + $0x10a0] sm:$0xff]
    %v2232 = vld [vmem:[#allocation2 + $0x10a8] sm:$0xff]
    %v2233 = vld [vmem:[#allocation2 + $0x10b0] sm:$0xff]
    %v2234 = vld [vmem:[#allocation2 + $0x10b8] sm:$0xff]
    %v2235 = vld [vmem:[#allocation2 + $0x10c0] sm:$0xff]
    %v2236 = vld [vmem:[#allocation2 + $0x10c8] sm:$0xff]
    %v2237 = vld [vmem:[#allocation2 + $0x10d0] sm:$0xff]
    %v2238 = vld [vmem:[#allocation2 + $0x10d8] sm:$0xff]
    %v2239 = vld [vmem:[#allocation2 + $0x10e0] sm:$0xff]
    %v2240 = vld [vmem:[#allocation2 + $0x10e8] sm:$0xff]
    %v2241 = vld [vmem:[#allocation2 + $0x10f0] sm:$0xff]
    %v2242 = vld [vmem:[#allocation2 + $0x10f8] sm:$0xff]
    %v2243 = vld [vmem:[#allocation2 + $0x1100] sm:$0xff]
    %v2244 = vld [vmem:[#allocation2 + $0x1108] sm:$0xff]
    %v2245 = vld [vmem:[#allocation2 + $0x1110] sm:$0xff]
    %v2246 = vld [vmem:[#allocation2 + $0x1118] sm:$0xff]
    %v2247 = vld [vmem:[#allocation2 + $0x1120] sm:$0xff]
    %v2248 = vld [vmem:[#allocation2 + $0x1128] sm:$0xff]
    %v2249 = vld [vmem:[#allocation2 + $0x1130] sm:$0xff]
    %v2250 = vld [vmem:[#allocation2 + $0x1138] sm:$0xff]
    %v2251 = vld [vmem:[#allocation2 + $0x1140] sm:$0xff]
    %v2252 = vld [vmem:[#allocation2 + $0x1148] sm:$0xff]
    %v2253 = vld [vmem:[#allocation2 + $0x1150] sm:$0xff]
    %v2254 = vld [vmem:[#allocation2 + $0x1158] sm:$0xff]
    %v2255 = vld [vmem:[#allocation2 + $0x1160] sm:$0xff]
    %v2256 = vld [vmem:[#allocation2 + $0x1168] sm:$0xff]
    %v2257 = vld [vmem:[#allocation2 + $0x1170] sm:$0xff]
    %v2258 = vld [vmem:[#allocation2 + $0x1178] sm:$0xff]
    %v2259 = vld [vmem:[#allocation2 + $0x1180] sm:$0xff]
    %v2260 = vld [vmem:[#allocation2 + $0x1188] sm:$0xff]
    %v2261 = vld [vmem:[#allocation2 + $0x1190] sm:$0xff]
    %v2262 = vld [vmem:[#allocation2 + $0x1198] sm:$0xff]
    %v2263 = vld [vmem:[#allocation2 + $0x11a0] sm:$0xff]
    %v2264 = vld [vmem:[#allocation2 + $0x11a8] sm:$0xff]
    %v2265 = vld [vmem:[#allocation2 + $0x11b0] sm:$0xff]
    %v2266 = vld [vmem:[#allocation2 + $0x11b8] sm:$0xff]
    %v2267 = vld [vmem:[#allocation2 + $0x11c0] sm:$0xff]
    %v2268 = vld [vmem:[#allocation2 + $0x11c8] sm:$0xff]
    %v2269 = vld [vmem:[#allocation2 + $0x11d0] sm:$0xff]
    %v2270 = vld [vmem:[#allocation2 + $0x11d8] sm:$0xff]
    %v2271 = vld [vmem:[#allocation2 + $0x11e0] sm:$0xff]
    %v2272 = vld [vmem:[#allocation2 + $0x11e8] sm:$0xff]
    %v2273 = vld [vmem:[#allocation2 + $0x11f0] sm:$0xff]
    %v2274 = vld [vmem:[#allocation2 + $0x11f8] sm:$0xff]
    %v2275 = vld [vmem:[#allocation2 + $0x1200] sm:$0xff]
    %v2276 = vld [vmem:[#allocation2 + $0x1208] sm:$0xff]
    %v2277 = vld [vmem:[#allocation2 + $0x1210] sm:$0xff]
    %v2278 = vld [vmem:[#allocation2 + $0x1218] sm:$0xff]
    %v2279 = vld [vmem:[#allocation2 + $0x1220] sm:$0xff]
    %v2280 = vld [vmem:[#allocation2 + $0x1228] sm:$0xff]
    %v2281 = vld [vmem:[#allocation2 + $0x1230] sm:$0xff]
    %v2282 = vld [vmem:[#allocation2 + $0x1238] sm:$0xff]
    %v2283 = vld [vmem:[#allocation2 + $0x1240] sm:$0xff]
    %v2284 = vld [vmem:[#allocation2 + $0x1248] sm:$0xff]
    %v2285 = vld [vmem:[#allocation2 + $0x1250] sm:$0xff]
    %v2286 = vld [vmem:[#allocation2 + $0x1258] sm:$0xff]
    %v2287 = vld [vmem:[#allocation2 + $0x1260] sm:$0xff]
    %v2288 = vld [vmem:[#allocation2 + $0x1268] sm:$0xff]
    %v2289 = vld [vmem:[#allocation2 + $0x1270] sm:$0xff]
    %v2290 = vld [vmem:[#allocation2 + $0x1278] sm:$0xff]
    %v2291 = vld [vmem:[#allocation2 + $0x1280] sm:$0xff]
    %v2292 = vld [vmem:[#allocation2 + $0x1288] sm:$0xff]
    %v2293 = vld [vmem:[#allocation2 + $0x1290] sm:$0xff]
    %v2294 = vld [vmem:[#allocation2 + $0x1298] sm:$0xff]
    %v2295 = vld [vmem:[#allocation2 + $0x12a0] sm:$0xff]
    %v2296 = vld [vmem:[#allocation2 + $0x12a8] sm:$0xff]
    %v2297 = vld [vmem:[#allocation2 + $0x12b0] sm:$0xff]
    %v2298 = vld [vmem:[#allocation2 + $0x12b8] sm:$0xff]
    %v2299 = vld [vmem:[#allocation2 + $0x12c0] sm:$0xff]
    %v2300 = vld [vmem:[#allocation2 + $0x12c8] sm:$0xff]
    %v2301 = vld [vmem:[#allocation2 + $0x12d0] sm:$0xff]
    %v2302 = vld [vmem:[#allocation2 + $0x12d8] sm:$0xff]
    %v2303 = vld [vmem:[#allocation2 + $0x12e0] sm:$0xff]
    %v2304 = vld [vmem:[#allocation2 + $0x12e8] sm:$0xff]
    %v2305 = vld [vmem:[#allocation2 + $0x12f0] sm:$0xff]
    %v2306 = vld [vmem:[#allocation2 + $0x12f8] sm:$0xff]
    %v2307 = vld [vmem:[#allocation2 + $0x1300] sm:$0xff]
    %v2308 = vld [vmem:[#allocation2 + $0x1308] sm:$0xff]
    %v2309 = vld [vmem:[#allocation2 + $0x1310] sm:$0xff]
    %v2310 = vld [vmem:[#allocation2 + $0x1318] sm:$0xff]
    %v2311 = vld [vmem:[#allocation2 + $0x1320] sm:$0xff]
    %v2312 = vld [vmem:[#allocation2 + $0x1328] sm:$0xff]
    %v2313 = vld [vmem:[#allocation2 + $0x1330] sm:$0xff]
    %v2314 = vld [vmem:[#allocation2 + $0x1338] sm:$0xff]
    %v2315 = vld [vmem:[#allocation2 + $0x1340] sm:$0xff]
    %v2316 = vld [vmem:[#allocation2 + $0x1348] sm:$0xff]
    %v2317 = vld [vmem:[#allocation2 + $0x1350] sm:$0xff]
    %v2318 = vld [vmem:[#allocation2 + $0x1358] sm:$0xff]
    %v2319 = vld [vmem:[#allocation2 + $0x1360] sm:$0xff]
    %v2320 = vld [vmem:[#allocation2 + $0x1368] sm:$0xff]
    %v2321 = vld [vmem:[#allocation2 + $0x1370] sm:$0xff]
    %v2322 = vld [vmem:[#allocation2 + $0x1378] sm:$0xff]
    %v2323 = vld [vmem:[#allocation2 + $0x1380] sm:$0xff]
    %v2324 = vld [vmem:[#allocation2 + $0x1388] sm:$0xff]
    %v2325 = vld [vmem:[#allocation2 + $0x1390] sm:$0xff]
    %v2326 = vld [vmem:[#allocation2 + $0x1398] sm:$0xff]
    %v2327 = vld [vmem:[#allocation2 + $0x13a0] sm:$0xff]
    %v2328 = vld [vmem:[#allocation2 + $0x13a8] sm:$0xff]
    %v2329 = vld [vmem:[#allocation2 + $0x13b0] sm:$0xff]
    %v2330 = vld [vmem:[#allocation2 + $0x13b8] sm:$0xff]
    %v2331 = vld [vmem:[#allocation2 + $0x13c0] sm:$0xff]
    %v2332 = vld [vmem:[#allocation2 + $0x13c8] sm:$0xff]
    %v2333 = vld [vmem:[#allocation2 + $0x13d0] sm:$0xff]
    %v2334 = vld [vmem:[#allocation2 + $0x13d8] sm:$0xff]
    %v2335 = vld [vmem:[#allocation2 + $0x13e0] sm:$0xff]
    %v2336 = vld [vmem:[#allocation2 + $0x13e8] sm:$0xff]
    %v2337 = vld [vmem:[#allocation2 + $0x13f0] sm:$0xff]
    %v2338 = vld [vmem:[#allocation2 + $0x13f8] sm:$0xff]
    %v2339 = vld [vmem:[#allocation2 + $0x1400] sm:$0xff]
    %v2340 = vld [vmem:[#allocation2 + $0x1408] sm:$0xff]
    %v2341 = vld [vmem:[#allocation2 + $0x1410] sm:$0xff]
    %v2342 = vld [vmem:[#allocation2 + $0x1418] sm:$0xff]
    %v2343 = vld [vmem:[#allocation2 + $0x1420] sm:$0xff]
    %v2344 = vld [vmem:[#allocation2 + $0x1428] sm:$0xff]
    %v2345 = vld [vmem:[#allocation2 + $0x1430] sm:$0xff]
    %v2346 = vld [vmem:[#allocation2 + $0x1438] sm:$0xff]
    %v2347 = vld [vmem:[#allocation2 + $0x1440] sm:$0xff]
    %v2348 = vld [vmem:[#allocation2 + $0x1448] sm:$0xff]
    %v2349 = vld [vmem:[#allocation2 + $0x1450] sm:$0xff]
    %v2350 = vld [vmem:[#allocation2 + $0x1458] sm:$0xff]
    %v2351 = vld [vmem:[#allocation2 + $0x1460] sm:$0xff]
    %v2352 = vld [vmem:[#allocation2 + $0x1468] sm:$0xff]
    %v2353 = vld [vmem:[#allocation2 + $0x1470] sm:$0xff]
    %v2354 = vld [vmem:[#allocation2 + $0x1478] sm:$0xff]
    %v2355 = vld [vmem:[#allocation2 + $0x1480] sm:$0xff]
    %v2356 = vld [vmem:[#allocation2 + $0x1488] sm:$0xff]
    %v2357 = vld [vmem:[#allocation2 + $0x1490] sm:$0xff]
    %v2358 = vld [vmem:[#allocation2 + $0x1498] sm:$0xff]
    %v2359 = vld [vmem:[#allocation2 + $0x14a0] sm:$0xff]
    %v2360 = vld [vmem:[#allocation2 + $0x14a8] sm:$0xff]
    %v2361 = vld [vmem:[#allocation2 + $0x14b0] sm:$0xff]
    %v2362 = vld [vmem:[#allocation2 + $0x14b8] sm:$0xff]
    %v2363 = vld [vmem:[#allocation2 + $0x14c0] sm:$0xff]
    %v2364 = vld [vmem:[#allocation2 + $0x14c8] sm:$0xff]
    %v2365 = vld [vmem:[#allocation2 + $0x14d0] sm:$0xff]
    %v2366 = vld [vmem:[#allocation2 + $0x14d8] sm:$0xff]
    %v2367 = vld [vmem:[#allocation2 + $0x14e0] sm:$0xff]
    %v2368 = vld [vmem:[#allocation2 + $0x14e8] sm:$0xff]
    %v2369 = vld [vmem:[#allocation2 + $0x14f0] sm:$0xff]
    %v2370 = vld [vmem:[#allocation2 + $0x14f8] sm:$0xff]
    %v2371 = vld [vmem:[#allocation2 + $0x1500] sm:$0xff]
    %v2372 = vld [vmem:[#allocation2 + $0x1508] sm:$0xff]
    %v2373 = vld [vmem:[#allocation2 + $0x1510] sm:$0xff]
    %v2374 = vld [vmem:[#allocation2 + $0x1518] sm:$0xff]
    %v2375 = vld [vmem:[#allocation2 + $0x1520] sm:$0xff]
    %v2376 = vld [vmem:[#allocation2 + $0x1528] sm:$0xff]
    %v2377 = vld [vmem:[#allocation2 + $0x1530] sm:$0xff]
    %v2378 = vld [vmem:[#allocation2 + $0x1538] sm:$0xff]
    %v2379 = vld [vmem:[#allocation2 + $0x1540] sm:$0xff]
    %v2380 = vld [vmem:[#allocation2 + $0x1548] sm:$0xff]
    %v2381 = vld [vmem:[#allocation2 + $0x1550] sm:$0xff]
    %v2382 = vld [vmem:[#allocation2 + $0x1558] sm:$0xff]
    %v2383 = vld [vmem:[#allocation2 + $0x1560] sm:$0xff]
    %v2384 = vld [vmem:[#allocation2 + $0x1568] sm:$0xff]
    %v2385 = vld [vmem:[#allocation2 + $0x1570] sm:$0xff]
    %v2386 = vld [vmem:[#allocation2 + $0x1578] sm:$0xff]
    %v2387 = vld [vmem:[#allocation2 + $0x1580] sm:$0xff]
    %v2388 = vld [vmem:[#allocation2 + $0x1588] sm:$0xff]
    %v2389 = vld [vmem:[#allocation2 + $0x1590] sm:$0xff]
    %v2390 = vld [vmem:[#allocation2 + $0x1598] sm:$0xff]
    %v2391 = vld [vmem:[#allocation2 + $0x15a0] sm:$0xff]
    %v2392 = vld [vmem:[#allocation2 + $0x15a8] sm:$0xff]
    %v2393 = vld [vmem:[#allocation2 + $0x15b0] sm:$0xff]
    %v2394 = vld [vmem:[#allocation2 + $0x15b8] sm:$0xff]
    %v2395 = vld [vmem:[#allocation2 + $0x15c0] sm:$0xff]
    %v2396 = vld [vmem:[#allocation2 + $0x15c8] sm:$0xff]
    %v2397 = vld [vmem:[#allocation2 + $0x15d0] sm:$0xff]
    %v2398 = vld [vmem:[#allocation2 + $0x15d8] sm:$0xff]
    %v2399 = vld [vmem:[#allocation2 + $0x15e0] sm:$0xff]
    %v2400 = vld [vmem:[#allocation2 + $0x15e8] sm:$0xff]
    %v2401 = vld [vmem:[#allocation2 + $0x15f0] sm:$0xff]
    %v2402 = vld [vmem:[#allocation2 + $0x15f8] sm:$0xff]
    %v2403 = vld [vmem:[#allocation2 + $0x1600] sm:$0xff]
    %v2404 = vld [vmem:[#allocation2 + $0x1608] sm:$0xff]
    %v2405 = vld [vmem:[#allocation2 + $0x1610] sm:$0xff]
    %v2406 = vld [vmem:[#allocation2 + $0x1618] sm:$0xff]
    %v2407 = vld [vmem:[#allocation2 + $0x1620] sm:$0xff]
    %v2408 = vld [vmem:[#allocation2 + $0x1628] sm:$0xff]
    %v2409 = vld [vmem:[#allocation2 + $0x1630] sm:$0xff]
    %v2410 = vld [vmem:[#allocation2 + $0x1638] sm:$0xff]
    %v2411 = vld [vmem:[#allocation2 + $0x1640] sm:$0xff]
    %v2412 = vld [vmem:[#allocation2 + $0x1648] sm:$0xff]
    %v2413 = vld [vmem:[#allocation2 + $0x1650] sm:$0xff]
    %v2414 = vld [vmem:[#allocation2 + $0x1658] sm:$0xff]
    %v2415 = vld [vmem:[#allocation2 + $0x1660] sm:$0xff]
    %v2416 = vld [vmem:[#allocation2 + $0x1668] sm:$0xff]
    %v2417 = vld [vmem:[#allocation2 + $0x1670] sm:$0xff]
    %v2418 = vld [vmem:[#allocation2 + $0x1678] sm:$0xff]
    %v2419 = vld [vmem:[#allocation2 + $0x1680] sm:$0xff]
    %v2420 = vld [vmem:[#allocation2 + $0x1688] sm:$0xff]
    %v2421 = vld [vmem:[#allocation2 + $0x1690] sm:$0xff]
    %v2422 = vld [vmem:[#allocation2 + $0x1698] sm:$0xff]
    %v2423 = vld [vmem:[#allocation2 + $0x16a0] sm:$0xff]
    %v2424 = vld [vmem:[#allocation2 + $0x16a8] sm:$0xff]
    %v2425 = vld [vmem:[#allocation2 + $0x16b0] sm:$0xff]
    %v2426 = vld [vmem:[#allocation2 + $0x16b8] sm:$0xff]
    %v2427 = vld [vmem:[#allocation2 + $0x16c0] sm:$0xff]
    %v2428 = vld [vmem:[#allocation2 + $0x16c8] sm:$0xff]
    %v2429 = vld [vmem:[#allocation2 + $0x16d0] sm:$0xff]
    %v2430 = vld [vmem:[#allocation2 + $0x16d8] sm:$0xff]
    %v2431 = vld [vmem:[#allocation2 + $0x16e0] sm:$0xff]
    %v2432 = vld [vmem:[#allocation2 + $0x16e8] sm:$0xff]
    %v2433 = vld [vmem:[#allocation2 + $0x16f0] sm:$0xff]
    %v2434 = vld [vmem:[#allocation2 + $0x16f8] sm:$0xff]
    %v2435 = vld [vmem:[#allocation2 + $0x1700] sm:$0xff]
    %v2436 = vld [vmem:[#allocation2 + $0x1708] sm:$0xff]
    %v2437 = vld [vmem:[#allocation2 + $0x1710] sm:$0xff]
    %v2438 = vld [vmem:[#allocation2 + $0x1718] sm:$0xff]
    %v2439 = vld [vmem:[#allocation2 + $0x1720] sm:$0xff]
    %v2440 = vld [vmem:[#allocation2 + $0x1728] sm:$0xff]
    %v2441 = vld [vmem:[#allocation2 + $0x1730] sm:$0xff]
    %v2442 = vld [vmem:[#allocation2 + $0x1738] sm:$0xff]
    %v2443 = vld [vmem:[#allocation2 + $0x1740] sm:$0xff]
    %v2444 = vld [vmem:[#allocation2 + $0x1748] sm:$0xff]
    %v2445 = vld [vmem:[#allocation2 + $0x1750] sm:$0xff]
    %v2446 = vld [vmem:[#allocation2 + $0x1758] sm:$0xff]
    %v2447 = vld [vmem:[#allocation2 + $0x1760] sm:$0xff]
    %v2448 = vld [vmem:[#allocation2 + $0x1768] sm:$0xff]
    %v2449 = vld [vmem:[#allocation2 + $0x1770] sm:$0xff]
    %v2450 = vld [vmem:[#allocation2 + $0x1778] sm:$0xff]
    %v2451 = vld [vmem:[#allocation2 + $0x1780] sm:$0xff]
    %v2452 = vld [vmem:[#allocation2 + $0x1788] sm:$0xff]
    %v2453 = vld [vmem:[#allocation2 + $0x1790] sm:$0xff]
    %v2454 = vld [vmem:[#allocation2 + $0x1798] sm:$0xff]
    %v2455 = vld [vmem:[#allocation2 + $0x17a0] sm:$0xff]
    %v2456 = vld [vmem:[#allocation2 + $0x17a8] sm:$0xff]
    %v2457 = vld [vmem:[#allocation2 + $0x17b0] sm:$0xff]
    %v2458 = vld [vmem:[#allocation2 + $0x17b8] sm:$0xff]
    %v2459 = vld [vmem:[#allocation2 + $0x17c0] sm:$0xff]
    %v2460 = vld [vmem:[#allocation2 + $0x17c8] sm:$0xff]
    %v2461 = vld [vmem:[#allocation2 + $0x17d0] sm:$0xff]
    %v2462 = vld [vmem:[#allocation2 + $0x17d8] sm:$0xff]
    %v2463 = vld [vmem:[#allocation2 + $0x17e0] sm:$0xff]
    %v2464 = vld [vmem:[#allocation2 + $0x17e8] sm:$0xff]
    %v2465 = vld [vmem:[#allocation2 + $0x17f0] sm:$0xff]
    %v2466 = vld [vmem:[#allocation2 + $0x17f8] sm:$0xff]
    %v2467 = vld [vmem:[#allocation2 + $0x1800] sm:$0xff]
    %v2468 = vld [vmem:[#allocation2 + $0x1808] sm:$0xff]
    %v2469 = vld [vmem:[#allocation2 + $0x1810] sm:$0xff]
    %v2470 = vld [vmem:[#allocation2 + $0x1818] sm:$0xff]
    %v2471 = vld [vmem:[#allocation2 + $0x1820] sm:$0xff]
    %v2472 = vld [vmem:[#allocation2 + $0x1828] sm:$0xff]
    %v2473 = vld [vmem:[#allocation2 + $0x1830] sm:$0xff]
    %v2474 = vld [vmem:[#allocation2 + $0x1838] sm:$0xff]
    %v2475 = vld [vmem:[#allocation2 + $0x1840] sm:$0xff]
    %v2476 = vld [vmem:[#allocation2 + $0x1848] sm:$0xff]
    %v2477 = vld [vmem:[#allocation2 + $0x1850] sm:$0xff]
    %v2478 = vld [vmem:[#allocation2 + $0x1858] sm:$0xff]
    %v2479 = vld [vmem:[#allocation2 + $0x1860] sm:$0xff]
    %v2480 = vld [vmem:[#allocation2 + $0x1868] sm:$0xff]
    %v2481 = vld [vmem:[#allocation2 + $0x1870] sm:$0xff]
    %v2482 = vld [vmem:[#allocation2 + $0x1878] sm:$0xff]
    %v2483 = vld [vmem:[#allocation2 + $0x1880] sm:$0xff]
    %v2484 = vld [vmem:[#allocation2 + $0x1888] sm:$0xff]
    %v2485 = vld [vmem:[#allocation2 + $0x1890] sm:$0xff]
    %v2486 = vld [vmem:[#allocation2 + $0x1898] sm:$0xff]
    %v2487 = vld [vmem:[#allocation2 + $0x18a0] sm:$0xff]
    %v2488 = vld [vmem:[#allocation2 + $0x18a8] sm:$0xff]
    %v2489 = vld [vmem:[#allocation2 + $0x18b0] sm:$0xff]
    %v2490 = vld [vmem:[#allocation2 + $0x18b8] sm:$0xff]
    %v2491 = vld [vmem:[#allocation2 + $0x18c0] sm:$0xff]
    %v2492 = vld [vmem:[#allocation2 + $0x18c8] sm:$0xff]
    %v2493 = vld [vmem:[#allocation2 + $0x18d0] sm:$0xff]
    %v2494 = vld [vmem:[#allocation2 + $0x18d8] sm:$0xff]
    %v2495 = vld [vmem:[#allocation2 + $0x18e0] sm:$0xff]
    %v2496 = vld [vmem:[#allocation2 + $0x18e8] sm:$0xff]
    %v2497 = vld [vmem:[#allocation2 + $0x18f0] sm:$0xff]
    %v2498 = vld [vmem:[#allocation2 + $0x18f8] sm:$0xff]
    %v2499 = vld [vmem:[#allocation2 + $0x1900] sm:$0xff]
    %v2500 = vld [vmem:[#allocation2 + $0x1908] sm:$0xff]
    %v2501 = vld [vmem:[#allocation2 + $0x1910] sm:$0xff]
    %v2502 = vld [vmem:[#allocation2 + $0x1918] sm:$0xff]
    %v2503 = vld [vmem:[#allocation2 + $0x1920] sm:$0xff]
    %v2504 = vld [vmem:[#allocation2 + $0x1928] sm:$0xff]
    %v2505 = vld [vmem:[#allocation2 + $0x1930] sm:$0xff]
    %v2506 = vld [vmem:[#allocation2 + $0x1938] sm:$0xff]
    %v2507 = vld [vmem:[#allocation2 + $0x1940] sm:$0xff]
    %v2508 = vld [vmem:[#allocation2 + $0x1948] sm:$0xff]
    %v2509 = vld [vmem:[#allocation2 + $0x1950] sm:$0xff]
    %v2510 = vld [vmem:[#allocation2 + $0x1958] sm:$0xff]
    %v2511 = vld [vmem:[#allocation2 + $0x1960] sm:$0xff]
    %v2512 = vld [vmem:[#allocation2 + $0x1968] sm:$0xff]
    %v2513 = vld [vmem:[#allocation2 + $0x1970] sm:$0xff]
    %v2514 = vld [vmem:[#allocation2 + $0x1978] sm:$0xff]
    %v2515 = vld [vmem:[#allocation2 + $0x1980] sm:$0xff]
    %v2516 = vld [vmem:[#allocation2 + $0x1988] sm:$0xff]
    %v2517 = vld [vmem:[#allocation2 + $0x1990] sm:$0xff]
    %v2518 = vld [vmem:[#allocation2 + $0x1998] sm:$0xff]
    %v2519 = vld [vmem:[#allocation2 + $0x19a0] sm:$0xff]
    %v2520 = vld [vmem:[#allocation2 + $0x19a8] sm:$0xff]
    %v2521 = vld [vmem:[#allocation2 + $0x19b0] sm:$0xff]
    %v2522 = vld [vmem:[#allocation2 + $0x19b8] sm:$0xff]
    %v2523 = vld [vmem:[#allocation2 + $0x19c0] sm:$0xff]
    %v2524 = vld [vmem:[#allocation2 + $0x19c8] sm:$0xff]
    %v2525 = vld [vmem:[#allocation2 + $0x19d0] sm:$0xff]
    %v2526 = vld [vmem:[#allocation2 + $0x19d8] sm:$0xff]
    %v2527 = vld [vmem:[#allocation2 + $0x19e0] sm:$0xff]
    %v2528 = vld [vmem:[#allocation2 + $0x19e8] sm:$0xff]
    %v2529 = vld [vmem:[#allocation2 + $0x19f0] sm:$0xff]
    %v2530 = vld [vmem:[#allocation2 + $0x19f8] sm:$0xff]
    %v2531 = vld [vmem:[#allocation2 + $0x1a00] sm:$0xff]
    %v2532 = vld [vmem:[#allocation2 + $0x1a08] sm:$0xff]
    %v2533 = vld [vmem:[#allocation2 + $0x1a10] sm:$0xff]
    %v2534 = vld [vmem:[#allocation2 + $0x1a18] sm:$0xff]
    %v2535 = vld [vmem:[#allocation2 + $0x1a20] sm:$0xff]
    %v2536 = vld [vmem:[#allocation2 + $0x1a28] sm:$0xff]
    %v2537 = vld [vmem:[#allocation2 + $0x1a30] sm:$0xff]
    %v2538 = vld [vmem:[#allocation2 + $0x1a38] sm:$0xff]
    %v2539 = vld [vmem:[#allocation2 + $0x1a40] sm:$0xff]
    %v2540 = vld [vmem:[#allocation2 + $0x1a48] sm:$0xff]
    %v2541 = vld [vmem:[#allocation2 + $0x1a50] sm:$0xff]
    %v2542 = vld [vmem:[#allocation2 + $0x1a58] sm:$0xff]
    %v2543 = vld [vmem:[#allocation2 + $0x1a60] sm:$0xff]
    %v2544 = vld [vmem:[#allocation2 + $0x1a68] sm:$0xff]
    %v2545 = vld [vmem:[#allocation2 + $0x1a70] sm:$0xff]
    %v2546 = vld [vmem:[#allocation2 + $0x1a78] sm:$0xff]
    %v2547 = vld [vmem:[#allocation2 + $0x1a80] sm:$0xff]
    %v2548 = vld [vmem:[#allocation2 + $0x1a88] sm:$0xff]
    %v2549 = vld [vmem:[#allocation2 + $0x1a90] sm:$0xff]
    %v2550 = vld [vmem:[#allocation2 + $0x1a98] sm:$0xff]
    %v2551 = vld [vmem:[#allocation2 + $0x1aa0] sm:$0xff]
    %v2552 = vld [vmem:[#allocation2 + $0x1aa8] sm:$0xff]
    %v2553 = vld [vmem:[#allocation2 + $0x1ab0] sm:$0xff]
    %v2554 = vld [vmem:[#allocation2 + $0x1ab8] sm:$0xff]
    %v2555 = vld [vmem:[#allocation2 + $0x1ac0] sm:$0xff]
    %v2556 = vld [vmem:[#allocation2 + $0x1ac8] sm:$0xff]
    %v2557 = vld [vmem:[#allocation2 + $0x1ad0] sm:$0xff]
    %v2558 = vld [vmem:[#allocation2 + $0x1ad8] sm:$0xff]
    %v2559 = vld [vmem:[#allocation2 + $0x1ae0] sm:$0xff]
    %v2560 = vld [vmem:[#allocation2 + $0x1ae8] sm:$0xff]
    %v2561 = vld [vmem:[#allocation2 + $0x1af0] sm:$0xff]
    %v2562 = vld [vmem:[#allocation2 + $0x1af8] sm:$0xff]
    %v2581 = vunpack.c.l.b16 %v1681
    %v2582 = vunpack.c.h.b16 %v1681
    %v2583 = vunpack.c.l.b16 %v1682
    %v2584 = vunpack.c.h.b16 %v1682
    %v2585 = vunpack.c.l.b16 %v1683
    %v2586 = vunpack.c.h.b16 %v1683
    %v2587 = vunpack.c.l.b16 %v1684
    %v2588 = vunpack.c.h.b16 %v1684
    %v2589 = vunpack.c.l.b16 %v1685
    %v2590 = vunpack.c.h.b16 %v1685
    %v2591 = vunpack.c.l.b16 %v1686
    %v2592 = vunpack.c.h.b16 %v1686
    %v2593 = vunpack.c.l.b16 %v1687
    %v2594 = vunpack.c.h.b16 %v1687
    %v2595 = vunpack.c.l.b16 %v1688
    %v2596 = vunpack.c.h.b16 %v1688
    %v2597 = vunpack.c.l.b16 %v1689
    %v2598 = vunpack.c.h.b16 %v1689
    %v2599 = vunpack.c.l.b16 %v1690
    %v2600 = vunpack.c.h.b16 %v1690
    %v2601 = vunpack.c.l.b16 %v1691
    %v2602 = vunpack.c.h.b16 %v1691
    %v2603 = vunpack.c.l.b16 %v1692
    %v2604 = vunpack.c.h.b16 %v1692
    %v2605 = vunpack.c.l.b16 %v1693
    %v2606 = vunpack.c.h.b16 %v1693
    %v2607 = vunpack.c.l.b16 %v1694
    %v2608 = vunpack.c.h.b16 %v1694
    %v2609 = vunpack.c.l.b16 %v1695
    %v2610 = vunpack.c.h.b16 %v1695
    %v2611 = vunpack.c.l.b16 %v1696
    %v2612 = vunpack.c.h.b16 %v1696
    %v2613 = vunpack.c.l.b16 %v1697
    %v2614 = vunpack.c.h.b16 %v1697
    %v2615 = vunpack.c.l.b16 %v1698
    %v2616 = vunpack.c.h.b16 %v1698
    %v2617 = vpack.c.b16 %v2581, %v2581
    %v2618 = vpack.c.b16 %v2582, %v2582
    %v2619 = vpack.c.b16 %v2583, %v2583
    %v2620 = vpack.c.b16 %v2584, %v2584
    %v2621 = vpack.c.b16 %v2585, %v2585
    %v2622 = vpack.c.b16 %v2586, %v2586
    %v2623 = vpack.c.b16 %v2587, %v2587
    %v2624 = vpack.c.b16 %v2588, %v2588
    %v2625 = vpack.c.b16 %v2589, %v2589
    %v2626 = vpack.c.b16 %v2590, %v2590
    %v2627 = vpack.c.b16 %v2591, %v2591
    %v2628 = vpack.c.b16 %v2592, %v2592
    %v2629 = vpack.c.b16 %v2593, %v2593
    %v2630 = vpack.c.b16 %v2594, %v2594
    %v2631 = vpack.c.b16 %v2595, %v2595
    %v2632 = vpack.c.b16 %v2596, %v2596
    %v2633 = vpack.c.b16 %v2597, %v2597
    %v2634 = vpack.c.b16 %v2598, %v2598
    %v2635 = vpack.c.b16 %v2599, %v2599
    %v2636 = vpack.c.b16 %v2600, %v2600
    %v2637 = vpack.c.b16 %v2601, %v2601
    %v2638 = vpack.c.b16 %v2602, %v2602
    %v2639 = vpack.c.b16 %v2603, %v2603
    %v2640 = vpack.c.b16 %v2604, %v2604
    %v2641 = vpack.c.b16 %v2605, %v2605
    %v2642 = vpack.c.b16 %v2606, %v2606
    %v2643 = vpack.c.b16 %v2607, %v2607
    %v2644 = vpack.c.b16 %v2608, %v2608
    %v2645 = vpack.c.b16 %v2609, %v2609
    %v2646 = vpack.c.b16 %v2610, %v2610
    %v2647 = vpack.c.b16 %v2611, %v2611
    %v2648 = vpack.c.b16 %v2612, %v2612
    %v2649 = vpack.c.b16 %v2613, %v2613
    %v2650 = vpack.c.b16 %v2614, %v2614
    %v2651 = vpack.c.b16 %v2615, %v2615
    %v2652 = vpack.c.b16 %v2616, %v2616
    %2689 = vmatprep.subr.bf16.mxu0 %v1700
    %2690 = vmatpush1.bf16.msra.mxu0 %v1699
    %2691 = vmatprep.subr.bf16.mxu0 %v1703
    %2692 = vmatpush1.bf16.msra.mxu0 %v1702
    %2693 = vmatprep.subr.bf16.mxu0 %v1706
    %2694 = vmatpush1.bf16.msra.mxu0 %v1705
    %2695 = vmatprep.subr.bf16.mxu0 %v1709
    %2696 = vmatpush1.bf16.msra.mxu0 %v1708
    %2697 = vmatprep.subr.bf16.mxu0 %v1712
    %2698 = vmatpush1.bf16.msra.mxu0 %v1711
    %2699 = vmatprep.subr.bf16.mxu0 %v1715
    %2700 = vmatpush1.bf16.msra.mxu0 %v1714
    %2701 = vmatprep.subr.bf16.mxu0 %v1718
    %2702 = vmatpush1.bf16.msra.mxu0 %v1717
    %2703 = vmatprep.subr.bf16.mxu0 %v1721
    %2704 = vmatpush1.bf16.msra.mxu0 %v1720
    %2705 = vmatprep.subr.bf16.mxu0 %v1724
    %2706 = vmatpush1.bf16.msra.mxu0 %v1723
    %2707 = vmatprep.subr.bf16.mxu0 %v1727
    %2708 = vmatpush1.bf16.msra.mxu0 %v1726
    %2709 = vmatprep.subr.bf16.mxu0 %v1730
    %2710 = vmatpush1.bf16.msra.mxu0 %v1729
    %2711 = vmatprep.subr.bf16.mxu0 %v1733
    %2712 = vmatpush1.bf16.msra.mxu0 %v1732
    %2713 = vmatprep.subr.bf16.mxu0 %v1736
    %2714 = vmatpush1.bf16.msra.mxu0 %v1735
    %2715 = vmatprep.subr.bf16.mxu0 %v1739
    %2716 = vmatpush1.bf16.msra.mxu0 %v1738
    %2717 = vmatprep.subr.bf16.mxu0 %v1742
    %2718 = vmatpush1.bf16.msra.mxu0 %v1741
    %2719 = vmatprep.subr.bf16.mxu0 %v1745
    %2720 = vmatpush1.bf16.msra.mxu0 %v1744
    %2721 = vmatprep.mubr.bf16.mxu0 %v2618
    %2722 = vmatmul.mubr.bf16.gmra.mrb[0].mxu0 %v2617
    %v2723 = vpop.f32.mrb[0].mxu0
    %v2724 = vadd.f32 0.0, %v2723
    %v2725 = vpop.f32.mrb[0].mxu0
    %v2726 = vadd.f32 0.0, %v2725
    %v2727 = vpop.f32.mrb[0].mxu0
    %v2728 = vpop.f32.mrb[0].mxu0
    %2729 = vdwg.mxu0
    %2730 = vmatprep.subr.bf16.mxu0 %v1748
    %2731 = vmatpush1.bf16.msra.mxu0 %v1747
    %2732 = vmatprep.subr.bf16.mxu0 %v1751
    %2733 = vmatpush1.bf16.msra.mxu0 %v1750
    %2734 = vmatprep.subr.bf16.mxu0 %v1754
    %2735 = vmatpush1.bf16.msra.mxu0 %v1753
    %2736 = vmatprep.subr.bf16.mxu0 %v1757
    %2737 = vmatpush1.bf16.msra.mxu0 %v1756
    %2738 = vmatprep.subr.bf16.mxu0 %v1760
    %2739 = vmatpush1.bf16.msra.mxu0 %v1759
    %2740 = vmatprep.subr.bf16.mxu0 %v1763
    %2741 = vmatpush1.bf16.msra.mxu0 %v1762
    %2742 = vmatprep.subr.bf16.mxu0 %v1766
    %2743 = vmatpush1.bf16.msra.mxu0 %v1765
    %2744 = vmatprep.subr.bf16.mxu0 %v1769
    %2745 = vmatpush1.bf16.msra.mxu0 %v1768
    %2746 = vmatprep.subr.bf16.mxu0 %v1772
    %2747 = vmatpush1.bf16.msra.mxu0 %v1771
    %2748 = vmatprep.subr.bf16.mxu0 %v1775
    %2749 = vmatpush1.bf16.msra.mxu0 %v1774
    %2750 = vmatprep.subr.bf16.mxu0 %v1778
    %2751 = vmatpush1.bf16.msra.mxu0 %v1777
    %2752 = vmatprep.subr.bf16.mxu0 %v1781
    %2753 = vmatpush1.bf16.msra.mxu0 %v1780
    %2754 = vmatprep.subr.bf16.mxu0 %v1784
    %2755 = vmatpush1.bf16.msra.mxu0 %v1783
    %2756 = vmatprep.subr.bf16.mxu0 %v1787
    %2757 = vmatpush1.bf16.msra.mxu0 %v1786
    %2758 = vmatprep.subr.bf16.mxu0 %v1790
    %2759 = vmatpush1.bf16.msra.mxu0 %v1789
    %2760 = vmatprep.subr.bf16.mxu0 %v1793
    %2761 = vmatpush1.bf16.msra.mxu0 %v1792
    %2762 = vmatprep.mubr.bf16.mxu0 %v2620
    %2763 = vmatmul.mubr.bf16.gmra.mrb[0].mxu0 %v2619
    %v2764 = vpop.f32.mrb[0].mxu0
    %v2765 = vadd.f32 %v2724, %v2764
    %v2766 = vpop.f32.mrb[0].mxu0
    %v2767 = vadd.f32 %v2726, %v2766
    %v2768 = vpop.f32.mrb[0].mxu0
    %v2769 = vpop.f32.mrb[0].mxu0
    %2770 = vdwg.mxu0
    %2771 = vmatprep.subr.bf16.mxu0 %v1796
    %2772 = vmatpush1.bf16.msra.mxu0 %v1795
    %2773 = vmatprep.subr.bf16.mxu0 %v1799
    %2774 = vmatpush1.bf16.msra.mxu0 %v1798
    %2775 = vmatprep.subr.bf16.mxu0 %v1802
    %2776 = vmatpush1.bf16.msra.mxu0 %v1801
    %2777 = vmatprep.subr.bf16.mxu0 %v1805
    %2778 = vmatpush1.bf16.msra.mxu0 %v1804
    %2779 = vmatprep.subr.bf16.mxu0 %v1808
    %2780 = vmatpush1.bf16.msra.mxu0 %v1807
    %2781 = vmatprep.subr.bf16.mxu0 %v1811
    %2782 = vmatpush1.bf16.msra.mxu0 %v1810
    %2783 = vmatprep.subr.bf16.mxu0 %v1814
    %2784 = vmatpush1.bf16.msra.mxu0 %v1813
    %2785 = vmatprep.subr.bf16.mxu0 %v1817
    %2786 = vmatpush1.bf16.msra.mxu0 %v1816
    %2787 = vmatprep.subr.bf16.mxu0 %v1820
    %2788 = vmatpush1.bf16.msra.mxu0 %v1819
    %2789 = vmatprep.subr.bf16.mxu0 %v1823
    %2790 = vmatpush1.bf16.msra.mxu0 %v1822
    %2791 = vmatprep.subr.bf16.mxu0 %v1826
    %2792 = vmatpush1.bf16.msra.mxu0 %v1825
    %2793 = vmatprep.subr.bf16.mxu0 %v1829
    %2794 = vmatpush1.bf16.msra.mxu0 %v1828
    %2795 = vmatprep.subr.bf16.mxu0 %v1832
    %2796 = vmatpush1.bf16.msra.mxu0 %v1831
    %2797 = vmatprep.subr.bf16.mxu0 %v1835
    %2798 = vmatpush1.bf16.msra.mxu0 %v1834
    %2799 = vmatprep.subr.bf16.mxu0 %v1838
    %2800 = vmatpush1.bf16.msra.mxu0 %v1837
    %2801 = vmatprep.subr.bf16.mxu0 %v1841
    %2802 = vmatpush1.bf16.msra.mxu0 %v1840
    %2803 = vmatprep.mubr.bf16.mxu0 %v2622
    %2804 = vmatmul.mubr.bf16.gmra.mrb[0].mxu0 %v2621
    %v2805 = vpop.f32.mrb[0].mxu0
    %v2806 = vadd.f32 %v2765, %v2805
    %v2807 = vpop.f32.mrb[0].mxu0
    %v2808 = vadd.f32 %v2767, %v2807
    %v2809 = vpop.f32.mrb[0].mxu0
    %v2810 = vpop.f32.mrb[0].mxu0
    %2811 = vdwg.mxu0
    %2812 = vmatprep.subr.bf16.mxu0 %v1844
    %2813 = vmatpush1.bf16.msra.mxu0 %v1843
    %2814 = vmatprep.subr.bf16.mxu0 %v1847
    %2815 = vmatpush1.bf16.msra.mxu0 %v1846
    %2816 = vmatprep.subr.bf16.mxu0 %v1850
    %2817 = vmatpush1.bf16.msra.mxu0 %v1849
    %2818 = vmatprep.subr.bf16.mxu0 %v1853
    %2819 = vmatpush1.bf16.msra.mxu0 %v1852
    %2820 = vmatprep.subr.bf16.mxu0 %v1856
    %2821 = vmatpush1.bf16.msra.mxu0 %v1855
    %2822 = vmatprep.subr.bf16.mxu0 %v1859
    %2823 = vmatpush1.bf16.msra.mxu0 %v1858
    %2824 = vmatprep.subr.bf16.mxu0 %v1862
    %2825 = vmatpush1.bf16.msra.mxu0 %v1861
    %2826 = vmatprep.subr.bf16.mxu0 %v1865
    %2827 = vmatpush1.bf16.msra.mxu0 %v1864
    %2828 = vmatprep.subr.bf16.mxu0 %v1868
    %2829 = vmatpush1.bf16.msra.mxu0 %v1867
    %2830 = vmatprep.subr.bf16.mxu0 %v1871
    %2831 = vmatpush1.bf16.msra.mxu0 %v1870
    %2832 = vmatprep.subr.bf16.mxu0 %v1874
    %2833 = vmatpush1.bf16.msra.mxu0 %v1873
    %2834 = vmatprep.subr.bf16.mxu0 %v1877
    %2835 = vmatpush1.bf16.msra.mxu0 %v1876
    %2836 = vmatprep.subr.bf16.mxu0 %v1880
    %2837 = vmatpush1.bf16.msra.mxu0 %v1879
    %2838 = vmatprep.subr.bf16.mxu0 %v1883
    %2839 = vmatpush1.bf16.msra.mxu0 %v1882
    %2840 = vmatprep.subr.bf16.mxu0 %v1886
    %2841 = vmatpush1.bf16.msra.mxu0 %v1885
    %2842 = vmatprep.subr.bf16.mxu0 %v1889
    %2843 = vmatpush1.bf16.msra.mxu0 %v1888
    %2844 = vmatprep.mubr.bf16.mxu0 %v2624
    %2845 = vmatmul.mubr.bf16.gmra.mrb[0].mxu0 %v2623
    %v2846 = vpop.f32.mrb[0].mxu0
    %v2847 = vadd.f32 %v2806, %v2846
    %v2848 = vpop.f32.mrb[0].mxu0
    %v2849 = vadd.f32 %v2808, %v2848
    %v2850 = vpop.f32.mrb[0].mxu0
    %v2851 = vpop.f32.mrb[0].mxu0
    %2852 = vdwg.mxu0
    %2853 = vmatprep.subr.bf16.mxu0 %v1892
    %2854 = vmatpush1.bf16.msra.mxu0 %v1891
    %2855 = vmatprep.subr.bf16.mxu0 %v1895
    %2856 = vmatpush1.bf16.msra.mxu0 %v1894
    %2857 = vmatprep.subr.bf16.mxu0 %v1898
    %2858 = vmatpush1.bf16.msra.mxu0 %v1897
    %2859 = vmatprep.subr.bf16.mxu0 %v1901
    %2860 = vmatpush1.bf16.msra.mxu0 %v1900
    %2861 = vmatprep.subr.bf16.mxu0 %v1904
    %2862 = vmatpush1.bf16.msra.mxu0 %v1903
    %2863 = vmatprep.subr.bf16.mxu0 %v1907
    %2864 = vmatpush1.bf16.msra.mxu0 %v1906
    %2865 = vmatprep.subr.bf16.mxu0 %v1910
    %2866 = vmatpush1.bf16.msra.mxu0 %v1909
    %2867 = vmatprep.subr.bf16.mxu0 %v1913
    %2868 = vmatpush1.bf16.msra.mxu0 %v1912
    %2869 = vmatprep.subr.bf16.mxu0 %v1916
    %2870 = vmatpush1.bf16.msra.mxu0 %v1915
    %2871 = vmatprep.subr.bf16.mxu0 %v1919
    %2872 = vmatpush1.bf16.msra.mxu0 %v1918
    %2873 = vmatprep.subr.bf16.mxu0 %v1922
    %2874 = vmatpush1.bf16.msra.mxu0 %v1921
    %2875 = vmatprep.subr.bf16.mxu0 %v1925
    %2876 = vmatpush1.bf16.msra.mxu0 %v1924
    %2877 = vmatprep.subr.bf16.mxu0 %v1928
    %2878 = vmatpush1.bf16.msra.mxu0 %v1927
    %2879 = vmatprep.subr.bf16.mxu0 %v1931
    %2880 = vmatpush1.bf16.msra.mxu0 %v1930
    %2881 = vmatprep.subr.bf16.mxu0 %v1934
    %2882 = vmatpush1.bf16.msra.mxu0 %v1933
    %2883 = vmatprep.subr.bf16.mxu0 %v1937
    %2884 = vmatpush1.bf16.msra.mxu0 %v1936
    %2885 = vmatprep.mubr.bf16.mxu0 %v2626
    %2886 = vmatmul.mubr.bf16.gmra.mrb[0].mxu0 %v2625
    %v2887 = vpop.f32.mrb[0].mxu0
    %v2888 = vadd.f32 %v2847, %v2887
    %v2889 = vpop.f32.mrb[0].mxu0
    %v2890 = vadd.f32 %v2849, %v2889
    %v2891 = vpop.f32.mrb[0].mxu0
    %v2892 = vpop.f32.mrb[0].mxu0
    %2893 = vdwg.mxu0
    %2894 = vmatprep.subr.bf16.mxu0 %v1940
    %2895 = vmatpush1.bf16.msra.mxu0 %v1939
    %2896 = vmatprep.subr.bf16.mxu0 %v1943
    %2897 = vmatpush1.bf16.msra.mxu0 %v1942
    %2898 = vmatprep.subr.bf16.mxu0 %v1946
    %2899 = vmatpush1.bf16.msra.mxu0 %v1945
    %2900 = vmatprep.subr.bf16.mxu0 %v1949
    %2901 = vmatpush1.bf16.msra.mxu0 %v1948
    %2902 = vmatprep.subr.bf16.mxu0 %v1952
    %2903 = vmatpush1.bf16.msra.mxu0 %v1951
    %2904 = vmatprep.subr.bf16.mxu0 %v1955
    %2905 = vmatpush1.bf16.msra.mxu0 %v1954
    %2906 = vmatprep.subr.bf16.mxu0 %v1958
    %2907 = vmatpush1.bf16.msra.mxu0 %v1957
    %2908 = vmatprep.subr.bf16.mxu0 %v1961
    %2909 = vmatpush1.bf16.msra.mxu0 %v1960
    %2910 = vmatprep.subr.bf16.mxu0 %v1964
    %2911 = vmatpush1.bf16.msra.mxu0 %v1963
    %2912 = vmatprep.subr.bf16.mxu0 %v1967
    %2913 = vmatpush1.bf16.msra.mxu0 %v1966
    %2914 = vmatprep.subr.bf16.mxu0 %v1970
    %2915 = vmatpush1.bf16.msra.mxu0 %v1969
    %2916 = vmatprep.subr.bf16.mxu0 %v1973
    %2917 = vmatpush1.bf16.msra.mxu0 %v1972
    %2918 = vmatprep.subr.bf16.mxu0 %v1976
    %2919 = vmatpush1.bf16.msra.mxu0 %v1975
    %2920 = vmatprep.subr.bf16.mxu0 %v1979
    %2921 = vmatpush1.bf16.msra.mxu0 %v1978
    %2922 = vmatprep.subr.bf16.mxu0 %v1982
    %2923 = vmatpush1.bf16.msra.mxu0 %v1981
    %2924 = vmatprep.subr.bf16.mxu0 %v1985
    %2925 = vmatpush1.bf16.msra.mxu0 %v1984
    %2926 = vmatprep.mubr.bf16.mxu0 %v2628
    %2927 = vmatmul.mubr.bf16.gmra.mrb[0].mxu0 %v2627
    %v2928 = vpop.f32.mrb[0].mxu0
    %v2929 = vadd.f32 %v2888, %v2928
    %v2930 = vpop.f32.mrb[0].mxu0
    %v2931 = vadd.f32 %v2890, %v2930
    %v2932 = vpop.f32.mrb[0].mxu0
    %v2933 = vpop.f32.mrb[0].mxu0
    %2934 = vdwg.mxu0
    %2935 = vmatprep.subr.bf16.mxu0 %v1988
    %2936 = vmatpush1.bf16.msra.mxu0 %v1987
    %2937 = vmatprep.subr.bf16.mxu0 %v1991
    %2938 = vmatpush1.bf16.msra.mxu0 %v1990
    %2939 = vmatprep.subr.bf16.mxu0 %v1994
    %2940 = vmatpush1.bf16.msra.mxu0 %v1993
    %2941 = vmatprep.subr.bf16.mxu0 %v1997
    %2942 = vmatpush1.bf16.msra.mxu0 %v1996
    %2943 = vmatprep.subr.bf16.mxu0 %v2000
    %2944 = vmatpush1.bf16.msra.mxu0 %v1999
    %2945 = vmatprep.subr.bf16.mxu0 %v2003
    %2946 = vmatpush1.bf16.msra.mxu0 %v2002
    %2947 = vmatprep.subr.bf16.mxu0 %v2006
    %2948 = vmatpush1.bf16.msra.mxu0 %v2005
    %2949 = vmatprep.subr.bf16.mxu0 %v2009
    %2950 = vmatpush1.bf16.msra.mxu0 %v2008
    %2951 = vmatprep.subr.bf16.mxu0 %v2012
    %2952 = vmatpush1.bf16.msra.mxu0 %v2011
    %2953 = vmatprep.subr.bf16.mxu0 %v2015
    %2954 = vmatpush1.bf16.msra.mxu0 %v2014
    %2955 = vmatprep.subr.bf16.mxu0 %v2018
    %2956 = vmatpush1.bf16.msra.mxu0 %v2017
    %2957 = vmatprep.subr.bf16.mxu0 %v2021
    %2958 = vmatpush1.bf16.msra.mxu0 %v2020
    %2959 = vmatprep.subr.bf16.mxu0 %v2024
    %2960 = vmatpush1.bf16.msra.mxu0 %v2023
    %2961 = vmatprep.subr.bf16.mxu0 %v2027
    %2962 = vmatpush1.bf16.msra.mxu0 %v2026
    %2963 = vmatprep.subr.bf16.mxu0 %v2030
    %2964 = vmatpush1.bf16.msra.mxu0 %v2029
    %2965 = vmatprep.subr.bf16.mxu0 %v2033
    %2966 = vmatpush1.bf16.msra.mxu0 %v2032
    %2967 = vmatprep.mubr.bf16.mxu0 %v2630
    %2968 = vmatmul.mubr.bf16.gmra.mrb[0].mxu0 %v2629
    %v2969 = vpop.f32.mrb[0].mxu0
    %v2970 = vadd.f32 %v2929, %v2969
    %v2971 = vpop.f32.mrb[0].mxu0
    %v2972 = vadd.f32 %v2931, %v2971
    %v2973 = vpop.f32.mrb[0].mxu0
    %v2974 = vpop.f32.mrb[0].mxu0
    %2975 = vdwg.mxu0
    %2976 = vmatprep.subr.bf16.mxu0 %v2036
    %2977 = vmatpush1.bf16.msra.mxu0 %v2035
    %2978 = vmatprep.subr.bf16.mxu0 %v2039
    %2979 = vmatpush1.bf16.msra.mxu0 %v2038
    %2980 = vmatprep.subr.bf16.mxu0 %v2042
    %2981 = vmatpush1.bf16.msra.mxu0 %v2041
    %2982 = vmatprep.subr.bf16.mxu0 %v2045
    %2983 = vmatpush1.bf16.msra.mxu0 %v2044
    %2984 = vmatprep.subr.bf16.mxu0 %v2048
    %2985 = vmatpush1.bf16.msra.mxu0 %v2047
    %2986 = vmatprep.subr.bf16.mxu0 %v2051
    %2987 = vmatpush1.bf16.msra.mxu0 %v2050
    %2988 = vmatprep.subr.bf16.mxu0 %v2054
    %2989 = vmatpush1.bf16.msra.mxu0 %v2053
    %2990 = vmatprep.subr.bf16.mxu0 %v2057
    %2991 = vmatpush1.bf16.msra.mxu0 %v2056
    %2992 = vmatprep.subr.bf16.mxu0 %v2060
    %2993 = vmatpush1.bf16.msra.mxu0 %v2059
    %2994 = vmatprep.subr.bf16.mxu0 %v2063
    %2995 = vmatpush1.bf16.msra.mxu0 %v2062
    %2996 = vmatprep.subr.bf16.mxu0 %v2066
    %2997 = vmatpush1.bf16.msra.mxu0 %v2065
    %2998 = vmatprep.subr.bf16.mxu0 %v2069
    %2999 = vmatpush1.bf16.msra.mxu0 %v2068
    %3000 = vmatprep.subr.bf16.mxu0 %v2072
    %3001 = vmatpush1.bf16.msra.mxu0 %v2071
    %3002 = vmatprep.subr.bf16.mxu0 %v2075
    %3003 = vmatpush1.bf16.msra.mxu0 %v2074
    %3004 = vmatprep.subr.bf16.mxu0 %v2078
    %3005 = vmatpush1.bf16.msra.mxu0 %v2077
    %3006 = vmatprep.subr.bf16.mxu0 %v2081
    %3007 = vmatpush1.bf16.msra.mxu0 %v2080
    %3008 = vmatprep.mubr.bf16.mxu0 %v2632
    %3009 = vmatmul.mubr.bf16.gmra.mrb[0].mxu0 %v2631
    %v3010 = vpop.f32.mrb[0].mxu0
    %v3011 = vadd.f32 %v2970, %v3010
    %v3012 = vpop.f32.mrb[0].mxu0
    %v3013 = vadd.f32 %v2972, %v3012
    %v3014 = vpop.f32.mrb[0].mxu0
    %v3015 = vpop.f32.mrb[0].mxu0
    %3016 = vdwg.mxu0
    %3017 = vmatprep.subr.bf16.mxu0 %v2084
    %3018 = vmatpush1.bf16.msra.mxu0 %v2083
    %3019 = vmatprep.subr.bf16.mxu0 %v2087
    %3020 = vmatpush1.bf16.msra.mxu0 %v2086
    %3021 = vmatprep.subr.bf16.mxu0 %v2090
    %3022 = vmatpush1.bf16.msra.mxu0 %v2089
    %3023 = vmatprep.subr.bf16.mxu0 %v2093
    %3024 = vmatpush1.bf16.msra.mxu0 %v2092
    %3025 = vmatprep.subr.bf16.mxu0 %v2096
    %3026 = vmatpush1.bf16.msra.mxu0 %v2095
    %3027 = vmatprep.subr.bf16.mxu0 %v2099
    %3028 = vmatpush1.bf16.msra.mxu0 %v2098
    %3029 = vmatprep.subr.bf16.mxu0 %v2102
    %3030 = vmatpush1.bf16.msra.mxu0 %v2101
    %3031 = vmatprep.subr.bf16.mxu0 %v2105
    %3032 = vmatpush1.bf16.msra.mxu0 %v2104
    %3033 = vmatprep.subr.bf16.mxu0 %v2108
    %3034 = vmatpush1.bf16.msra.mxu0 %v2107
    %3035 = vmatprep.subr.bf16.mxu0 %v2111
    %3036 = vmatpush1.bf16.msra.mxu0 %v2110
    %3037 = vmatprep.subr.bf16.mxu0 %v2114
    %3038 = vmatpush1.bf16.msra.mxu0 %v2113
    %3039 = vmatprep.subr.bf16.mxu0 %v2117
    %3040 = vmatpush1.bf16.msra.mxu0 %v2116
    %3041 = vmatprep.subr.bf16.mxu0 %v2120
    %3042 = vmatpush1.bf16.msra.mxu0 %v2119
    %3043 = vmatprep.subr.bf16.mxu0 %v2123
    %3044 = vmatpush1.bf16.msra.mxu0 %v2122
    %3045 = vmatprep.subr.bf16.mxu0 %v2126
    %3046 = vmatpush1.bf16.msra.mxu0 %v2125
    %3047 = vmatprep.subr.bf16.mxu0 %v2129
    %3048 = vmatpush1.bf16.msra.mxu0 %v2128
    %3049 = vmatprep.mubr.bf16.mxu0 %v2634
    %3050 = vmatmul.mubr.bf16.gmra.mrb[0].mxu0 %v2633
    %v3051 = vpop.f32.mrb[0].mxu0
    %v3052 = vadd.f32 %v3011, %v3051
    %v3053 = vpop.f32.mrb[0].mxu0
    %v3054 = vadd.f32 %v3013, %v3053
    %v3055 = vpop.f32.mrb[0].mxu0
    %v3056 = vpop.f32.mrb[0].mxu0
    %3057 = vdwg.mxu0
    %3058 = vmatprep.subr.bf16.mxu0 %v2132
    %3059 = vmatpush1.bf16.msra.mxu0 %v2131
    %3060 = vmatprep.subr.bf16.mxu0 %v2135
    %3061 = vmatpush1.bf16.msra.mxu0 %v2134
    %3062 = vmatprep.subr.bf16.mxu0 %v2138
    %3063 = vmatpush1.bf16.msra.mxu0 %v2137
    %3064 = vmatprep.subr.bf16.mxu0 %v2141
    %3065 = vmatpush1.bf16.msra.mxu0 %v2140
    %3066 = vmatprep.subr.bf16.mxu0 %v2144
    %3067 = vmatpush1.bf16.msra.mxu0 %v2143
    %3068 = vmatprep.subr.bf16.mxu0 %v2147
    %3069 = vmatpush1.bf16.msra.mxu0 %v2146
    %3070 = vmatprep.subr.bf16.mxu0 %v2150
    %3071 = vmatpush1.bf16.msra.mxu0 %v2149
    %3072 = vmatprep.subr.bf16.mxu0 %v2153
    %3073 = vmatpush1.bf16.msra.mxu0 %v2152
    %3074 = vmatprep.subr.bf16.mxu0 %v2156
    %3075 = vmatpush1.bf16.msra.mxu0 %v2155
    %3076 = vmatprep.subr.bf16.mxu0 %v2159
    %3077 = vmatpush1.bf16.msra.mxu0 %v2158
    %3078 = vmatprep.subr.bf16.mxu0 %v2162
    %3079 = vmatpush1.bf16.msra.mxu0 %v2161
    %3080 = vmatprep.subr.bf16.mxu0 %v2165
    %3081 = vmatpush1.bf16.msra.mxu0 %v2164
    %3082 = vmatprep.subr.bf16.mxu0 %v2168
    %3083 = vmatpush1.bf16.msra.mxu0 %v2167
    %3084 = vmatprep.subr.bf16.mxu0 %v2171
    %3085 = vmatpush1.bf16.msra.mxu0 %v2170
    %3086 = vmatprep.subr.bf16.mxu0 %v2174
    %3087 = vmatpush1.bf16.msra.mxu0 %v2173
    %3088 = vmatprep.subr.bf16.mxu0 %v2177
    %3089 = vmatpush1.bf16.msra.mxu0 %v2176
    %3090 = vmatprep.mubr.bf16.mxu0 %v2636
    %3091 = vmatmul.mubr.bf16.gmra.mrb[0].mxu0 %v2635
    %v3092 = vpop.f32.mrb[0].mxu0
    %v3093 = vadd.f32 %v3052, %v3092
    %v3094 = vpop.f32.mrb[0].mxu0
    %v3095 = vadd.f32 %v3054, %v3094
    %v3096 = vpop.f32.mrb[0].mxu0
    %v3097 = vpop.f32.mrb[0].mxu0
    %3098 = vdwg.mxu0
    %3099 = vmatprep.subr.bf16.mxu0 %v2180
    %3100 = vmatpush1.bf16.msra.mxu0 %v2179
    %3101 = vmatprep.subr.bf16.mxu0 %v2183
    %3102 = vmatpush1.bf16.msra.mxu0 %v2182
    %3103 = vmatprep.subr.bf16.mxu0 %v2186
    %3104 = vmatpush1.bf16.msra.mxu0 %v2185
    %3105 = vmatprep.subr.bf16.mxu0 %v2189
    %3106 = vmatpush1.bf16.msra.mxu0 %v2188
    %3107 = vmatprep.subr.bf16.mxu0 %v2192
    %3108 = vmatpush1.bf16.msra.mxu0 %v2191
    %3109 = vmatprep.subr.bf16.mxu0 %v2195
    %3110 = vmatpush1.bf16.msra.mxu0 %v2194
    %3111 = vmatprep.subr.bf16.mxu0 %v2198
    %3112 = vmatpush1.bf16.msra.mxu0 %v2197
    %3113 = vmatprep.subr.bf16.mxu0 %v2201
    %3114 = vmatpush1.bf16.msra.mxu0 %v2200
    %3115 = vmatprep.subr.bf16.mxu0 %v2204
    %3116 = vmatpush1.bf16.msra.mxu0 %v2203
    %3117 = vmatprep.subr.bf16.mxu0 %v2207
    %3118 = vmatpush1.bf16.msra.mxu0 %v2206
    %3119 = vmatprep.subr.bf16.mxu0 %v2210
    %3120 = vmatpush1.bf16.msra.mxu0 %v2209
    %3121 = vmatprep.subr.bf16.mxu0 %v2213
    %3122 = vmatpush1.bf16.msra.mxu0 %v2212
    %3123 = vmatprep.subr.bf16.mxu0 %v2216
    %3124 = vmatpush1.bf16.msra.mxu0 %v2215
    %3125 = vmatprep.subr.bf16.mxu0 %v2219
    %3126 = vmatpush1.bf16.msra.mxu0 %v2218
    %3127 = vmatprep.subr.bf16.mxu0 %v2222
    %3128 = vmatpush1.bf16.msra.mxu0 %v2221
    %3129 = vmatprep.subr.bf16.mxu0 %v2225
    %3130 = vmatpush1.bf16.msra.mxu0 %v2224
    %3131 = vmatprep.mubr.bf16.mxu0 %v2638
    %3132 = vmatmul.mubr.bf16.gmra.mrb[0].mxu0 %v2637
    %v3133 = vpop.f32.mrb[0].mxu0
    %v3134 = vadd.f32 %v3093, %v3133
    %v3135 = vpop.f32.mrb[0].mxu0
    %v3136 = vadd.f32 %v3095, %v3135
    %v3137 = vpop.f32.mrb[0].mxu0
    %v3138 = vpop.f32.mrb[0].mxu0
    %3139 = vdwg.mxu0
    %3140 = vmatprep.subr.bf16.mxu0 %v2228
    %3141 = vmatpush1.bf16.msra.mxu0 %v2227
    %3142 = vmatprep.subr.bf16.mxu0 %v2231
    %3143 = vmatpush1.bf16.msra.mxu0 %v2230
    %3144 = vmatprep.subr.bf16.mxu0 %v2234
    %3145 = vmatpush1.bf16.msra.mxu0 %v2233
    %3146 = vmatprep.subr.bf16.mxu0 %v2237
    %3147 = vmatpush1.bf16.msra.mxu0 %v2236
    %3148 = vmatprep.subr.bf16.mxu0 %v2240
    %3149 = vmatpush1.bf16.msra.mxu0 %v2239
    %3150 = vmatprep.subr.bf16.mxu0 %v2243
    %3151 = vmatpush1.bf16.msra.mxu0 %v2242
    %3152 = vmatprep.subr.bf16.mxu0 %v2246
    %3153 = vmatpush1.bf16.msra.mxu0 %v2245
    %3154 = vmatprep.subr.bf16.mxu0 %v2249
    %3155 = vmatpush1.bf16.msra.mxu0 %v2248
    %3156 = vmatprep.subr.bf16.mxu0 %v2252
    %3157 = vmatpush1.bf16.msra.mxu0 %v2251
    %3158 = vmatprep.subr.bf16.mxu0 %v2255
    %3159 = vmatpush1.bf16.msra.mxu0 %v2254
    %3160 = vmatprep.subr.bf16.mxu0 %v2258
    %3161 = vmatpush1.bf16.msra.mxu0 %v2257
    %3162 = vmatprep.subr.bf16.mxu0 %v2261
    %3163 = vmatpush1.bf16.msra.mxu0 %v2260
    %3164 = vmatprep.subr.bf16.mxu0 %v2264
    %3165 = vmatpush1.bf16.msra.mxu0 %v2263
    %3166 = vmatprep.subr.bf16.mxu0 %v2267
    %3167 = vmatpush1.bf16.msra.mxu0 %v2266
    %3168 = vmatprep.subr.bf16.mxu0 %v2270
    %3169 = vmatpush1.bf16.msra.mxu0 %v2269
    %3170 = vmatprep.subr.bf16.mxu0 %v2273
    %3171 = vmatpush1.bf16.msra.mxu0 %v2272
    %3172 = vmatprep.mubr.bf16.mxu0 %v2640
    %3173 = vmatmul.mubr.bf16.gmra.mrb[0].mxu0 %v2639
    %v3174 = vpop.f32.mrb[0].mxu0
    %v3175 = vadd.f32 %v3134, %v3174
    %v3176 = vpop.f32.mrb[0].mxu0
    %v3177 = vadd.f32 %v3136, %v3176
    %v3178 = vpop.f32.mrb[0].mxu0
    %v3179 = vpop.f32.mrb[0].mxu0
    %3180 = vdwg.mxu0
    %3181 = vmatprep.subr.bf16.mxu0 %v2276
    %3182 = vmatpush1.bf16.msra.mxu0 %v2275
    %3183 = vmatprep.subr.bf16.mxu0 %v2279
    %3184 = vmatpush1.bf16.msra.mxu0 %v2278
    %3185 = vmatprep.subr.bf16.mxu0 %v2282
    %3186 = vmatpush1.bf16.msra.mxu0 %v2281
    %3187 = vmatprep.subr.bf16.mxu0 %v2285
    %3188 = vmatpush1.bf16.msra.mxu0 %v2284
    %3189 = vmatprep.subr.bf16.mxu0 %v2288
    %3190 = vmatpush1.bf16.msra.mxu0 %v2287
    %3191 = vmatprep.subr.bf16.mxu0 %v2291
    %3192 = vmatpush1.bf16.msra.mxu0 %v2290
    %3193 = vmatprep.subr.bf16.mxu0 %v2294
    %3194 = vmatpush1.bf16.msra.mxu0 %v2293
    %3195 = vmatprep.subr.bf16.mxu0 %v2297
    %3196 = vmatpush1.bf16.msra.mxu0 %v2296
    %3197 = vmatprep.subr.bf16.mxu0 %v2300
    %3198 = vmatpush1.bf16.msra.mxu0 %v2299
    %3199 = vmatprep.subr.bf16.mxu0 %v2303
    %3200 = vmatpush1.bf16.msra.mxu0 %v2302
    %3201 = vmatprep.subr.bf16.mxu0 %v2306
    %3202 = vmatpush1.bf16.msra.mxu0 %v2305
    %3203 = vmatprep.subr.bf16.mxu0 %v2309
    %3204 = vmatpush1.bf16.msra.mxu0 %v2308
    %3205 = vmatprep.subr.bf16.mxu0 %v2312
    %3206 = vmatpush1.bf16.msra.mxu0 %v2311
    %3207 = vmatprep.subr.bf16.mxu0 %v2315
    %3208 = vmatpush1.bf16.msra.mxu0 %v2314
    %3209 = vmatprep.subr.bf16.mxu0 %v2318
    %3210 = vmatpush1.bf16.msra.mxu0 %v2317
    %3211 = vmatprep.subr.bf16.mxu0 %v2321
    %3212 = vmatpush1.bf16.msra.mxu0 %v2320
    %3213 = vmatprep.mubr.bf16.mxu0 %v2642
    %3214 = vmatmul.mubr.bf16.gmra.mrb[0].mxu0 %v2641
    %v3215 = vpop.f32.mrb[0].mxu0
    %v3216 = vadd.f32 %v3175, %v3215
    %v3217 = vpop.f32.mrb[0].mxu0
    %v3218 = vadd.f32 %v3177, %v3217
    %v3219 = vpop.f32.mrb[0].mxu0
    %v3220 = vpop.f32.mrb[0].mxu0
    %3221 = vdwg.mxu0
    %3222 = vmatprep.subr.bf16.mxu0 %v2324
    %3223 = vmatpush1.bf16.msra.mxu0 %v2323
    %3224 = vmatprep.subr.bf16.mxu0 %v2327
    %3225 = vmatpush1.bf16.msra.mxu0 %v2326
    %3226 = vmatprep.subr.bf16.mxu0 %v2330
    %3227 = vmatpush1.bf16.msra.mxu0 %v2329
    %3228 = vmatprep.subr.bf16.mxu0 %v2333
    %3229 = vmatpush1.bf16.msra.mxu0 %v2332
    %3230 = vmatprep.subr.bf16.mxu0 %v2336
    %3231 = vmatpush1.bf16.msra.mxu0 %v2335
    %3232 = vmatprep.subr.bf16.mxu0 %v2339
    %3233 = vmatpush1.bf16.msra.mxu0 %v2338
    %3234 = vmatprep.subr.bf16.mxu0 %v2342
    %3235 = vmatpush1.bf16.msra.mxu0 %v2341
    %3236 = vmatprep.subr.bf16.mxu0 %v2345
    %3237 = vmatpush1.bf16.msra.mxu0 %v2344
    %3238 = vmatprep.subr.bf16.mxu0 %v2348
    %3239 = vmatpush1.bf16.msra.mxu0 %v2347
    %3240 = vmatprep.subr.bf16.mxu0 %v2351
    %3241 = vmatpush1.bf16.msra.mxu0 %v2350
    %3242 = vmatprep.subr.bf16.mxu0 %v2354
    %3243 = vmatpush1.bf16.msra.mxu0 %v2353
    %3244 = vmatprep.subr.bf16.mxu0 %v2357
    %3245 = vmatpush1.bf16.msra.mxu0 %v2356
    %3246 = vmatprep.subr.bf16.mxu0 %v2360
    %3247 = vmatpush1.bf16.msra.mxu0 %v2359
    %3248 = vmatprep.subr.bf16.mxu0 %v2363
    %3249 = vmatpush1.bf16.msra.mxu0 %v2362
    %3250 = vmatprep.subr.bf16.mxu0 %v2366
    %3251 = vmatpush1.bf16.msra.mxu0 %v2365
    %3252 = vmatprep.subr.bf16.mxu0 %v2369
    %3253 = vmatpush1.bf16.msra.mxu0 %v2368
    %3254 = vmatprep.mubr.bf16.mxu0 %v2644
    %3255 = vmatmul.mubr.bf16.gmra.mrb[0].mxu0 %v2643
    %v3256 = vpop.f32.mrb[0].mxu0
    %v3257 = vadd.f32 %v3216, %v3256
    %v3258 = vpop.f32.mrb[0].mxu0
    %v3259 = vadd.f32 %v3218, %v3258
    %v3260 = vpop.f32.mrb[0].mxu0
    %v3261 = vpop.f32.mrb[0].mxu0
    %3262 = vdwg.mxu0
    %3263 = vmatprep.subr.bf16.mxu0 %v2372
    %3264 = vmatpush1.bf16.msra.mxu0 %v2371
    %3265 = vmatprep.subr.bf16.mxu0 %v2375
    %3266 = vmatpush1.bf16.msra.mxu0 %v2374
    %3267 = vmatprep.subr.bf16.mxu0 %v2378
    %3268 = vmatpush1.bf16.msra.mxu0 %v2377
    %3269 = vmatprep.subr.bf16.mxu0 %v2381
    %3270 = vmatpush1.bf16.msra.mxu0 %v2380
    %3271 = vmatprep.subr.bf16.mxu0 %v2384
    %3272 = vmatpush1.bf16.msra.mxu0 %v2383
    %3273 = vmatprep.subr.bf16.mxu0 %v2387
    %3274 = vmatpush1.bf16.msra.mxu0 %v2386
    %3275 = vmatprep.subr.bf16.mxu0 %v2390
    %3276 = vmatpush1.bf16.msra.mxu0 %v2389
    %3277 = vmatprep.subr.bf16.mxu0 %v2393
    %3278 = vmatpush1.bf16.msra.mxu0 %v2392
    %3279 = vmatprep.subr.bf16.mxu0 %v2396
    %3280 = vmatpush1.bf16.msra.mxu0 %v2395
    %3281 = vmatprep.subr.bf16.mxu0 %v2399
    %3282 = vmatpush1.bf16.msra.mxu0 %v2398
    %3283 = vmatprep.subr.bf16.mxu0 %v2402
    %3284 = vmatpush1.bf16.msra.mxu0 %v2401
    %3285 = vmatprep.subr.bf16.mxu0 %v2405
    %3286 = vmatpush1.bf16.msra.mxu0 %v2404
    %3287 = vmatprep.subr.bf16.mxu0 %v2408
    %3288 = vmatpush1.bf16.msra.mxu0 %v2407
    %3289 = vmatprep.subr.bf16.mxu0 %v2411
    %3290 = vmatpush1.bf16.msra.mxu0 %v2410
    %3291 = vmatprep.subr.bf16.mxu0 %v2414
    %3292 = vmatpush1.bf16.msra.mxu0 %v2413
    %3293 = vmatprep.subr.bf16.mxu0 %v2417
    %3294 = vmatpush1.bf16.msra.mxu0 %v2416
    %3295 = vmatprep.mubr.bf16.mxu0 %v2646
    %3296 = vmatmul.mubr.bf16.gmra.mrb[0].mxu0 %v2645
    %v3297 = vpop.f32.mrb[0].mxu0
    %v3298 = vadd.f32 %v3257, %v3297
    %v3299 = vpop.f32.mrb[0].mxu0
    %v3300 = vadd.f32 %v3259, %v3299
    %v3301 = vpop.f32.mrb[0].mxu0
    %v3302 = vpop.f32.mrb[0].mxu0
    %3303 = vdwg.mxu0
    %3304 = vmatprep.subr.bf16.mxu0 %v2420
    %3305 = vmatpush1.bf16.msra.mxu0 %v2419
    %3306 = vmatprep.subr.bf16.mxu0 %v2423
    %3307 = vmatpush1.bf16.msra.mxu0 %v2422
    %3308 = vmatprep.subr.bf16.mxu0 %v2426
    %3309 = vmatpush1.bf16.msra.mxu0 %v2425
    %3310 = vmatprep.subr.bf16.mxu0 %v2429
    %3311 = vmatpush1.bf16.msra.mxu0 %v2428
    %3312 = vmatprep.subr.bf16.mxu0 %v2432
    %3313 = vmatpush1.bf16.msra.mxu0 %v2431
    %3314 = vmatprep.subr.bf16.mxu0 %v2435
    %3315 = vmatpush1.bf16.msra.mxu0 %v2434
    %3316 = vmatprep.subr.bf16.mxu0 %v2438
    %3317 = vmatpush1.bf16.msra.mxu0 %v2437
    %3318 = vmatprep.subr.bf16.mxu0 %v2441
    %3319 = vmatpush1.bf16.msra.mxu0 %v2440
    %3320 = vmatprep.subr.bf16.mxu0 %v2444
    %3321 = vmatpush1.bf16.msra.mxu0 %v2443
    %3322 = vmatprep.subr.bf16.mxu0 %v2447
    %3323 = vmatpush1.bf16.msra.mxu0 %v2446
    %3324 = vmatprep.subr.bf16.mxu0 %v2450
    %3325 = vmatpush1.bf16.msra.mxu0 %v2449
    %3326 = vmatprep.subr.bf16.mxu0 %v2453
    %3327 = vmatpush1.bf16.msra.mxu0 %v2452
    %3328 = vmatprep.subr.bf16.mxu0 %v2456
    %3329 = vmatpush1.bf16.msra.mxu0 %v2455
    %3330 = vmatprep.subr.bf16.mxu0 %v2459
    %3331 = vmatpush1.bf16.msra.mxu0 %v2458
    %3332 = vmatprep.subr.bf16.mxu0 %v2462
    %3333 = vmatpush1.bf16.msra.mxu0 %v2461
    %3334 = vmatprep.subr.bf16.mxu0 %v2465
    %3335 = vmatpush1.bf16.msra.mxu0 %v2464
    %3336 = vmatprep.mubr.bf16.mxu0 %v2648
    %3337 = vmatmul.mubr.bf16.gmra.mrb[0].mxu0 %v2647
    %v3338 = vpop.f32.mrb[0].mxu0
    %v3339 = vadd.f32 %v3298, %v3338
    %v3340 = vpop.f32.mrb[0].mxu0
    %v3341 = vadd.f32 %v3300, %v3340
    %v3342 = vpop.f32.mrb[0].mxu0
    %v3343 = vpop.f32.mrb[0].mxu0
    %3344 = vdwg.mxu0
    %3345 = vmatprep.subr.bf16.mxu0 %v2468
    %3346 = vmatpush1.bf16.msra.mxu0 %v2467
    %3347 = vmatprep.subr.bf16.mxu0 %v2471
    %3348 = vmatpush1.bf16.msra.mxu0 %v2470
    %3349 = vmatprep.subr.bf16.mxu0 %v2474
    %3350 = vmatpush1.bf16.msra.mxu0 %v2473
    %3351 = vmatprep.subr.bf16.mxu0 %v2477
    %3352 = vmatpush1.bf16.msra.mxu0 %v2476
    %3353 = vmatprep.subr.bf16.mxu0 %v2480
    %3354 = vmatpush1.bf16.msra.mxu0 %v2479
    %3355 = vmatprep.subr.bf16.mxu0 %v2483
    %3356 = vmatpush1.bf16.msra.mxu0 %v2482
    %3357 = vmatprep.subr.bf16.mxu0 %v2486
    %3358 = vmatpush1.bf16.msra.mxu0 %v2485
    %3359 = vmatprep.subr.bf16.mxu0 %v2489
    %3360 = vmatpush1.bf16.msra.mxu0 %v2488
    %3361 = vmatprep.subr.bf16.mxu0 %v2492
    %3362 = vmatpush1.bf16.msra.mxu0 %v2491
    %3363 = vmatprep.subr.bf16.mxu0 %v2495
    %3364 = vmatpush1.bf16.msra.mxu0 %v2494
    %3365 = vmatprep.subr.bf16.mxu0 %v2498
    %3366 = vmatpush1.bf16.msra.mxu0 %v2497
    %3367 = vmatprep.subr.bf16.mxu0 %v2501
    %3368 = vmatpush1.bf16.msra.mxu0 %v2500
    %3369 = vmatprep.subr.bf16.mxu0 %v2504
    %3370 = vmatpush1.bf16.msra.mxu0 %v2503
    %3371 = vmatprep.subr.bf16.mxu0 %v2507
    %3372 = vmatpush1.bf16.msra.mxu0 %v2506
    %3373 = vmatprep.subr.bf16.mxu0 %v2510
    %3374 = vmatpush1.bf16.msra.mxu0 %v2509
    %3375 = vmatprep.subr.bf16.mxu0 %v2513
    %3376 = vmatpush1.bf16.msra.mxu0 %v2512
    %3377 = vmatprep.mubr.bf16.mxu0 %v2650
    %3378 = vmatmul.mubr.bf16.gmra.mrb[0].mxu0 %v2649
    %v3379 = vpop.f32.mrb[0].mxu0
    %v3380 = vadd.f32 %v3339, %v3379
    %v3381 = vpop.f32.mrb[0].mxu0
    %v3382 = vadd.f32 %v3341, %v3381
    %v3383 = vpop.f32.mrb[0].mxu0
    %v3384 = vpop.f32.mrb[0].mxu0
    %3385 = vdwg.mxu0
    %3386 = vmatprep.subr.bf16.mxu0 %v2516
    %3387 = vmatpush1.bf16.msra.mxu0 %v2515
    %3388 = vmatprep.subr.bf16.mxu0 %v2519
    %3389 = vmatpush1.bf16.msra.mxu0 %v2518
    %3390 = vmatprep.subr.bf16.mxu0 %v2522
    %3391 = vmatpush1.bf16.msra.mxu0 %v2521
    %3392 = vmatprep.subr.bf16.mxu0 %v2525
    %3393 = vmatpush1.bf16.msra.mxu0 %v2524
    %3394 = vmatprep.subr.bf16.mxu0 %v2528
    %3395 = vmatpush1.bf16.msra.mxu0 %v2527
    %3396 = vmatprep.subr.bf16.mxu0 %v2531
    %3397 = vmatpush1.bf16.msra.mxu0 %v2530
    %3398 = vmatprep.subr.bf16.mxu0 %v2534
    %3399 = vmatpush1.bf16.msra.mxu0 %v2533
    %3400 = vmatprep.subr.bf16.mxu0 %v2537
    %3401 = vmatpush1.bf16.msra.mxu0 %v2536
    %3402 = vmatprep.subr.bf16.mxu0 %v2540
    %3403 = vmatpush1.bf16.msra.mxu0 %v2539
    %3404 = vmatprep.subr.bf16.mxu0 %v2543
    %3405 = vmatpush1.bf16.msra.mxu0 %v2542
    %3406 = vmatprep.subr.bf16.mxu0 %v2546
    %3407 = vmatpush1.bf16.msra.mxu0 %v2545
    %3408 = vmatprep.subr.bf16.mxu0 %v2549
    %3409 = vmatpush1.bf16.msra.mxu0 %v2548
    %3410 = vmatprep.subr.bf16.mxu0 %v2552
    %3411 = vmatpush1.bf16.msra.mxu0 %v2551
    %3412 = vmatprep.subr.bf16.mxu0 %v2555
    %3413 = vmatpush1.bf16.msra.mxu0 %v2554
    %3414 = vmatprep.subr.bf16.mxu0 %v2558
    %3415 = vmatpush1.bf16.msra.mxu0 %v2557
    %3416 = vmatprep.subr.bf16.mxu0 %v2561
    %3417 = vmatpush1.bf16.msra.mxu0 %v2560
    %3418 = vmatprep.mubr.bf16.mxu0 %v2652
    %3419 = vmatmul.mubr.bf16.gmra.mrb[0].mxu0 %v2651
    %v3420 = vpop.f32.mrb[0].mxu0
    %v3421 = vadd.f32 %v3380, %v3420
    %v3422 = vpop.f32.mrb[0].mxu0
    %v3423 = vadd.f32 %v3382, %v3422
    %v3424 = vpop.f32.mrb[0].mxu0
    %v3425 = vpop.f32.mrb[0].mxu0
    %3426 = vdwg.mxu0
    %3427 = vmatprep.subr.bf16.mxu0 0
    %3428 = vmatpush1.bf16.msra.mxu0 %v1701
    %3429 = vmatprep.subr.bf16.mxu0 0
    %3430 = vmatpush1.bf16.msra.mxu0 %v1704
    %3431 = vmatprep.subr.bf16.mxu0 0
    %3432 = vmatpush1.bf16.msra.mxu0 %v1707
    %3433 = vmatprep.subr.bf16.mxu0 0
    %3434 = vmatpush1.bf16.msra.mxu0 %v1710
    %3435 = vmatprep.subr.bf16.mxu0 0
    %3436 = vmatpush1.bf16.msra.mxu0 %v1713
    %3437 = vmatprep.subr.bf16.mxu0 0
    %3438 = vmatpush1.bf16.msra.mxu0 %v1716
    %3439 = vmatprep.subr.bf16.mxu0 0
    %3440 = vmatpush1.bf16.msra.mxu0 %v1719
    %3441 = vmatprep.subr.bf16.mxu0 0
    %3442 = vmatpush1.bf16.msra.mxu0 %v1722
    %3443 = vmatprep.subr.bf16.mxu0 0
    %3444 = vmatpush1.bf16.msra.mxu0 %v1725
    %3445 = vmatprep.subr.bf16.mxu0 0
    %3446 = vmatpush1.bf16.msra.mxu0 %v1728
    %3447 = vmatprep.subr.bf16.mxu0 0
    %3448 = vmatpush1.bf16.msra.mxu0 %v1731
    %3449 = vmatprep.subr.bf16.mxu0 0
    %3450 = vmatpush1.bf16.msra.mxu0 %v1734
    %3451 = vmatprep.subr.bf16.mxu0 0
    %3452 = vmatpush1.bf16.msra.mxu0 %v1737
    %3453 = vmatprep.subr.bf16.mxu0 0
    %3454 = vmatpush1.bf16.msra.mxu0 %v1740
    %3455 = vmatprep.subr.bf16.mxu0 0
    %3456 = vmatpush1.bf16.msra.mxu0 %v1743
    %3457 = vmatprep.subr.bf16.mxu0 0
    %3458 = vmatpush1.bf16.msra.mxu0 %v1746
    %3459 = vmatprep.mubr.bf16.mxu0 %v2618
    %3460 = vmatmul.mubr.bf16.gmra.mrb[0].mxu0 %v2617
    %v3461 = vpop.f32.mrb[0].mxu0
    %v3462 = vadd.f32 0.0, %v3461
    %v3463 = vpop.f32.mrb[0].mxu0
    %v3464 = vpop.f32.mrb[0].mxu0
    %v3465 = vpop.f32.mrb[0].mxu0
    %3466 = vdwg.mxu0
    %3467 = vmatprep.subr.bf16.mxu0 0
    %3468 = vmatpush1.bf16.msra.mxu0 %v1749
    %3469 = vmatprep.subr.bf16.mxu0 0
    %3470 = vmatpush1.bf16.msra.mxu0 %v1752
    %3471 = vmatprep.subr.bf16.mxu0 0
    %3472 = vmatpush1.bf16.msra.mxu0 %v1755
    %3473 = vmatprep.subr.bf16.mxu0 0
    %3474 = vmatpush1.bf16.msra.mxu0 %v1758
    %3475 = vmatprep.subr.bf16.mxu0 0
    %3476 = vmatpush1.bf16.msra.mxu0 %v1761
    %3477 = vmatprep.subr.bf16.mxu0 0
    %3478 = vmatpush1.bf16.msra.mxu0 %v1764
    %3479 = vmatprep.subr.bf16.mxu0 0
    %3480 = vmatpush1.bf16.msra.mxu0 %v1767
    %3481 = vmatprep.subr.bf16.mxu0 0
    %3482 = vmatpush1.bf16.msra.mxu0 %v1770
    %3483 = vmatprep.subr.bf16.mxu0 0
    %3484 = vmatpush1.bf16.msra.mxu0 %v1773
    %3485 = vmatprep.subr.bf16.mxu0 0
    %3486 = vmatpush1.bf16.msra.mxu0 %v1776
    %3487 = vmatprep.subr.bf16.mxu0 0
    %3488 = vmatpush1.bf16.msra.mxu0 %v1779
    %3489 = vmatprep.subr.bf16.mxu0 0
    %3490 = vmatpush1.bf16.msra.mxu0 %v1782
    %3491 = vmatprep.subr.bf16.mxu0 0
    %3492 = vmatpush1.bf16.msra.mxu0 %v1785
    %3493 = vmatprep.subr.bf16.mxu0 0
    %3494 = vmatpush1.bf16.msra.mxu0 %v1788
    %3495 = vmatprep.subr.bf16.mxu0 0
    %3496 = vmatpush1.bf16.msra.mxu0 %v1791
    %3497 = vmatprep.subr.bf16.mxu0 0
    %3498 = vmatpush1.bf16.msra.mxu0 %v1794
    %3499 = vmatprep.mubr.bf16.mxu0 %v2620
    %3500 = vmatmul.mubr.bf16.gmra.mrb[0].mxu0 %v2619
    %v3501 = vpop.f32.mrb[0].mxu0
    %v3502 = vadd.f32 %v3462, %v3501
    %v3503 = vpop.f32.mrb[0].mxu0
    %v3504 = vpop.f32.mrb[0].mxu0
    %v3505 = vpop.f32.mrb[0].mxu0
    %3506 = vdwg.mxu0
    %3507 = vmatprep.subr.bf16.mxu0 0
    %3508 = vmatpush1.bf16.msra.mxu0 %v1797
    %3509 = vmatprep.subr.bf16.mxu0 0
    %3510 = vmatpush1.bf16.msra.mxu0 %v1800
    %3511 = vmatprep.subr.bf16.mxu0 0
    %3512 = vmatpush1.bf16.msra.mxu0 %v1803
    %3513 = vmatprep.subr.bf16.mxu0 0
    %3514 = vmatpush1.bf16.msra.mxu0 %v1806
    %3515 = vmatprep.subr.bf16.mxu0 0
    %3516 = vmatpush1.bf16.msra.mxu0 %v1809
    %3517 = vmatprep.subr.bf16.mxu0 0
    %3518 = vmatpush1.bf16.msra.mxu0 %v1812
    %3519 = vmatprep.subr.bf16.mxu0 0
    %3520 = vmatpush1.bf16.msra.mxu0 %v1815
    %3521 = vmatprep.subr.bf16.mxu0 0
    %3522 = vmatpush1.bf16.msra.mxu0 %v1818
    %3523 = vmatprep.subr.bf16.mxu0 0
    %3524 = vmatpush1.bf16.msra.mxu0 %v1821
    %3525 = vmatprep.subr.bf16.mxu0 0
    %3526 = vmatpush1.bf16.msra.mxu0 %v1824
    %3527 = vmatprep.subr.bf16.mxu0 0
    %3528 = vmatpush1.bf16.msra.mxu0 %v1827
    %3529 = vmatprep.subr.bf16.mxu0 0
    %3530 = vmatpush1.bf16.msra.mxu0 %v1830
    %3531 = vmatprep.subr.bf16.mxu0 0
    %3532 = vmatpush1.bf16.msra.mxu0 %v1833
    %3533 = vmatprep.subr.bf16.mxu0 0
    %3534 = vmatpush1.bf16.msra.mxu0 %v1836
    %3535 = vmatprep.subr.bf16.mxu0 0
    %3536 = vmatpush1.bf16.msra.mxu0 %v1839
    %3537 = vmatprep.subr.bf16.mxu0 0
    %3538 = vmatpush1.bf16.msra.mxu0 %v1842
    %3539 = vmatprep.mubr.bf16.mxu0 %v2622
    %3540 = vmatmul.mubr.bf16.gmra.mrb[0].mxu0 %v2621
    %v3541 = vpop.f32.mrb[0].mxu0
    %v3542 = vadd.f32 %v3502, %v3541
    %v3543 = vpop.f32.mrb[0].mxu0
    %v3544 = vpop.f32.mrb[0].mxu0
    %v3545 = vpop.f32.mrb[0].mxu0
    %3546 = vdwg.mxu0
    %3547 = vmatprep.subr.bf16.mxu0 0
    %3548 = vmatpush1.bf16.msra.mxu0 %v1845
    %3549 = vmatprep.subr.bf16.mxu0 0
    %3550 = vmatpush1.bf16.msra.mxu0 %v1848
    %3551 = vmatprep.subr.bf16.mxu0 0
    %3552 = vmatpush1.bf16.msra.mxu0 %v1851
    %3553 = vmatprep.subr.bf16.mxu0 0
    %3554 = vmatpush1.bf16.msra.mxu0 %v1854
    %3555 = vmatprep.subr.bf16.mxu0 0
    %3556 = vmatpush1.bf16.msra.mxu0 %v1857
    %3557 = vmatprep.subr.bf16.mxu0 0
    %3558 = vmatpush1.bf16.msra.mxu0 %v1860
    %3559 = vmatprep.subr.bf16.mxu0 0
    %3560 = vmatpush1.bf16.msra.mxu0 %v1863
    %3561 = vmatprep.subr.bf16.mxu0 0
    %3562 = vmatpush1.bf16.msra.mxu0 %v1866
    %3563 = vmatprep.subr.bf16.mxu0 0
    %3564 = vmatpush1.bf16.msra.mxu0 %v1869
    %3565 = vmatprep.subr.bf16.mxu0 0
    %3566 = vmatpush1.bf16.msra.mxu0 %v1872
    %3567 = vmatprep.subr.bf16.mxu0 0
    %3568 = vmatpush1.bf16.msra.mxu0 %v1875
    %3569 = vmatprep.subr.bf16.mxu0 0
    %3570 = vmatpush1.bf16.msra.mxu0 %v1878
    %3571 = vmatprep.subr.bf16.mxu0 0
    %3572 = vmatpush1.bf16.msra.mxu0 %v1881
    %3573 = vmatprep.subr.bf16.mxu0 0
    %3574 = vmatpush1.bf16.msra.mxu0 %v1884
    %3575 = vmatprep.subr.bf16.mxu0 0
    %3576 = vmatpush1.bf16.msra.mxu0 %v1887
    %3577 = vmatprep.subr.bf16.mxu0 0
    %3578 = vmatpush1.bf16.msra.mxu0 %v1890
    %3579 = vmatprep.mubr.bf16.mxu0 %v2624
    %3580 = vmatmul.mubr.bf16.gmra.mrb[0].mxu0 %v2623
    %v3581 = vpop.f32.mrb[0].mxu0
    %v3582 = vadd.f32 %v3542, %v3581
    %v3583 = vpop.f32.mrb[0].mxu0
    %v3584 = vpop.f32.mrb[0].mxu0
    %v3585 = vpop.f32.mrb[0].mxu0
    %3586 = vdwg.mxu0
    %3587 = vmatprep.subr.bf16.mxu0 0
    %3588 = vmatpush1.bf16.msra.mxu0 %v1893
    %3589 = vmatprep.subr.bf16.mxu0 0
    %3590 = vmatpush1.bf16.msra.mxu0 %v1896
    %3591 = vmatprep.subr.bf16.mxu0 0
    %3592 = vmatpush1.bf16.msra.mxu0 %v1899
    %3593 = vmatprep.subr.bf16.mxu0 0
    %3594 = vmatpush1.bf16.msra.mxu0 %v1902
    %3595 = vmatprep.subr.bf16.mxu0 0
    %3596 = vmatpush1.bf16.msra.mxu0 %v1905
    %3597 = vmatprep.subr.bf16.mxu0 0
    %3598 = vmatpush1.bf16.msra.mxu0 %v1908
    %3599 = vmatprep.subr.bf16.mxu0 0
    %3600 = vmatpush1.bf16.msra.mxu0 %v1911
    %3601 = vmatprep.subr.bf16.mxu0 0
    %3602 = vmatpush1.bf16.msra.mxu0 %v1914
    %3603 = vmatprep.subr.bf16.mxu0 0
    %3604 = vmatpush1.bf16.msra.mxu0 %v1917
    %3605 = vmatprep.subr.bf16.mxu0 0
    %3606 = vmatpush1.bf16.msra.mxu0 %v1920
    %3607 = vmatprep.subr.bf16.mxu0 0
    %3608 = vmatpush1.bf16.msra.mxu0 %v1923
    %3609 = vmatprep.subr.bf16.mxu0 0
    %3610 = vmatpush1.bf16.msra.mxu0 %v1926
    %3611 = vmatprep.subr.bf16.mxu0 0
    %3612 = vmatpush1.bf16.msra.mxu0 %v1929
    %3613 = vmatprep.subr.bf16.mxu0 0
    %3614 = vmatpush1.bf16.msra.mxu0 %v1932
    %3615 = vmatprep.subr.bf16.mxu0 0
    %3616 = vmatpush1.bf16.msra.mxu0 %v1935
    %3617 = vmatprep.subr.bf16.mxu0 0
    %3618 = vmatpush1.bf16.msra.mxu0 %v1938
    %3619 = vmatprep.mubr.bf16.mxu0 %v2626
    %3620 = vmatmul.mubr.bf16.gmra.mrb[0].mxu0 %v2625
    %v3621 = vpop.f32.mrb[0].mxu0
    %v3622 = vadd.f32 %v3582, %v3621
    %v3623 = vpop.f32.mrb[0].mxu0
    %v3624 = vpop.f32.mrb[0].mxu0
    %v3625 = vpop.f32.mrb[0].mxu0
    %3626 = vdwg.mxu0
    %3627 = vmatprep.subr.bf16.mxu0 0
    %3628 = vmatpush1.bf16.msra.mxu0 %v1941
    %3629 = vmatprep.subr.bf16.mxu0 0
    %3630 = vmatpush1.bf16.msra.mxu0 %v1944
    %3631 = vmatprep.subr.bf16.mxu0 0
    %3632 = vmatpush1.bf16.msra.mxu0 %v1947
    %3633 = vmatprep.subr.bf16.mxu0 0
    %3634 = vmatpush1.bf16.msra.mxu0 %v1950
    %3635 = vmatprep.subr.bf16.mxu0 0
    %3636 = vmatpush1.bf16.msra.mxu0 %v1953
    %3637 = vmatprep.subr.bf16.mxu0 0
    %3638 = vmatpush1.bf16.msra.mxu0 %v1956
    %3639 = vmatprep.subr.bf16.mxu0 0
    %3640 = vmatpush1.bf16.msra.mxu0 %v1959
    %3641 = vmatprep.subr.bf16.mxu0 0
    %3642 = vmatpush1.bf16.msra.mxu0 %v1962
    %3643 = vmatprep.subr.bf16.mxu0 0
    %3644 = vmatpush1.bf16.msra.mxu0 %v1965
    %3645 = vmatprep.subr.bf16.mxu0 0
    %3646 = vmatpush1.bf16.msra.mxu0 %v1968
    %3647 = vmatprep.subr.bf16.mxu0 0
    %3648 = vmatpush1.bf16.msra.mxu0 %v1971
    %3649 = vmatprep.subr.bf16.mxu0 0
    %3650 = vmatpush1.bf16.msra.mxu0 %v1974
    %3651 = vmatprep.subr.bf16.mxu0 0
    %3652 = vmatpush1.bf16.msra.mxu0 %v1977
    %3653 = vmatprep.subr.bf16.mxu0 0
    %3654 = vmatpush1.bf16.msra.mxu0 %v1980
    %3655 = vmatprep.subr.bf16.mxu0 0
    %3656 = vmatpush1.bf16.msra.mxu0 %v1983
    %3657 = vmatprep.subr.bf16.mxu0 0
    %3658 = vmatpush1.bf16.msra.mxu0 %v1986
    %3659 = vmatprep.mubr.bf16.mxu0 %v2628
    %3660 = vmatmul.mubr.bf16.gmra.mrb[0].mxu0 %v2627
    %v3661 = vpop.f32.mrb[0].mxu0
    %v3662 = vadd.f32 %v3622, %v3661
    %v3663 = vpop.f32.mrb[0].mxu0
    %v3664 = vpop.f32.mrb[0].mxu0
    %v3665 = vpop.f32.mrb[0].mxu0
    %3666 = vdwg.mxu0
    %3667 = vmatprep.subr.bf16.mxu0 0
    %3668 = vmatpush1.bf16.msra.mxu0 %v1989
    %3669 = vmatprep.subr.bf16.mxu0 0
    %3670 = vmatpush1.bf16.msra.mxu0 %v1992
    %3671 = vmatprep.subr.bf16.mxu0 0
    %3672 = vmatpush1.bf16.msra.mxu0 %v1995
    %3673 = vmatprep.subr.bf16.mxu0 0
    %3674 = vmatpush1.bf16.msra.mxu0 %v1998
    %3675 = vmatprep.subr.bf16.mxu0 0
    %3676 = vmatpush1.bf16.msra.mxu0 %v2001
    %3677 = vmatprep.subr.bf16.mxu0 0
    %3678 = vmatpush1.bf16.msra.mxu0 %v2004
    %3679 = vmatprep.subr.bf16.mxu0 0
    %3680 = vmatpush1.bf16.msra.mxu0 %v2007
    %3681 = vmatprep.subr.bf16.mxu0 0
    %3682 = vmatpush1.bf16.msra.mxu0 %v2010
    %3683 = vmatprep.subr.bf16.mxu0 0
    %3684 = vmatpush1.bf16.msra.mxu0 %v2013
    %3685 = vmatprep.subr.bf16.mxu0 0
    %3686 = vmatpush1.bf16.msra.mxu0 %v2016
    %3687 = vmatprep.subr.bf16.mxu0 0
    %3688 = vmatpush1.bf16.msra.mxu0 %v2019
    %3689 = vmatprep.subr.bf16.mxu0 0
    %3690 = vmatpush1.bf16.msra.mxu0 %v2022
    %3691 = vmatprep.subr.bf16.mxu0 0
    %3692 = vmatpush1.bf16.msra.mxu0 %v2025
    %3693 = vmatprep.subr.bf16.mxu0 0
    %3694 = vmatpush1.bf16.msra.mxu0 %v2028
    %3695 = vmatprep.subr.bf16.mxu0 0
    %3696 = vmatpush1.bf16.msra.mxu0 %v2031
    %3697 = vmatprep.subr.bf16.mxu0 0
    %3698 = vmatpush1.bf16.msra.mxu0 %v2034
    %3699 = vmatprep.mubr.bf16.mxu0 %v2630
    %3700 = vmatmul.mubr.bf16.gmra.mrb[0].mxu0 %v2629
    %v3701 = vpop.f32.mrb[0].mxu0
    %v3702 = vadd.f32 %v3662, %v3701
    %v3703 = vpop.f32.mrb[0].mxu0
    %v3704 = vpop.f32.mrb[0].mxu0
    %v3705 = vpop.f32.mrb[0].mxu0
    %3706 = vdwg.mxu0
    %3707 = vmatprep.subr.bf16.mxu0 0
    %3708 = vmatpush1.bf16.msra.mxu0 %v2037
    %3709 = vmatprep.subr.bf16.mxu0 0
    %3710 = vmatpush1.bf16.msra.mxu0 %v2040
    %3711 = vmatprep.subr.bf16.mxu0 0
    %3712 = vmatpush1.bf16.msra.mxu0 %v2043
    %3713 = vmatprep.subr.bf16.mxu0 0
    %3714 = vmatpush1.bf16.msra.mxu0 %v2046
    %3715 = vmatprep.subr.bf16.mxu0 0
    %3716 = vmatpush1.bf16.msra.mxu0 %v2049
    %3717 = vmatprep.subr.bf16.mxu0 0
    %3718 = vmatpush1.bf16.msra.mxu0 %v2052
    %3719 = vmatprep.subr.bf16.mxu0 0
    %3720 = vmatpush1.bf16.msra.mxu0 %v2055
    %3721 = vmatprep.subr.bf16.mxu0 0
    %3722 = vmatpush1.bf16.msra.mxu0 %v2058
    %3723 = vmatprep.subr.bf16.mxu0 0
    %3724 = vmatpush1.bf16.msra.mxu0 %v2061
    %3725 = vmatprep.subr.bf16.mxu0 0
    %3726 = vmatpush1.bf16.msra.mxu0 %v2064
    %3727 = vmatprep.subr.bf16.mxu0 0
    %3728 = vmatpush1.bf16.msra.mxu0 %v2067
    %3729 = vmatprep.subr.bf16.mxu0 0
    %3730 = vmatpush1.bf16.msra.mxu0 %v2070
    %3731 = vmatprep.subr.bf16.mxu0 0
    %3732 = vmatpush1.bf16.msra.mxu0 %v2073
    %3733 = vmatprep.subr.bf16.mxu0 0
    %3734 = vmatpush1.bf16.msra.mxu0 %v2076
    %3735 = vmatprep.subr.bf16.mxu0 0
    %3736 = vmatpush1.bf16.msra.mxu0 %v2079
    %3737 = vmatprep.subr.bf16.mxu0 0
    %3738 = vmatpush1.bf16.msra.mxu0 %v2082
    %3739 = vmatprep.mubr.bf16.mxu0 %v2632
    %3740 = vmatmul.mubr.bf16.gmra.mrb[0].mxu0 %v2631
    %v3741 = vpop.f32.mrb[0].mxu0
    %v3742 = vadd.f32 %v3702, %v3741
    %v3743 = vpop.f32.mrb[0].mxu0
    %v3744 = vpop.f32.mrb[0].mxu0
    %v3745 = vpop.f32.mrb[0].mxu0
    %3746 = vdwg.mxu0
    %3747 = vmatprep.subr.bf16.mxu0 0
    %3748 = vmatpush1.bf16.msra.mxu0 %v2085
    %3749 = vmatprep.subr.bf16.mxu0 0
    %3750 = vmatpush1.bf16.msra.mxu0 %v2088
    %3751 = vmatprep.subr.bf16.mxu0 0
    %3752 = vmatpush1.bf16.msra.mxu0 %v2091
    %3753 = vmatprep.subr.bf16.mxu0 0
    %3754 = vmatpush1.bf16.msra.mxu0 %v2094
    %3755 = vmatprep.subr.bf16.mxu0 0
    %3756 = vmatpush1.bf16.msra.mxu0 %v2097
    %3757 = vmatprep.subr.bf16.mxu0 0
    %3758 = vmatpush1.bf16.msra.mxu0 %v2100
    %3759 = vmatprep.subr.bf16.mxu0 0
    %3760 = vmatpush1.bf16.msra.mxu0 %v2103
    %3761 = vmatprep.subr.bf16.mxu0 0
    %3762 = vmatpush1.bf16.msra.mxu0 %v2106
    %3763 = vmatprep.subr.bf16.mxu0 0
    %3764 = vmatpush1.bf16.msra.mxu0 %v2109
    %3765 = vmatprep.subr.bf16.mxu0 0
    %3766 = vmatpush1.bf16.msra.mxu0 %v2112
    %3767 = vmatprep.subr.bf16.mxu0 0
    %3768 = vmatpush1.bf16.msra.mxu0 %v2115
    %3769 = vmatprep.subr.bf16.mxu0 0
    %3770 = vmatpush1.bf16.msra.mxu0 %v2118
    %3771 = vmatprep.subr.bf16.mxu0 0
    %3772 = vmatpush1.bf16.msra.mxu0 %v2121
    %3773 = vmatprep.subr.bf16.mxu0 0
    %3774 = vmatpush1.bf16.msra.mxu0 %v2124
    %3775 = vmatprep.subr.bf16.mxu0 0
    %3776 = vmatpush1.bf16.msra.mxu0 %v2127
    %3777 = vmatprep.subr.bf16.mxu0 0
    %3778 = vmatpush1.bf16.msra.mxu0 %v2130
    %3779 = vmatprep.mubr.bf16.mxu0 %v2634
    %3780 = vmatmul.mubr.bf16.gmra.mrb[0].mxu0 %v2633
    %v3781 = vpop.f32.mrb[0].mxu0
    %v3782 = vadd.f32 %v3742, %v3781
    %v3783 = vpop.f32.mrb[0].mxu0
    %v3784 = vpop.f32.mrb[0].mxu0
    %v3785 = vpop.f32.mrb[0].mxu0
    %3786 = vdwg.mxu0
    %3787 = vmatprep.subr.bf16.mxu0 0
    %3788 = vmatpush1.bf16.msra.mxu0 %v2133
    %3789 = vmatprep.subr.bf16.mxu0 0
    %3790 = vmatpush1.bf16.msra.mxu0 %v2136
    %3791 = vmatprep.subr.bf16.mxu0 0
    %3792 = vmatpush1.bf16.msra.mxu0 %v2139
    %3793 = vmatprep.subr.bf16.mxu0 0
    %3794 = vmatpush1.bf16.msra.mxu0 %v2142
    %3795 = vmatprep.subr.bf16.mxu0 0
    %3796 = vmatpush1.bf16.msra.mxu0 %v2145
    %3797 = vmatprep.subr.bf16.mxu0 0
    %3798 = vmatpush1.bf16.msra.mxu0 %v2148
    %3799 = vmatprep.subr.bf16.mxu0 0
    %3800 = vmatpush1.bf16.msra.mxu0 %v2151
    %3801 = vmatprep.subr.bf16.mxu0 0
    %3802 = vmatpush1.bf16.msra.mxu0 %v2154
    %3803 = vmatprep.subr.bf16.mxu0 0
    %3804 = vmatpush1.bf16.msra.mxu0 %v2157
    %3805 = vmatprep.subr.bf16.mxu0 0
    %3806 = vmatpush1.bf16.msra.mxu0 %v2160
    %3807 = vmatprep.subr.bf16.mxu0 0
    %3808 = vmatpush1.bf16.msra.mxu0 %v2163
    %3809 = vmatprep.subr.bf16.mxu0 0
    %3810 = vmatpush1.bf16.msra.mxu0 %v2166
    %3811 = vmatprep.subr.bf16.mxu0 0
    %3812 = vmatpush1.bf16.msra.mxu0 %v2169
    %3813 = vmatprep.subr.bf16.mxu0 0
    %3814 = vmatpush1.bf16.msra.mxu0 %v2172
    %3815 = vmatprep.subr.bf16.mxu0 0
    %3816 = vmatpush1.bf16.msra.mxu0 %v2175
    %3817 = vmatprep.subr.bf16.mxu0 0
    %3818 = vmatpush1.bf16.msra.mxu0 %v2178
    %3819 = vmatprep.mubr.bf16.mxu0 %v2636
    %3820 = vmatmul.mubr.bf16.gmra.mrb[0].mxu0 %v2635
    %v3821 = vpop.f32.mrb[0].mxu0
    %v3822 = vadd.f32 %v3782, %v3821
    %v3823 = vpop.f32.mrb[0].mxu0
    %v3824 = vpop.f32.mrb[0].mxu0
    %v3825 = vpop.f32.mrb[0].mxu0
    %3826 = vdwg.mxu0
    %3827 = vmatprep.subr.bf16.mxu0 0
    %3828 = vmatpush1.bf16.msra.mxu0 %v2181
    %3829 = vmatprep.subr.bf16.mxu0 0
    %3830 = vmatpush1.bf16.msra.mxu0 %v2184
    %3831 = vmatprep.subr.bf16.mxu0 0
    %3832 = vmatpush1.bf16.msra.mxu0 %v2187
    %3833 = vmatprep.subr.bf16.mxu0 0
    %3834 = vmatpush1.bf16.msra.mxu0 %v2190
    %3835 = vmatprep.subr.bf16.mxu0 0
    %3836 = vmatpush1.bf16.msra.mxu0 %v2193
    %3837 = vmatprep.subr.bf16.mxu0 0
    %3838 = vmatpush1.bf16.msra.mxu0 %v2196
    %3839 = vmatprep.subr.bf16.mxu0 0
    %3840 = vmatpush1.bf16.msra.mxu0 %v2199
    %3841 = vmatprep.subr.bf16.mxu0 0
    %3842 = vmatpush1.bf16.msra.mxu0 %v2202
    %3843 = vmatprep.subr.bf16.mxu0 0
    %3844 = vmatpush1.bf16.msra.mxu0 %v2205
    %3845 = vmatprep.subr.bf16.mxu0 0
    %3846 = vmatpush1.bf16.msra.mxu0 %v2208
    %3847 = vmatprep.subr.bf16.mxu0 0
    %3848 = vmatpush1.bf16.msra.mxu0 %v2211
    %3849 = vmatprep.subr.bf16.mxu0 0
    %3850 = vmatpush1.bf16.msra.mxu0 %v2214
    %3851 = vmatprep.subr.bf16.mxu0 0
    %3852 = vmatpush1.bf16.msra.mxu0 %v2217
    %3853 = vmatprep.subr.bf16.mxu0 0
    %3854 = vmatpush1.bf16.msra.mxu0 %v2220
    %3855 = vmatprep.subr.bf16.mxu0 0
    %3856 = vmatpush1.bf16.msra.mxu0 %v2223
    %3857 = vmatprep.subr.bf16.mxu0 0
    %3858 = vmatpush1.bf16.msra.mxu0 %v2226
    %3859 = vmatprep.mubr.bf16.mxu0 %v2638
    %3860 = vmatmul.mubr.bf16.gmra.mrb[0].mxu0 %v2637
    %v3861 = vpop.f32.mrb[0].mxu0
    %v3862 = vadd.f32 %v3822, %v3861
    %v3863 = vpop.f32.mrb[0].mxu0
    %v3864 = vpop.f32.mrb[0].mxu0
    %v3865 = vpop.f32.mrb[0].mxu0
    %3866 = vdwg.mxu0
    %3867 = vmatprep.subr.bf16.mxu0 0
    %3868 = vmatpush1.bf16.msra.mxu0 %v2229
    %3869 = vmatprep.subr.bf16.mxu0 0
    %3870 = vmatpush1.bf16.msra.mxu0 %v2232
    %3871 = vmatprep.subr.bf16.mxu0 0
    %3872 = vmatpush1.bf16.msra.mxu0 %v2235
    %3873 = vmatprep.subr.bf16.mxu0 0
    %3874 = vmatpush1.bf16.msra.mxu0 %v2238
    %3875 = vmatprep.subr.bf16.mxu0 0
    %3876 = vmatpush1.bf16.msra.mxu0 %v2241
    %3877 = vmatprep.subr.bf16.mxu0 0
    %3878 = vmatpush1.bf16.msra.mxu0 %v2244
    %3879 = vmatprep.subr.bf16.mxu0 0
    %3880 = vmatpush1.bf16.msra.mxu0 %v2247
    %3881 = vmatprep.subr.bf16.mxu0 0
    %3882 = vmatpush1.bf16.msra.mxu0 %v2250
    %3883 = vmatprep.subr.bf16.mxu0 0
    %3884 = vmatpush1.bf16.msra.mxu0 %v2253
    %3885 = vmatprep.subr.bf16.mxu0 0
    %3886 = vmatpush1.bf16.msra.mxu0 %v2256
    %3887 = vmatprep.subr.bf16.mxu0 0
    %3888 = vmatpush1.bf16.msra.mxu0 %v2259
    %3889 = vmatprep.subr.bf16.mxu0 0
    %3890 = vmatpush1.bf16.msra.mxu0 %v2262
    %3891 = vmatprep.subr.bf16.mxu0 0
    %3892 = vmatpush1.bf16.msra.mxu0 %v2265
    %3893 = vmatprep.subr.bf16.mxu0 0
    %3894 = vmatpush1.bf16.msra.mxu0 %v2268
    %3895 = vmatprep.subr.bf16.mxu0 0
    %3896 = vmatpush1.bf16.msra.mxu0 %v2271
    %3897 = vmatprep.subr.bf16.mxu0 0
    %3898 = vmatpush1.bf16.msra.mxu0 %v2274
    %3899 = vmatprep.mubr.bf16.mxu0 %v2640
    %3900 = vmatmul.mubr.bf16.gmra.mrb[0].mxu0 %v2639
    %v3901 = vpop.f32.mrb[0].mxu0
    %v3902 = vadd.f32 %v3862, %v3901
    %v3903 = vpop.f32.mrb[0].mxu0
    %v3904 = vpop.f32.mrb[0].mxu0
    %v3905 = vpop.f32.mrb[0].mxu0
    %3906 = vdwg.mxu0
    %3907 = vmatprep.subr.bf16.mxu0 0
    %3908 = vmatpush1.bf16.msra.mxu0 %v2277
    %3909 = vmatprep.subr.bf16.mxu0 0
    %3910 = vmatpush1.bf16.msra.mxu0 %v2280
    %3911 = vmatprep.subr.bf16.mxu0 0
    %3912 = vmatpush1.bf16.msra.mxu0 %v2283
    %3913 = vmatprep.subr.bf16.mxu0 0
    %3914 = vmatpush1.bf16.msra.mxu0 %v2286
    %3915 = vmatprep.subr.bf16.mxu0 0
    %3916 = vmatpush1.bf16.msra.mxu0 %v2289
    %3917 = vmatprep.subr.bf16.mxu0 0
    %3918 = vmatpush1.bf16.msra.mxu0 %v2292
    %3919 = vmatprep.subr.bf16.mxu0 0
    %3920 = vmatpush1.bf16.msra.mxu0 %v2295
    %3921 = vmatprep.subr.bf16.mxu0 0
    %3922 = vmatpush1.bf16.msra.mxu0 %v2298
    %3923 = vmatprep.subr.bf16.mxu0 0
    %3924 = vmatpush1.bf16.msra.mxu0 %v2301
    %3925 = vmatprep.subr.bf16.mxu0 0
    %3926 = vmatpush1.bf16.msra.mxu0 %v2304
    %3927 = vmatprep.subr.bf16.mxu0 0
    %3928 = vmatpush1.bf16.msra.mxu0 %v2307
    %3929 = vmatprep.subr.bf16.mxu0 0
    %3930 = vmatpush1.bf16.msra.mxu0 %v2310
    %3931 = vmatprep.subr.bf16.mxu0 0
    %3932 = vmatpush1.bf16.msra.mxu0 %v2313
    %3933 = vmatprep.subr.bf16.mxu0 0
    %3934 = vmatpush1.bf16.msra.mxu0 %v2316
    %3935 = vmatprep.subr.bf16.mxu0 0
    %3936 = vmatpush1.bf16.msra.mxu0 %v2319
    %3937 = vmatprep.subr.bf16.mxu0 0
    %3938 = vmatpush1.bf16.msra.mxu0 %v2322
    %3939 = vmatprep.mubr.bf16.mxu0 %v2642
    %3940 = vmatmul.mubr.bf16.gmra.mrb[0].mxu0 %v2641
    %v3941 = vpop.f32.mrb[0].mxu0
    %v3942 = vadd.f32 %v3902, %v3941
    %v3943 = vpop.f32.mrb[0].mxu0
    %v3944 = vpop.f32.mrb[0].mxu0
    %v3945 = vpop.f32.mrb[0].mxu0
    %3946 = vdwg.mxu0
    %3947 = vmatprep.subr.bf16.mxu0 0
    %3948 = vmatpush1.bf16.msra.mxu0 %v2325
    %3949 = vmatprep.subr.bf16.mxu0 0
    %3950 = vmatpush1.bf16.msra.mxu0 %v2328
    %3951 = vmatprep.subr.bf16.mxu0 0
    %3952 = vmatpush1.bf16.msra.mxu0 %v2331
    %3953 = vmatprep.subr.bf16.mxu0 0
    %3954 = vmatpush1.bf16.msra.mxu0 %v2334
    %3955 = vmatprep.subr.bf16.mxu0 0
    %3956 = vmatpush1.bf16.msra.mxu0 %v2337
    %3957 = vmatprep.subr.bf16.mxu0 0
    %3958 = vmatpush1.bf16.msra.mxu0 %v2340
    %3959 = vmatprep.subr.bf16.mxu0 0
    %3960 = vmatpush1.bf16.msra.mxu0 %v2343
    %3961 = vmatprep.subr.bf16.mxu0 0
    %3962 = vmatpush1.bf16.msra.mxu0 %v2346
    %3963 = vmatprep.subr.bf16.mxu0 0
    %3964 = vmatpush1.bf16.msra.mxu0 %v2349
    %3965 = vmatprep.subr.bf16.mxu0 0
    %3966 = vmatpush1.bf16.msra.mxu0 %v2352
    %3967 = vmatprep.subr.bf16.mxu0 0
    %3968 = vmatpush1.bf16.msra.mxu0 %v2355
    %3969 = vmatprep.subr.bf16.mxu0 0
    %3970 = vmatpush1.bf16.msra.mxu0 %v2358
    %3971 = vmatprep.subr.bf16.mxu0 0
    %3972 = vmatpush1.bf16.msra.mxu0 %v2361
    %3973 = vmatprep.subr.bf16.mxu0 0
    %3974 = vmatpush1.bf16.msra.mxu0 %v2364
    %3975 = vmatprep.subr.bf16.mxu0 0
    %3976 = vmatpush1.bf16.msra.mxu0 %v2367
    %3977 = vmatprep.subr.bf16.mxu0 0
    %3978 = vmatpush1.bf16.msra.mxu0 %v2370
    %3979 = vmatprep.mubr.bf16.mxu0 %v2644
    %3980 = vmatmul.mubr.bf16.gmra.mrb[0].mxu0 %v2643
    %v3981 = vpop.f32.mrb[0].mxu0
    %v3982 = vadd.f32 %v3942, %v3981
    %v3983 = vpop.f32.mrb[0].mxu0
    %v3984 = vpop.f32.mrb[0].mxu0
    %v3985 = vpop.f32.mrb[0].mxu0
    %3986 = vdwg.mxu0
    %3987 = vmatprep.subr.bf16.mxu0 0
    %3988 = vmatpush1.bf16.msra.mxu0 %v2373
    %3989 = vmatprep.subr.bf16.mxu0 0
    %3990 = vmatpush1.bf16.msra.mxu0 %v2376
    %3991 = vmatprep.subr.bf16.mxu0 0
    %3992 = vmatpush1.bf16.msra.mxu0 %v2379
    %3993 = vmatprep.subr.bf16.mxu0 0
    %3994 = vmatpush1.bf16.msra.mxu0 %v2382
    %3995 = vmatprep.subr.bf16.mxu0 0
    %3996 = vmatpush1.bf16.msra.mxu0 %v2385
    %3997 = vmatprep.subr.bf16.mxu0 0
    %3998 = vmatpush1.bf16.msra.mxu0 %v2388
    %3999 = vmatprep.subr.bf16.mxu0 0
    %4000 = vmatpush1.bf16.msra.mxu0 %v2391
    %4001 = vmatprep.subr.bf16.mxu0 0
    %4002 = vmatpush1.bf16.msra.mxu0 %v2394
    %4003 = vmatprep.subr.bf16.mxu0 0
    %4004 = vmatpush1.bf16.msra.mxu0 %v2397
    %4005 = vmatprep.subr.bf16.mxu0 0
    %4006 = vmatpush1.bf16.msra.mxu0 %v2400
    %4007 = vmatprep.subr.bf16.mxu0 0
    %4008 = vmatpush1.bf16.msra.mxu0 %v2403
    %4009 = vmatprep.subr.bf16.mxu0 0
    %4010 = vmatpush1.bf16.msra.mxu0 %v2406
    %4011 = vmatprep.subr.bf16.mxu0 0
    %4012 = vmatpush1.bf16.msra.mxu0 %v2409
    %4013 = vmatprep.subr.bf16.mxu0 0
    %4014 = vmatpush1.bf16.msra.mxu0 %v2412
    %4015 = vmatprep.subr.bf16.mxu0 0
    %4016 = vmatpush1.bf16.msra.mxu0 %v2415
    %4017 = vmatprep.subr.bf16.mxu0 0
    %4018 = vmatpush1.bf16.msra.mxu0 %v2418
    %4019 = vmatprep.mubr.bf16.mxu0 %v2646
    %4020 = vmatmul.mubr.bf16.gmra.mrb[0].mxu0 %v2645
    %v4021 = vpop.f32.mrb[0].mxu0
    %v4022 = vadd.f32 %v3982, %v4021
    %v4023 = vpop.f32.mrb[0].mxu0
    %v4024 = vpop.f32.mrb[0].mxu0
    %v4025 = vpop.f32.mrb[0].mxu0
    %4026 = vdwg.mxu0
    %4027 = vmatprep.subr.bf16.mxu0 0
    %4028 = vmatpush1.bf16.msra.mxu0 %v2421
    %4029 = vmatprep.subr.bf16.mxu0 0
    %4030 = vmatpush1.bf16.msra.mxu0 %v2424
    %4031 = vmatprep.subr.bf16.mxu0 0
    %4032 = vmatpush1.bf16.msra.mxu0 %v2427
    %4033 = vmatprep.subr.bf16.mxu0 0
    %4034 = vmatpush1.bf16.msra.mxu0 %v2430
    %4035 = vmatprep.subr.bf16.mxu0 0
    %4036 = vmatpush1.bf16.msra.mxu0 %v2433
    %4037 = vmatprep.subr.bf16.mxu0 0
    %4038 = vmatpush1.bf16.msra.mxu0 %v2436
    %4039 = vmatprep.subr.bf16.mxu0 0
    %4040 = vmatpush1.bf16.msra.mxu0 %v2439
    %4041 = vmatprep.subr.bf16.mxu0 0
    %4042 = vmatpush1.bf16.msra.mxu0 %v2442
    %4043 = vmatprep.subr.bf16.mxu0 0
    %4044 = vmatpush1.bf16.msra.mxu0 %v2445
    %4045 = vmatprep.subr.bf16.mxu0 0
    %4046 = vmatpush1.bf16.msra.mxu0 %v2448
    %4047 = vmatprep.subr.bf16.mxu0 0
    %4048 = vmatpush1.bf16.msra.mxu0 %v2451
    %4049 = vmatprep.subr.bf16.mxu0 0
    %4050 = vmatpush1.bf16.msra.mxu0 %v2454
    %4051 = vmatprep.subr.bf16.mxu0 0
    %4052 = vmatpush1.bf16.msra.mxu0 %v2457
    %4053 = vmatprep.subr.bf16.mxu0 0
    %4054 = vmatpush1.bf16.msra.mxu0 %v2460
    %4055 = vmatprep.subr.bf16.mxu0 0
    %4056 = vmatpush1.bf16.msra.mxu0 %v2463
    %4057 = vmatprep.subr.bf16.mxu0 0
    %4058 = vmatpush1.bf16.msra.mxu0 %v2466
    %4059 = vmatprep.mubr.bf16.mxu0 %v2648
    %4060 = vmatmul.mubr.bf16.gmra.mrb[0].mxu0 %v2647
    %v4061 = vpop.f32.mrb[0].mxu0
    %v4062 = vadd.f32 %v4022, %v4061
    %v4063 = vpop.f32.mrb[0].mxu0
    %v4064 = vpop.f32.mrb[0].mxu0
    %v4065 = vpop.f32.mrb[0].mxu0
    %4066 = vdwg.mxu0
    %4067 = vmatprep.subr.bf16.mxu0 0
    %4068 = vmatpush1.bf16.msra.mxu0 %v2469
    %4069 = vmatprep.subr.bf16.mxu0 0
    %4070 = vmatpush1.bf16.msra.mxu0 %v2472
    %4071 = vmatprep.subr.bf16.mxu0 0
    %4072 = vmatpush1.bf16.msra.mxu0 %v2475
    %4073 = vmatprep.subr.bf16.mxu0 0
    %4074 = vmatpush1.bf16.msra.mxu0 %v2478
    %4075 = vmatprep.subr.bf16.mxu0 0
    %4076 = vmatpush1.bf16.msra.mxu0 %v2481
    %4077 = vmatprep.subr.bf16.mxu0 0
    %4078 = vmatpush1.bf16.msra.mxu0 %v2484
    %4079 = vmatprep.subr.bf16.mxu0 0
    %4080 = vmatpush1.bf16.msra.mxu0 %v2487
    %4081 = vmatprep.subr.bf16.mxu0 0
    %4082 = vmatpush1.bf16.msra.mxu0 %v2490
    %4083 = vmatprep.subr.bf16.mxu0 0
    %4084 = vmatpush1.bf16.msra.mxu0 %v2493
    %4085 = vmatprep.subr.bf16.mxu0 0
    %4086 = vmatpush1.bf16.msra.mxu0 %v2496
    %4087 = vmatprep.subr.bf16.mxu0 0
    %4088 = vmatpush1.bf16.msra.mxu0 %v2499
    %4089 = vmatprep.subr.bf16.mxu0 0
    %4090 = vmatpush1.bf16.msra.mxu0 %v2502
    %4091 = vmatprep.subr.bf16.mxu0 0
    %4092 = vmatpush1.bf16.msra.mxu0 %v2505
    %4093 = vmatprep.subr.bf16.mxu0 0
    %4094 = vmatpush1.bf16.msra.mxu0 %v2508
    %4095 = vmatprep.subr.bf16.mxu0 0
    %4096 = vmatpush1.bf16.msra.mxu0 %v2511
    %4097 = vmatprep.subr.bf16.mxu0 0
    %4098 = vmatpush1.bf16.msra.mxu0 %v2514
    %4099 = vmatprep.mubr.bf16.mxu0 %v2650
    %4100 = vmatmul.mubr.bf16.gmra.mrb[0].mxu0 %v2649
    %v4101 = vpop.f32.mrb[0].mxu0
    %v4102 = vadd.f32 %v4062, %v4101
    %v4103 = vpop.f32.mrb[0].mxu0
    %v4104 = vpop.f32.mrb[0].mxu0
    %v4105 = vpop.f32.mrb[0].mxu0
    %4106 = vdwg.mxu0
    %4107 = vmatprep.subr.bf16.mxu0 0
    %4108 = vmatpush1.bf16.msra.mxu0 %v2517
    %4109 = vmatprep.subr.bf16.mxu0 0
    %4110 = vmatpush1.bf16.msra.mxu0 %v2520
    %4111 = vmatprep.subr.bf16.mxu0 0
    %4112 = vmatpush1.bf16.msra.mxu0 %v2523
    %4113 = vmatprep.subr.bf16.mxu0 0
    %4114 = vmatpush1.bf16.msra.mxu0 %v2526
    %4115 = vmatprep.subr.bf16.mxu0 0
    %4116 = vmatpush1.bf16.msra.mxu0 %v2529
    %4117 = vmatprep.subr.bf16.mxu0 0
    %4118 = vmatpush1.bf16.msra.mxu0 %v2532
    %4119 = vmatprep.subr.bf16.mxu0 0
    %4120 = vmatpush1.bf16.msra.mxu0 %v2535
    %4121 = vmatprep.subr.bf16.mxu0 0
    %4122 = vmatpush1.bf16.msra.mxu0 %v2538
    %4123 = vmatprep.subr.bf16.mxu0 0
    %4124 = vmatpush1.bf16.msra.mxu0 %v2541
    %4125 = vmatprep.subr.bf16.mxu0 0
    %4126 = vmatpush1.bf16.msra.mxu0 %v2544
    %4127 = vmatprep.subr.bf16.mxu0 0
    %4128 = vmatpush1.bf16.msra.mxu0 %v2547
    %4129 = vmatprep.subr.bf16.mxu0 0
    %4130 = vmatpush1.bf16.msra.mxu0 %v2550
    %4131 = vmatprep.subr.bf16.mxu0 0
    %4132 = vmatpush1.bf16.msra.mxu0 %v2553
    %4133 = vmatprep.subr.bf16.mxu0 0
    %4134 = vmatpush1.bf16.msra.mxu0 %v2556
    %4135 = vmatprep.subr.bf16.mxu0 0
    %4136 = vmatpush1.bf16.msra.mxu0 %v2559
    %4137 = vmatprep.subr.bf16.mxu0 0
    %4138 = vmatpush1.bf16.msra.mxu0 %v2562
    %4139 = vmatprep.mubr.bf16.mxu0 %v2652
    %4140 = vmatmul.mubr.bf16.gmra.mrb[0].mxu0 %v2651
    %v4141 = vpop.f32.mrb[0].mxu0
    %v4142 = vadd.f32 %v4102, %v4141
    %v4143 = vpop.f32.mrb[0].mxu0
    %v4144 = vpop.f32.mrb[0].mxu0
    %v4145 = vpop.f32.mrb[0].mxu0
    %4146 = vdwg.mxu0
    %v4147 = vmax.f32 %v3421, 0.0
    %v4148 = vmax.f32 %v3423, 0.0
    %v4149 = vmax.f32 %v4142, 0.0
    %v4150 = vrot.slane %v4147, 4
    %v4151 = vadd.f32 %v4147, %v4150
    %v4152 = vrot.slane %v4151, 2
    %v4153 = vadd.f32 %v4151, %v4152
    %v4154 = vrot.slane %v4153, 1
    %v4155 = vadd.f32 %v4153, %v4154
    %v4156 = vrot.slane %v4148, 4
    %v4157 = vadd.f32 %v4148, %v4156
    %v4158 = vrot.slane %v4157, 2
    %v4159 = vadd.f32 %v4157, %v4158
    %v4160 = vrot.slane %v4159, 1
    %v4161 = vadd.f32 %v4159, %v4160
    %v4162 = vrot.slane %v4149, 4
    %v4163 = vadd.f32 %v4149, %v4162
    %v4164 = vrot.slane %v4163, 2
    %v4165 = vadd.f32 %v4163, %v4164
    %v4166 = vrot.slane %v4165, 1
    %v4167 = vadd.f32 %v4165, %v4166
    %v4168 = vrcp.pop 8.0
    %v4169 = vmul.f32 %v4155, %v4168
    %v4170 = vmul.f32 %v4161, %v4168
    %v4171 = vmul.f32 %v4167, %v4168
    %v4172 = vsub.f32 %v4147, %v4169
    %v4173 = vsub.f32 %v4148, %v4170
    %v4174 = vsub.f32 %v4149, %v4171
    %v4175 = vmul.f32 %v4172, %v4172
    %v4176 = vmul.f32 %v4173, %v4173
    %v4177 = vmul.f32 %v4174, %v4174
    %v4178 = vrot.slane %v4175, 4
    %v4179 = vadd.f32 %v4175, %v4178
    %v4180 = vrot.slane %v4179, 2
    %v4181 = vadd.f32 %v4179, %v4180
    %v4182 = vrot.slane %v4181, 1
    %v4183 = vadd.f32 %v4181, %v4182
    %v4184 = vrot.slane %v4176, 4
    %v4185 = vadd.f32 %v4176, %v4184
    %v4186 = vrot.slane %v4185, 2
    %v4187 = vadd.f32 %v4185, %v4186
    %v4188 = vrot.slane %v4187, 1
    %v4189 = vadd.f32 %v4187, %v4188
    %v4190 = vrot.slane %v4177, 4
    %v4191 = vadd.f32 %v4177, %v4190
    %v4192 = vrot.slane %v4191, 2
    %v4193 = vadd.f32 %v4191, %v4192
    %v4194 = vrot.slane %v4193, 1
    %v4195 = vadd.f32 %v4193, %v4194
    %v4196 = vmul.f32 %v4183, %v4168
    %v4197 = vmul.f32 %v4189, %v4168
    %v4198 = vmul.f32 %v4195, %v4168
    %v4199 = vld [vmem:[#allocation22] sm:$0x7]
    %v4201 = vlaneseq
    %v4202 = vshrl.u32 %v4201, 7
    %v4203 = vsub.s32 0, %v4202
    %v4204 = vrot.slane %v4199, %v4203
    %v4205 = vlaneseq
    %v4206 = vshrl.u32 %v4205, 7
    %v4207 = vsub.s32 1, %v4206
    %v4208 = vrot.slane %v4199, %v4207
    %v4209 = vlaneseq
    %v4210 = vshrl.u32 %v4209, 7
    %v4211 = vsub.s32 2, %v4210
    %v4212 = vrot.slane %v4199, %v4211
    %v4216 = vmul.f32 %v4204, %v4172
    %v4217 = vmul.f32 %v4208, %v4173
    %v4218 = vmul.f32 %v4212, %v4174
    %v4219 = vadd.f32 %v4196, 1e-05
    %v4220 = vadd.f32 %v4197, 1e-05
    %v4221 = vadd.f32 %v4198, 1e-05
    %v4222 = vrsqrt.pop %v4219
    %v4223 = vrsqrt.pop %v4220
    %v4224 = vrsqrt.pop %v4221
    %v4225 = vmul.f32 %v4216, %v4222
    %v4226 = vmul.f32 %v4217, %v4223
    %v4227 = vmul.f32 %v4218, %v4224
    %v4228 = vld [vmem:[#allocation24] sm:$0x7]
    %v4230 = vlaneseq
    %v4231 = vshrl.u32 %v4230, 7
    %v4232 = vsub.s32 0, %v4231
    %v4233 = vrot.slane %v4228, %v4232
    %v4234 = vlaneseq
    %v4235 = vshrl.u32 %v4234, 7
    %v4236 = vsub.s32 1, %v4235
    %v4237 = vrot.slane %v4228, %v4236
    %v4238 = vlaneseq
    %v4239 = vshrl.u32 %v4238, 7
    %v4240 = vsub.s32 2, %v4239
    %v4241 = vrot.slane %v4228, %v4240
    %v4245 = vadd.f32 %v4225, %v4233
    %v4246 = vadd.f32 %v4226, %v4237
    %v4247 = vadd.f32 %v4227, %v4241
    %s4248 = smul.u32 4, 432
    %s4249 = smul.u32 %s4248, 1
    %s4250 = sshll.u32 %s4249, 4
    %4251 = dma.done %s225, %s4250
    %v4252 = vsub.f32 0.0, %v4245
    %v4253 = vsub.f32 0.0, %v4246
    %v4254 = vsub.f32 0.0, %v4247
    %v4255 = vmul.f32 %v4252, 1.442695
    %v4256 = vpow.pop %v4255
    %v4257 = vmul.f32 %v4253, 1.442695
    %v4258 = vpow.pop %v4257
    %v4259 = vmul.f32 %v4254, 1.442695
    %v4260 = vpow.pop %v4259
    %v4261 = vadd.f32 %v4256, 1.0
    %v4262 = vadd.f32 %v4258, 1.0
    %v4263 = vadd.f32 %v4260, 1.0
    %v4264 = vrcp.pop %v4261
    %v4265 = vmul.f32 1.0, %v4264
    %v4266 = vrcp.pop %v4262
    %v4267 = vmul.f32 1.0, %v4266
    %v4268 = vrcp.pop %v4263
    %v4269 = vmul.f32 1.0, %v4268
    %v4270 = vmul.f32 %v4245, %v4265
    %v4271 = vmul.f32 %v4246, %v4267
    %v4272 = vmul.f32 %v4247, %v4269
    %v4273 = vpack.c.bf16 %v4270, %v4270
    %v4274 = vpack.c.bf16 %v4271, %v4271
    %v4275 = vpack.c.bf16 %v4272, %v4272
    %v4279 = vunpack.c.l.b16 %v4273
    %v4280 = vunpack.c.l.b16 %v4274
    %v4281 = vunpack.c.l.b16 %v4275
    %v4282 = vpack.c.b16 %v4280, %v4279
    %v4283 = vpack.c.b16 %v4281, %v4281
    %4286 = vst [vmem:[#allocation7] sm:$0xff] %v4282
    %4287 = vst [vmem:[#allocation7 + $0x8] sm:$0xf] %v4283
    %v4288 = vsub.f32 %v4245, -2.2
    %v4289 = vsub.f32 %v4246, -2.2
    %v4290 = vsub.f32 %v4247, -2.2
    %v4291 = vsub.f32 %v4245, -1.8
    %v4292 = vsub.f32 %v4246, -1.8
    %v4293 = vsub.f32 %v4247, -1.8
    %v4294 = vsub.f32 %v4245, -1.4
    %v4295 = vsub.f32 %v4246, -1.4
    %v4296 = vsub.f32 %v4247, -1.4
    %v4297 = vsub.f32 %v4245, -1.0
    %v4298 = vsub.f32 %v4246, -1.0
    %v4299 = vsub.f32 %v4247, -1.0
    %v4300 = vsub.f32 %v4245, -0.6
    %v4301 = vsub.f32 %v4246, -0.6
    %v4302 = vsub.f32 %v4247, -0.6
    %v4303 = vsub.f32 %v4245, -0.2
    %v4304 = vsub.f32 %v4246, -0.2
    %v4305 = vsub.f32 %v4247, -0.2
    %v4306 = vsub.f32 %v4245, 0.2
    %v4307 = vsub.f32 %v4246, 0.2
    %v4308 = vsub.f32 %v4247, 0.2
    %v4309 = vsub.f32 %v4245, 0.6
    %v4310 = vsub.f32 %v4246, 0.6
    %v4311 = vsub.f32 %v4247, 0.6
    %v4312 = vsub.f32 %v4245, 1.0
    %v4313 = vsub.f32 %v4246, 1.0
    %v4314 = vsub.f32 %v4247, 1.0
    %v4315 = vsub.f32 %v4245, 1.4
    %v4316 = vsub.f32 %v4246, 1.4
    %v4317 = vsub.f32 %v4247, 1.4
    %v4318 = vsub.f32 %v4245, 1.8
    %v4319 = vsub.f32 %v4246, 1.8
    %v4320 = vsub.f32 %v4247, 1.8
    %v4321 = vsub.f32 %v4245, 2.2
    %v4322 = vsub.f32 %v4246, 2.2
    %v4323 = vsub.f32 %v4247, 2.2
    %vm4324 = vcmp.ge.f32.partialorder %v4288, 0.0
    %vm4325 = vcmp.ge.f32.partialorder %v4289, 0.0
    %vm4326 = vcmp.ge.f32.partialorder %v4290, 0.0
    %vm4327 = vcmp.lt.f32.partialorder %v4291, 0.0
    %vm4328 = vcmp.lt.f32.partialorder %v4292, 0.0
    %vm4329 = vcmp.lt.f32.partialorder %v4293, 0.0
    %vm4330 = vmand %vm4324, %vm4327
    %vm4331 = vmand %vm4325, %vm4328
    %vm4332 = vmand %vm4326, %vm4329
    %v4333 = vsel %vm4330, 1.0, 0.0
    %v4334 = vsel %vm4331, 1.0, 0.0
    %v4335 = vsel %vm4332, 1.0, 0.0
    %vm4336 = vcmp.ge.f32.partialorder %v4291, 0.0
    %vm4337 = vcmp.ge.f32.partialorder %v4292, 0.0
    %vm4338 = vcmp.ge.f32.partialorder %v4293, 0.0
    %vm4339 = vcmp.lt.f32.partialorder %v4294, 0.0
    %vm4340 = vcmp.lt.f32.partialorder %v4295, 0.0
    %vm4341 = vcmp.lt.f32.partialorder %v4296, 0.0
    %vm4342 = vmand %vm4336, %vm4339
    %vm4343 = vmand %vm4337, %vm4340
    %vm4344 = vmand %vm4338, %vm4341
    %v4345 = vsel %vm4342, 1.0, 0.0
    %v4346 = vsel %vm4343, 1.0, 0.0
    %v4347 = vsel %vm4344, 1.0, 0.0
    %vm4348 = vcmp.ge.f32.partialorder %v4294, 0.0
    %vm4349 = vcmp.ge.f32.partialorder %v4295, 0.0
    %vm4350 = vcmp.ge.f32.partialorder %v4296, 0.0
    %vm4351 = vcmp.lt.f32.partialorder %v4297, 0.0
    %vm4352 = vcmp.lt.f32.partialorder %v4298, 0.0
    %vm4353 = vcmp.lt.f32.partialorder %v4299, 0.0
    %vm4354 = vmand %vm4348, %vm4351
    %vm4355 = vmand %vm4349, %vm4352
    %vm4356 = vmand %vm4350, %vm4353
    %v4357 = vsel %vm4354, 1.0, 0.0
    %v4358 = vsel %vm4355, 1.0, 0.0
    %v4359 = vsel %vm4356, 1.0, 0.0
    %vm4360 = vcmp.ge.f32.partialorder %v4297, 0.0
    %vm4361 = vcmp.ge.f32.partialorder %v4298, 0.0
    %vm4362 = vcmp.ge.f32.partialorder %v4299, 0.0
    %vm4363 = vcmp.lt.f32.partialorder %v4300, 0.0
    %vm4364 = vcmp.lt.f32.partialorder %v4301, 0.0
    %vm4365 = vcmp.lt.f32.partialorder %v4302, 0.0
    %vm4366 = vmand %vm4360, %vm4363
    %vm4367 = vmand %vm4361, %vm4364
    %vm4368 = vmand %vm4362, %vm4365
    %v4369 = vsel %vm4366, 1.0, 0.0
    %v4370 = vsel %vm4367, 1.0, 0.0
    %v4371 = vsel %vm4368, 1.0, 0.0
    %vm4372 = vcmp.ge.f32.partialorder %v4300, 0.0
    %vm4373 = vcmp.ge.f32.partialorder %v4301, 0.0
    %vm4374 = vcmp.ge.f32.partialorder %v4302, 0.0
    %vm4375 = vcmp.lt.f32.partialorder %v4303, 0.0
    %vm4376 = vcmp.lt.f32.partialorder %v4304, 0.0
    %vm4377 = vcmp.lt.f32.partialorder %v4305, 0.0
    %vm4378 = vmand %vm4372, %vm4375
    %vm4379 = vmand %vm4373, %vm4376
    %vm4380 = vmand %vm4374, %vm4377
    %v4381 = vsel %vm4378, 1.0, 0.0
    %v4382 = vsel %vm4379, 1.0, 0.0
    %v4383 = vsel %vm4380, 1.0, 0.0
    %vm4384 = vcmp.ge.f32.partialorder %v4303, 0.0
    %vm4385 = vcmp.ge.f32.partialorder %v4304, 0.0
    %vm4386 = vcmp.ge.f32.partialorder %v4305, 0.0
    %vm4387 = vcmp.lt.f32.partialorder %v4306, 0.0
    %vm4388 = vcmp.lt.f32.partialorder %v4307, 0.0
    %vm4389 = vcmp.lt.f32.partialorder %v4308, 0.0
    %vm4390 = vmand %vm4384, %vm4387
    %vm4391 = vmand %vm4385, %vm4388
    %vm4392 = vmand %vm4386, %vm4389
    %v4393 = vsel %vm4390, 1.0, 0.0
    %v4394 = vsel %vm4391, 1.0, 0.0
    %v4395 = vsel %vm4392, 1.0, 0.0
    %vm4396 = vcmp.ge.f32.partialorder %v4306, 0.0
    %vm4397 = vcmp.ge.f32.partialorder %v4307, 0.0
    %vm4398 = vcmp.ge.f32.partialorder %v4308, 0.0
    %vm4399 = vcmp.lt.f32.partialorder %v4309, 0.0
    %vm4400 = vcmp.lt.f32.partialorder %v4310, 0.0
    %vm4401 = vcmp.lt.f32.partialorder %v4311, 0.0
    %vm4402 = vmand %vm4396, %vm4399
    %vm4403 = vmand %vm4397, %vm4400
    %vm4404 = vmand %vm4398, %vm4401
    %v4405 = vsel %vm4402, 1.0, 0.0
    %v4406 = vsel %vm4403, 1.0, 0.0
    %v4407 = vsel %vm4404, 1.0, 0.0
    %vm4408 = vcmp.ge.f32.partialorder %v4309, 0.0
    %vm4409 = vcmp.ge.f32.partialorder %v4310, 0.0
    %vm4410 = vcmp.ge.f32.partialorder %v4311, 0.0
    %vm4411 = vcmp.lt.f32.partialorder %v4312, 0.0
    %vm4412 = vcmp.lt.f32.partialorder %v4313, 0.0
    %vm4413 = vcmp.lt.f32.partialorder %v4314, 0.0
    %vm4414 = vmand %vm4408, %vm4411
    %vm4415 = vmand %vm4409, %vm4412
    %vm4416 = vmand %vm4410, %vm4413
    %v4417 = vsel %vm4414, 1.0, 0.0
    %v4418 = vsel %vm4415, 1.0, 0.0
    %v4419 = vsel %vm4416, 1.0, 0.0
    %vm4420 = vcmp.ge.f32.partialorder %v4312, 0.0
    %vm4421 = vcmp.ge.f32.partialorder %v4313, 0.0
    %vm4422 = vcmp.ge.f32.partialorder %v4314, 0.0
    %vm4423 = vcmp.lt.f32.partialorder %v4315, 0.0
    %vm4424 = vcmp.lt.f32.partialorder %v4316, 0.0
    %vm4425 = vcmp.lt.f32.partialorder %v4317, 0.0
    %vm4426 = vmand %vm4420, %vm4423
    %vm4427 = vmand %vm4421, %vm4424
    %vm4428 = vmand %vm4422, %vm4425
    %v4429 = vsel %vm4426, 1.0, 0.0
    %v4430 = vsel %vm4427, 1.0, 0.0
    %v4431 = vsel %vm4428, 1.0, 0.0
    %vm4432 = vcmp.ge.f32.partialorder %v4315, 0.0
    %vm4433 = vcmp.ge.f32.partialorder %v4316, 0.0
    %vm4434 = vcmp.ge.f32.partialorder %v4317, 0.0
    %vm4435 = vcmp.lt.f32.partialorder %v4318, 0.0
    %vm4436 = vcmp.lt.f32.partialorder %v4319, 0.0
    %vm4437 = vcmp.lt.f32.partialorder %v4320, 0.0
    %vm4438 = vmand %vm4432, %vm4435
    %vm4439 = vmand %vm4433, %vm4436
    %vm4440 = vmand %vm4434, %vm4437
    %v4441 = vsel %vm4438, 1.0, 0.0
    %v4442 = vsel %vm4439, 1.0, 0.0
    %v4443 = vsel %vm4440, 1.0, 0.0
    %vm4444 = vcmp.ge.f32.partialorder %v4318, 0.0
    %vm4445 = vcmp.ge.f32.partialorder %v4319, 0.0
    %vm4446 = vcmp.ge.f32.partialorder %v4320, 0.0
    %vm4447 = vcmp.lt.f32.partialorder %v4321, 0.0
    %vm4448 = vcmp.lt.f32.partialorder %v4322, 0.0
    %vm4449 = vcmp.lt.f32.partialorder %v4323, 0.0
    %vm4450 = vmand %vm4444, %vm4447
    %vm4451 = vmand %vm4445, %vm4448
    %vm4452 = vmand %vm4446, %vm4449
    %v4453 = vsel %vm4450, 1.0, 0.0
    %v4454 = vsel %vm4451, 1.0, 0.0
    %v4455 = vsel %vm4452, 1.0, 0.0
    %v4456 = vmul.f32 %v4288, %v4333
    %v4457 = vmul.f32 %v4289, %v4334
    %v4458 = vmul.f32 %v4290, %v4335
    %v4459 = vmul.f32 %v4291, %v4345
    %v4460 = vmul.f32 %v4292, %v4346
    %v4461 = vmul.f32 %v4293, %v4347
    %v4462 = vmul.f32 %v4294, %v4357
    %v4463 = vmul.f32 %v4295, %v4358
    %v4464 = vmul.f32 %v4296, %v4359
    %v4465 = vmul.f32 %v4297, %v4369
    %v4466 = vmul.f32 %v4298, %v4370
    %v4467 = vmul.f32 %v4299, %v4371
    %v4468 = vmul.f32 %v4300, %v4381
    %v4469 = vmul.f32 %v4301, %v4382
    %v4470 = vmul.f32 %v4302, %v4383
    %v4471 = vmul.f32 %v4303, %v4393
    %v4472 = vmul.f32 %v4304, %v4394
    %v4473 = vmul.f32 %v4305, %v4395
    %v4474 = vmul.f32 %v4306, %v4405
    %v4475 = vmul.f32 %v4307, %v4406
    %v4476 = vmul.f32 %v4308, %v4407
    %v4477 = vmul.f32 %v4309, %v4417
    %v4478 = vmul.f32 %v4310, %v4418
    %v4479 = vmul.f32 %v4311, %v4419
    %v4480 = vmul.f32 %v4312, %v4429
    %v4481 = vmul.f32 %v4313, %v4430
    %v4482 = vmul.f32 %v4314, %v4431
    %v4483 = vmul.f32 %v4315, %v4441
    %v4484 = vmul.f32 %v4316, %v4442
    %v4485 = vmul.f32 %v4317, %v4443
    %v4486 = vmul.f32 %v4318, %v4453
    %v4487 = vmul.f32 %v4319, %v4454
    %v4488 = vmul.f32 %v4320, %v4455
    %v4489 = vmul.f32 %v4345, 0.4
    %v4490 = vmul.f32 %v4346, 0.4
    %v4491 = vmul.f32 %v4347, 0.4
    %v4492 = vadd.f32 %v4456, %v4489
    %v4493 = vadd.f32 %v4457, %v4490
    %v4494 = vadd.f32 %v4458, %v4491
    %v4495 = vsub.f32 %v4492, %v4459
    %v4496 = vsub.f32 %v4493, %v4460
    %v4497 = vsub.f32 %v4494, %v4461
    %v4498 = vmul.f32 %v4495, 2.5
    %v4499 = vmul.f32 %v4496, 2.5
    %v4500 = vmul.f32 %v4497, 2.5
    %v4501 = vmul.f32 %v4357, 0.4
    %v4502 = vmul.f32 %v4358, 0.4
    %v4503 = vmul.f32 %v4359, 0.4
    %v4504 = vadd.f32 %v4459, %v4501
    %v4505 = vadd.f32 %v4460, %v4502
    %v4506 = vadd.f32 %v4461, %v4503
    %v4507 = vsub.f32 %v4504, %v4462
    %v4508 = vsub.f32 %v4505, %v4463
    %v4509 = vsub.f32 %v4506, %v4464
    %v4510 = vmul.f32 %v4507, 2.5
    %v4511 = vmul.f32 %v4508, 2.5
    %v4512 = vmul.f32 %v4509, 2.5
    %v4513 = vmul.f32 %v4369, 0.4
    %v4514 = vmul.f32 %v4370, 0.4
    %v4515 = vmul.f32 %v4371, 0.4
    %v4516 = vadd.f32 %v4462, %v4513
    %v4517 = vadd.f32 %v4463, %v4514
    %v4518 = vadd.f32 %v4464, %v4515
    %v4519 = vsub.f32 %v4516, %v4465
    %v4520 = vsub.f32 %v4517, %v4466
    %v4521 = vsub.f32 %v4518, %v4467
    %v4522 = vmul.f32 %v4519, 2.5
    %v4523 = vmul.f32 %v4520, 2.5
    %v4524 = vmul.f32 %v4521, 2.5
    %v4525 = vmul.f32 %v4381, 0.4
    %v4526 = vmul.f32 %v4382, 0.4
    %v4527 = vmul.f32 %v4383, 0.4
    %v4528 = vadd.f32 %v4465, %v4525
    %v4529 = vadd.f32 %v4466, %v4526
    %v4530 = vadd.f32 %v4467, %v4527
    %v4531 = vsub.f32 %v4528, %v4468
    %v4532 = vsub.f32 %v4529, %v4469
    %v4533 = vsub.f32 %v4530, %v4470
    %v4534 = vmul.f32 %v4531, 2.5
    %v4535 = vmul.f32 %v4532, 2.5
    %v4536 = vmul.f32 %v4533, 2.5
    %v4537 = vmul.f32 %v4393, 0.4
    %v4538 = vmul.f32 %v4394, 0.4
    %v4539 = vmul.f32 %v4395, 0.4
    %v4540 = vadd.f32 %v4468, %v4537
    %v4541 = vadd.f32 %v4469, %v4538
    %v4542 = vadd.f32 %v4470, %v4539
    %v4543 = vsub.f32 %v4540, %v4471
    %v4544 = vsub.f32 %v4541, %v4472
    %v4545 = vsub.f32 %v4542, %v4473
    %v4546 = vmul.f32 %v4543, 2.5
    %v4547 = vmul.f32 %v4544, 2.5
    %v4548 = vmul.f32 %v4545, 2.5
    %v4549 = vmul.f32 %v4405, 0.4
    %v4550 = vmul.f32 %v4406, 0.4
    %v4551 = vmul.f32 %v4407, 0.4
    %v4552 = vadd.f32 %v4471, %v4549
    %v4553 = vadd.f32 %v4472, %v4550
    %v4554 = vadd.f32 %v4473, %v4551
    %v4555 = vsub.f32 %v4552, %v4474
    %v4556 = vsub.f32 %v4553, %v4475
    %v4557 = vsub.f32 %v4554, %v4476
    %v4558 = vmul.f32 %v4555, 2.5
    %v4559 = vmul.f32 %v4556, 2.5
    %v4560 = vmul.f32 %v4557, 2.5
    %v4561 = vmul.f32 %v4417, 0.4
    %v4562 = vmul.f32 %v4418, 0.4
    %v4563 = vmul.f32 %v4419, 0.4
    %v4564 = vadd.f32 %v4474, %v4561
    %v4565 = vadd.f32 %v4475, %v4562
    %v4566 = vadd.f32 %v4476, %v4563
    %v4567 = vsub.f32 %v4564, %v4477
    %v4568 = vsub.f32 %v4565, %v4478
    %v4569 = vsub.f32 %v4566, %v4479
    %v4570 = vmul.f32 %v4567, 2.5
    %v4571 = vmul.f32 %v4568, 2.5
    %v4572 = vmul.f32 %v4569, 2.5
    %v4573 = vmul.f32 %v4429, 0.4
    %v4574 = vmul.f32 %v4430, 0.4
    %v4575 = vmul.f32 %v4431, 0.4
    %v4576 = vadd.f32 %v4477, %v4573
    %v4577 = vadd.f32 %v4478, %v4574
    %v4578 = vadd.f32 %v4479, %v4575
    %v4579 = vsub.f32 %v4576, %v4480
    %v4580 = vsub.f32 %v4577, %v4481
    %v4581 = vsub.f32 %v4578, %v4482
    %v4582 = vmul.f32 %v4579, 2.5
    %v4583 = vmul.f32 %v4580, 2.5
    %v4584 = vmul.f32 %v4581, 2.5
    %v4585 = vmul.f32 %v4441, 0.4
    %v4586 = vmul.f32 %v4442, 0.4
    %v4587 = vmul.f32 %v4443, 0.4
    %v4588 = vadd.f32 %v4480, %v4585
    %v4589 = vadd.f32 %v4481, %v4586
    %v4590 = vadd.f32 %v4482, %v4587
    %v4591 = vsub.f32 %v4588, %v4483
    %v4592 = vsub.f32 %v4589, %v4484
    %v4593 = vsub.f32 %v4590, %v4485
    %v4594 = vmul.f32 %v4591, 2.5
    %v4595 = vmul.f32 %v4592, 2.5
    %v4596 = vmul.f32 %v4593, 2.5
    %v4597 = vmul.f32 %v4453, 0.4
    %v4598 = vmul.f32 %v4454, 0.4
    %v4599 = vmul.f32 %v4455, 0.4
    %v4600 = vadd.f32 %v4483, %v4597
    %v4601 = vadd.f32 %v4484, %v4598
    %v4602 = vadd.f32 %v4485, %v4599
    %v4603 = vsub.f32 %v4600, %v4486
    %v4604 = vsub.f32 %v4601, %v4487
    %v4605 = vsub.f32 %v4602, %v4488
    %v4606 = vmul.f32 %v4603, 2.5
    %v4607 = vmul.f32 %v4604, 2.5
    %v4608 = vmul.f32 %v4605, 2.5
    %v4609 = vmul.f32 %v4288, %v4498
    %v4610 = vmul.f32 %v4289, %v4499
    %v4611 = vmul.f32 %v4290, %v4500
    %v4612 = vmul.f32 %v4291, %v4510
    %v4613 = vmul.f32 %v4292, %v4511
    %v4614 = vmul.f32 %v4293, %v4512
    %v4615 = vmul.f32 %v4294, %v4522
    %v4616 = vmul.f32 %v4295, %v4523
    %v4617 = vmul.f32 %v4296, %v4524
    %v4618 = vmul.f32 %v4297, %v4534
    %v4619 = vmul.f32 %v4298, %v4535
    %v4620 = vmul.f32 %v4299, %v4536
    %v4621 = vmul.f32 %v4300, %v4546
    %v4622 = vmul.f32 %v4301, %v4547
    %v4623 = vmul.f32 %v4302, %v4548
    %v4624 = vmul.f32 %v4303, %v4558
    %v4625 = vmul.f32 %v4304, %v4559
    %v4626 = vmul.f32 %v4305, %v4560
    %v4627 = vmul.f32 %v4306, %v4570
    %v4628 = vmul.f32 %v4307, %v4571
    %v4629 = vmul.f32 %v4308, %v4572
    %v4630 = vmul.f32 %v4309, %v4582
    %v4631 = vmul.f32 %v4310, %v4583
    %v4632 = vmul.f32 %v4311, %v4584
    %v4633 = vmul.f32 %v4312, %v4594
    %v4634 = vmul.f32 %v4313, %v4595
    %v4635 = vmul.f32 %v4314, %v4596
    %v4636 = vmul.f32 %v4315, %v4606
    %v4637 = vmul.f32 %v4316, %v4607
    %v4638 = vmul.f32 %v4317, %v4608
    %v4639 = vmul.f32 %v4510, 0.8
    %v4640 = vmul.f32 %v4511, 0.8
    %v4641 = vmul.f32 %v4512, 0.8
    %v4642 = vadd.f32 %v4609, %v4639
    %v4643 = vadd.f32 %v4610, %v4640
    %v4644 = vadd.f32 %v4611, %v4641
    %v4645 = vsub.f32 %v4642, %v4612
    %v4646 = vsub.f32 %v4643, %v4613
    %v4647 = vsub.f32 %v4644, %v4614
    %v4648 = vmul.f32 %v4645, 1.25
    %v4649 = vmul.f32 %v4646, 1.25
    %v4650 = vmul.f32 %v4647, 1.25
    %v4651 = vmul.f32 %v4522, 0.8
    %v4652 = vmul.f32 %v4523, 0.8
    %v4653 = vmul.f32 %v4524, 0.8
    %v4654 = vadd.f32 %v4612, %v4651
    %v4655 = vadd.f32 %v4613, %v4652
    %v4656 = vadd.f32 %v4614, %v4653
    %v4657 = vsub.f32 %v4654, %v4615
    %v4658 = vsub.f32 %v4655, %v4616
    %v4659 = vsub.f32 %v4656, %v4617
    %v4660 = vmul.f32 %v4657, 1.25
    %v4661 = vmul.f32 %v4658, 1.25
    %v4662 = vmul.f32 %v4659, 1.25
    %v4663 = vmul.f32 %v4534, 0.8
    %v4664 = vmul.f32 %v4535, 0.8
    %v4665 = vmul.f32 %v4536, 0.8
    %v4666 = vadd.f32 %v4615, %v4663
    %v4667 = vadd.f32 %v4616, %v4664
    %v4668 = vadd.f32 %v4617, %v4665
    %v4669 = vsub.f32 %v4666, %v4618
    %v4670 = vsub.f32 %v4667, %v4619
    %v4671 = vsub.f32 %v4668, %v4620
    %v4672 = vmul.f32 %v4669, 1.25
    %v4673 = vmul.f32 %v4670, 1.25
    %v4674 = vmul.f32 %v4671, 1.25
    %v4675 = vmul.f32 %v4546, 0.8
    %v4676 = vmul.f32 %v4547, 0.8
    %v4677 = vmul.f32 %v4548, 0.8
    %v4678 = vadd.f32 %v4618, %v4675
    %v4679 = vadd.f32 %v4619, %v4676
    %v4680 = vadd.f32 %v4620, %v4677
    %v4681 = vsub.f32 %v4678, %v4621
    %v4682 = vsub.f32 %v4679, %v4622
    %v4683 = vsub.f32 %v4680, %v4623
    %v4684 = vmul.f32 %v4681, 1.25
    %v4685 = vmul.f32 %v4682, 1.25
    %v4686 = vmul.f32 %v4683, 1.25
    %v4687 = vmul.f32 %v4558, 0.8
    %v4688 = vmul.f32 %v4559, 0.8
    %v4689 = vmul.f32 %v4560, 0.8
    %v4690 = vadd.f32 %v4621, %v4687
    %v4691 = vadd.f32 %v4622, %v4688
    %v4692 = vadd.f32 %v4623, %v4689
    %v4693 = vsub.f32 %v4690, %v4624
    %v4694 = vsub.f32 %v4691, %v4625
    %v4695 = vsub.f32 %v4692, %v4626
    %v4696 = vmul.f32 %v4693, 1.25
    %v4697 = vmul.f32 %v4694, 1.25
    %v4698 = vmul.f32 %v4695, 1.25
    %v4699 = vmul.f32 %v4570, 0.8
    %v4700 = vmul.f32 %v4571, 0.8
    %v4701 = vmul.f32 %v4572, 0.8
    %v4702 = vadd.f32 %v4624, %v4699
    %v4703 = vadd.f32 %v4625, %v4700
    %v4704 = vadd.f32 %v4626, %v4701
    %v4705 = vsub.f32 %v4702, %v4627
    %v4706 = vsub.f32 %v4703, %v4628
    %v4707 = vsub.f32 %v4704, %v4629
    %v4708 = vmul.f32 %v4705, 1.25
    %v4709 = vmul.f32 %v4706, 1.25
    %v4710 = vmul.f32 %v4707, 1.25
    %v4711 = vmul.f32 %v4582, 0.8
    %v4712 = vmul.f32 %v4583, 0.8
    %v4713 = vmul.f32 %v4584, 0.8
    %v4714 = vadd.f32 %v4627, %v4711
    %v4715 = vadd.f32 %v4628, %v4712
    %v4716 = vadd.f32 %v4629, %v4713
    %v4717 = vsub.f32 %v4714, %v4630
    %v4718 = vsub.f32 %v4715, %v4631
    %v4719 = vsub.f32 %v4716, %v4632
    %v4720 = vmul.f32 %v4717, 1.25
    %v4721 = vmul.f32 %v4718, 1.25
    %v4722 = vmul.f32 %v4719, 1.25
    %v4723 = vmul.f32 %v4594, 0.8
    %v4724 = vmul.f32 %v4595, 0.8
    %v4725 = vmul.f32 %v4596, 0.8
    %v4726 = vadd.f32 %v4630, %v4723
    %v4727 = vadd.f32 %v4631, %v4724
    %v4728 = vadd.f32 %v4632, %v4725
    %v4729 = vsub.f32 %v4726, %v4633
    %v4730 = vsub.f32 %v4727, %v4634
    %v4731 = vsub.f32 %v4728, %v4635
    %v4732 = vmul.f32 %v4729, 1.25
    %v4733 = vmul.f32 %v4730, 1.25
    %v4734 = vmul.f32 %v4731, 1.25
    %v4735 = vmul.f32 %v4606, 0.8
    %v4736 = vmul.f32 %v4607, 0.8
    %v4737 = vmul.f32 %v4608, 0.8
    %v4738 = vadd.f32 %v4633, %v4735
    %v4739 = vadd.f32 %v4634, %v4736
    %v4740 = vadd.f32 %v4635, %v4737
    %v4741 = vsub.f32 %v4738, %v4636
    %v4742 = vsub.f32 %v4739, %v4637
    %v4743 = vsub.f32 %v4740, %v4638
    %v4744 = vmul.f32 %v4741, 1.25
    %v4745 = vmul.f32 %v4742, 1.25
    %v4746 = vmul.f32 %v4743, 1.25
    %v4747 = vmul.f32 %v4288, %v4648
    %v4748 = vmul.f32 %v4289, %v4649
    %v4749 = vmul.f32 %v4290, %v4650
    %v4750 = vmul.f32 %v4291, %v4660
    %v4751 = vmul.f32 %v4292, %v4661
    %v4752 = vmul.f32 %v4293, %v4662
    %v4753 = vmul.f32 %v4294, %v4672
    %v4754 = vmul.f32 %v4295, %v4673
    %v4755 = vmul.f32 %v4296, %v4674
    %v4756 = vmul.f32 %v4297, %v4684
    %v4757 = vmul.f32 %v4298, %v4685
    %v4758 = vmul.f32 %v4299, %v4686
    %v4759 = vmul.f32 %v4300, %v4696
    %v4760 = vmul.f32 %v4301, %v4697
    %v4761 = vmul.f32 %v4302, %v4698
    %v4762 = vmul.f32 %v4303, %v4708
    %v4763 = vmul.f32 %v4304, %v4709
    %v4764 = vmul.f32 %v4305, %v4710
    %v4765 = vmul.f32 %v4306, %v4720
    %v4766 = vmul.f32 %v4307, %v4721
    %v4767 = vmul.f32 %v4308, %v4722
    %v4768 = vmul.f32 %v4309, %v4732
    %v4769 = vmul.f32 %v4310, %v4733
    %v4770 = vmul.f32 %v4311, %v4734
    %v4771 = vmul.f32 %v4312, %v4744
    %v4772 = vmul.f32 %v4313, %v4745
    %v4773 = vmul.f32 %v4314, %v4746
    %v4774 = vmul.f32 %v4660, 1.2
    %v4775 = vmul.f32 %v4661, 1.2
    %v4776 = vmul.f32 %v4662, 1.2
    %v4777 = vadd.f32 %v4747, %v4774
    %v4778 = vadd.f32 %v4748, %v4775
    %v4779 = vadd.f32 %v4749, %v4776
    %v4780 = vsub.f32 %v4777, %v4750
    %v4781 = vsub.f32 %v4778, %v4751
    %v4782 = vsub.f32 %v4779, %v4752
    %v4783 = vmul.f32 %v4780, 0.8333333
    %v4784 = vmul.f32 %v4781, 0.8333333
    %v4785 = vmul.f32 %v4782, 0.8333333
    %v4786 = vmul.f32 %v4672, 1.2
    %v4787 = vmul.f32 %v4673, 1.2
    %v4788 = vmul.f32 %v4674, 1.2
    %v4789 = vadd.f32 %v4750, %v4786
    %v4790 = vadd.f32 %v4751, %v4787
    %v4791 = vadd.f32 %v4752, %v4788
    %v4792 = vsub.f32 %v4789, %v4753
    %v4793 = vsub.f32 %v4790, %v4754
    %v4794 = vsub.f32 %v4791, %v4755
    %v4795 = vmul.f32 %v4792, 0.8333333
    %v4796 = vmul.f32 %v4793, 0.8333333
    %v4797 = vmul.f32 %v4794, 0.8333333
    %v4798 = vmul.f32 %v4684, 1.2
    %v4799 = vmul.f32 %v4685, 1.2
    %v4800 = vmul.f32 %v4686, 1.2
    %v4801 = vadd.f32 %v4753, %v4798
    %v4802 = vadd.f32 %v4754, %v4799
    %v4803 = vadd.f32 %v4755, %v4800
    %v4804 = vsub.f32 %v4801, %v4756
    %v4805 = vsub.f32 %v4802, %v4757
    %v4806 = vsub.f32 %v4803, %v4758
    %v4807 = vmul.f32 %v4804, 0.8333333
    %v4808 = vmul.f32 %v4805, 0.8333333
    %v4809 = vmul.f32 %v4806, 0.8333333
    %v4810 = vmul.f32 %v4696, 1.2
    %v4811 = vmul.f32 %v4697, 1.2
    %v4812 = vmul.f32 %v4698, 1.2
    %v4813 = vadd.f32 %v4756, %v4810
    %v4814 = vadd.f32 %v4757, %v4811
    %v4815 = vadd.f32 %v4758, %v4812
    %v4816 = vsub.f32 %v4813, %v4759
    %v4817 = vsub.f32 %v4814, %v4760
    %v4818 = vsub.f32 %v4815, %v4761
    %v4819 = vmul.f32 %v4816, 0.8333333
    %v4820 = vmul.f32 %v4817, 0.8333333
    %v4821 = vmul.f32 %v4818, 0.8333333
    %v4822 = vmul.f32 %v4708, 1.2
    %v4823 = vmul.f32 %v4709, 1.2
    %v4824 = vmul.f32 %v4710, 1.2
    %v4825 = vadd.f32 %v4759, %v4822
    %v4826 = vadd.f32 %v4760, %v4823
    %v4827 = vadd.f32 %v4761, %v4824
    %v4828 = vsub.f32 %v4825, %v4762
    %v4829 = vsub.f32 %v4826, %v4763
    %v4830 = vsub.f32 %v4827, %v4764
    %v4831 = vmul.f32 %v4828, 0.8333333
    %v4832 = vmul.f32 %v4829, 0.8333333
    %v4833 = vmul.f32 %v4830, 0.8333333
    %v4834 = vmul.f32 %v4720, 1.2
    %v4835 = vmul.f32 %v4721, 1.2
    %v4836 = vmul.f32 %v4722, 1.2
    %v4837 = vadd.f32 %v4762, %v4834
    %v4838 = vadd.f32 %v4763, %v4835
    %v4839 = vadd.f32 %v4764, %v4836
    %v4840 = vsub.f32 %v4837, %v4765
    %v4841 = vsub.f32 %v4838, %v4766
    %v4842 = vsub.f32 %v4839, %v4767
    %v4843 = vmul.f32 %v4840, 0.8333333
    %v4844 = vmul.f32 %v4841, 0.8333333
    %v4845 = vmul.f32 %v4842, 0.8333333
    %v4846 = vmul.f32 %v4732, 1.2
    %v4847 = vmul.f32 %v4733, 1.2
    %v4848 = vmul.f32 %v4734, 1.2
    %v4849 = vadd.f32 %v4765, %v4846
    %v4850 = vadd.f32 %v4766, %v4847
    %v4851 = vadd.f32 %v4767, %v4848
    %v4852 = vsub.f32 %v4849, %v4768
    %v4853 = vsub.f32 %v4850, %v4769
    %v4854 = vsub.f32 %v4851, %v4770
    %v4855 = vmul.f32 %v4852, 0.8333333
    %v4856 = vmul.f32 %v4853, 0.8333333
    %v4857 = vmul.f32 %v4854, 0.8333333
    %v4858 = vmul.f32 %v4744, 1.2
    %v4859 = vmul.f32 %v4745, 1.2
    %v4860 = vmul.f32 %v4746, 1.2
    %v4861 = vadd.f32 %v4768, %v4858
    %v4862 = vadd.f32 %v4769, %v4859
    %v4863 = vadd.f32 %v4770, %v4860
    %v4864 = vsub.f32 %v4861, %v4771
    %v4865 = vsub.f32 %v4862, %v4772
    %v4866 = vsub.f32 %v4863, %v4773
    %v4867 = vmul.f32 %v4864, 0.8333333
    %v4868 = vmul.f32 %v4865, 0.8333333
    %v4869 = vmul.f32 %v4866, 0.8333333
    %v4870 = vpack.c.bf16 %v4783, %v4783
    %v4871 = vpack.c.bf16 %v4784, %v4784
    %v4872 = vpack.c.bf16 %v4785, %v4785
    %v4876 = vunpack.c.l.b16 %v4870
    %v4877 = vunpack.c.l.b16 %v4871
    %v4878 = vunpack.c.l.b16 %v4872
    %v4879 = vpack.c.b16 %v4877, %v4876
    %v4880 = vpack.c.b16 %v4878, %v4878
    %4883 = vst [vmem:[#allocation7 + $0xc] sm:$0xff] %v4879
    %4884 = vst [vmem:[#allocation7 + $0x14] sm:$0xf] %v4880
    %v4885 = vpack.c.bf16 %v4795, %v4795
    %v4886 = vpack.c.bf16 %v4796, %v4796
    %v4887 = vpack.c.bf16 %v4797, %v4797
    %v4891 = vunpack.c.l.b16 %v4885
    %v4892 = vunpack.c.l.b16 %v4886
    %v4893 = vunpack.c.l.b16 %v4887
    %v4894 = vpack.c.b16 %v4892, %v4891
    %v4895 = vpack.c.b16 %v4893, %v4893
    %4898 = vst [vmem:[#allocation7 + $0x18] sm:$0xff] %v4894
    %4899 = vst [vmem:[#allocation7 + $0x20] sm:$0xf] %v4895
    %v4900 = vpack.c.bf16 %v4807, %v4807
    %v4901 = vpack.c.bf16 %v4808, %v4808
    %v4902 = vpack.c.bf16 %v4809, %v4809
    %v4906 = vunpack.c.l.b16 %v4900
    %v4907 = vunpack.c.l.b16 %v4901
    %v4908 = vunpack.c.l.b16 %v4902
    %v4909 = vpack.c.b16 %v4907, %v4906
    %v4910 = vpack.c.b16 %v4908, %v4908
    %4913 = vst [vmem:[#allocation7 + $0x24] sm:$0xff] %v4909
    %4914 = vst [vmem:[#allocation7 + $0x2c] sm:$0xf] %v4910
    %v4915 = vpack.c.bf16 %v4819, %v4819
    %v4916 = vpack.c.bf16 %v4820, %v4820
    %v4917 = vpack.c.bf16 %v4821, %v4821
    %v4921 = vunpack.c.l.b16 %v4915
    %v4922 = vunpack.c.l.b16 %v4916
    %v4923 = vunpack.c.l.b16 %v4917
    %v4924 = vpack.c.b16 %v4922, %v4921
    %v4925 = vpack.c.b16 %v4923, %v4923
    %4928 = vst [vmem:[#allocation7 + $0x30] sm:$0xff] %v4924
    %4929 = vst [vmem:[#allocation7 + $0x38] sm:$0xf] %v4925
    %v4930 = vpack.c.bf16 %v4831, %v4831
    %v4931 = vpack.c.bf16 %v4832, %v4832
    %v4932 = vpack.c.bf16 %v4833, %v4833
    %v4936 = vunpack.c.l.b16 %v4930
    %v4937 = vunpack.c.l.b16 %v4931
    %v4938 = vunpack.c.l.b16 %v4932
    %v4939 = vpack.c.b16 %v4937, %v4936
    %v4940 = vpack.c.b16 %v4938, %v4938
    %4943 = vst [vmem:[#allocation7 + $0x3c] sm:$0xff] %v4939
    %4944 = vst [vmem:[#allocation7 + $0x44] sm:$0xf] %v4940
    %v4945 = vpack.c.bf16 %v4843, %v4843
    %v4946 = vpack.c.bf16 %v4844, %v4844
    %v4947 = vpack.c.bf16 %v4845, %v4845
    %v4951 = vunpack.c.l.b16 %v4945
    %v4952 = vunpack.c.l.b16 %v4946
    %v4953 = vunpack.c.l.b16 %v4947
    %v4954 = vpack.c.b16 %v4952, %v4951
    %v4955 = vpack.c.b16 %v4953, %v4953
    %4958 = vst [vmem:[#allocation7 + $0x48] sm:$0xff] %v4954
    %4959 = vst [vmem:[#allocation7 + $0x50] sm:$0xf] %v4955
    %v4960 = vpack.c.bf16 %v4855, %v4855
    %v4961 = vpack.c.bf16 %v4856, %v4856
    %v4962 = vpack.c.bf16 %v4857, %v4857
    %v4966 = vunpack.c.l.b16 %v4960
    %v4967 = vunpack.c.l.b16 %v4961
    %v4968 = vunpack.c.l.b16 %v4962
    %v4969 = vpack.c.b16 %v4967, %v4966
    %v4970 = vpack.c.b16 %v4968, %v4968
    %4973 = vst [vmem:[#allocation7 + $0x54] sm:$0xff] %v4969
    %4974 = vst [vmem:[#allocation7 + $0x5c] sm:$0xf] %v4970
    %v4975 = vpack.c.bf16 %v4867, %v4867
    %v4976 = vpack.c.bf16 %v4868, %v4868
    %v4977 = vpack.c.bf16 %v4869, %v4869
    %v4981 = vunpack.c.l.b16 %v4975
    %v4982 = vunpack.c.l.b16 %v4976
    %v4983 = vunpack.c.l.b16 %v4977
    %v4984 = vpack.c.b16 %v4982, %v4981
    %v4985 = vpack.c.b16 %v4983, %v4983
    %4988 = vst [vmem:[#allocation7 + $0x60] sm:$0xff] %v4984
    %4989 = vst [vmem:[#allocation7 + $0x68] sm:$0xf] %v4985
    %v4990 = vld [vmem:[#allocation7] sm:$0xff]
    %v4991 = vld [vmem:[#allocation7 + $0x8] sm:$0xff]
    %v4992 = vld [vmem:[#allocation7 + $0x10] sm:$0xff]
    %v4993 = vld [vmem:[#allocation7 + $0x18] sm:$0xff]
    %v4994 = vld [vmem:[#allocation7 + $0x20] sm:$0xff]
    %v4995 = vld [vmem:[#allocation7 + $0x28] sm:$0xff]
    %v4996 = vld [vmem:[#allocation7 + $0x30] sm:$0xff]
    %v4997 = vld [vmem:[#allocation7 + $0x38] sm:$0xff]
    %v4998 = vld [vmem:[#allocation7 + $0x40] sm:$0xff]
    %v4999 = vld [vmem:[#allocation7 + $0x48] sm:$0xff]
    %v5000 = vld [vmem:[#allocation7 + $0x50] sm:$0xff]
    %v5001 = vld [vmem:[#allocation7 + $0x58] sm:$0xff]
    %v5002 = vld [vmem:[#allocation7 + $0x60] sm:$0xff]
    %v5003 = vld [vmem:[#allocation7 + $0x68] sm:$0xf]
    %v5004 = vld [vmem:[#allocation3] sm:$0xff]
    %v5005 = vld [vmem:[#allocation3 + $0x8] sm:$0xff]
    %v5006 = vld [vmem:[#allocation3 + $0x10] sm:$0xff]
    %v5007 = vld [vmem:[#allocation3 + $0x18] sm:$0xff]
    %v5008 = vld [vmem:[#allocation3 + $0x20] sm:$0xff]
    %v5009 = vld [vmem:[#allocation3 + $0x28] sm:$0xff]
    %v5010 = vld [vmem:[#allocation3 + $0x30] sm:$0xff]
    %v5011 = vld [vmem:[#allocation3 + $0x38] sm:$0xff]
    %v5012 = vld [vmem:[#allocation3 + $0x40] sm:$0xff]
    %v5013 = vld [vmem:[#allocation3 + $0x48] sm:$0xff]
    %v5014 = vld [vmem:[#allocation3 + $0x50] sm:$0xff]
    %v5015 = vld [vmem:[#allocation3 + $0x58] sm:$0xff]
    %v5016 = vld [vmem:[#allocation3 + $0x60] sm:$0xff]
    %v5017 = vld [vmem:[#allocation3 + $0x68] sm:$0xff]
    %v5018 = vld [vmem:[#allocation3 + $0x70] sm:$0xff]
    %v5019 = vld [vmem:[#allocation3 + $0x78] sm:$0xff]
    %v5020 = vld [vmem:[#allocation3 + $0x80] sm:$0xff]
    %v5021 = vld [vmem:[#allocation3 + $0x88] sm:$0xff]
    %v5022 = vld [vmem:[#allocation3 + $0x90] sm:$0xff]
    %v5023 = vld [vmem:[#allocation3 + $0x98] sm:$0xff]
    %v5024 = vld [vmem:[#allocation3 + $0xa0] sm:$0xff]
    %v5025 = vld [vmem:[#allocation3 + $0xa8] sm:$0xff]
    %v5026 = vld [vmem:[#allocation3 + $0xb0] sm:$0xff]
    %v5027 = vld [vmem:[#allocation3 + $0xb8] sm:$0xff]
    %v5028 = vld [vmem:[#allocation3 + $0xc0] sm:$0xff]
    %v5029 = vld [vmem:[#allocation3 + $0xc8] sm:$0xff]
    %v5030 = vld [vmem:[#allocation3 + $0xd0] sm:$0xff]
    %v5031 = vld [vmem:[#allocation3 + $0xd8] sm:$0xff]
    %v5032 = vld [vmem:[#allocation3 + $0xe0] sm:$0xff]
    %v5033 = vld [vmem:[#allocation3 + $0xe8] sm:$0xff]
    %v5034 = vld [vmem:[#allocation3 + $0xf0] sm:$0xff]
    %v5035 = vld [vmem:[#allocation3 + $0xf8] sm:$0xff]
    %v5036 = vld [vmem:[#allocation3 + $0x100] sm:$0xff]
    %v5037 = vld [vmem:[#allocation3 + $0x108] sm:$0xff]
    %v5038 = vld [vmem:[#allocation3 + $0x110] sm:$0xff]
    %v5039 = vld [vmem:[#allocation3 + $0x118] sm:$0xff]
    %v5040 = vld [vmem:[#allocation3 + $0x120] sm:$0xff]
    %v5041 = vld [vmem:[#allocation3 + $0x128] sm:$0xff]
    %v5042 = vld [vmem:[#allocation3 + $0x130] sm:$0xff]
    %v5043 = vld [vmem:[#allocation3 + $0x138] sm:$0xff]
    %v5044 = vld [vmem:[#allocation3 + $0x140] sm:$0xff]
    %v5045 = vld [vmem:[#allocation3 + $0x148] sm:$0xff]
    %v5046 = vld [vmem:[#allocation3 + $0x150] sm:$0xff]
    %v5047 = vld [vmem:[#allocation3 + $0x158] sm:$0xff]
    %v5048 = vld [vmem:[#allocation3 + $0x160] sm:$0xff]
    %v5049 = vld [vmem:[#allocation3 + $0x168] sm:$0xff]
    %v5050 = vld [vmem:[#allocation3 + $0x170] sm:$0xff]
    %v5051 = vld [vmem:[#allocation3 + $0x178] sm:$0xff]
    %v5052 = vld [vmem:[#allocation3 + $0x180] sm:$0xff]
    %v5053 = vld [vmem:[#allocation3 + $0x188] sm:$0xff]
    %v5054 = vld [vmem:[#allocation3 + $0x190] sm:$0xff]
    %v5055 = vld [vmem:[#allocation3 + $0x198] sm:$0xff]
    %v5056 = vld [vmem:[#allocation3 + $0x1a0] sm:$0xff]
    %v5057 = vld [vmem:[#allocation3 + $0x1a8] sm:$0xff]
    %v5058 = vld [vmem:[#allocation3 + $0x1b0] sm:$0xff]
    %v5059 = vld [vmem:[#allocation3 + $0x1b8] sm:$0xff]
    %v5060 = vld [vmem:[#allocation3 + $0x1c0] sm:$0xff]
    %v5061 = vld [vmem:[#allocation3 + $0x1c8] sm:$0xff]
    %v5062 = vld [vmem:[#allocation3 + $0x1d0] sm:$0xff]
    %v5063 = vld [vmem:[#allocation3 + $0x1d8] sm:$0xff]
    %v5064 = vld [vmem:[#allocation3 + $0x1e0] sm:$0xff]
    %v5065 = vld [vmem:[#allocation3 + $0x1e8] sm:$0xff]
    %v5066 = vld [vmem:[#allocation3 + $0x1f0] sm:$0xff]
    %v5067 = vld [vmem:[#allocation3 + $0x1f8] sm:$0xff]
    %v5068 = vld [vmem:[#allocation3 + $0x200] sm:$0xff]
    %v5069 = vld [vmem:[#allocation3 + $0x208] sm:$0xff]
    %v5070 = vld [vmem:[#allocation3 + $0x210] sm:$0xff]
    %v5071 = vld [vmem:[#allocation3 + $0x218] sm:$0xff]
    %v5072 = vld [vmem:[#allocation3 + $0x220] sm:$0xff]
    %v5073 = vld [vmem:[#allocation3 + $0x228] sm:$0xff]
    %v5074 = vld [vmem:[#allocation3 + $0x230] sm:$0xff]
    %v5075 = vld [vmem:[#allocation3 + $0x238] sm:$0xff]
    %v5076 = vld [vmem:[#allocation3 + $0x240] sm:$0xff]
    %v5077 = vld [vmem:[#allocation3 + $0x248] sm:$0xff]
    %v5078 = vld [vmem:[#allocation3 + $0x250] sm:$0xff]
    %v5079 = vld [vmem:[#allocation3 + $0x258] sm:$0xff]
    %v5080 = vld [vmem:[#allocation3 + $0x260] sm:$0xff]
    %v5081 = vld [vmem:[#allocation3 + $0x268] sm:$0xff]
    %v5082 = vld [vmem:[#allocation3 + $0x270] sm:$0xff]
    %v5083 = vld [vmem:[#allocation3 + $0x278] sm:$0xff]
    %v5084 = vld [vmem:[#allocation3 + $0x280] sm:$0xff]
    %v5085 = vld [vmem:[#allocation3 + $0x288] sm:$0xff]
    %v5086 = vld [vmem:[#allocation3 + $0x290] sm:$0xff]
    %v5087 = vld [vmem:[#allocation3 + $0x298] sm:$0xff]
    %v5088 = vld [vmem:[#allocation3 + $0x2a0] sm:$0xff]
    %v5089 = vld [vmem:[#allocation3 + $0x2a8] sm:$0xff]
    %v5090 = vld [vmem:[#allocation3 + $0x2b0] sm:$0xff]
    %v5091 = vld [vmem:[#allocation3 + $0x2b8] sm:$0xff]
    %v5092 = vld [vmem:[#allocation3 + $0x2c0] sm:$0xff]
    %v5093 = vld [vmem:[#allocation3 + $0x2c8] sm:$0xff]
    %v5094 = vld [vmem:[#allocation3 + $0x2d0] sm:$0xff]
    %v5095 = vld [vmem:[#allocation3 + $0x2d8] sm:$0xff]
    %v5096 = vld [vmem:[#allocation3 + $0x2e0] sm:$0xff]
    %v5097 = vld [vmem:[#allocation3 + $0x2e8] sm:$0xff]
    %v5098 = vld [vmem:[#allocation3 + $0x2f0] sm:$0xff]
    %v5099 = vld [vmem:[#allocation3 + $0x2f8] sm:$0xff]
    %v5100 = vld [vmem:[#allocation3 + $0x300] sm:$0xff]
    %v5101 = vld [vmem:[#allocation3 + $0x308] sm:$0xff]
    %v5102 = vld [vmem:[#allocation3 + $0x310] sm:$0xff]
    %v5103 = vld [vmem:[#allocation3 + $0x318] sm:$0xff]
    %v5104 = vld [vmem:[#allocation3 + $0x320] sm:$0xff]
    %v5105 = vld [vmem:[#allocation3 + $0x328] sm:$0xff]
    %v5106 = vld [vmem:[#allocation3 + $0x330] sm:$0xff]
    %v5107 = vld [vmem:[#allocation3 + $0x338] sm:$0xff]
    %v5108 = vld [vmem:[#allocation3 + $0x340] sm:$0xff]
    %v5109 = vld [vmem:[#allocation3 + $0x348] sm:$0xff]
    %v5110 = vld [vmem:[#allocation3 + $0x350] sm:$0xff]
    %v5111 = vld [vmem:[#allocation3 + $0x358] sm:$0xff]
    %v5112 = vld [vmem:[#allocation3 + $0x360] sm:$0xff]
    %v5113 = vld [vmem:[#allocation3 + $0x368] sm:$0xff]
    %v5114 = vld [vmem:[#allocation3 + $0x370] sm:$0xff]
    %v5115 = vld [vmem:[#allocation3 + $0x378] sm:$0xff]
    %v5116 = vld [vmem:[#allocation3 + $0x380] sm:$0xff]
    %v5117 = vld [vmem:[#allocation3 + $0x388] sm:$0xff]
    %v5118 = vld [vmem:[#allocation3 + $0x390] sm:$0xff]
    %v5119 = vld [vmem:[#allocation3 + $0x398] sm:$0xff]
    %v5120 = vld [vmem:[#allocation3 + $0x3a0] sm:$0xff]
    %v5121 = vld [vmem:[#allocation3 + $0x3a8] sm:$0xff]
    %v5122 = vld [vmem:[#allocation3 + $0x3b0] sm:$0xff]
    %v5123 = vld [vmem:[#allocation3 + $0x3b8] sm:$0xff]
    %v5124 = vld [vmem:[#allocation3 + $0x3c0] sm:$0xff]
    %v5125 = vld [vmem:[#allocation3 + $0x3c8] sm:$0xff]
    %v5126 = vld [vmem:[#allocation3 + $0x3d0] sm:$0xff]
    %v5127 = vld [vmem:[#allocation3 + $0x3d8] sm:$0xff]
    %v5128 = vld [vmem:[#allocation3 + $0x3e0] sm:$0xff]
    %v5129 = vld [vmem:[#allocation3 + $0x3e8] sm:$0xff]
    %v5130 = vld [vmem:[#allocation3 + $0x3f0] sm:$0xff]
    %v5131 = vld [vmem:[#allocation3 + $0x3f8] sm:$0xff]
    %v5132 = vld [vmem:[#allocation3 + $0x400] sm:$0xff]
    %v5133 = vld [vmem:[#allocation3 + $0x408] sm:$0xff]
    %v5134 = vld [vmem:[#allocation3 + $0x410] sm:$0xff]
    %v5135 = vld [vmem:[#allocation3 + $0x418] sm:$0xff]
    %v5136 = vld [vmem:[#allocation3 + $0x420] sm:$0xff]
    %v5137 = vld [vmem:[#allocation3 + $0x428] sm:$0xff]
    %v5138 = vld [vmem:[#allocation3 + $0x430] sm:$0xff]
    %v5139 = vld [vmem:[#allocation3 + $0x438] sm:$0xff]
    %v5140 = vld [vmem:[#allocation3 + $0x440] sm:$0xff]
    %v5141 = vld [vmem:[#allocation3 + $0x448] sm:$0xff]
    %v5142 = vld [vmem:[#allocation3 + $0x450] sm:$0xff]
    %v5143 = vld [vmem:[#allocation3 + $0x458] sm:$0xff]
    %v5144 = vld [vmem:[#allocation3 + $0x460] sm:$0xff]
    %v5145 = vld [vmem:[#allocation3 + $0x468] sm:$0xff]
    %v5146 = vld [vmem:[#allocation3 + $0x470] sm:$0xff]
    %v5147 = vld [vmem:[#allocation3 + $0x478] sm:$0xff]
    %v5148 = vld [vmem:[#allocation3 + $0x480] sm:$0xff]
    %v5149 = vld [vmem:[#allocation3 + $0x488] sm:$0xff]
    %v5150 = vld [vmem:[#allocation3 + $0x490] sm:$0xff]
    %v5151 = vld [vmem:[#allocation3 + $0x498] sm:$0xff]
    %v5152 = vld [vmem:[#allocation3 + $0x4a0] sm:$0xff]
    %v5153 = vld [vmem:[#allocation3 + $0x4a8] sm:$0xff]
    %v5154 = vld [vmem:[#allocation3 + $0x4b0] sm:$0xff]
    %v5155 = vld [vmem:[#allocation3 + $0x4b8] sm:$0xff]
    %v5156 = vld [vmem:[#allocation3 + $0x4c0] sm:$0xff]
    %v5157 = vld [vmem:[#allocation3 + $0x4c8] sm:$0xff]
    %v5158 = vld [vmem:[#allocation3 + $0x4d0] sm:$0xff]
    %v5159 = vld [vmem:[#allocation3 + $0x4d8] sm:$0xff]
    %v5160 = vld [vmem:[#allocation3 + $0x4e0] sm:$0xff]
    %v5161 = vld [vmem:[#allocation3 + $0x4e8] sm:$0xff]
    %v5162 = vld [vmem:[#allocation3 + $0x4f0] sm:$0xff]
    %v5163 = vld [vmem:[#allocation3 + $0x4f8] sm:$0xff]
    %v5164 = vld [vmem:[#allocation3 + $0x500] sm:$0xff]
    %v5165 = vld [vmem:[#allocation3 + $0x508] sm:$0xff]
    %v5166 = vld [vmem:[#allocation3 + $0x510] sm:$0xff]
    %v5167 = vld [vmem:[#allocation3 + $0x518] sm:$0xff]
    %v5168 = vld [vmem:[#allocation3 + $0x520] sm:$0xff]
    %v5169 = vld [vmem:[#allocation3 + $0x528] sm:$0xff]
    %v5170 = vld [vmem:[#allocation3 + $0x530] sm:$0xff]
    %v5171 = vld [vmem:[#allocation3 + $0x538] sm:$0xff]
    %v5172 = vld [vmem:[#allocation3 + $0x540] sm:$0xff]
    %v5173 = vld [vmem:[#allocation3 + $0x548] sm:$0xff]
    %v5174 = vld [vmem:[#allocation3 + $0x550] sm:$0xff]
    %v5175 = vld [vmem:[#allocation3 + $0x558] sm:$0xff]
    %v5176 = vld [vmem:[#allocation3 + $0x560] sm:$0xff]
    %v5177 = vld [vmem:[#allocation3 + $0x568] sm:$0xff]
    %v5178 = vld [vmem:[#allocation3 + $0x570] sm:$0xff]
    %v5179 = vld [vmem:[#allocation3 + $0x578] sm:$0xff]
    %v5180 = vld [vmem:[#allocation3 + $0x580] sm:$0xff]
    %v5181 = vld [vmem:[#allocation3 + $0x588] sm:$0xff]
    %v5182 = vld [vmem:[#allocation3 + $0x590] sm:$0xff]
    %v5183 = vld [vmem:[#allocation3 + $0x598] sm:$0xff]
    %v5184 = vld [vmem:[#allocation3 + $0x5a0] sm:$0xff]
    %v5185 = vld [vmem:[#allocation3 + $0x5a8] sm:$0xff]
    %v5186 = vld [vmem:[#allocation3 + $0x5b0] sm:$0xff]
    %v5187 = vld [vmem:[#allocation3 + $0x5b8] sm:$0xff]
    %v5188 = vld [vmem:[#allocation3 + $0x5c0] sm:$0xff]
    %v5189 = vld [vmem:[#allocation3 + $0x5c8] sm:$0xff]
    %v5190 = vld [vmem:[#allocation3 + $0x5d0] sm:$0xff]
    %v5191 = vld [vmem:[#allocation3 + $0x5d8] sm:$0xff]
    %v5192 = vld [vmem:[#allocation3 + $0x5e0] sm:$0xff]
    %v5193 = vld [vmem:[#allocation3 + $0x5e8] sm:$0xff]
    %v5194 = vld [vmem:[#allocation3 + $0x5f0] sm:$0xff]
    %v5195 = vld [vmem:[#allocation3 + $0x5f8] sm:$0xff]
    %v5196 = vld [vmem:[#allocation3 + $0x600] sm:$0xff]
    %v5197 = vld [vmem:[#allocation3 + $0x608] sm:$0xff]
    %v5198 = vld [vmem:[#allocation3 + $0x610] sm:$0xff]
    %v5199 = vld [vmem:[#allocation3 + $0x618] sm:$0xff]
    %v5200 = vld [vmem:[#allocation3 + $0x620] sm:$0xff]
    %v5201 = vld [vmem:[#allocation3 + $0x628] sm:$0xff]
    %v5202 = vld [vmem:[#allocation3 + $0x630] sm:$0xff]
    %v5203 = vld [vmem:[#allocation3 + $0x638] sm:$0xff]
    %v5204 = vld [vmem:[#allocation3 + $0x640] sm:$0xff]
    %v5205 = vld [vmem:[#allocation3 + $0x648] sm:$0xff]
    %v5206 = vld [vmem:[#allocation3 + $0x650] sm:$0xff]
    %v5207 = vld [vmem:[#allocation3 + $0x658] sm:$0xff]
    %v5208 = vld [vmem:[#allocation3 + $0x660] sm:$0xff]
    %v5209 = vld [vmem:[#allocation3 + $0x668] sm:$0xff]
    %v5210 = vld [vmem:[#allocation3 + $0x670] sm:$0xff]
    %v5211 = vld [vmem:[#allocation3 + $0x678] sm:$0xff]
    %v5212 = vld [vmem:[#allocation3 + $0x680] sm:$0xff]
    %v5213 = vld [vmem:[#allocation3 + $0x688] sm:$0xff]
    %v5214 = vld [vmem:[#allocation3 + $0x690] sm:$0xff]
    %v5215 = vld [vmem:[#allocation3 + $0x698] sm:$0xff]
    %v5216 = vld [vmem:[#allocation3 + $0x6a0] sm:$0xff]
    %v5217 = vld [vmem:[#allocation3 + $0x6a8] sm:$0xff]
    %v5218 = vld [vmem:[#allocation3 + $0x6b0] sm:$0xff]
    %v5219 = vld [vmem:[#allocation3 + $0x6b8] sm:$0xff]
    %v5234 = vunpack.c.l.b16 %v4990
    %v5235 = vunpack.c.h.b16 %v4990
    %v5236 = vunpack.c.l.b16 %v4991
    %v5237 = vunpack.c.h.b16 %v4991
    %v5238 = vunpack.c.l.b16 %v4992
    %v5239 = vunpack.c.h.b16 %v4992
    %v5240 = vunpack.c.l.b16 %v4993
    %v5241 = vunpack.c.h.b16 %v4993
    %v5242 = vunpack.c.l.b16 %v4994
    %v5243 = vunpack.c.h.b16 %v4994
    %v5244 = vunpack.c.l.b16 %v4995
    %v5245 = vunpack.c.h.b16 %v4995
    %v5246 = vunpack.c.l.b16 %v4996
    %v5247 = vunpack.c.h.b16 %v4996
    %v5248 = vunpack.c.l.b16 %v4997
    %v5249 = vunpack.c.h.b16 %v4997
    %v5250 = vunpack.c.l.b16 %v4998
    %v5251 = vunpack.c.h.b16 %v4998
    %v5252 = vunpack.c.l.b16 %v4999
    %v5253 = vunpack.c.h.b16 %v4999
    %v5254 = vunpack.c.l.b16 %v5000
    %v5255 = vunpack.c.h.b16 %v5000
    %v5256 = vunpack.c.l.b16 %v5001
    %v5257 = vunpack.c.h.b16 %v5001
    %v5258 = vunpack.c.l.b16 %v5002
    %v5259 = vunpack.c.h.b16 %v5002
    %v5260 = vunpack.c.l.b16 %v5003
    %v5261 = vpack.c.b16 %v5234, %v5234
    %v5262 = vpack.c.b16 %v5235, %v5235
    %v5263 = vpack.c.b16 %v5236, %v5236
    %v5264 = vpack.c.b16 %v5237, %v5237
    %v5265 = vpack.c.b16 %v5238, %v5238
    %v5266 = vpack.c.b16 %v5239, %v5239
    %v5267 = vpack.c.b16 %v5240, %v5240
    %v5268 = vpack.c.b16 %v5241, %v5241
    %v5269 = vpack.c.b16 %v5242, %v5242
    %v5270 = vpack.c.b16 %v5243, %v5243
    %v5271 = vpack.c.b16 %v5244, %v5244
    %v5272 = vpack.c.b16 %v5245, %v5245
    %v5273 = vpack.c.b16 %v5246, %v5246
    %v5274 = vpack.c.b16 %v5247, %v5247
    %v5275 = vpack.c.b16 %v5248, %v5248
    %v5276 = vpack.c.b16 %v5249, %v5249
    %v5277 = vpack.c.b16 %v5250, %v5250
    %v5278 = vpack.c.b16 %v5251, %v5251
    %v5279 = vpack.c.b16 %v5252, %v5252
    %v5280 = vpack.c.b16 %v5253, %v5253
    %v5281 = vpack.c.b16 %v5254, %v5254
    %v5282 = vpack.c.b16 %v5255, %v5255
    %v5283 = vpack.c.b16 %v5256, %v5256
    %v5284 = vpack.c.b16 %v5257, %v5257
    %v5285 = vpack.c.b16 %v5258, %v5258
    %v5286 = vpack.c.b16 %v5259, %v5259
    %v5287 = vpack.c.b16 %v5260, %v5260
    %5315 = vmatprep.subr.bf16.mxu0 0
    %5316 = vmatpush1.bf16.msra.mxu0 %v5004
    %5317 = vmatprep.subr.bf16.mxu0 0
    %5318 = vmatpush1.bf16.msra.mxu0 %v5005
    %5319 = vmatprep.subr.bf16.mxu0 0
    %5320 = vmatpush1.bf16.msra.mxu0 %v5006
    %5321 = vmatprep.subr.bf16.mxu0 0
    %5322 = vmatpush1.bf16.msra.mxu0 %v5007
    %5323 = vmatprep.subr.bf16.mxu0 0
    %5324 = vmatpush1.bf16.msra.mxu0 %v5008
    %5325 = vmatprep.subr.bf16.mxu0 0
    %5326 = vmatpush1.bf16.msra.mxu0 %v5009
    %5327 = vmatprep.subr.bf16.mxu0 0
    %5328 = vmatpush1.bf16.msra.mxu0 %v5010
    %5329 = vmatprep.subr.bf16.mxu0 0
    %5330 = vmatpush1.bf16.msra.mxu0 %v5011
    %5331 = vmatprep.subr.bf16.mxu0 0
    %5332 = vmatpush1.bf16.msra.mxu0 %v5012
    %5333 = vmatprep.subr.bf16.mxu0 0
    %5334 = vmatpush1.bf16.msra.mxu0 %v5013
    %5335 = vmatprep.subr.bf16.mxu0 0
    %5336 = vmatpush1.bf16.msra.mxu0 %v5014
    %5337 = vmatprep.subr.bf16.mxu0 0
    %5338 = vmatpush1.bf16.msra.mxu0 %v5015
    %5339 = vmatprep.subr.bf16.mxu0 0
    %5340 = vmatpush1.bf16.msra.mxu0 %v5016
    %5341 = vmatprep.subr.bf16.mxu0 0
    %5342 = vmatpush1.bf16.msra.mxu0 %v5017
    %5343 = vmatprep.subr.bf16.mxu0 0
    %5344 = vmatpush1.bf16.msra.mxu0 %v5018
    %5345 = vmatprep.subr.bf16.mxu0 0
    %5346 = vmatpush1.bf16.msra.mxu0 %v5019
    %5347 = vmatprep.mubr.bf16.mxu0 %v5262
    %5348 = vmatmul.mubr.bf16.gmra.mrb[0].mxu0 %v5261
    %v5349 = vpop.f32.mrb[0].mxu0
    %v5350 = vadd.f32 0.0, %v5349
    %v5351 = vpop.f32.mrb[0].mxu0
    %v5352 = vpop.f32.mrb[0].mxu0
    %v5353 = vpop.f32.mrb[0].mxu0
    %5354 = vdwg.mxu0
    %5355 = vmatprep.subr.bf16.mxu0 0
    %5356 = vmatpush1.bf16.msra.mxu0 %v5020
    %5357 = vmatprep.subr.bf16.mxu0 0
    %5358 = vmatpush1.bf16.msra.mxu0 %v5021
    %5359 = vmatprep.subr.bf16.mxu0 0
    %5360 = vmatpush1.bf16.msra.mxu0 %v5022
    %5361 = vmatprep.subr.bf16.mxu0 0
    %5362 = vmatpush1.bf16.msra.mxu0 %v5023
    %5363 = vmatprep.subr.bf16.mxu0 0
    %5364 = vmatpush1.bf16.msra.mxu0 %v5024
    %5365 = vmatprep.subr.bf16.mxu0 0
    %5366 = vmatpush1.bf16.msra.mxu0 %v5025
    %5367 = vmatprep.subr.bf16.mxu0 0
    %5368 = vmatpush1.bf16.msra.mxu0 %v5026
    %5369 = vmatprep.subr.bf16.mxu0 0
    %5370 = vmatpush1.bf16.msra.mxu0 %v5027
    %5371 = vmatprep.subr.bf16.mxu0 0
    %5372 = vmatpush1.bf16.msra.mxu0 %v5028
    %5373 = vmatprep.subr.bf16.mxu0 0
    %5374 = vmatpush1.bf16.msra.mxu0 %v5029
    %5375 = vmatprep.subr.bf16.mxu0 0
    %5376 = vmatpush1.bf16.msra.mxu0 %v5030
    %5377 = vmatprep.subr.bf16.mxu0 0
    %5378 = vmatpush1.bf16.msra.mxu0 %v5031
    %5379 = vmatprep.subr.bf16.mxu0 0
    %5380 = vmatpush1.bf16.msra.mxu0 %v5032
    %5381 = vmatprep.subr.bf16.mxu0 0
    %5382 = vmatpush1.bf16.msra.mxu0 %v5033
    %5383 = vmatprep.subr.bf16.mxu0 0
    %5384 = vmatpush1.bf16.msra.mxu0 %v5034
    %5385 = vmatprep.subr.bf16.mxu0 0
    %5386 = vmatpush1.bf16.msra.mxu0 %v5035
    %5387 = vmatprep.mubr.bf16.mxu0 %v5264
    %5388 = vmatmul.mubr.bf16.gmra.mrb[0].mxu0 %v5263
    %v5389 = vpop.f32.mrb[0].mxu0
    %v5390 = vadd.f32 %v5350, %v5389
    %v5391 = vpop.f32.mrb[0].mxu0
    %v5392 = vpop.f32.mrb[0].mxu0
    %v5393 = vpop.f32.mrb[0].mxu0
    %5394 = vdwg.mxu0
    %5395 = vmatprep.subr.bf16.mxu0 0
    %5396 = vmatpush1.bf16.msra.mxu0 %v5036
    %5397 = vmatprep.subr.bf16.mxu0 0
    %5398 = vmatpush1.bf16.msra.mxu0 %v5037
    %5399 = vmatprep.subr.bf16.mxu0 0
    %5400 = vmatpush1.bf16.msra.mxu0 %v5038
    %5401 = vmatprep.subr.bf16.mxu0 0
    %5402 = vmatpush1.bf16.msra.mxu0 %v5039
    %5403 = vmatprep.subr.bf16.mxu0 0
    %5404 = vmatpush1.bf16.msra.mxu0 %v5040
    %5405 = vmatprep.subr.bf16.mxu0 0
    %5406 = vmatpush1.bf16.msra.mxu0 %v5041
    %5407 = vmatprep.subr.bf16.mxu0 0
    %5408 = vmatpush1.bf16.msra.mxu0 %v5042
    %5409 = vmatprep.subr.bf16.mxu0 0
    %5410 = vmatpush1.bf16.msra.mxu0 %v5043
    %5411 = vmatprep.subr.bf16.mxu0 0
    %5412 = vmatpush1.bf16.msra.mxu0 %v5044
    %5413 = vmatprep.subr.bf16.mxu0 0
    %5414 = vmatpush1.bf16.msra.mxu0 %v5045
    %5415 = vmatprep.subr.bf16.mxu0 0
    %5416 = vmatpush1.bf16.msra.mxu0 %v5046
    %5417 = vmatprep.subr.bf16.mxu0 0
    %5418 = vmatpush1.bf16.msra.mxu0 %v5047
    %5419 = vmatprep.subr.bf16.mxu0 0
    %5420 = vmatpush1.bf16.msra.mxu0 %v5048
    %5421 = vmatprep.subr.bf16.mxu0 0
    %5422 = vmatpush1.bf16.msra.mxu0 %v5049
    %5423 = vmatprep.subr.bf16.mxu0 0
    %5424 = vmatpush1.bf16.msra.mxu0 %v5050
    %5425 = vmatprep.subr.bf16.mxu0 0
    %5426 = vmatpush1.bf16.msra.mxu0 %v5051
    %5427 = vmatprep.mubr.bf16.mxu0 %v5266
    %5428 = vmatmul.mubr.bf16.gmra.mrb[0].mxu0 %v5265
    %v5429 = vpop.f32.mrb[0].mxu0
    %v5430 = vadd.f32 %v5390, %v5429
    %v5431 = vpop.f32.mrb[0].mxu0
    %v5432 = vpop.f32.mrb[0].mxu0
    %v5433 = vpop.f32.mrb[0].mxu0
    %5434 = vdwg.mxu0
    %5435 = vmatprep.subr.bf16.mxu0 0
    %5436 = vmatpush1.bf16.msra.mxu0 %v5052
    %5437 = vmatprep.subr.bf16.mxu0 0
    %5438 = vmatpush1.bf16.msra.mxu0 %v5053
    %5439 = vmatprep.subr.bf16.mxu0 0
    %5440 = vmatpush1.bf16.msra.mxu0 %v5054
    %5441 = vmatprep.subr.bf16.mxu0 0
    %5442 = vmatpush1.bf16.msra.mxu0 %v5055
    %5443 = vmatprep.subr.bf16.mxu0 0
    %5444 = vmatpush1.bf16.msra.mxu0 %v5056
    %5445 = vmatprep.subr.bf16.mxu0 0
    %5446 = vmatpush1.bf16.msra.mxu0 %v5057
    %5447 = vmatprep.subr.bf16.mxu0 0
    %5448 = vmatpush1.bf16.msra.mxu0 %v5058
    %5449 = vmatprep.subr.bf16.mxu0 0
    %5450 = vmatpush1.bf16.msra.mxu0 %v5059
    %5451 = vmatprep.subr.bf16.mxu0 0
    %5452 = vmatpush1.bf16.msra.mxu0 %v5060
    %5453 = vmatprep.subr.bf16.mxu0 0
    %5454 = vmatpush1.bf16.msra.mxu0 %v5061
    %5455 = vmatprep.subr.bf16.mxu0 0
    %5456 = vmatpush1.bf16.msra.mxu0 %v5062
    %5457 = vmatprep.subr.bf16.mxu0 0
    %5458 = vmatpush1.bf16.msra.mxu0 %v5063
    %5459 = vmatprep.subr.bf16.mxu0 0
    %5460 = vmatpush1.bf16.msra.mxu0 %v5064
    %5461 = vmatprep.subr.bf16.mxu0 0
    %5462 = vmatpush1.bf16.msra.mxu0 %v5065
    %5463 = vmatprep.subr.bf16.mxu0 0
    %5464 = vmatpush1.bf16.msra.mxu0 %v5066
    %5465 = vmatprep.subr.bf16.mxu0 0
    %5466 = vmatpush1.bf16.msra.mxu0 %v5067
    %5467 = vmatprep.mubr.bf16.mxu0 %v5268
    %5468 = vmatmul.mubr.bf16.gmra.mrb[0].mxu0 %v5267
    %v5469 = vpop.f32.mrb[0].mxu0
    %v5470 = vadd.f32 %v5430, %v5469
    %v5471 = vpop.f32.mrb[0].mxu0
    %v5472 = vpop.f32.mrb[0].mxu0
    %v5473 = vpop.f32.mrb[0].mxu0
    %5474 = vdwg.mxu0
    %5475 = vmatprep.subr.bf16.mxu0 0
    %5476 = vmatpush1.bf16.msra.mxu0 %v5068
    %5477 = vmatprep.subr.bf16.mxu0 0
    %5478 = vmatpush1.bf16.msra.mxu0 %v5069
    %5479 = vmatprep.subr.bf16.mxu0 0
    %5480 = vmatpush1.bf16.msra.mxu0 %v5070
    %5481 = vmatprep.subr.bf16.mxu0 0
    %5482 = vmatpush1.bf16.msra.mxu0 %v5071
    %5483 = vmatprep.subr.bf16.mxu0 0
    %5484 = vmatpush1.bf16.msra.mxu0 %v5072
    %5485 = vmatprep.subr.bf16.mxu0 0
    %5486 = vmatpush1.bf16.msra.mxu0 %v5073
    %5487 = vmatprep.subr.bf16.mxu0 0
    %5488 = vmatpush1.bf16.msra.mxu0 %v5074
    %5489 = vmatprep.subr.bf16.mxu0 0
    %5490 = vmatpush1.bf16.msra.mxu0 %v5075
    %5491 = vmatprep.subr.bf16.mxu0 0
    %5492 = vmatpush1.bf16.msra.mxu0 %v5076
    %5493 = vmatprep.subr.bf16.mxu0 0
    %5494 = vmatpush1.bf16.msra.mxu0 %v5077
    %5495 = vmatprep.subr.bf16.mxu0 0
    %5496 = vmatpush1.bf16.msra.mxu0 %v5078
    %5497 = vmatprep.subr.bf16.mxu0 0
    %5498 = vmatpush1.bf16.msra.mxu0 %v5079
    %5499 = vmatprep.subr.bf16.mxu0 0
    %5500 = vmatpush1.bf16.msra.mxu0 %v5080
    %5501 = vmatprep.subr.bf16.mxu0 0
    %5502 = vmatpush1.bf16.msra.mxu0 %v5081
    %5503 = vmatprep.subr.bf16.mxu0 0
    %5504 = vmatpush1.bf16.msra.mxu0 %v5082
    %5505 = vmatprep.subr.bf16.mxu0 0
    %5506 = vmatpush1.bf16.msra.mxu0 %v5083
    %5507 = vmatprep.mubr.bf16.mxu0 %v5270
    %5508 = vmatmul.mubr.bf16.gmra.mrb[0].mxu0 %v5269
    %v5509 = vpop.f32.mrb[0].mxu0
    %v5510 = vadd.f32 %v5470, %v5509
    %v5511 = vpop.f32.mrb[0].mxu0
    %v5512 = vpop.f32.mrb[0].mxu0
    %v5513 = vpop.f32.mrb[0].mxu0
    %5514 = vdwg.mxu0
    %5515 = vmatprep.subr.bf16.mxu0 0
    %5516 = vmatpush1.bf16.msra.mxu0 %v5084
    %5517 = vmatprep.subr.bf16.mxu0 0
    %5518 = vmatpush1.bf16.msra.mxu0 %v5085
    %5519 = vmatprep.subr.bf16.mxu0 0
    %5520 = vmatpush1.bf16.msra.mxu0 %v5086
    %5521 = vmatprep.subr.bf16.mxu0 0
    %5522 = vmatpush1.bf16.msra.mxu0 %v5087
    %5523 = vmatprep.subr.bf16.mxu0 0
    %5524 = vmatpush1.bf16.msra.mxu0 %v5088
    %5525 = vmatprep.subr.bf16.mxu0 0
    %5526 = vmatpush1.bf16.msra.mxu0 %v5089
    %5527 = vmatprep.subr.bf16.mxu0 0
    %5528 = vmatpush1.bf16.msra.mxu0 %v5090
    %5529 = vmatprep.subr.bf16.mxu0 0
    %5530 = vmatpush1.bf16.msra.mxu0 %v5091
    %5531 = vmatprep.subr.bf16.mxu0 0
    %5532 = vmatpush1.bf16.msra.mxu0 %v5092
    %5533 = vmatprep.subr.bf16.mxu0 0
    %5534 = vmatpush1.bf16.msra.mxu0 %v5093
    %5535 = vmatprep.subr.bf16.mxu0 0
    %5536 = vmatpush1.bf16.msra.mxu0 %v5094
    %5537 = vmatprep.subr.bf16.mxu0 0
    %5538 = vmatpush1.bf16.msra.mxu0 %v5095
    %5539 = vmatprep.subr.bf16.mxu0 0
    %5540 = vmatpush1.bf16.msra.mxu0 %v5096
    %5541 = vmatprep.subr.bf16.mxu0 0
    %5542 = vmatpush1.bf16.msra.mxu0 %v5097
    %5543 = vmatprep.subr.bf16.mxu0 0
    %5544 = vmatpush1.bf16.msra.mxu0 %v5098
    %5545 = vmatprep.subr.bf16.mxu0 0
    %5546 = vmatpush1.bf16.msra.mxu0 %v5099
    %5547 = vmatprep.mubr.bf16.mxu0 %v5272
    %5548 = vmatmul.mubr.bf16.gmra.mrb[0].mxu0 %v5271
    %v5549 = vpop.f32.mrb[0].mxu0
    %v5550 = vadd.f32 %v5510, %v5549
    %v5551 = vpop.f32.mrb[0].mxu0
    %v5552 = vpop.f32.mrb[0].mxu0
    %v5553 = vpop.f32.mrb[0].mxu0
    %5554 = vdwg.mxu0
    %5555 = vmatprep.subr.bf16.mxu0 0
    %5556 = vmatpush1.bf16.msra.mxu0 %v5100
    %5557 = vmatprep.subr.bf16.mxu0 0
    %5558 = vmatpush1.bf16.msra.mxu0 %v5101
    %5559 = vmatprep.subr.bf16.mxu0 0
    %5560 = vmatpush1.bf16.msra.mxu0 %v5102
    %5561 = vmatprep.subr.bf16.mxu0 0
    %5562 = vmatpush1.bf16.msra.mxu0 %v5103
    %5563 = vmatprep.subr.bf16.mxu0 0
    %5564 = vmatpush1.bf16.msra.mxu0 %v5104
    %5565 = vmatprep.subr.bf16.mxu0 0
    %5566 = vmatpush1.bf16.msra.mxu0 %v5105
    %5567 = vmatprep.subr.bf16.mxu0 0
    %5568 = vmatpush1.bf16.msra.mxu0 %v5106
    %5569 = vmatprep.subr.bf16.mxu0 0
    %5570 = vmatpush1.bf16.msra.mxu0 %v5107
    %5571 = vmatprep.subr.bf16.mxu0 0
    %5572 = vmatpush1.bf16.msra.mxu0 %v5108
    %5573 = vmatprep.subr.bf16.mxu0 0
    %5574 = vmatpush1.bf16.msra.mxu0 %v5109
    %5575 = vmatprep.subr.bf16.mxu0 0
    %5576 = vmatpush1.bf16.msra.mxu0 %v5110
    %5577 = vmatprep.subr.bf16.mxu0 0
    %5578 = vmatpush1.bf16.msra.mxu0 %v5111
    %5579 = vmatprep.subr.bf16.mxu0 0
    %5580 = vmatpush1.bf16.msra.mxu0 %v5112
    %5581 = vmatprep.subr.bf16.mxu0 0
    %5582 = vmatpush1.bf16.msra.mxu0 %v5113
    %5583 = vmatprep.subr.bf16.mxu0 0
    %5584 = vmatpush1.bf16.msra.mxu0 %v5114
    %5585 = vmatprep.subr.bf16.mxu0 0
    %5586 = vmatpush1.bf16.msra.mxu0 %v5115
    %5587 = vmatprep.mubr.bf16.mxu0 %v5274
    %5588 = vmatmul.mubr.bf16.gmra.mrb[0].mxu0 %v5273
    %v5589 = vpop.f32.mrb[0].mxu0
    %v5590 = vadd.f32 %v5550, %v5589
    %v5591 = vpop.f32.mrb[0].mxu0
    %v5592 = vpop.f32.mrb[0].mxu0
    %v5593 = vpop.f32.mrb[0].mxu0
    %5594 = vdwg.mxu0
    %5595 = vmatprep.subr.bf16.mxu0 0
    %5596 = vmatpush1.bf16.msra.mxu0 %v5116
    %5597 = vmatprep.subr.bf16.mxu0 0
    %5598 = vmatpush1.bf16.msra.mxu0 %v5117
    %5599 = vmatprep.subr.bf16.mxu0 0
    %5600 = vmatpush1.bf16.msra.mxu0 %v5118
    %5601 = vmatprep.subr.bf16.mxu0 0
    %5602 = vmatpush1.bf16.msra.mxu0 %v5119
    %5603 = vmatprep.subr.bf16.mxu0 0
    %5604 = vmatpush1.bf16.msra.mxu0 %v5120
    %5605 = vmatprep.subr.bf16.mxu0 0
    %5606 = vmatpush1.bf16.msra.mxu0 %v5121
    %5607 = vmatprep.subr.bf16.mxu0 0
    %5608 = vmatpush1.bf16.msra.mxu0 %v5122
    %5609 = vmatprep.subr.bf16.mxu0 0
    %5610 = vmatpush1.bf16.msra.mxu0 %v5123
    %5611 = vmatprep.subr.bf16.mxu0 0
    %5612 = vmatpush1.bf16.msra.mxu0 %v5124
    %5613 = vmatprep.subr.bf16.mxu0 0
    %5614 = vmatpush1.bf16.msra.mxu0 %v5125
    %5615 = vmatprep.subr.bf16.mxu0 0
    %5616 = vmatpush1.bf16.msra.mxu0 %v5126
    %5617 = vmatprep.subr.bf16.mxu0 0
    %5618 = vmatpush1.bf16.msra.mxu0 %v5127
    %5619 = vmatprep.subr.bf16.mxu0 0
    %5620 = vmatpush1.bf16.msra.mxu0 %v5128
    %5621 = vmatprep.subr.bf16.mxu0 0
    %5622 = vmatpush1.bf16.msra.mxu0 %v5129
    %5623 = vmatprep.subr.bf16.mxu0 0
    %5624 = vmatpush1.bf16.msra.mxu0 %v5130
    %5625 = vmatprep.subr.bf16.mxu0 0
    %5626 = vmatpush1.bf16.msra.mxu0 %v5131
    %5627 = vmatprep.mubr.bf16.mxu0 %v5276
    %5628 = vmatmul.mubr.bf16.gmra.mrb[0].mxu0 %v5275
    %v5629 = vpop.f32.mrb[0].mxu0
    %v5630 = vadd.f32 %v5590, %v5629
    %v5631 = vpop.f32.mrb[0].mxu0
    %v5632 = vpop.f32.mrb[0].mxu0
    %v5633 = vpop.f32.mrb[0].mxu0
    %5634 = vdwg.mxu0
    %5635 = vmatprep.subr.bf16.mxu0 0
    %5636 = vmatpush1.bf16.msra.mxu0 %v5132
    %5637 = vmatprep.subr.bf16.mxu0 0
    %5638 = vmatpush1.bf16.msra.mxu0 %v5133
    %5639 = vmatprep.subr.bf16.mxu0 0
    %5640 = vmatpush1.bf16.msra.mxu0 %v5134
    %5641 = vmatprep.subr.bf16.mxu0 0
    %5642 = vmatpush1.bf16.msra.mxu0 %v5135
    %5643 = vmatprep.subr.bf16.mxu0 0
    %5644 = vmatpush1.bf16.msra.mxu0 %v5136
    %5645 = vmatprep.subr.bf16.mxu0 0
    %5646 = vmatpush1.bf16.msra.mxu0 %v5137
    %5647 = vmatprep.subr.bf16.mxu0 0
    %5648 = vmatpush1.bf16.msra.mxu0 %v5138
    %5649 = vmatprep.subr.bf16.mxu0 0
    %5650 = vmatpush1.bf16.msra.mxu0 %v5139
    %5651 = vmatprep.subr.bf16.mxu0 0
    %5652 = vmatpush1.bf16.msra.mxu0 %v5140
    %5653 = vmatprep.subr.bf16.mxu0 0
    %5654 = vmatpush1.bf16.msra.mxu0 %v5141
    %5655 = vmatprep.subr.bf16.mxu0 0
    %5656 = vmatpush1.bf16.msra.mxu0 %v5142
    %5657 = vmatprep.subr.bf16.mxu0 0
    %5658 = vmatpush1.bf16.msra.mxu0 %v5143
    %5659 = vmatprep.subr.bf16.mxu0 0
    %5660 = vmatpush1.bf16.msra.mxu0 %v5144
    %5661 = vmatprep.subr.bf16.mxu0 0
    %5662 = vmatpush1.bf16.msra.mxu0 %v5145
    %5663 = vmatprep.subr.bf16.mxu0 0
    %5664 = vmatpush1.bf16.msra.mxu0 %v5146
    %5665 = vmatprep.subr.bf16.mxu0 0
    %5666 = vmatpush1.bf16.msra.mxu0 %v5147
    %5667 = vmatprep.mubr.bf16.mxu0 %v5278
    %5668 = vmatmul.mubr.bf16.gmra.mrb[0].mxu0 %v5277
    %v5669 = vpop.f32.mrb[0].mxu0
    %v5670 = vadd.f32 %v5630, %v5669
    %v5671 = vpop.f32.mrb[0].mxu0
    %v5672 = vpop.f32.mrb[0].mxu0
    %v5673 = vpop.f32.mrb[0].mxu0
    %5674 = vdwg.mxu0
    %5675 = vmatprep.subr.bf16.mxu0 0
    %5676 = vmatpush1.bf16.msra.mxu0 %v5148
    %5677 = vmatprep.subr.bf16.mxu0 0
    %5678 = vmatpush1.bf16.msra.mxu0 %v5149
    %5679 = vmatprep.subr.bf16.mxu0 0
    %5680 = vmatpush1.bf16.msra.mxu0 %v5150
    %5681 = vmatprep.subr.bf16.mxu0 0
    %5682 = vmatpush1.bf16.msra.mxu0 %v5151
    %5683 = vmatprep.subr.bf16.mxu0 0
    %5684 = vmatpush1.bf16.msra.mxu0 %v5152
    %5685 = vmatprep.subr.bf16.mxu0 0
    %5686 = vmatpush1.bf16.msra.mxu0 %v5153
    %5687 = vmatprep.subr.bf16.mxu0 0
    %5688 = vmatpush1.bf16.msra.mxu0 %v5154
    %5689 = vmatprep.subr.bf16.mxu0 0
    %5690 = vmatpush1.bf16.msra.mxu0 %v5155
    %5691 = vmatprep.subr.bf16.mxu0 0
    %5692 = vmatpush1.bf16.msra.mxu0 %v5156
    %5693 = vmatprep.subr.bf16.mxu0 0
    %5694 = vmatpush1.bf16.msra.mxu0 %v5157
    %5695 = vmatprep.subr.bf16.mxu0 0
    %5696 = vmatpush1.bf16.msra.mxu0 %v5158
    %5697 = vmatprep.subr.bf16.mxu0 0
    %5698 = vmatpush1.bf16.msra.mxu0 %v5159
    %5699 = vmatprep.subr.bf16.mxu0 0
    %5700 = vmatpush1.bf16.msra.mxu0 %v5160
    %5701 = vmatprep.subr.bf16.mxu0 0
    %5702 = vmatpush1.bf16.msra.mxu0 %v5161
    %5703 = vmatprep.subr.bf16.mxu0 0
    %5704 = vmatpush1.bf16.msra.mxu0 %v5162
    %5705 = vmatprep.subr.bf16.mxu0 0
    %5706 = vmatpush1.bf16.msra.mxu0 %v5163
    %5707 = vmatprep.mubr.bf16.mxu0 %v5280
    %5708 = vmatmul.mubr.bf16.gmra.mrb[0].mxu0 %v5279
    %v5709 = vpop.f32.mrb[0].mxu0
    %v5710 = vadd.f32 %v5670, %v5709
    %v5711 = vpop.f32.mrb[0].mxu0
    %v5712 = vpop.f32.mrb[0].mxu0
    %v5713 = vpop.f32.mrb[0].mxu0
    %5714 = vdwg.mxu0
    %5715 = vmatprep.subr.bf16.mxu0 0
    %5716 = vmatpush1.bf16.msra.mxu0 %v5164
    %5717 = vmatprep.subr.bf16.mxu0 0
    %5718 = vmatpush1.bf16.msra.mxu0 %v5165
    %5719 = vmatprep.subr.bf16.mxu0 0
    %5720 = vmatpush1.bf16.msra.mxu0 %v5166
    %5721 = vmatprep.subr.bf16.mxu0 0
    %5722 = vmatpush1.bf16.msra.mxu0 %v5167
    %5723 = vmatprep.subr.bf16.mxu0 0
    %5724 = vmatpush1.bf16.msra.mxu0 %v5168
    %5725 = vmatprep.subr.bf16.mxu0 0
    %5726 = vmatpush1.bf16.msra.mxu0 %v5169
    %5727 = vmatprep.subr.bf16.mxu0 0
    %5728 = vmatpush1.bf16.msra.mxu0 %v5170
    %5729 = vmatprep.subr.bf16.mxu0 0
    %5730 = vmatpush1.bf16.msra.mxu0 %v5171
    %5731 = vmatprep.subr.bf16.mxu0 0
    %5732 = vmatpush1.bf16.msra.mxu0 %v5172
    %5733 = vmatprep.subr.bf16.mxu0 0
    %5734 = vmatpush1.bf16.msra.mxu0 %v5173
    %5735 = vmatprep.subr.bf16.mxu0 0
    %5736 = vmatpush1.bf16.msra.mxu0 %v5174
    %5737 = vmatprep.subr.bf16.mxu0 0
    %5738 = vmatpush1.bf16.msra.mxu0 %v5175
    %5739 = vmatprep.subr.bf16.mxu0 0
    %5740 = vmatpush1.bf16.msra.mxu0 %v5176
    %5741 = vmatprep.subr.bf16.mxu0 0
    %5742 = vmatpush1.bf16.msra.mxu0 %v5177
    %5743 = vmatprep.subr.bf16.mxu0 0
    %5744 = vmatpush1.bf16.msra.mxu0 %v5178
    %5745 = vmatprep.subr.bf16.mxu0 0
    %5746 = vmatpush1.bf16.msra.mxu0 %v5179
    %5747 = vmatprep.mubr.bf16.mxu0 %v5282
    %5748 = vmatmul.mubr.bf16.gmra.mrb[0].mxu0 %v5281
    %v5749 = vpop.f32.mrb[0].mxu0
    %v5750 = vadd.f32 %v5710, %v5749
    %v5751 = vpop.f32.mrb[0].mxu0
    %v5752 = vpop.f32.mrb[0].mxu0
    %v5753 = vpop.f32.mrb[0].mxu0
    %5754 = vdwg.mxu0
    %5755 = vmatprep.subr.bf16.mxu0 0
    %5756 = vmatpush1.bf16.msra.mxu0 %v5180
    %5757 = vmatprep.subr.bf16.mxu0 0
    %5758 = vmatpush1.bf16.msra.mxu0 %v5181
    %5759 = vmatprep.subr.bf16.mxu0 0
    %5760 = vmatpush1.bf16.msra.mxu0 %v5182
    %5761 = vmatprep.subr.bf16.mxu0 0
    %5762 = vmatpush1.bf16.msra.mxu0 %v5183
    %5763 = vmatprep.subr.bf16.mxu0 0
    %5764 = vmatpush1.bf16.msra.mxu0 %v5184
    %5765 = vmatprep.subr.bf16.mxu0 0
    %5766 = vmatpush1.bf16.msra.mxu0 %v5185
    %5767 = vmatprep.subr.bf16.mxu0 0
    %5768 = vmatpush1.bf16.msra.mxu0 %v5186
    %5769 = vmatprep.subr.bf16.mxu0 0
    %5770 = vmatpush1.bf16.msra.mxu0 %v5187
    %5771 = vmatprep.subr.bf16.mxu0 0
    %5772 = vmatpush1.bf16.msra.mxu0 %v5188
    %5773 = vmatprep.subr.bf16.mxu0 0
    %5774 = vmatpush1.bf16.msra.mxu0 %v5189
    %5775 = vmatprep.subr.bf16.mxu0 0
    %5776 = vmatpush1.bf16.msra.mxu0 %v5190
    %5777 = vmatprep.subr.bf16.mxu0 0
    %5778 = vmatpush1.bf16.msra.mxu0 %v5191
    %5779 = vmatprep.subr.bf16.mxu0 0
    %5780 = vmatpush1.bf16.msra.mxu0 %v5192
    %5781 = vmatprep.subr.bf16.mxu0 0
    %5782 = vmatpush1.bf16.msra.mxu0 %v5193
    %5783 = vmatprep.subr.bf16.mxu0 0
    %5784 = vmatpush1.bf16.msra.mxu0 %v5194
    %5785 = vmatprep.subr.bf16.mxu0 0
    %5786 = vmatpush1.bf16.msra.mxu0 %v5195
    %5787 = vmatprep.mubr.bf16.mxu0 %v5284
    %5788 = vmatmul.mubr.bf16.gmra.mrb[0].mxu0 %v5283
    %v5789 = vpop.f32.mrb[0].mxu0
    %v5790 = vadd.f32 %v5750, %v5789
    %v5791 = vpop.f32.mrb[0].mxu0
    %v5792 = vpop.f32.mrb[0].mxu0
    %v5793 = vpop.f32.mrb[0].mxu0
    %5794 = vdwg.mxu0
    %5795 = vmatprep.subr.bf16.mxu0 0
    %5796 = vmatpush1.bf16.msra.mxu0 %v5196
    %5797 = vmatprep.subr.bf16.mxu0 0
    %5798 = vmatpush1.bf16.msra.mxu0 %v5197
    %5799 = vmatprep.subr.bf16.mxu0 0
    %5800 = vmatpush1.bf16.msra.mxu0 %v5198
    %5801 = vmatprep.subr.bf16.mxu0 0
    %5802 = vmatpush1.bf16.msra.mxu0 %v5199
    %5803 = vmatprep.subr.bf16.mxu0 0
    %5804 = vmatpush1.bf16.msra.mxu0 %v5200
    %5805 = vmatprep.subr.bf16.mxu0 0
    %5806 = vmatpush1.bf16.msra.mxu0 %v5201
    %5807 = vmatprep.subr.bf16.mxu0 0
    %5808 = vmatpush1.bf16.msra.mxu0 %v5202
    %5809 = vmatprep.subr.bf16.mxu0 0
    %5810 = vmatpush1.bf16.msra.mxu0 %v5203
    %5811 = vmatprep.subr.bf16.mxu0 0
    %5812 = vmatpush1.bf16.msra.mxu0 %v5204
    %5813 = vmatprep.subr.bf16.mxu0 0
    %5814 = vmatpush1.bf16.msra.mxu0 %v5205
    %5815 = vmatprep.subr.bf16.mxu0 0
    %5816 = vmatpush1.bf16.msra.mxu0 %v5206
    %5817 = vmatprep.subr.bf16.mxu0 0
    %5818 = vmatpush1.bf16.msra.mxu0 %v5207
    %5819 = vmatprep.subr.bf16.mxu0 0
    %5820 = vmatpush1.bf16.msra.mxu0 %v5208
    %5821 = vmatprep.subr.bf16.mxu0 0
    %5822 = vmatpush1.bf16.msra.mxu0 %v5209
    %5823 = vmatprep.subr.bf16.mxu0 0
    %5824 = vmatpush1.bf16.msra.mxu0 %v5210
    %5825 = vmatprep.subr.bf16.mxu0 0
    %5826 = vmatpush1.bf16.msra.mxu0 %v5211
    %5827 = vmatprep.mubr.bf16.mxu0 %v5286
    %5828 = vmatmul.mubr.bf16.gmra.mrb[0].mxu0 %v5285
    %v5829 = vpop.f32.mrb[0].mxu0
    %v5830 = vadd.f32 %v5790, %v5829
    %v5831 = vpop.f32.mrb[0].mxu0
    %v5832 = vpop.f32.mrb[0].mxu0
    %v5833 = vpop.f32.mrb[0].mxu0
    %5834 = vdwg.mxu0
    %5835 = vmatprep.subr.bf16.mxu0 0
    %5836 = vmatpush1.bf16.msra.mxu0 %v5212
    %5837 = vmatprep.subr.bf16.mxu0 0
    %5838 = vmatpush1.bf16.msra.mxu0 %v5213
    %5839 = vmatprep.subr.bf16.mxu0 0
    %5840 = vmatpush1.bf16.msra.mxu0 %v5214
    %5841 = vmatprep.subr.bf16.mxu0 0
    %5842 = vmatpush1.bf16.msra.mxu0 %v5215
    %5843 = vmatprep.subr.bf16.mxu0 0
    %5844 = vmatpush1.bf16.msra.mxu0 %v5216
    %5845 = vmatprep.subr.bf16.mxu0 0
    %5846 = vmatpush1.bf16.msra.mxu0 %v5217
    %5847 = vmatprep.subr.bf16.mxu0 0
    %5848 = vmatpush1.bf16.msra.mxu0 %v5218
    %5849 = vmatprep.subr.bf16.mxu0 0
    %5850 = vmatpush1.bf16.msra.mxu0 %v5219
    %5851 = vmatprep.subr.bf16.mxu0 0
    %5852 = vmatpush1.bf16.msra.mxu0 0
    %5853 = vmatprep.subr.bf16.mxu0 0
    %5854 = vmatpush1.bf16.msra.mxu0 0
    %5855 = vmatprep.subr.bf16.mxu0 0
    %5856 = vmatpush1.bf16.msra.mxu0 0
    %5857 = vmatprep.subr.bf16.mxu0 0
    %5858 = vmatpush1.bf16.msra.mxu0 0
    %5859 = vmatprep.subr.bf16.mxu0 0
    %5860 = vmatpush1.bf16.msra.mxu0 0
    %5861 = vmatprep.subr.bf16.mxu0 0
    %5862 = vmatpush1.bf16.msra.mxu0 0
    %5863 = vmatprep.subr.bf16.mxu0 0
    %5864 = vmatpush1.bf16.msra.mxu0 0
    %5865 = vmatprep.subr.bf16.mxu0 0
    %5866 = vmatpush1.bf16.msra.mxu0 0
    %5867 = vmatprep.mubr.bf16.mxu0 0
    %5868 = vmatmul.mubr.bf16.gmra.mrb[0].mxu0 %v5287
    %v5869 = vpop.f32.mrb[0].mxu0
    %v5870 = vadd.f32 %v5830, %v5869
    %v5871 = vpop.f32.mrb[0].mxu0
    %v5872 = vpop.f32.mrb[0].mxu0
    %v5873 = vpop.f32.mrb[0].mxu0
    %5874 = vdwg.mxu0
    %v5875 = vmax.f32 %v5870, 0.0
    %v5876 = vsub.f32 0.0, %v5875
    %v5877 = vmul.f32 %v5876, 1.442695
    %v5878 = vpow.pop %v5877
    %v5879 = vadd.f32 %v5878, 1.0
    %v5880 = vrcp.pop %v5879
    %v5881 = vmul.f32 1.0, %v5880
    %v5882 = vmul.f32 %v5875, %v5881
    %v5883 = vpack.c.bf16 %v5882, %v5882
    %5884 = vst [vmem:[#allocation7] sm:$0xf] %v5883
    %v5885 = vsub.f32 %v5875, -2.2
    %v5886 = vsub.f32 %v5875, -1.8
    %v5887 = vsub.f32 %v5875, -1.4
    %v5888 = vsub.f32 %v5875, -1.0
    %v5889 = vsub.f32 %v5875, -0.6
    %v5890 = vsub.f32 %v5875, -0.2
    %v5891 = vsub.f32 %v5875, 0.2
    %v5892 = vsub.f32 %v5875, 0.6
    %v5893 = vsub.f32 %v5875, 1.0
    %v5894 = vsub.f32 %v5875, 1.4
    %v5895 = vsub.f32 %v5875, 1.8
    %v5896 = vsub.f32 %v5875, 2.2
    %vm5897 = vcmp.ge.f32.partialorder %v5885, 0.0
    %vm5898 = vcmp.lt.f32.partialorder %v5886, 0.0
    %vm5899 = vmand %vm5897, %vm5898
    %v5900 = vsel %vm5899, 1.0, 0.0
    %vm5901 = vcmp.ge.f32.partialorder %v5886, 0.0
    %vm5902 = vcmp.lt.f32.partialorder %v5887, 0.0
    %vm5903 = vmand %vm5901, %vm5902
    %v5904 = vsel %vm5903, 1.0, 0.0
    %vm5905 = vcmp.ge.f32.partialorder %v5887, 0.0
    %vm5906 = vcmp.lt.f32.partialorder %v5888, 0.0
    %vm5907 = vmand %vm5905, %vm5906
    %v5908 = vsel %vm5907, 1.0, 0.0
    %vm5909 = vcmp.ge.f32.partialorder %v5888, 0.0
    %vm5910 = vcmp.lt.f32.partialorder %v5889, 0.0
    %vm5911 = vmand %vm5909, %vm5910
    %v5912 = vsel %vm5911, 1.0, 0.0
    %vm5913 = vcmp.ge.f32.partialorder %v5889, 0.0
    %vm5914 = vcmp.lt.f32.partialorder %v5890, 0.0
    %vm5915 = vmand %vm5913, %vm5914
    %v5916 = vsel %vm5915, 1.0, 0.0
    %vm5917 = vcmp.ge.f32.partialorder %v5890, 0.0
    %vm5918 = vcmp.lt.f32.partialorder %v5891, 0.0
    %vm5919 = vmand %vm5917, %vm5918
    %v5920 = vsel %vm5919, 1.0, 0.0
    %vm5921 = vcmp.ge.f32.partialorder %v5891, 0.0
    %vm5922 = vcmp.lt.f32.partialorder %v5892, 0.0
    %vm5923 = vmand %vm5921, %vm5922
    %v5924 = vsel %vm5923, 1.0, 0.0
    %vm5925 = vcmp.ge.f32.partialorder %v5892, 0.0
    %vm5926 = vcmp.lt.f32.partialorder %v5893, 0.0
    %vm5927 = vmand %vm5925, %vm5926
    %v5928 = vsel %vm5927, 1.0, 0.0
    %vm5929 = vcmp.ge.f32.partialorder %v5893, 0.0
    %vm5930 = vcmp.lt.f32.partialorder %v5894, 0.0
    %vm5931 = vmand %vm5929, %vm5930
    %v5932 = vsel %vm5931, 1.0, 0.0
    %vm5933 = vcmp.ge.f32.partialorder %v5894, 0.0
    %vm5934 = vcmp.lt.f32.partialorder %v5895, 0.0
    %vm5935 = vmand %vm5933, %vm5934
    %v5936 = vsel %vm5935, 1.0, 0.0
    %vm5937 = vcmp.ge.f32.partialorder %v5895, 0.0
    %vm5938 = vcmp.lt.f32.partialorder %v5896, 0.0
    %vm5939 = vmand %vm5937, %vm5938
    %v5940 = vsel %vm5939, 1.0, 0.0
    %v5941 = vmul.f32 %v5885, %v5900
    %v5942 = vmul.f32 %v5886, %v5904
    %v5943 = vmul.f32 %v5887, %v5908
    %v5944 = vmul.f32 %v5888, %v5912
    %v5945 = vmul.f32 %v5889, %v5916
    %v5946 = vmul.f32 %v5890, %v5920
    %v5947 = vmul.f32 %v5891, %v5924
    %v5948 = vmul.f32 %v5892, %v5928
    %v5949 = vmul.f32 %v5893, %v5932
    %v5950 = vmul.f32 %v5894, %v5936
    %v5951 = vmul.f32 %v5895, %v5940
    %v5952 = vmul.f32 %v5904, 0.4
    %v5953 = vadd.f32 %v5941, %v5952
    %v5954 = vsub.f32 %v5953, %v5942
    %v5955 = vmul.f32 %v5954, 2.5
    %v5956 = vmul.f32 %v5908, 0.4
    %v5957 = vadd.f32 %v5942, %v5956
    %v5958 = vsub.f32 %v5957, %v5943
    %v5959 = vmul.f32 %v5958, 2.5
    %v5960 = vmul.f32 %v5912, 0.4
    %v5961 = vadd.f32 %v5943, %v5960
    %v5962 = vsub.f32 %v5961, %v5944
    %v5963 = vmul.f32 %v5962, 2.5
    %v5964 = vmul.f32 %v5916, 0.4
    %v5965 = vadd.f32 %v5944, %v5964
    %v5966 = vsub.f32 %v5965, %v5945
    %v5967 = vmul.f32 %v5966, 2.5
    %v5968 = vmul.f32 %v5920, 0.4
    %v5969 = vadd.f32 %v5945, %v5968
    %v5970 = vsub.f32 %v5969, %v5946
    %v5971 = vmul.f32 %v5970, 2.5
    %v5972 = vmul.f32 %v5924, 0.4
    %v5973 = vadd.f32 %v5946, %v5972
    %v5974 = vsub.f32 %v5973, %v5947
    %v5975 = vmul.f32 %v5974, 2.5
    %v5976 = vmul.f32 %v5928, 0.4
    %v5977 = vadd.f32 %v5947, %v5976
    %v5978 = vsub.f32 %v5977, %v5948
    %v5979 = vmul.f32 %v5978, 2.5
    %v5980 = vmul.f32 %v5932, 0.4
    %v5981 = vadd.f32 %v5948, %v5980
    %v5982 = vsub.f32 %v5981, %v5949
    %v5983 = vmul.f32 %v5982, 2.5
    %v5984 = vmul.f32 %v5936, 0.4
    %v5985 = vadd.f32 %v5949, %v5984
    %v5986 = vsub.f32 %v5985, %v5950
    %v5987 = vmul.f32 %v5986, 2.5
    %v5988 = vmul.f32 %v5940, 0.4
    %v5989 = vadd.f32 %v5950, %v5988
    %v5990 = vsub.f32 %v5989, %v5951
    %v5991 = vmul.f32 %v5990, 2.5
    %v5992 = vmul.f32 %v5885, %v5955
    %v5993 = vmul.f32 %v5886, %v5959
    %v5994 = vmul.f32 %v5887, %v5963
    %v5995 = vmul.f32 %v5888, %v5967
    %v5996 = vmul.f32 %v5889, %v5971
    %v5997 = vmul.f32 %v5890, %v5975
    %v5998 = vmul.f32 %v5891, %v5979
    %v5999 = vmul.f32 %v5892, %v5983
    %v6000 = vmul.f32 %v5893, %v5987
    %v6001 = vmul.f32 %v5894, %v5991
    %v6002 = vmul.f32 %v5959, 0.8
    %v6003 = vadd.f32 %v5992, %v6002
    %v6004 = vsub.f32 %v6003, %v5993
    %v6005 = vmul.f32 %v6004, 1.25
    %v6006 = vmul.f32 %v5963, 0.8
    %v6007 = vadd.f32 %v5993, %v6006
    %v6008 = vsub.f32 %v6007, %v5994
    %v6009 = vmul.f32 %v6008, 1.25
    %v6010 = vmul.f32 %v5967, 0.8
    %v6011 = vadd.f32 %v5994, %v6010
    %v6012 = vsub.f32 %v6011, %v5995
    %v6013 = vmul.f32 %v6012, 1.25
    %v6014 = vmul.f32 %v5971, 0.8
    %v6015 = vadd.f32 %v5995, %v6014
    %v6016 = vsub.f32 %v6015, %v5996
    %v6017 = vmul.f32 %v6016, 1.25
    %v6018 = vmul.f32 %v5975, 0.8
    %v6019 = vadd.f32 %v5996, %v6018
    %v6020 = vsub.f32 %v6019, %v5997
    %v6021 = vmul.f32 %v6020, 1.25
    %v6022 = vmul.f32 %v5979, 0.8
    %v6023 = vadd.f32 %v5997, %v6022
    %v6024 = vsub.f32 %v6023, %v5998
    %v6025 = vmul.f32 %v6024, 1.25
    %v6026 = vmul.f32 %v5983, 0.8
    %v6027 = vadd.f32 %v5998, %v6026
    %v6028 = vsub.f32 %v6027, %v5999
    %v6029 = vmul.f32 %v6028, 1.25
    %v6030 = vmul.f32 %v5987, 0.8
    %v6031 = vadd.f32 %v5999, %v6030
    %v6032 = vsub.f32 %v6031, %v6000
    %v6033 = vmul.f32 %v6032, 1.25
    %v6034 = vmul.f32 %v5991, 0.8
    %v6035 = vadd.f32 %v6000, %v6034
    %v6036 = vsub.f32 %v6035, %v6001
    %v6037 = vmul.f32 %v6036, 1.25
    %v6038 = vmul.f32 %v5885, %v6005
    %v6039 = vmul.f32 %v5886, %v6009
    %v6040 = vmul.f32 %v5887, %v6013
    %v6041 = vmul.f32 %v5888, %v6017
    %v6042 = vmul.f32 %v5889, %v6021
    %v6043 = vmul.f32 %v5890, %v6025
    %v6044 = vmul.f32 %v5891, %v6029
    %v6045 = vmul.f32 %v5892, %v6033
    %v6046 = vmul.f32 %v5893, %v6037
    %v6047 = vmul.f32 %v6009, 1.2
    %v6048 = vadd.f32 %v6038, %v6047
    %v6049 = vsub.f32 %v6048, %v6039
    %v6050 = vmul.f32 %v6049, 0.8333333
    %v6051 = vmul.f32 %v6013, 1.2
    %v6052 = vadd.f32 %v6039, %v6051
    %v6053 = vsub.f32 %v6052, %v6040
    %v6054 = vmul.f32 %v6053, 0.8333333
    %v6055 = vmul.f32 %v6017, 1.2
    %v6056 = vadd.f32 %v6040, %v6055
    %v6057 = vsub.f32 %v6056, %v6041
    %v6058 = vmul.f32 %v6057, 0.8333333
    %v6059 = vmul.f32 %v6021, 1.2
    %v6060 = vadd.f32 %v6041, %v6059
    %v6061 = vsub.f32 %v6060, %v6042
    %v6062 = vmul.f32 %v6061, 0.8333333
    %v6063 = vmul.f32 %v6025, 1.2
    %v6064 = vadd.f32 %v6042, %v6063
    %v6065 = vsub.f32 %v6064, %v6043
    %v6066 = vmul.f32 %v6065, 0.8333333
    %v6067 = vmul.f32 %v6029, 1.2
    %v6068 = vadd.f32 %v6043, %v6067
    %v6069 = vsub.f32 %v6068, %v6044
    %v6070 = vmul.f32 %v6069, 0.8333333
    %v6071 = vmul.f32 %v6033, 1.2
    %v6072 = vadd.f32 %v6044, %v6071
    %v6073 = vsub.f32 %v6072, %v6045
    %v6074 = vmul.f32 %v6073, 0.8333333
    %v6075 = vmul.f32 %v6037, 1.2
    %v6076 = vadd.f32 %v6045, %v6075
    %v6077 = vsub.f32 %v6076, %v6046
    %v6078 = vmul.f32 %v6077, 0.8333333
    %v6079 = vpack.c.bf16 %v6050, %v6050
    %6080 = vst [vmem:[#allocation7 + $0x4] sm:$0xf] %v6079
    %v6081 = vpack.c.bf16 %v6054, %v6054
    %6082 = vst [vmem:[#allocation7 + $0x8] sm:$0xf] %v6081
    %v6083 = vpack.c.bf16 %v6058, %v6058
    %6084 = vst [vmem:[#allocation7 + $0xc] sm:$0xf] %v6083
    %v6085 = vpack.c.bf16 %v6062, %v6062
    %6086 = vst [vmem:[#allocation7 + $0x10] sm:$0xf] %v6085
    %v6087 = vpack.c.bf16 %v6066, %v6066
    %6088 = vst [vmem:[#allocation7 + $0x14] sm:$0xf] %v6087
    %v6089 = vpack.c.bf16 %v6070, %v6070
    %6090 = vst [vmem:[#allocation7 + $0x18] sm:$0xf] %v6089
    %v6091 = vpack.c.bf16 %v6074, %v6074
    %6092 = vst [vmem:[#allocation7 + $0x1c] sm:$0xf] %v6091
    %v6093 = vpack.c.bf16 %v6078, %v6078
    %6094 = vst [vmem:[#allocation7 + $0x20] sm:$0xf] %v6093
    %v6095 = vld [vmem:[#allocation7] sm:$0xff]
    %v6096 = vld [vmem:[#allocation7 + $0x8] sm:$0xff]
    %v6097 = vld [vmem:[#allocation7 + $0x10] sm:$0xff]
    %v6098 = vld [vmem:[#allocation7 + $0x18] sm:$0xff]
    %v6099 = vld [vmem:[#allocation7 + $0x20] sm:$0xf]
    %v6100 = vld [vmem:[%s16] sm:$0xf]
    %v6101 = vld [vmem:[%s16 + $0x4] sm:$0xf]
    %v6102 = vld [vmem:[%s16 + $0x8] sm:$0xf]
    %v6103 = vld [vmem:[%s16 + $0xc] sm:$0xf]
    %v6104 = vld [vmem:[%s16 + $0x10] sm:$0xf]
    %v6105 = vld [vmem:[%s16 + $0x14] sm:$0xf]
    %v6106 = vld [vmem:[%s16 + $0x18] sm:$0xf]
    %v6107 = vld [vmem:[%s16 + $0x1c] sm:$0xf]
    %v6108 = vld [vmem:[%s16 + $0x20] sm:$0xf]
    %v6109 = vld [vmem:[%s16 + $0x24] sm:$0xf]
    %v6110 = vld [vmem:[%s16 + $0x28] sm:$0xf]
    %v6111 = vld [vmem:[%s16 + $0x2c] sm:$0xf]
    %v6112 = vld [vmem:[%s16 + $0x30] sm:$0xf]
    %v6113 = vld [vmem:[%s16 + $0x34] sm:$0xf]
    %v6114 = vld [vmem:[%s16 + $0x38] sm:$0xf]
    %v6115 = vld [vmem:[%s16 + $0x3c] sm:$0xf]
    %v6116 = vld [vmem:[%s16 + $0x40] sm:$0xf]
    %v6117 = vld [vmem:[%s16 + $0x44] sm:$0xf]
    %v6118 = vld [vmem:[%s16 + $0x48] sm:$0xf]
    %v6119 = vld [vmem:[%s16 + $0x4c] sm:$0xf]
    %v6120 = vld [vmem:[%s16 + $0x50] sm:$0xf]
    %v6121 = vld [vmem:[%s16 + $0x54] sm:$0xf]
    %v6122 = vld [vmem:[%s16 + $0x58] sm:$0xf]
    %v6123 = vld [vmem:[%s16 + $0x5c] sm:$0xf]
    %v6124 = vld [vmem:[%s16 + $0x60] sm:$0xf]
    %v6125 = vld [vmem:[%s16 + $0x64] sm:$0xf]
    %v6126 = vld [vmem:[%s16 + $0x68] sm:$0xf]
    %v6127 = vld [vmem:[%s16 + $0x6c] sm:$0xf]
    %v6128 = vld [vmem:[%s16 + $0x70] sm:$0xf]
    %v6129 = vld [vmem:[%s16 + $0x74] sm:$0xf]
    %v6130 = vld [vmem:[%s16 + $0x78] sm:$0xf]
    %v6131 = vld [vmem:[%s16 + $0x7c] sm:$0xf]
    %v6132 = vld [vmem:[%s16 + $0x80] sm:$0xf]
    %v6133 = vld [vmem:[%s16 + $0x84] sm:$0xf]
    %v6134 = vld [vmem:[%s16 + $0x88] sm:$0xf]
    %v6135 = vld [vmem:[%s16 + $0x8c] sm:$0xf]
    %v6136 = vld [vmem:[%s16 + $0x90] sm:$0xf]
    %v6137 = vld [vmem:[%s16 + $0x94] sm:$0xf]
    %v6138 = vld [vmem:[%s16 + $0x98] sm:$0xf]
    %v6139 = vld [vmem:[%s16 + $0x9c] sm:$0xf]
    %v6140 = vld [vmem:[%s16 + $0xa0] sm:$0xf]
    %v6141 = vld [vmem:[%s16 + $0xa4] sm:$0xf]
    %v6142 = vld [vmem:[%s16 + $0xa8] sm:$0xf]
    %v6143 = vld [vmem:[%s16 + $0xac] sm:$0xf]
    %v6144 = vld [vmem:[%s16 + $0xb0] sm:$0xf]
    %v6145 = vld [vmem:[%s16 + $0xb4] sm:$0xf]
    %v6146 = vld [vmem:[%s16 + $0xb8] sm:$0xf]
    %v6147 = vld [vmem:[%s16 + $0xbc] sm:$0xf]
    %v6148 = vld [vmem:[%s16 + $0xc0] sm:$0xf]
    %v6149 = vld [vmem:[%s16 + $0xc4] sm:$0xf]
    %v6150 = vld [vmem:[%s16 + $0xc8] sm:$0xf]
    %v6151 = vld [vmem:[%s16 + $0xcc] sm:$0xf]
    %v6152 = vld [vmem:[%s16 + $0xd0] sm:$0xf]
    %v6153 = vld [vmem:[%s16 + $0xd4] sm:$0xf]
    %v6154 = vld [vmem:[%s16 + $0xd8] sm:$0xf]
    %v6155 = vld [vmem:[%s16 + $0xdc] sm:$0xf]
    %v6156 = vld [vmem:[%s16 + $0xe0] sm:$0xf]
    %v6157 = vld [vmem:[%s16 + $0xe4] sm:$0xf]
    %v6158 = vld [vmem:[%s16 + $0xe8] sm:$0xf]
    %v6159 = vld [vmem:[%s16 + $0xec] sm:$0xf]
    %v6160 = vld [vmem:[%s16 + $0xf0] sm:$0xf]
    %v6161 = vld [vmem:[%s16 + $0xf4] sm:$0xf]
    %v6162 = vld [vmem:[%s16 + $0xf8] sm:$0xf]
    %v6163 = vld [vmem:[%s16 + $0xfc] sm:$0xf]
    %v6164 = vld [vmem:[%s16 + $0x100] sm:$0xf]
    %v6165 = vld [vmem:[%s16 + $0x104] sm:$0xf]
    %v6166 = vld [vmem:[%s16 + $0x108] sm:$0xf]
    %v6167 = vld [vmem:[%s16 + $0x10c] sm:$0xf]
    %v6168 = vld [vmem:[%s16 + $0x110] sm:$0xf]
    %v6169 = vld [vmem:[%s16 + $0x114] sm:$0xf]
    %v6170 = vld [vmem:[%s16 + $0x118] sm:$0xf]
    %v6171 = vld [vmem:[%s16 + $0x11c] sm:$0xf]
    %v6172 = vld [vmem:[%s16 + $0x120] sm:$0xf]
    %v6173 = vld [vmem:[%s16 + $0x124] sm:$0xf]
    %v6174 = vld [vmem:[%s16 + $0x128] sm:$0xf]
    %v6175 = vld [vmem:[%s16 + $0x12c] sm:$0xf]
    %v6176 = vld [vmem:[%s16 + $0x130] sm:$0xf]
    %v6177 = vld [vmem:[%s16 + $0x134] sm:$0xf]
    %v6178 = vld [vmem:[%s16 + $0x138] sm:$0xf]
    %v6179 = vld [vmem:[%s16 + $0x13c] sm:$0xf]
    %v6180 = vld [vmem:[%s16 + $0x140] sm:$0xf]
    %v6181 = vld [vmem:[%s16 + $0x144] sm:$0xf]
    %v6182 = vld [vmem:[%s16 + $0x148] sm:$0xf]
    %v6183 = vld [vmem:[%s16 + $0x14c] sm:$0xf]
    %v6184 = vld [vmem:[%s16 + $0x150] sm:$0xf]
    %v6185 = vld [vmem:[%s16 + $0x154] sm:$0xf]
    %v6186 = vld [vmem:[%s16 + $0x158] sm:$0xf]
    %v6187 = vld [vmem:[%s16 + $0x15c] sm:$0xf]
    %v6188 = vld [vmem:[%s16 + $0x160] sm:$0xf]
    %v6189 = vld [vmem:[%s16 + $0x164] sm:$0xf]
    %v6190 = vld [vmem:[%s16 + $0x168] sm:$0xf]
    %v6191 = vld [vmem:[%s16 + $0x16c] sm:$0xf]
    %v6192 = vld [vmem:[%s16 + $0x170] sm:$0xf]
    %v6193 = vld [vmem:[%s16 + $0x174] sm:$0xf]
    %v6194 = vld [vmem:[%s16 + $0x178] sm:$0xf]
    %v6195 = vld [vmem:[%s16 + $0x17c] sm:$0xf]
    %v6196 = vld [vmem:[%s16 + $0x180] sm:$0xf]
    %v6197 = vld [vmem:[%s16 + $0x184] sm:$0xf]
    %v6198 = vld [vmem:[%s16 + $0x188] sm:$0xf]
    %v6199 = vld [vmem:[%s16 + $0x18c] sm:$0xf]
    %v6200 = vld [vmem:[%s16 + $0x190] sm:$0xf]
    %v6201 = vld [vmem:[%s16 + $0x194] sm:$0xf]
    %v6202 = vld [vmem:[%s16 + $0x198] sm:$0xf]
    %v6203 = vld [vmem:[%s16 + $0x19c] sm:$0xf]
    %v6204 = vld [vmem:[%s16 + $0x1a0] sm:$0xf]
    %v6205 = vld [vmem:[%s16 + $0x1a4] sm:$0xf]
    %v6206 = vld [vmem:[%s16 + $0x1a8] sm:$0xf]
    %v6207 = vld [vmem:[%s16 + $0x1ac] sm:$0xf]
    %v6208 = vld [vmem:[%s16 + $0x1b0] sm:$0xf]
    %v6209 = vld [vmem:[%s16 + $0x1b4] sm:$0xf]
    %v6210 = vld [vmem:[%s16 + $0x1b8] sm:$0xf]
    %v6211 = vld [vmem:[%s16 + $0x1bc] sm:$0xf]
    %v6212 = vld [vmem:[%s16 + $0x1c0] sm:$0xf]
    %v6213 = vld [vmem:[%s16 + $0x1c4] sm:$0xf]
    %v6214 = vld [vmem:[%s16 + $0x1c8] sm:$0xf]
    %v6215 = vld [vmem:[%s16 + $0x1cc] sm:$0xf]
    %v6216 = vld [vmem:[%s16 + $0x1d0] sm:$0xf]
    %v6217 = vld [vmem:[%s16 + $0x1d4] sm:$0xf]
    %v6218 = vld [vmem:[%s16 + $0x1d8] sm:$0xf]
    %v6219 = vld [vmem:[%s16 + $0x1dc] sm:$0xf]
    %v6220 = vld [vmem:[%s16 + $0x1e0] sm:$0xf]
    %v6221 = vld [vmem:[%s16 + $0x1e4] sm:$0xf]
    %v6222 = vld [vmem:[%s16 + $0x1e8] sm:$0xf]
    %v6223 = vld [vmem:[%s16 + $0x1ec] sm:$0xf]
    %v6224 = vld [vmem:[%s16 + $0x1f0] sm:$0xf]
    %v6225 = vld [vmem:[%s16 + $0x1f4] sm:$0xf]
    %v6226 = vld [vmem:[%s16 + $0x1f8] sm:$0xf]
    %v6227 = vld [vmem:[%s16 + $0x1fc] sm:$0xf]
    %v6228 = vld [vmem:[%s16 + $0x200] sm:$0xf]
    %v6229 = vld [vmem:[%s16 + $0x204] sm:$0xf]
    %v6230 = vld [vmem:[%s16 + $0x208] sm:$0xf]
    %v6231 = vld [vmem:[%s16 + $0x20c] sm:$0xf]
    %v6232 = vld [vmem:[%s16 + $0x210] sm:$0xf]
    %v6233 = vld [vmem:[%s16 + $0x214] sm:$0xf]
    %v6234 = vld [vmem:[%s16 + $0x218] sm:$0xf]
    %v6235 = vld [vmem:[%s16 + $0x21c] sm:$0xf]
    %v6236 = vld [vmem:[%s16 + $0x220] sm:$0xf]
    %v6237 = vld [vmem:[%s16 + $0x224] sm:$0xf]
    %v6238 = vld [vmem:[%s16 + $0x228] sm:$0xf]
    %v6239 = vld [vmem:[%s16 + $0x22c] sm:$0xf]
    %v6240 = vld [vmem:[%s16 + $0x230] sm:$0xf]
    %v6241 = vld [vmem:[%s16 + $0x234] sm:$0xf]
    %v6242 = vld [vmem:[%s16 + $0x238] sm:$0xf]
    %v6243 = vld [vmem:[%s16 + $0x23c] sm:$0xf]
    %v6249 = vunpack.c.l.b16 %v6095
    %v6250 = vunpack.c.h.b16 %v6095
    %v6251 = vunpack.c.l.b16 %v6096
    %v6252 = vunpack.c.h.b16 %v6096
    %v6253 = vunpack.c.l.b16 %v6097
    %v6254 = vunpack.c.h.b16 %v6097
    %v6255 = vunpack.c.l.b16 %v6098
    %v6256 = vunpack.c.h.b16 %v6098
    %v6257 = vunpack.c.l.b16 %v6099
    %v6258 = vpack.c.b16 %v6249, %v6249
    %v6259 = vpack.c.b16 %v6250, %v6250
    %v6260 = vpack.c.b16 %v6251, %v6251
    %v6261 = vpack.c.b16 %v6252, %v6252
    %v6262 = vpack.c.b16 %v6253, %v6253
    %v6263 = vpack.c.b16 %v6254, %v6254
    %v6264 = vpack.c.b16 %v6255, %v6255
    %v6265 = vpack.c.b16 %v6256, %v6256
    %v6266 = vpack.c.b16 %v6257, %v6257
    %v6420 = vunpack.c.l.b16 %v6100
    %v6421 = vunpack.c.l.b16 %v6101
    %v6422 = vunpack.c.l.b16 %v6102
    %v6423 = vunpack.c.l.b16 %v6103
    %v6424 = vunpack.c.l.b16 %v6104
    %v6425 = vunpack.c.l.b16 %v6105
    %v6426 = vunpack.c.l.b16 %v6106
    %v6427 = vunpack.c.l.b16 %v6107
    %v6428 = vunpack.c.l.b16 %v6108
    %v6429 = vunpack.c.l.b16 %v6109
    %v6430 = vunpack.c.l.b16 %v6110
    %v6431 = vunpack.c.l.b16 %v6111
    %v6432 = vunpack.c.l.b16 %v6112
    %v6433 = vunpack.c.l.b16 %v6113
    %v6434 = vunpack.c.l.b16 %v6114
    %v6435 = vunpack.c.l.b16 %v6115
    %v6436 = vunpack.c.l.b16 %v6116
    %v6437 = vunpack.c.l.b16 %v6117
    %v6438 = vunpack.c.l.b16 %v6118
    %v6439 = vunpack.c.l.b16 %v6119
    %v6440 = vunpack.c.l.b16 %v6120
    %v6441 = vunpack.c.l.b16 %v6121
    %v6442 = vunpack.c.l.b16 %v6122
    %v6443 = vunpack.c.l.b16 %v6123
    %v6444 = vunpack.c.l.b16 %v6124
    %v6445 = vunpack.c.l.b16 %v6125
    %v6446 = vunpack.c.l.b16 %v6126
    %v6447 = vunpack.c.l.b16 %v6127
    %v6448 = vunpack.c.l.b16 %v6128
    %v6449 = vunpack.c.l.b16 %v6129
    %v6450 = vunpack.c.l.b16 %v6130
    %v6451 = vunpack.c.l.b16 %v6131
    %v6452 = vunpack.c.l.b16 %v6132
    %v6453 = vunpack.c.l.b16 %v6133
    %v6454 = vunpack.c.l.b16 %v6134
    %v6455 = vunpack.c.l.b16 %v6135
    %v6456 = vunpack.c.l.b16 %v6136
    %v6457 = vunpack.c.l.b16 %v6137
    %v6458 = vunpack.c.l.b16 %v6138
    %v6459 = vunpack.c.l.b16 %v6139
    %v6460 = vunpack.c.l.b16 %v6140
    %v6461 = vunpack.c.l.b16 %v6141
    %v6462 = vunpack.c.l.b16 %v6142
    %v6463 = vunpack.c.l.b16 %v6143
    %v6464 = vunpack.c.l.b16 %v6144
    %v6465 = vunpack.c.l.b16 %v6145
    %v6466 = vunpack.c.l.b16 %v6146
    %v6467 = vunpack.c.l.b16 %v6147
    %v6468 = vunpack.c.l.b16 %v6148
    %v6469 = vunpack.c.l.b16 %v6149
    %v6470 = vunpack.c.l.b16 %v6150
    %v6471 = vunpack.c.l.b16 %v6151
    %v6472 = vunpack.c.l.b16 %v6152
    %v6473 = vunpack.c.l.b16 %v6153
    %v6474 = vunpack.c.l.b16 %v6154
    %v6475 = vunpack.c.l.b16 %v6155
    %v6476 = vunpack.c.l.b16 %v6156
    %v6477 = vunpack.c.l.b16 %v6157
    %v6478 = vunpack.c.l.b16 %v6158
    %v6479 = vunpack.c.l.b16 %v6159
    %v6480 = vunpack.c.l.b16 %v6160
    %v6481 = vunpack.c.l.b16 %v6161
    %v6482 = vunpack.c.l.b16 %v6162
    %v6483 = vunpack.c.l.b16 %v6163
    %v6484 = vunpack.c.l.b16 %v6164
    %v6485 = vunpack.c.l.b16 %v6165
    %v6486 = vunpack.c.l.b16 %v6166
    %v6487 = vunpack.c.l.b16 %v6167
    %v6488 = vunpack.c.l.b16 %v6168
    %v6489 = vunpack.c.l.b16 %v6169
    %v6490 = vunpack.c.l.b16 %v6170
    %v6491 = vunpack.c.l.b16 %v6171
    %v6492 = vunpack.c.l.b16 %v6172
    %v6493 = vunpack.c.l.b16 %v6173
    %v6494 = vunpack.c.l.b16 %v6174
    %v6495 = vunpack.c.l.b16 %v6175
    %v6496 = vunpack.c.l.b16 %v6176
    %v6497 = vunpack.c.l.b16 %v6177
    %v6498 = vunpack.c.l.b16 %v6178
    %v6499 = vunpack.c.l.b16 %v6179
    %v6500 = vunpack.c.l.b16 %v6180
    %v6501 = vunpack.c.l.b16 %v6181
    %v6502 = vunpack.c.l.b16 %v6182
    %v6503 = vunpack.c.l.b16 %v6183
    %v6504 = vunpack.c.l.b16 %v6184
    %v6505 = vunpack.c.l.b16 %v6185
    %v6506 = vunpack.c.l.b16 %v6186
    %v6507 = vunpack.c.l.b16 %v6187
    %v6508 = vunpack.c.l.b16 %v6188
    %v6509 = vunpack.c.l.b16 %v6189
    %v6510 = vunpack.c.l.b16 %v6190
    %v6511 = vunpack.c.l.b16 %v6191
    %v6512 = vunpack.c.l.b16 %v6192
    %v6513 = vunpack.c.l.b16 %v6193
    %v6514 = vunpack.c.l.b16 %v6194
    %v6515 = vunpack.c.l.b16 %v6195
    %v6516 = vunpack.c.l.b16 %v6196
    %v6517 = vunpack.c.l.b16 %v6197
    %v6518 = vunpack.c.l.b16 %v6198
    %v6519 = vunpack.c.l.b16 %v6199
    %v6520 = vunpack.c.l.b16 %v6200
    %v6521 = vunpack.c.l.b16 %v6201
    %v6522 = vunpack.c.l.b16 %v6202
    %v6523 = vunpack.c.l.b16 %v6203
    %v6524 = vunpack.c.l.b16 %v6204
    %v6525 = vunpack.c.l.b16 %v6205
    %v6526 = vunpack.c.l.b16 %v6206
    %v6527 = vunpack.c.l.b16 %v6207
    %v6528 = vunpack.c.l.b16 %v6208
    %v6529 = vunpack.c.l.b16 %v6209
    %v6530 = vunpack.c.l.b16 %v6210
    %v6531 = vunpack.c.l.b16 %v6211
    %v6532 = vunpack.c.l.b16 %v6212
    %v6533 = vunpack.c.l.b16 %v6213
    %v6534 = vunpack.c.l.b16 %v6214
    %v6535 = vunpack.c.l.b16 %v6215
    %v6536 = vunpack.c.l.b16 %v6216
    %v6537 = vunpack.c.l.b16 %v6217
    %v6538 = vunpack.c.l.b16 %v6218
    %v6539 = vunpack.c.l.b16 %v6219
    %v6540 = vunpack.c.l.b16 %v6220
    %v6541 = vunpack.c.l.b16 %v6221
    %v6542 = vunpack.c.l.b16 %v6222
    %v6543 = vunpack.c.l.b16 %v6223
    %v6544 = vunpack.c.l.b16 %v6224
    %v6545 = vunpack.c.l.b16 %v6225
    %v6546 = vunpack.c.l.b16 %v6226
    %v6547 = vunpack.c.l.b16 %v6227
    %v6548 = vunpack.c.l.b16 %v6228
    %v6549 = vunpack.c.l.b16 %v6229
    %v6550 = vunpack.c.l.b16 %v6230
    %v6551 = vunpack.c.l.b16 %v6231
    %v6552 = vunpack.c.l.b16 %v6232
    %v6553 = vunpack.c.l.b16 %v6233
    %v6554 = vunpack.c.l.b16 %v6234
    %v6555 = vunpack.c.l.b16 %v6235
    %v6556 = vunpack.c.l.b16 %v6236
    %v6557 = vunpack.c.l.b16 %v6237
    %v6558 = vunpack.c.l.b16 %v6238
    %v6559 = vunpack.c.l.b16 %v6239
    %v6560 = vunpack.c.l.b16 %v6240
    %v6561 = vunpack.c.l.b16 %v6241
    %v6562 = vunpack.c.l.b16 %v6242
    %v6563 = vunpack.c.l.b16 %v6243
    %v6564 = vpack.c.b16 %v6421, %v6420
    %v6565 = vpack.c.b16 %v6423, %v6422
    %v6566 = vpack.c.b16 %v6425, %v6424
    %v6567 = vpack.c.b16 %v6427, %v6426
    %v6568 = vpack.c.b16 %v6429, %v6428
    %v6569 = vpack.c.b16 %v6431, %v6430
    %v6570 = vpack.c.b16 %v6433, %v6432
    %v6571 = vpack.c.b16 %v6435, %v6434
    %v6572 = vpack.c.b16 %v6437, %v6436
    %v6573 = vpack.c.b16 %v6439, %v6438
    %v6574 = vpack.c.b16 %v6441, %v6440
    %v6575 = vpack.c.b16 %v6443, %v6442
    %v6576 = vpack.c.b16 %v6445, %v6444
    %v6577 = vpack.c.b16 %v6447, %v6446
    %v6578 = vpack.c.b16 %v6449, %v6448
    %v6579 = vpack.c.b16 %v6451, %v6450
    %v6580 = vpack.c.b16 %v6453, %v6452
    %v6581 = vpack.c.b16 %v6455, %v6454
    %v6582 = vpack.c.b16 %v6457, %v6456
    %v6583 = vpack.c.b16 %v6459, %v6458
    %v6584 = vpack.c.b16 %v6461, %v6460
    %v6585 = vpack.c.b16 %v6463, %v6462
    %v6586 = vpack.c.b16 %v6465, %v6464
    %v6587 = vpack.c.b16 %v6467, %v6466
    %v6588 = vpack.c.b16 %v6469, %v6468
    %v6589 = vpack.c.b16 %v6471, %v6470
    %v6590 = vpack.c.b16 %v6473, %v6472
    %v6591 = vpack.c.b16 %v6475, %v6474
    %v6592 = vpack.c.b16 %v6477, %v6476
    %v6593 = vpack.c.b16 %v6479, %v6478
    %v6594 = vpack.c.b16 %v6481, %v6480
    %v6595 = vpack.c.b16 %v6483, %v6482
    %v6596 = vpack.c.b16 %v6485, %v6484
    %v6597 = vpack.c.b16 %v6487, %v6486
    %v6598 = vpack.c.b16 %v6489, %v6488
    %v6599 = vpack.c.b16 %v6491, %v6490
    %v6600 = vpack.c.b16 %v6493, %v6492
    %v6601 = vpack.c.b16 %v6495, %v6494
    %v6602 = vpack.c.b16 %v6497, %v6496
    %v6603 = vpack.c.b16 %v6499, %v6498
    %v6604 = vpack.c.b16 %v6501, %v6500
    %v6605 = vpack.c.b16 %v6503, %v6502
    %v6606 = vpack.c.b16 %v6505, %v6504
    %v6607 = vpack.c.b16 %v6507, %v6506
    %v6608 = vpack.c.b16 %v6509, %v6508
    %v6609 = vpack.c.b16 %v6511, %v6510
    %v6610 = vpack.c.b16 %v6513, %v6512
    %v6611 = vpack.c.b16 %v6515, %v6514
    %v6612 = vpack.c.b16 %v6517, %v6516
    %v6613 = vpack.c.b16 %v6519, %v6518
    %v6614 = vpack.c.b16 %v6521, %v6520
    %v6615 = vpack.c.b16 %v6523, %v6522
    %v6616 = vpack.c.b16 %v6525, %v6524
    %v6617 = vpack.c.b16 %v6527, %v6526
    %v6618 = vpack.c.b16 %v6529, %v6528
    %v6619 = vpack.c.b16 %v6531, %v6530
    %v6620 = vpack.c.b16 %v6533, %v6532
    %v6621 = vpack.c.b16 %v6535, %v6534
    %v6622 = vpack.c.b16 %v6537, %v6536
    %v6623 = vpack.c.b16 %v6539, %v6538
    %v6624 = vpack.c.b16 %v6541, %v6540
    %v6625 = vpack.c.b16 %v6543, %v6542
    %v6626 = vpack.c.b16 %v6545, %v6544
    %v6627 = vpack.c.b16 %v6547, %v6546
    %v6628 = vpack.c.b16 %v6549, %v6548
    %v6629 = vpack.c.b16 %v6551, %v6550
    %v6630 = vpack.c.b16 %v6553, %v6552
    %v6631 = vpack.c.b16 %v6555, %v6554
    %v6632 = vpack.c.b16 %v6557, %v6556
    %v6633 = vpack.c.b16 %v6559, %v6558
    %v6634 = vpack.c.b16 %v6561, %v6560
    %v6635 = vpack.c.b16 %v6563, %v6562
    %6708 = vmatprep.subr.bf16.mxu0 0
    %6709 = vmatpush1.bf16.msra.mxu0 %v6564
    %6710 = vmatprep.subr.bf16.mxu0 0
    %6711 = vmatpush1.bf16.msra.mxu0 %v6565
    %6712 = vmatprep.subr.bf16.mxu0 0
    %6713 = vmatpush1.bf16.msra.mxu0 %v6566
    %6714 = vmatprep.subr.bf16.mxu0 0
    %6715 = vmatpush1.bf16.msra.mxu0 %v6567
    %6716 = vmatprep.subr.bf16.mxu0 0
    %6717 = vmatpush1.bf16.msra.mxu0 %v6568
    %6718 = vmatprep.subr.bf16.mxu0 0
    %6719 = vmatpush1.bf16.msra.mxu0 %v6569
    %6720 = vmatprep.subr.bf16.mxu0 0
    %6721 = vmatpush1.bf16.msra.mxu0 %v6570
    %6722 = vmatprep.subr.bf16.mxu0 0
    %6723 = vmatpush1.bf16.msra.mxu0 %v6571
    %6724 = vmatprep.subr.bf16.mxu0 0
    %6725 = vmatpush1.bf16.msra.mxu0 %v6572
    %6726 = vmatprep.subr.bf16.mxu0 0
    %6727 = vmatpush1.bf16.msra.mxu0 %v6573
    %6728 = vmatprep.subr.bf16.mxu0 0
    %6729 = vmatpush1.bf16.msra.mxu0 %v6574
    %6730 = vmatprep.subr.bf16.mxu0 0
    %6731 = vmatpush1.bf16.msra.mxu0 %v6575
    %6732 = vmatprep.subr.bf16.mxu0 0
    %6733 = vmatpush1.bf16.msra.mxu0 %v6576
    %6734 = vmatprep.subr.bf16.mxu0 0
    %6735 = vmatpush1.bf16.msra.mxu0 %v6577
    %6736 = vmatprep.subr.bf16.mxu0 0
    %6737 = vmatpush1.bf16.msra.mxu0 %v6578
    %6738 = vmatprep.subr.bf16.mxu0 0
    %6739 = vmatpush1.bf16.msra.mxu0 %v6579
    %6740 = vmatprep.mubr.bf16.mxu0 %v6259
    %6741 = vmatmul.mubr.bf16.gmra.mrb[0].mxu0 %v6258
    %v6742 = vpop.f32.mrb[0].mxu0
    %v6743 = vadd.f32 0.0, %v6742
    %v6744 = vpop.f32.mrb[0].mxu0
    %v6745 = vpop.f32.mrb[0].mxu0
    %v6746 = vpop.f32.mrb[0].mxu0
    %6747 = vdwg.mxu0
    %6748 = vmatprep.subr.bf16.mxu0 0
    %6749 = vmatpush1.bf16.msra.mxu0 %v6580
    %6750 = vmatprep.subr.bf16.mxu0 0
    %6751 = vmatpush1.bf16.msra.mxu0 %v6581
    %6752 = vmatprep.subr.bf16.mxu0 0
    %6753 = vmatpush1.bf16.msra.mxu0 %v6582
    %6754 = vmatprep.subr.bf16.mxu0 0
    %6755 = vmatpush1.bf16.msra.mxu0 %v6583
    %6756 = vmatprep.subr.bf16.mxu0 0
    %6757 = vmatpush1.bf16.msra.mxu0 %v6584
    %6758 = vmatprep.subr.bf16.mxu0 0
    %6759 = vmatpush1.bf16.msra.mxu0 %v6585
    %6760 = vmatprep.subr.bf16.mxu0 0
    %6761 = vmatpush1.bf16.msra.mxu0 %v6586
    %6762 = vmatprep.subr.bf16.mxu0 0
    %6763 = vmatpush1.bf16.msra.mxu0 %v6587
    %6764 = vmatprep.subr.bf16.mxu0 0
    %6765 = vmatpush1.bf16.msra.mxu0 %v6588
    %6766 = vmatprep.subr.bf16.mxu0 0
    %6767 = vmatpush1.bf16.msra.mxu0 %v6589
    %6768 = vmatprep.subr.bf16.mxu0 0
    %6769 = vmatpush1.bf16.msra.mxu0 %v6590
    %6770 = vmatprep.subr.bf16.mxu0 0
    %6771 = vmatpush1.bf16.msra.mxu0 %v6591
    %6772 = vmatprep.subr.bf16.mxu0 0
    %6773 = vmatpush1.bf16.msra.mxu0 %v6592
    %6774 = vmatprep.subr.bf16.mxu0 0
    %6775 = vmatpush1.bf16.msra.mxu0 %v6593
    %6776 = vmatprep.subr.bf16.mxu0 0
    %6777 = vmatpush1.bf16.msra.mxu0 %v6594
    %6778 = vmatprep.subr.bf16.mxu0 0
    %6779 = vmatpush1.bf16.msra.mxu0 %v6595
    %6780 = vmatprep.mubr.bf16.mxu0 %v6261
    %6781 = vmatmul.mubr.bf16.gmra.mrb[0].mxu0 %v6260
    %v6782 = vpop.f32.mrb[0].mxu0
    %v6783 = vadd.f32 %v6743, %v6782
    %v6784 = vpop.f32.mrb[0].mxu0
    %v6785 = vpop.f32.mrb[0].mxu0
    %v6786 = vpop.f32.mrb[0].mxu0
    %6787 = vdwg.mxu0
    %6788 = vmatprep.subr.bf16.mxu0 0
    %6789 = vmatpush1.bf16.msra.mxu0 %v6596
    %6790 = vmatprep.subr.bf16.mxu0 0
    %6791 = vmatpush1.bf16.msra.mxu0 %v6597
    %6792 = vmatprep.subr.bf16.mxu0 0
    %6793 = vmatpush1.bf16.msra.mxu0 %v6598
    %6794 = vmatprep.subr.bf16.mxu0 0
    %6795 = vmatpush1.bf16.msra.mxu0 %v6599
    %6796 = vmatprep.subr.bf16.mxu0 0
    %6797 = vmatpush1.bf16.msra.mxu0 %v6600
    %6798 = vmatprep.subr.bf16.mxu0 0
    %6799 = vmatpush1.bf16.msra.mxu0 %v6601
    %6800 = vmatprep.subr.bf16.mxu0 0
    %6801 = vmatpush1.bf16.msra.mxu0 %v6602
    %6802 = vmatprep.subr.bf16.mxu0 0
    %6803 = vmatpush1.bf16.msra.mxu0 %v6603
    %6804 = vmatprep.subr.bf16.mxu0 0
    %6805 = vmatpush1.bf16.msra.mxu0 %v6604
    %6806 = vmatprep.subr.bf16.mxu0 0
    %6807 = vmatpush1.bf16.msra.mxu0 %v6605
    %6808 = vmatprep.subr.bf16.mxu0 0
    %6809 = vmatpush1.bf16.msra.mxu0 %v6606
    %6810 = vmatprep.subr.bf16.mxu0 0
    %6811 = vmatpush1.bf16.msra.mxu0 %v6607
    %6812 = vmatprep.subr.bf16.mxu0 0
    %6813 = vmatpush1.bf16.msra.mxu0 %v6608
    %6814 = vmatprep.subr.bf16.mxu0 0
    %6815 = vmatpush1.bf16.msra.mxu0 %v6609
    %6816 = vmatprep.subr.bf16.mxu0 0
    %6817 = vmatpush1.bf16.msra.mxu0 %v6610
    %6818 = vmatprep.subr.bf16.mxu0 0
    %6819 = vmatpush1.bf16.msra.mxu0 %v6611
    %6820 = vmatprep.mubr.bf16.mxu0 %v6263
    %6821 = vmatmul.mubr.bf16.gmra.mrb[0].mxu0 %v6262
    %v6822 = vpop.f32.mrb[0].mxu0
    %v6823 = vadd.f32 %v6783, %v6822
    %v6824 = vpop.f32.mrb[0].mxu0
    %v6825 = vpop.f32.mrb[0].mxu0
    %v6826 = vpop.f32.mrb[0].mxu0
    %6827 = vdwg.mxu0
    %6828 = vmatprep.subr.bf16.mxu0 0
    %6829 = vmatpush1.bf16.msra.mxu0 %v6612
    %6830 = vmatprep.subr.bf16.mxu0 0
    %6831 = vmatpush1.bf16.msra.mxu0 %v6613
    %6832 = vmatprep.subr.bf16.mxu0 0
    %6833 = vmatpush1.bf16.msra.mxu0 %v6614
    %6834 = vmatprep.subr.bf16.mxu0 0
    %6835 = vmatpush1.bf16.msra.mxu0 %v6615
    %6836 = vmatprep.subr.bf16.mxu0 0
    %6837 = vmatpush1.bf16.msra.mxu0 %v6616
    %6838 = vmatprep.subr.bf16.mxu0 0
    %6839 = vmatpush1.bf16.msra.mxu0 %v6617
    %6840 = vmatprep.subr.bf16.mxu0 0
    %6841 = vmatpush1.bf16.msra.mxu0 %v6618
    %6842 = vmatprep.subr.bf16.mxu0 0
    %6843 = vmatpush1.bf16.msra.mxu0 %v6619
    %6844 = vmatprep.subr.bf16.mxu0 0
    %6845 = vmatpush1.bf16.msra.mxu0 %v6620
    %6846 = vmatprep.subr.bf16.mxu0 0
    %6847 = vmatpush1.bf16.msra.mxu0 %v6621
    %6848 = vmatprep.subr.bf16.mxu0 0
    %6849 = vmatpush1.bf16.msra.mxu0 %v6622
    %6850 = vmatprep.subr.bf16.mxu0 0
    %6851 = vmatpush1.bf16.msra.mxu0 %v6623
    %6852 = vmatprep.subr.bf16.mxu0 0
    %6853 = vmatpush1.bf16.msra.mxu0 %v6624
    %6854 = vmatprep.subr.bf16.mxu0 0
    %6855 = vmatpush1.bf16.msra.mxu0 %v6625
    %6856 = vmatprep.subr.bf16.mxu0 0
    %6857 = vmatpush1.bf16.msra.mxu0 %v6626
    %6858 = vmatprep.subr.bf16.mxu0 0
    %6859 = vmatpush1.bf16.msra.mxu0 %v6627
    %6860 = vmatprep.mubr.bf16.mxu0 %v6265
    %6861 = vmatmul.mubr.bf16.gmra.mrb[0].mxu0 %v6264
    %v6862 = vpop.f32.mrb[0].mxu0
    %v6863 = vadd.f32 %v6823, %v6862
    %v6864 = vpop.f32.mrb[0].mxu0
    %v6865 = vpop.f32.mrb[0].mxu0
    %v6866 = vpop.f32.mrb[0].mxu0
    %6867 = vdwg.mxu0
    %6868 = vmatprep.subr.bf16.mxu0 0
    %6869 = vmatpush1.bf16.msra.mxu0 %v6628
    %6870 = vmatprep.subr.bf16.mxu0 0
    %6871 = vmatpush1.bf16.msra.mxu0 %v6629
    %6872 = vmatprep.subr.bf16.mxu0 0
    %6873 = vmatpush1.bf16.msra.mxu0 %v6630
    %6874 = vmatprep.subr.bf16.mxu0 0
    %6875 = vmatpush1.bf16.msra.mxu0 %v6631
    %6876 = vmatprep.subr.bf16.mxu0 0
    %6877 = vmatpush1.bf16.msra.mxu0 %v6632
    %6878 = vmatprep.subr.bf16.mxu0 0
    %6879 = vmatpush1.bf16.msra.mxu0 %v6633
    %6880 = vmatprep.subr.bf16.mxu0 0
    %6881 = vmatpush1.bf16.msra.mxu0 %v6634
    %6882 = vmatprep.subr.bf16.mxu0 0
    %6883 = vmatpush1.bf16.msra.mxu0 %v6635
    %6884 = vmatprep.subr.bf16.mxu0 0
    %6885 = vmatpush1.bf16.msra.mxu0 0
    %6886 = vmatprep.subr.bf16.mxu0 0
    %6887 = vmatpush1.bf16.msra.mxu0 0
    %6888 = vmatprep.subr.bf16.mxu0 0
    %6889 = vmatpush1.bf16.msra.mxu0 0
    %6890 = vmatprep.subr.bf16.mxu0 0
    %6891 = vmatpush1.bf16.msra.mxu0 0
    %6892 = vmatprep.subr.bf16.mxu0 0
    %6893 = vmatpush1.bf16.msra.mxu0 0
    %6894 = vmatprep.subr.bf16.mxu0 0
    %6895 = vmatpush1.bf16.msra.mxu0 0
    %6896 = vmatprep.subr.bf16.mxu0 0
    %6897 = vmatpush1.bf16.msra.mxu0 0
    %6898 = vmatprep.subr.bf16.mxu0 0
    %6899 = vmatpush1.bf16.msra.mxu0 0
    %6900 = vmatprep.mubr.bf16.mxu0 0
    %6901 = vmatmul.mubr.bf16.gmra.mrb[0].mxu0 %v6266
    %v6902 = vpop.f32.mrb[0].mxu0
    %v6903 = vadd.f32 %v6863, %v6902
    %v6904 = vpop.f32.mrb[0].mxu0
    %v6905 = vpop.f32.mrb[0].mxu0
    %v6906 = vpop.f32.mrb[0].mxu0
    %6907 = vdwg.mxu0
    %v6908 = vmax.f32 %v6903, 0.0
    %v6909 = vld [vmem:[%s17] sm:$0xff]
    %v6910 = vld [vmem:[%s17 + $0x8] sm:$0x1]
    %v6911 = vsub.f32 0.0, %v6908
    %v6912 = vmul.f32 %v6911, 1.442695
    %v6913 = vpow.pop %v6912
    %v6914 = vadd.f32 %v6913, 1.0
    %v6915 = vrcp.pop %v6914
    %v6916 = vmul.f32 1.0, %v6915
    %v6917 = vmul.f32 %v6908, %v6916
    %v6918 = vlaneseq
    %v6919 = vshrl.u32 %v6918, 7
    %v6920 = vsub.s32 0, %v6919
    %v6921 = vrot.slane %v6909, %v6920
    %v6922 = vmul.f32 %v6917, %v6921
    %v6923 = vsub.f32 %v6908, -2.2
    %v6924 = vsub.f32 %v6908, -1.8
    %v6925 = vsub.f32 %v6908, -1.4
    %v6926 = vsub.f32 %v6908, -1.0
    %v6927 = vsub.f32 %v6908, -0.6
    %v6928 = vsub.f32 %v6908, -0.2
    %v6929 = vsub.f32 %v6908, 0.2
    %v6930 = vsub.f32 %v6908, 0.6
    %v6931 = vsub.f32 %v6908, 1.0
    %v6932 = vsub.f32 %v6908, 1.4
    %v6933 = vsub.f32 %v6908, 1.8
    %v6934 = vsub.f32 %v6908, 2.2
    %vm6935 = vcmp.ge.f32.partialorder %v6923, 0.0
    %vm6936 = vcmp.lt.f32.partialorder %v6924, 0.0
    %vm6937 = vmand %vm6935, %vm6936
    %v6938 = vsel %vm6937, 1.0, 0.0
    %vm6939 = vcmp.ge.f32.partialorder %v6924, 0.0
    %vm6940 = vcmp.lt.f32.partialorder %v6925, 0.0
    %vm6941 = vmand %vm6939, %vm6940
    %v6942 = vsel %vm6941, 1.0, 0.0
    %vm6943 = vcmp.ge.f32.partialorder %v6925, 0.0
    %vm6944 = vcmp.lt.f32.partialorder %v6926, 0.0
    %vm6945 = vmand %vm6943, %vm6944
    %v6946 = vsel %vm6945, 1.0, 0.0
    %vm6947 = vcmp.ge.f32.partialorder %v6926, 0.0
    %vm6948 = vcmp.lt.f32.partialorder %v6927, 0.0
    %vm6949 = vmand %vm6947, %vm6948
    %v6950 = vsel %vm6949, 1.0, 0.0
    %vm6951 = vcmp.ge.f32.partialorder %v6927, 0.0
    %vm6952 = vcmp.lt.f32.partialorder %v6928, 0.0
    %vm6953 = vmand %vm6951, %vm6952
    %v6954 = vsel %vm6953, 1.0, 0.0
    %vm6955 = vcmp.ge.f32.partialorder %v6928, 0.0
    %vm6956 = vcmp.lt.f32.partialorder %v6929, 0.0
    %vm6957 = vmand %vm6955, %vm6956
    %v6958 = vsel %vm6957, 1.0, 0.0
    %vm6959 = vcmp.ge.f32.partialorder %v6929, 0.0
    %vm6960 = vcmp.lt.f32.partialorder %v6930, 0.0
    %vm6961 = vmand %vm6959, %vm6960
    %v6962 = vsel %vm6961, 1.0, 0.0
    %vm6963 = vcmp.ge.f32.partialorder %v6930, 0.0
    %vm6964 = vcmp.lt.f32.partialorder %v6931, 0.0
    %vm6965 = vmand %vm6963, %vm6964
    %v6966 = vsel %vm6965, 1.0, 0.0
    %vm6967 = vcmp.ge.f32.partialorder %v6931, 0.0
    %vm6968 = vcmp.lt.f32.partialorder %v6932, 0.0
    %vm6969 = vmand %vm6967, %vm6968
    %v6970 = vsel %vm6969, 1.0, 0.0
    %vm6971 = vcmp.ge.f32.partialorder %v6932, 0.0
    %vm6972 = vcmp.lt.f32.partialorder %v6933, 0.0
    %vm6973 = vmand %vm6971, %vm6972
    %v6974 = vsel %vm6973, 1.0, 0.0
    %vm6975 = vcmp.ge.f32.partialorder %v6933, 0.0
    %vm6976 = vcmp.lt.f32.partialorder %v6934, 0.0
    %vm6977 = vmand %vm6975, %vm6976
    %v6978 = vsel %vm6977, 1.0, 0.0
    %v6979 = vmul.f32 %v6923, %v6938
    %v6980 = vmul.f32 %v6924, %v6942
    %v6981 = vmul.f32 %v6925, %v6946
    %v6982 = vmul.f32 %v6926, %v6950
    %v6983 = vmul.f32 %v6927, %v6954
    %v6984 = vmul.f32 %v6928, %v6958
    %v6985 = vmul.f32 %v6929, %v6962
    %v6986 = vmul.f32 %v6930, %v6966
    %v6987 = vmul.f32 %v6931, %v6970
    %v6988 = vmul.f32 %v6932, %v6974
    %v6989 = vmul.f32 %v6933, %v6978
    %v6990 = vmul.f32 %v6942, 0.4
    %v6991 = vadd.f32 %v6979, %v6990
    %v6992 = vsub.f32 %v6991, %v6980
    %v6993 = vmul.f32 %v6992, 2.5
    %v6994 = vmul.f32 %v6946, 0.4
    %v6995 = vadd.f32 %v6980, %v6994
    %v6996 = vsub.f32 %v6995, %v6981
    %v6997 = vmul.f32 %v6996, 2.5
    %v6998 = vmul.f32 %v6950, 0.4
    %v6999 = vadd.f32 %v6981, %v6998
    %v7000 = vsub.f32 %v6999, %v6982
    %v7001 = vmul.f32 %v7000, 2.5
    %v7002 = vmul.f32 %v6954, 0.4
    %v7003 = vadd.f32 %v6982, %v7002
    %v7004 = vsub.f32 %v7003, %v6983
    %v7005 = vmul.f32 %v7004, 2.5
    %v7006 = vmul.f32 %v6958, 0.4
    %v7007 = vadd.f32 %v6983, %v7006
    %v7008 = vsub.f32 %v7007, %v6984
    %v7009 = vmul.f32 %v7008, 2.5
    %v7010 = vmul.f32 %v6962, 0.4
    %v7011 = vadd.f32 %v6984, %v7010
    %v7012 = vsub.f32 %v7011, %v6985
    %v7013 = vmul.f32 %v7012, 2.5
    %v7014 = vmul.f32 %v6966, 0.4
    %v7015 = vadd.f32 %v6985, %v7014
    %v7016 = vsub.f32 %v7015, %v6986
    %v7017 = vmul.f32 %v7016, 2.5
    %v7018 = vmul.f32 %v6970, 0.4
    %v7019 = vadd.f32 %v6986, %v7018
    %v7020 = vsub.f32 %v7019, %v6987
    %v7021 = vmul.f32 %v7020, 2.5
    %v7022 = vmul.f32 %v6974, 0.4
    %v7023 = vadd.f32 %v6987, %v7022
    %v7024 = vsub.f32 %v7023, %v6988
    %v7025 = vmul.f32 %v7024, 2.5
    %v7026 = vmul.f32 %v6978, 0.4
    %v7027 = vadd.f32 %v6988, %v7026
    %v7028 = vsub.f32 %v7027, %v6989
    %v7029 = vmul.f32 %v7028, 2.5
    %v7030 = vmul.f32 %v6923, %v6993
    %v7031 = vmul.f32 %v6924, %v6997
    %v7032 = vmul.f32 %v6925, %v7001
    %v7033 = vmul.f32 %v6926, %v7005
    %v7034 = vmul.f32 %v6927, %v7009
    %v7035 = vmul.f32 %v6928, %v7013
    %v7036 = vmul.f32 %v6929, %v7017
    %v7037 = vmul.f32 %v6930, %v7021
    %v7038 = vmul.f32 %v6931, %v7025
    %v7039 = vmul.f32 %v6932, %v7029
    %v7040 = vmul.f32 %v6997, 0.8
    %v7041 = vadd.f32 %v7030, %v7040
    %v7042 = vsub.f32 %v7041, %v7031
    %v7043 = vmul.f32 %v7042, 1.25
    %v7044 = vmul.f32 %v7001, 0.8
    %v7045 = vadd.f32 %v7031, %v7044
    %v7046 = vsub.f32 %v7045, %v7032
    %v7047 = vmul.f32 %v7046, 1.25
    %v7048 = vmul.f32 %v7005, 0.8
    %v7049 = vadd.f32 %v7032, %v7048
    %v7050 = vsub.f32 %v7049, %v7033
    %v7051 = vmul.f32 %v7050, 1.25
    %v7052 = vmul.f32 %v7009, 0.8
    %v7053 = vadd.f32 %v7033, %v7052
    %v7054 = vsub.f32 %v7053, %v7034
    %v7055 = vmul.f32 %v7054, 1.25
    %v7056 = vmul.f32 %v7013, 0.8
    %v7057 = vadd.f32 %v7034, %v7056
    %v7058 = vsub.f32 %v7057, %v7035
    %v7059 = vmul.f32 %v7058, 1.25
    %v7060 = vmul.f32 %v7017, 0.8
    %v7061 = vadd.f32 %v7035, %v7060
    %v7062 = vsub.f32 %v7061, %v7036
    %v7063 = vmul.f32 %v7062, 1.25
    %v7064 = vmul.f32 %v7021, 0.8
    %v7065 = vadd.f32 %v7036, %v7064
    %v7066 = vsub.f32 %v7065, %v7037
    %v7067 = vmul.f32 %v7066, 1.25
    %v7068 = vmul.f32 %v7025, 0.8
    %v7069 = vadd.f32 %v7037, %v7068
    %v7070 = vsub.f32 %v7069, %v7038
    %v7071 = vmul.f32 %v7070, 1.25
    %v7072 = vmul.f32 %v7029, 0.8
    %v7073 = vadd.f32 %v7038, %v7072
    %v7074 = vsub.f32 %v7073, %v7039
    %v7075 = vmul.f32 %v7074, 1.25
    %v7076 = vmul.f32 %v6923, %v7043
    %v7077 = vmul.f32 %v6924, %v7047
    %v7078 = vmul.f32 %v6925, %v7051
    %v7079 = vmul.f32 %v6926, %v7055
    %v7080 = vmul.f32 %v6927, %v7059
    %v7081 = vmul.f32 %v6928, %v7063
    %v7082 = vmul.f32 %v6929, %v7067
    %v7083 = vmul.f32 %v6930, %v7071
    %v7084 = vmul.f32 %v6931, %v7075
    %v7085 = vmul.f32 %v7047, 1.2
    %v7086 = vadd.f32 %v7076, %v7085
    %v7087 = vsub.f32 %v7086, %v7077
    %v7088 = vmul.f32 %v7087, 0.8333333
    %v7089 = vmul.f32 %v7051, 1.2
    %v7090 = vadd.f32 %v7077, %v7089
    %v7091 = vsub.f32 %v7090, %v7078
    %v7092 = vmul.f32 %v7091, 0.8333333
    %v7093 = vmul.f32 %v7055, 1.2
    %v7094 = vadd.f32 %v7078, %v7093
    %v7095 = vsub.f32 %v7094, %v7079
    %v7096 = vmul.f32 %v7095, 0.8333333
    %v7097 = vmul.f32 %v7059, 1.2
    %v7098 = vadd.f32 %v7079, %v7097
    %v7099 = vsub.f32 %v7098, %v7080
    %v7100 = vmul.f32 %v7099, 0.8333333
    %v7101 = vmul.f32 %v7063, 1.2
    %v7102 = vadd.f32 %v7080, %v7101
    %v7103 = vsub.f32 %v7102, %v7081
    %v7104 = vmul.f32 %v7103, 0.8333333
    %v7105 = vmul.f32 %v7067, 1.2
    %v7106 = vadd.f32 %v7081, %v7105
    %v7107 = vsub.f32 %v7106, %v7082
    %v7108 = vmul.f32 %v7107, 0.8333333
    %v7109 = vmul.f32 %v7071, 1.2
    %v7110 = vadd.f32 %v7082, %v7109
    %v7111 = vsub.f32 %v7110, %v7083
    %v7112 = vmul.f32 %v7111, 0.8333333
    %v7113 = vmul.f32 %v7075, 1.2
    %v7114 = vadd.f32 %v7083, %v7113
    %v7115 = vsub.f32 %v7114, %v7084
    %v7116 = vmul.f32 %v7115, 0.8333333
    %v7117 = vlaneseq
    %v7118 = vshrl.u32 %v7117, 7
    %v7119 = vsub.s32 1, %v7118
    %v7120 = vrot.slane %v6909, %v7119
    %v7121 = vmul.f32 %v7088, %v7120
    %v7122 = vadd.f32 %v6922, %v7121
    %v7123 = vlaneseq
    %v7124 = vshrl.u32 %v7123, 7
    %v7125 = vsub.s32 2, %v7124
    %v7126 = vrot.slane %v6909, %v7125
    %v7127 = vmul.f32 %v7092, %v7126
    %v7128 = vadd.f32 %v7122, %v7127
    %v7129 = vlaneseq
    %v7130 = vshrl.u32 %v7129, 7
    %v7131 = vsub.s32 3, %v7130
    %v7132 = vrot.slane %v6909, %v7131
    %v7133 = vmul.f32 %v7096, %v7132
    %v7134 = vadd.f32 %v7128, %v7133
    %v7135 = vlaneseq
    %v7136 = vshrl.u32 %v7135, 7
    %v7137 = vsub.s32 4, %v7136
    %v7138 = vrot.slane %v6909, %v7137
    %v7139 = vmul.f32 %v7100, %v7138
    %v7140 = vadd.f32 %v7134, %v7139
    %v7141 = vlaneseq
    %v7142 = vshrl.u32 %v7141, 7
    %v7143 = vsub.s32 5, %v7142
    %v7144 = vrot.slane %v6909, %v7143
    %v7145 = vmul.f32 %v7104, %v7144
    %v7146 = vadd.f32 %v7140, %v7145
    %v7147 = vlaneseq
    %v7148 = vshrl.u32 %v7147, 7
    %v7149 = vsub.s32 6, %v7148
    %v7150 = vrot.slane %v6909, %v7149
    %v7151 = vmul.f32 %v7108, %v7150
    %v7152 = vadd.f32 %v7146, %v7151
    %v7153 = vlaneseq
    %v7154 = vshrl.u32 %v7153, 7
    %v7155 = vsub.s32 7, %v7154
    %v7156 = vrot.slane %v6909, %v7155
    %v7157 = vmul.f32 %v7112, %v7156
    %v7158 = vadd.f32 %v7152, %v7157
    %v7159 = vlaneseq
    %v7160 = vshrl.u32 %v7159, 7
    %v7161 = vsub.s32 0, %v7160
    %v7162 = vrot.slane %v6910, %v7161
    %v7163 = vmul.f32 %v7116, %v7162
    %v7164 = vadd.f32 %v7158, %v7163
    %vm7165 = vcmask 64512
    %v7166 = vsel %vm7165, %v7164, 0.0
    %7167 = vadd.xlane.f32.xlu0 %v7166
    %v7168 = vpop.xlane.xlu0 %7167
    %v7169 = vld [vmem:[%s4] sm:$0xff]
    %v7170 = vld [vmem:[%s18] sm:$0xff]
    %v7171 = vld [vmem:[%s18 + $0x8] sm:$0x1]
    %v7172 = vsub.f32 0.0, %v7169
    %v7173 = vmul.f32 %v7172, 1.442695
    %v7174 = vpow.pop %v7173
    %v7175 = vadd.f32 %v7174, 1.0
    %v7176 = vrcp.pop %v7175
    %v7177 = vmul.f32 1.0, %v7176
    %v7178 = vmul.f32 %v7169, %v7177
    %v7179 = vlaneseq
    %v7180 = vshrl.u32 %v7179, 7
    %v7181 = vsub.s32 0, %v7180
    %v7182 = vrot.slane %v7170, %v7181
    %v7183 = vmul.f32 %v7178, %v7182
    %v7184 = vsub.f32 %v7169, -2.2
    %v7185 = vsub.f32 %v7169, -1.8
    %v7186 = vsub.f32 %v7169, -1.4
    %v7187 = vsub.f32 %v7169, -1.0
    %v7188 = vsub.f32 %v7169, -0.6
    %v7189 = vsub.f32 %v7169, -0.2
    %v7190 = vsub.f32 %v7169, 0.2
    %v7191 = vsub.f32 %v7169, 0.6
    %v7192 = vsub.f32 %v7169, 1.0
    %v7193 = vsub.f32 %v7169, 1.4
    %v7194 = vsub.f32 %v7169, 1.8
    %v7195 = vsub.f32 %v7169, 2.2
    %vm7196 = vcmp.ge.f32.partialorder %v7184, 0.0
    %vm7197 = vcmp.lt.f32.partialorder %v7185, 0.0
    %vm7198 = vmand %vm7196, %vm7197
    %v7199 = vsel %vm7198, 1.0, 0.0
    %vm7200 = vcmp.ge.f32.partialorder %v7185, 0.0
    %vm7201 = vcmp.lt.f32.partialorder %v7186, 0.0
    %vm7202 = vmand %vm7200, %vm7201
    %v7203 = vsel %vm7202, 1.0, 0.0
    %vm7204 = vcmp.ge.f32.partialorder %v7186, 0.0
    %vm7205 = vcmp.lt.f32.partialorder %v7187, 0.0
    %vm7206 = vmand %vm7204, %vm7205
    %v7207 = vsel %vm7206, 1.0, 0.0
    %vm7208 = vcmp.ge.f32.partialorder %v7187, 0.0
    %vm7209 = vcmp.lt.f32.partialorder %v7188, 0.0
    %vm7210 = vmand %vm7208, %vm7209
    %v7211 = vsel %vm7210, 1.0, 0.0
    %vm7212 = vcmp.ge.f32.partialorder %v7188, 0.0
    %vm7213 = vcmp.lt.f32.partialorder %v7189, 0.0
    %vm7214 = vmand %vm7212, %vm7213
    %v7215 = vsel %vm7214, 1.0, 0.0
    %vm7216 = vcmp.ge.f32.partialorder %v7189, 0.0
    %vm7217 = vcmp.lt.f32.partialorder %v7190, 0.0
    %vm7218 = vmand %vm7216, %vm7217
    %v7219 = vsel %vm7218, 1.0, 0.0
    %vm7220 = vcmp.ge.f32.partialorder %v7190, 0.0
    %vm7221 = vcmp.lt.f32.partialorder %v7191, 0.0
    %vm7222 = vmand %vm7220, %vm7221
    %v7223 = vsel %vm7222, 1.0, 0.0
    %vm7224 = vcmp.ge.f32.partialorder %v7191, 0.0
    %vm7225 = vcmp.lt.f32.partialorder %v7192, 0.0
    %vm7226 = vmand %vm7224, %vm7225
    %v7227 = vsel %vm7226, 1.0, 0.0
    %vm7228 = vcmp.ge.f32.partialorder %v7192, 0.0
    %vm7229 = vcmp.lt.f32.partialorder %v7193, 0.0
    %vm7230 = vmand %vm7228, %vm7229
    %v7231 = vsel %vm7230, 1.0, 0.0
    %vm7232 = vcmp.ge.f32.partialorder %v7193, 0.0
    %vm7233 = vcmp.lt.f32.partialorder %v7194, 0.0
    %vm7234 = vmand %vm7232, %vm7233
    %v7235 = vsel %vm7234, 1.0, 0.0
    %vm7236 = vcmp.ge.f32.partialorder %v7194, 0.0
    %vm7237 = vcmp.lt.f32.partialorder %v7195, 0.0
    %vm7238 = vmand %vm7236, %vm7237
    %v7239 = vsel %vm7238, 1.0, 0.0
    %v7240 = vmul.f32 %v7184, %v7199
    %v7241 = vmul.f32 %v7185, %v7203
    %v7242 = vmul.f32 %v7186, %v7207
    %v7243 = vmul.f32 %v7187, %v7211
    %v7244 = vmul.f32 %v7188, %v7215
    %v7245 = vmul.f32 %v7189, %v7219
    %v7246 = vmul.f32 %v7190, %v7223
    %v7247 = vmul.f32 %v7191, %v7227
    %v7248 = vmul.f32 %v7192, %v7231
    %v7249 = vmul.f32 %v7193, %v7235
    %v7250 = vmul.f32 %v7194, %v7239
    %v7251 = vmul.f32 %v7203, 0.4
    %v7252 = vadd.f32 %v7240, %v7251
    %v7253 = vsub.f32 %v7252, %v7241
    %v7254 = vmul.f32 %v7253, 2.5
    %v7255 = vmul.f32 %v7207, 0.4
    %v7256 = vadd.f32 %v7241, %v7255
    %v7257 = vsub.f32 %v7256, %v7242
    %v7258 = vmul.f32 %v7257, 2.5
    %v7259 = vmul.f32 %v7211, 0.4
    %v7260 = vadd.f32 %v7242, %v7259
    %v7261 = vsub.f32 %v7260, %v7243
    %v7262 = vmul.f32 %v7261, 2.5
    %v7263 = vmul.f32 %v7215, 0.4
    %v7264 = vadd.f32 %v7243, %v7263
    %v7265 = vsub.f32 %v7264, %v7244
    %v7266 = vmul.f32 %v7265, 2.5
    %v7267 = vmul.f32 %v7219, 0.4
    %v7268 = vadd.f32 %v7244, %v7267
    %v7269 = vsub.f32 %v7268, %v7245
    %v7270 = vmul.f32 %v7269, 2.5
    %v7271 = vmul.f32 %v7223, 0.4
    %v7272 = vadd.f32 %v7245, %v7271
    %v7273 = vsub.f32 %v7272, %v7246
    %v7274 = vmul.f32 %v7273, 2.5
    %v7275 = vmul.f32 %v7227, 0.4
    %v7276 = vadd.f32 %v7246, %v7275
    %v7277 = vsub.f32 %v7276, %v7247
    %v7278 = vmul.f32 %v7277, 2.5
    %v7279 = vmul.f32 %v7231, 0.4
    %v7280 = vadd.f32 %v7247, %v7279
    %v7281 = vsub.f32 %v7280, %v7248
    %v7282 = vmul.f32 %v7281, 2.5
    %v7283 = vmul.f32 %v7235, 0.4
    %v7284 = vadd.f32 %v7248, %v7283
    %v7285 = vsub.f32 %v7284, %v7249
    %v7286 = vmul.f32 %v7285, 2.5
    %v7287 = vmul.f32 %v7239, 0.4
    %v7288 = vadd.f32 %v7249, %v7287
    %v7289 = vsub.f32 %v7288, %v7250
    %v7290 = vmul.f32 %v7289, 2.5
    %v7291 = vmul.f32 %v7184, %v7254
    %v7292 = vmul.f32 %v7185, %v7258
    %v7293 = vmul.f32 %v7186, %v7262
    %v7294 = vmul.f32 %v7187, %v7266
    %v7295 = vmul.f32 %v7188, %v7270
    %v7296 = vmul.f32 %v7189, %v7274
    %v7297 = vmul.f32 %v7190, %v7278
    %v7298 = vmul.f32 %v7191, %v7282
    %v7299 = vmul.f32 %v7192, %v7286
    %v7300 = vmul.f32 %v7193, %v7290
    %v7301 = vmul.f32 %v7258, 0.8
    %v7302 = vadd.f32 %v7291, %v7301
    %v7303 = vsub.f32 %v7302, %v7292
    %v7304 = vmul.f32 %v7303, 1.25
    %v7305 = vmul.f32 %v7262, 0.8
    %v7306 = vadd.f32 %v7292, %v7305
    %v7307 = vsub.f32 %v7306, %v7293
    %v7308 = vmul.f32 %v7307, 1.25
    %v7309 = vmul.f32 %v7266, 0.8
    %v7310 = vadd.f32 %v7293, %v7309
    %v7311 = vsub.f32 %v7310, %v7294
    %v7312 = vmul.f32 %v7311, 1.25
    %v7313 = vmul.f32 %v7270, 0.8
    %v7314 = vadd.f32 %v7294, %v7313
    %v7315 = vsub.f32 %v7314, %v7295
    %v7316 = vmul.f32 %v7315, 1.25
    %v7317 = vmul.f32 %v7274, 0.8
    %v7318 = vadd.f32 %v7295, %v7317
    %v7319 = vsub.f32 %v7318, %v7296
    %v7320 = vmul.f32 %v7319, 1.25
    %v7321 = vmul.f32 %v7278, 0.8
    %v7322 = vadd.f32 %v7296, %v7321
    %v7323 = vsub.f32 %v7322, %v7297
    %v7324 = vmul.f32 %v7323, 1.25
    %v7325 = vmul.f32 %v7282, 0.8
    %v7326 = vadd.f32 %v7297, %v7325
    %v7327 = vsub.f32 %v7326, %v7298
    %v7328 = vmul.f32 %v7327, 1.25
    %v7329 = vmul.f32 %v7286, 0.8
    %v7330 = vadd.f32 %v7298, %v7329
    %v7331 = vsub.f32 %v7330, %v7299
    %v7332 = vmul.f32 %v7331, 1.25
    %v7333 = vmul.f32 %v7290, 0.8
    %v7334 = vadd.f32 %v7299, %v7333
    %v7335 = vsub.f32 %v7334, %v7300
    %v7336 = vmul.f32 %v7335, 1.25
    %v7337 = vmul.f32 %v7184, %v7304
    %v7338 = vmul.f32 %v7185, %v7308
    %v7339 = vmul.f32 %v7186, %v7312
    %v7340 = vmul.f32 %v7187, %v7316
    %v7341 = vmul.f32 %v7188, %v7320
    %v7342 = vmul.f32 %v7189, %v7324
    %v7343 = vmul.f32 %v7190, %v7328
    %v7344 = vmul.f32 %v7191, %v7332
    %v7345 = vmul.f32 %v7192, %v7336
    %v7346 = vmul.f32 %v7308, 1.2
    %v7347 = vadd.f32 %v7337, %v7346
    %v7348 = vsub.f32 %v7347, %v7338
    %v7349 = vmul.f32 %v7348, 0.8333333
    %v7350 = vmul.f32 %v7312, 1.2
    %v7351 = vadd.f32 %v7338, %v7350
    %v7352 = vsub.f32 %v7351, %v7339
    %v7353 = vmul.f32 %v7352, 0.8333333
    %v7354 = vmul.f32 %v7316, 1.2
    %v7355 = vadd.f32 %v7339, %v7354
    %v7356 = vsub.f32 %v7355, %v7340
    %v7357 = vmul.f32 %v7356, 0.8333333
    %v7358 = vmul.f32 %v7320, 1.2
    %v7359 = vadd.f32 %v7340, %v7358
    %v7360 = vsub.f32 %v7359, %v7341
    %v7361 = vmul.f32 %v7360, 0.8333333
    %v7362 = vmul.f32 %v7324, 1.2
    %v7363 = vadd.f32 %v7341, %v7362
    %v7364 = vsub.f32 %v7363, %v7342
    %v7365 = vmul.f32 %v7364, 0.8333333
    %v7366 = vmul.f32 %v7328, 1.2
    %v7367 = vadd.f32 %v7342, %v7366
    %v7368 = vsub.f32 %v7367, %v7343
    %v7369 = vmul.f32 %v7368, 0.8333333
    %v7370 = vmul.f32 %v7332, 1.2
    %v7371 = vadd.f32 %v7343, %v7370
    %v7372 = vsub.f32 %v7371, %v7344
    %v7373 = vmul.f32 %v7372, 0.8333333
    %v7374 = vmul.f32 %v7336, 1.2
    %v7375 = vadd.f32 %v7344, %v7374
    %v7376 = vsub.f32 %v7375, %v7345
    %v7377 = vmul.f32 %v7376, 0.8333333
    %v7378 = vlaneseq
    %v7379 = vshrl.u32 %v7378, 7
    %v7380 = vsub.s32 1, %v7379
    %v7381 = vrot.slane %v7170, %v7380
    %v7382 = vmul.f32 %v7349, %v7381
    %v7383 = vadd.f32 %v7183, %v7382
    %v7384 = vlaneseq
    %v7385 = vshrl.u32 %v7384, 7
    %v7386 = vsub.s32 2, %v7385
    %v7387 = vrot.slane %v7170, %v7386
    %v7388 = vmul.f32 %v7353, %v7387
    %v7389 = vadd.f32 %v7383, %v7388
    %v7390 = vlaneseq
    %v7391 = vshrl.u32 %v7390, 7
    %v7392 = vsub.s32 3, %v7391
    %v7393 = vrot.slane %v7170, %v7392
    %v7394 = vmul.f32 %v7357, %v7393
    %v7395 = vadd.f32 %v7389, %v7394
    %v7396 = vlaneseq
    %v7397 = vshrl.u32 %v7396, 7
    %v7398 = vsub.s32 4, %v7397
    %v7399 = vrot.slane %v7170, %v7398
    %v7400 = vmul.f32 %v7361, %v7399
    %v7401 = vadd.f32 %v7395, %v7400
    %v7402 = vlaneseq
    %v7403 = vshrl.u32 %v7402, 7
    %v7404 = vsub.s32 5, %v7403
    %v7405 = vrot.slane %v7170, %v7404
    %v7406 = vmul.f32 %v7365, %v7405
    %v7407 = vadd.f32 %v7401, %v7406
    %v7408 = vlaneseq
    %v7409 = vshrl.u32 %v7408, 7
    %v7410 = vsub.s32 6, %v7409
    %v7411 = vrot.slane %v7170, %v7410
    %v7412 = vmul.f32 %v7369, %v7411
    %v7413 = vadd.f32 %v7407, %v7412
    %v7414 = vlaneseq
    %v7415 = vshrl.u32 %v7414, 7
    %v7416 = vsub.s32 7, %v7415
    %v7417 = vrot.slane %v7170, %v7416
    %v7418 = vmul.f32 %v7373, %v7417
    %v7419 = vadd.f32 %v7413, %v7418
    %v7420 = vlaneseq
    %v7421 = vshrl.u32 %v7420, 7
    %v7422 = vsub.s32 0, %v7421
    %v7423 = vrot.slane %v7171, %v7422
    %v7424 = vmul.f32 %v7377, %v7423
    %v7425 = vadd.f32 %v7419, %v7424
    %vm7426 = vcmask 15360
    %v7427 = vsel %vm7426, %v7425, 0.0
    %7428 = vadd.xlane.f32.xlu0 %v7427
    %v7429 = vpop.xlane.xlu0 %7428
    %v7430 = vadd.f32 %v7168, %v7429
    %v7431 = vsub.f32 0.0, %v7430
    %v7432 = vmul.f32 %v7431, 1.442695
    %v7433 = vpow.pop %v7432
    %v7434 = vadd.f32 %v7433, 1.0
    %v7435 = vrcp.pop %v7434
    %v7436 = vmul.f32 1.0, %v7435
    %vm7437 = vcmask 7168
    %7438 = vst.msk [vmem:[%s19] sm:$0xff] %vm7437, %v7436
    // Predicated region
    $region118: #{cmodel_forward.1} parent=1 // pred_check
      _
    $region119: #{cmodel_forward.1} parent=1 // pred_check_branch
      %7440 = sbr.rel (0) target = $region121
    $region120: #{cmodel_forward.1} parent=1 // pred_region
      _
    $region121: #{cmodel_forward.1} parent=1 // pred_fallthru
      _
    // Predicated region
    $region122: #{cmodel_forward.1} parent=1 // pred_check
      _
    $region123: #{cmodel_forward.1} parent=1 // pred_check_branch
      %7442 = sbr.rel (0) target = $region125
    $region124: #{cmodel_forward.1} parent=1 // pred_region
      _
    $region125: #{cmodel_forward.1} parent=1 // pred_fallthru
      _
    %7443 = vsyncpa [#allocation9], 1
    %7444 = vsyncpa [#allocation11], 1
    %7445 = vsyncpa [#allocation14], 1
    %7446 = vsyncpa [#allocation17], 1
    %7447 = vsyncpa [#allocation20], 1
    %7448 = vsyncpa [#allocation23], 1
  %7449 = vsyncmov [#allocation4]
  %s7450 = vpop.sfrf %7449
  %p7451 = scmp.eq.s32.totalorder %s7450, 0
  %p7452 = pneg %p7451
  %7454 = shalt.err (%p7452)
  %s7455 = scalar_lea.sflag [#allocation4], 1
  %7456 = vsyncmov %s7455
  %s7457 = vpop.sfrf %7456
  %p7458 = scmp.eq.s32.totalorder %s7457, 0
  %p7459 = pneg %p7458
  %7461 = shalt.err (%p7459)

</llo_original>
